<compile_context>
chip_gen: v6e
topology: v6e:2x2x1
jax: 0.10.0
libtpu: 0.0.40
codegen_flags: <defaults>
</compile_context>

<pallas_src>
import math

import numpy as np
import jax
import jax.numpy as jnp
from jax.experimental import pallas as pl
from jax.experimental.pallas import tpu as pltpu

LANE = 128        # TPU lane width; both slabs are padded to this many columns
ROW_ALIGN = 16    # bf16 sublane tile height; every weight block starts tile-aligned


def _round_up(x, m):
    return ((x + m - 1) // m) * m


# ------------------------------ network plan --------------------------------
# plan entries: (kind, cin, cout)

def build_plan(ch, out_ch, ch_mult, num_res_blocks, z_channels):
    nres = len(ch_mult)
    block_in = ch * ch_mult[nres - 1]
    plan = [
        ("conv3", z_channels, block_in),
        ("resnet", block_in, block_in),
        ("attn", block_in, block_in),
        ("resnet", block_in, block_in),
    ]
    for i_level in reversed(range(nres)):
        block_out = ch * ch_mult[i_level]
        for _ in range(num_res_blocks + 1):
            plan.append(("resnet", block_in, block_out))
            block_in = block_out
        if i_level != 0:
            plan.append(("upsample", block_in, block_in))
    plan.append(("norm_swish_conv", block_in, out_ch))
    return plan


# --------------------------- parameter initialization -----------------------

def init_conv3(key, cin, cout):
    kw, kb = jax.random.split(key)
    bound = 1.0 / math.sqrt(cin * 3)
    return {"w": jax.random.uniform(kw, (3, cin, cout), jnp.float32, -bound, bound),
            "b": jax.random.uniform(kb, (cout,), jnp.float32, -bound, bound)}


def init_conv1(key, cin, cout):
    kw, kb = jax.random.split(key)
    bound = 1.0 / math.sqrt(cin)
    return {"w": jax.random.uniform(kw, (cin, cout), jnp.float32, -bound, bound),
            "b": jax.random.uniform(kb, (cout,), jnp.float32, -bound, bound)}


def init_ln(c):
    return {"g": jnp.ones((c,), jnp.float32), "b": jnp.zeros((c,), jnp.float32)}


def init_raw_params(key, plan):
    raw = []
    for kind, cin, cout in plan:
        key, k1, k2, k3, k4 = jax.random.split(key, 5)
        if kind == "conv3":
            raw.append(init_conv3(k1, cin, cout))
        elif kind == "resnet":
            p = {"ln1": init_ln(cin), "conv1": init_conv3(k1, cin, cout),
                 "ln2": init_ln(cout), "conv2": init_conv3(k2, cout, cout)}
            if cin != cout:
                p["nin"] = init_conv1(k3, cin, cout)
            raw.append(p)
        elif kind == "attn":
            raw.append({"ln": init_ln(cin),
                        "q": init_conv1(k1, cin, cin), "k": init_conv1(k2, cin, cin),
                        "v": init_conv1(k3, cin, cin), "proj": init_conv1(k4, cin, cin)})
        elif kind == "upsample":
            raw.append({"conv": init_conv3(k1, cin, cin)})
        elif kind == "norm_swish_conv":
            raw.append({"ln": init_ln(cin), "conv": init_conv3(k1, cin, cout)})
        else:
            raise ValueError(kind)
    return raw


# ---------------------- pack all params into two slabs -----------------------

class _Packer:
    """Packs every weight matrix into one (rows, LANE) bf16 slab and every 1-D
    vector (bias / LayerNorm affine) into one (n_vec, LANE) f32 slab so the
    kernel takes 3 inputs instead of ~75 (each separate input otherwise costs a
    DMA descriptor + its own (8,128)-padded VMEM tile)."""

    def __init__(self):
        self._mats = []   # (row_offset, np array (cin, cout))
        self._rows = 0
        self._vecs = []   # list of (c,) arrays

    def add_mat(self, w):
        w = np.asarray(w, np.float32)
        cin, cout = w.shape
        assert cout <= LANE, "test-size channels fit one lane tile"
        off = self._rows
        self._mats.append((off, w))
        self._rows += _round_up(cin, ROW_ALIGN)
        return (off, cin, cout)

    def add_vec(self, v):
        v = np.asarray(v, np.float32).reshape(-1)
        assert v.shape[0] <= LANE
        idx = len(self._vecs)
        self._vecs.append(v)
        return (idx, v.shape[0])

    def finalize(self):
        rows = max(_round_up(self._rows, ROW_ALIGN), ROW_ALIGN)
        w_slab = np.zeros((rows, LANE), np.float32)
        for off, w in self._mats:
            cin, cout = w.shape
            w_slab[off:off + cin, :cout] = w
        nv = max(_round_up(len(self._vecs), 8), 8)
        v_slab = np.zeros((nv, LANE), np.float32)
        for i, v in enumerate(self._vecs):
            v_slab[i, :v.shape[0]] = v
        # weights feed the MXU -> bf16 (halves weight VMEM); vectors stay f32
        return jnp.asarray(w_slab).astype(jnp.bfloat16), jnp.asarray(v_slab)


def pack_params(plan, raw):
    pk = _Packer()
    layout = []

    def pack_conv3(p):
        w = np.asarray(p["w"], np.float32)      # (3, cin, cout)
        return {"taps": [pk.add_mat(w[i]) for i in range(3)],
                "b": pk.add_vec(p["b"])}

    def pack_upsample_conv3(p):
        w = np.asarray(p["w"], np.float32)
        w0, w1, w2 = w[0], w[1], w[2]
        # fused 2x nearest upsample + conv, applied to pre-upsample rows:
        #   even out rows: x[t-1] @ w0      + x[t]   @ (w1+w2)
        #   odd  out rows: x[t]   @ (w0+w1) + x[t+1] @ w2
        return {"taps": [pk.add_mat(w0), pk.add_mat(w1 + w2),
                         pk.add_mat(w0 + w1), pk.add_mat(w2)],
                "b": pk.add_vec(p["b"])}

    def pack_conv1(p, scale=1.0):
        return {"w": pk.add_mat(np.asarray(p["w"], np.float32) * scale),
                "b": pk.add_vec(np.asarray(p["b"], np.float32) * scale)}

    def pack_ln(p):
        return {"g": pk.add_vec(p["g"]), "b": pk.add_vec(p["b"])}

    for (kind, cin, cout), p in zip(plan, raw):
        if kind == "conv3":
            layout.append({"conv": pack_conv3(p)})
        elif kind == "resnet":
            d = {"ln1": pack_ln(p["ln1"]), "conv1": pack_conv3(p["conv1"]),
                 "ln2": pack_ln(p["ln2"]), "conv2": pack_conv3(p["conv2"])}
            if "nin" in p:
                d["nin"] = pack_conv1(p["nin"])
            layout.append(d)
        elif kind == "attn":
            layout.append({"ln": pack_ln(p["ln"]),
                           "q": pack_conv1(p["q"], 1.0 / math.sqrt(cin)),  # fold scale
                           "k": pack_conv1(p["k"]), "v": pack_conv1(p["v"]),
                           "proj": pack_conv1(p["proj"])})
        elif kind == "upsample":
            layout.append({"conv": pack_upsample_conv3(p["conv"])})
        elif kind == "norm_swish_conv":
            layout.append({"ln": pack_ln(p["ln"]), "conv": pack_conv3(p["conv"])})
        else:
            raise ValueError(kind)

    w_slab, v_slab = pk.finalize()
    return w_slab, v_slab, layout


# --------------------------------- kernel -----------------------------------

def make_decoder_kernel(plan, layout, T0):
    F32, BF16 = jnp.float32, jnp.bfloat16

    def kernel(z_ref, w_ref, v_ref, out_ref):
        mask_cache = {}

        def edge_masks(t_len):
            if t_len not in mask_cache:
                t = jax.lax.broadcasted_iota(jnp.int32, (t_len, 1), 0)
                mask_cache[t_len] = (t == 0, t == t_len - 1)
            return mask_cache[t_len]

        def mat(spec):                              # bf16 (cin, cout) from weight slab
            off, cin, cout = spec
            return w_ref[off:off + cin, 0:cout]

        def vec(spec):                              # f32 (1, c) from vector slab
            idx, c = spec
            return v_ref[idx:idx + 1, 0:c]

        def mm(a, b):                               # bf16 x bf16 -> f32 accumulation
            return jnp.dot(a, b, preferred_element_type=F32)

        def layernorm(x, lnp):
            mu = jnp.mean(x, axis=-1, keepdims=True)
            xc = x - mu
            var = jnp.mean(xc * xc, axis=-1, keepdims=True)   # two-pass: no cancellation
            return xc * jax.lax.rsqrt(var + 1e-6) * vec(lnp["g"]) + vec(lnp["b"])

        def swish(x):
            return x * jax.nn.sigmoid(x)

        def shifted(x, t_len):
            # x[t-1] / x[t+1] with zero padding at the sequence edges, bf16 for MXU.
            first, last = edge_masks(t_len)
            xp = jnp.where(first, 0.0, pltpu.roll(x, shift=1, axis=0))
            xn = jnp.where(last, 0.0, pltpu.roll(x, shift=t_len - 1, axis=0))
            return xp.astype(BF16), xn.astype(BF16)

        def conv3(x, cp, t_len):
            # Conv1d(k=3, pad=1): three tap matmuls accumulated into one (t,cout)
            # buffer (no (t,3*cout) intermediate, lane-aligned output).
            w0, w1, w2 = (mat(s) for s in cp["taps"])
            xp, xn = shifted(x, t_len)
            y = mm(xp, w0) + mm(x.astype(BF16), w1) + mm(xn, w2)
            return y + vec(cp["b"])

        def upsample_conv3(x, cp, t_len):
            # Fused nearest-neighbour 2x upsample + Conv1d(k=3, pad=1):
            #   out[2t]   = x[t-1] @ w0      + x[t]   @ (w1+w2) + b
            #   out[2t+1] = x[t]   @ (w0+w1) + x[t+1] @ w2      + b
            # 4 tap matmuls on the pre-upsample rows (vs 6 on 2x rows), then a
            # single interleave of the results.
            w0, w12, w01, w2 = (mat(s) for s in cp["taps"])
            b = vec(cp["b"])
            xb = x.astype(BF16)
            xp, xn = shifted(x, t_len)
            y_even = mm(xp, w0) + mm(xb, w12) + b
            y_odd = mm(xb, w01) + mm(xn, w2) + b
            cout = y_even.shape[-1]
            return jnp.stack([y_even, y_odd], axis=1).reshape(2 * t_len, cout)

        T = T0
        h = z_ref[0].astype(F32)                    # (T0, z_channels), this batch elem

        for (kind, cin, cout), lp in zip(plan, layout):
            if kind == "conv3":
                h = conv3(h, lp["conv"], T)
            elif kind == "resnet":
                a = conv3(swish(layernorm(h, lp["ln1"])), lp["conv1"], T)
                a = conv3(swish(layernorm(a, lp["ln2"])), lp["conv2"], T)
                if "nin" in lp:
                    h = mm(h.astype(BF16), mat(lp["nin"]["w"])) + vec(lp["nin"]["b"]) + a
                else:
                    h = h + a
            elif kind == "attn":
                # TODO(synk): flash-style KV tiling if T grows (scores are O(T^2) VMEM).
                hn = layernorm(h, lp["ln"]).astype(BF16)
                q = mm(hn, mat(lp["q"]["w"])) + vec(lp["q"]["b"])   # 1/sqrt(c) pre-folded
                k = mm(hn, mat(lp["k"]["w"])) + vec(lp["k"]["b"])
                v = mm(hn, mat(lp["v"]["w"])) + vec(lp["v"]["b"])
                s = jax.lax.dot_general(q.astype(BF16), k.astype(BF16),
                                        (((1,), (1,)), ((), ())),
                                        preferred_element_type=F32)  # (T,T), no k.T
                m = jnp.max(s, axis=-1, keepdims=True)
                p = jnp.exp(s - m)
                p = p * pl.reciprocal(jnp.sum(p, axis=-1, keepdims=True), approx=True)
                o = mm(p.astype(BF16), v.astype(BF16))
                h = h + mm(o.astype(BF16), mat(lp["proj"]["w"])) + vec(lp["proj"]["b"])
            elif kind == "upsample":
                h = upsample_conv3(h, lp["conv"], T)
                T = 2 * T
            elif kind == "norm_swish_conv":
                h = conv3(swish(layernorm(h, lp["ln"])), lp["conv"], T)
            else:
                raise ValueError(kind)

        out_ref[0] = h.astype(out_ref.dtype)

    return kernel


# ------------------------------ pallas wrapper -------------------------------

def decoder_forward_pallas(plan, raw, z, seq_length, out_ch):
    B, T0, zc = z.shape
    n_up = sum(1 for k, _, _ in plan if k == "upsample")
    assert T0 * (2 ** n_up) == seq_length

    w_slab, v_slab, layout = pack_params(plan, raw)

    return pl.pallas_call(
        make_decoder_kernel(plan, layout, T0),
        out_shape=jax.ShapeDtypeStruct((B, seq_length, out_ch), jnp.float32),
        grid=(B,),                                            # batch across cores
        in_specs=[
            pl.BlockSpec((1, T0, zc), lambda b: (b, 0, 0)),
            pl.BlockSpec(w_slab.shape, lambda b: (0, 0)),     # constant -> VMEM resident
            pl.BlockSpec(v_slab.shape, lambda b: (0, 0)),     # constant -> VMEM resident
        ],
        out_specs=pl.BlockSpec((1, seq_length, out_ch), lambda b: (b, 0, 0)),
        compiler_params=pltpu.CompilerParams(
            dimension_semantics=("parallel",),                # v7x: 2 TCs split batch
            vmem_limit_bytes=64 * 1024 * 1024,
        ),
    )(z, w_slab, v_slab)


# ---------------------------- pure-JAX reference -----------------------------

def reference_forward(plan, raw, z):
    def ln(x, p):
        mu = jnp.mean(x, -1, keepdims=True)
        var = jnp.mean((x - mu) ** 2, -1, keepdims=True)
        return (x - mu) / jnp.sqrt(var + 1e-6) * p["g"] + p["b"]

    def conv3(x, p):
        w, b = p["w"], p["b"]
        T = x.shape[1]
        xp = jnp.pad(x, ((0, 0), (1, 1), (0, 0)))
        return (jnp.einsum("btc,cd->btd", xp[:, 0:T], w[0])
                + jnp.einsum("btc,cd->btd", xp[:, 1:T + 1], w[1])
                + jnp.einsum("btc,cd->btd", xp[:, 2:T + 2], w[2]) + b)

    def conv1(x, p):
        return jnp.einsum("btc,cd->btd", x, p["w"]) + p["b"]

    def swish(x):
        return x * jax.nn.sigmoid(x)

    h = z
    for (kind, cin, cout), p in zip(plan, raw):
        if kind == "conv3":
            h = conv3(h, p)
        elif kind == "resnet":
            x = h
            a = conv3(swish(ln(x, p["ln1"])), p["conv1"])
            a = conv3(swish(ln(a, p["ln2"])), p["conv2"])
            if "nin" in p:
                x = conv1(x, p["nin"])
            h = x + a
        elif kind == "attn":
            x = h
            hn = ln(x, p["ln"])
            q = conv1(hn, p["q"])
            k = conv1(hn, p["k"])
            v = conv1(hn, p["v"])
            s = jnp.einsum("btc,bsc->bts", q, k) / jnp.sqrt(jnp.float32(cout))
            a = jax.nn.softmax(s, axis=-1)
            o = jnp.einsum("bts,bsc->btc", a, v)
            h = x + conv1(o, p["proj"])
        elif kind == "upsample":
            h = jnp.repeat(h, 2, axis=1)
            h = conv3(h, p["conv"])
        elif kind == "norm_swish_conv":
            h = conv3(swish(ln(h, p["ln"])), p["conv"])
    return h


# ----------------------------------- main ------------------------------------

if __name__ == "__main__":
    # small but structurally faithful config
    ch, out_ch = 32, 8
    ch_mult = [1, 2]
    num_res_blocks = 1
    seq_length = 16
    z_channels = 4
    B = 2

    down_factor = 2 ** (len(ch_mult) - 1)
    T0 = seq_length // down_factor

    plan = build_plan(ch, out_ch, ch_mult, num_res_blocks, z_channels)

    key = jax.random.PRNGKey(0)
    kz, kp = jax.random.split(key)
    z = jax.random.normal(kz, (B, T0, z_channels), jnp.float32)   # channels-last
    raw = init_raw_params(kp, plan)

    out = decoder_forward_pallas(plan, raw, z, seq_length, out_ch)
    out = jax.block_until_ready(out)

    assert out.shape == (B, seq_length, out_ch), out.shape
    assert bool(jnp.all(jnp.isfinite(out)))

    with jax.default_matmul_precision("highest"):
        ref = reference_forward(plan, raw, z)
    ref = jax.block_until_ready(ref)
    max_err = float(jnp.max(jnp.abs(out - ref)))
    # kernel matmuls run bf16 operands / f32 accumulation vs f32 reference,
    # so use a bf16-appropriate tolerance (structural bugs give O(1) errors).
    assert max_err < 1e-1, f"max abs err vs f32 reference: {max_err}"

    print("KERNEL_OK")
</pallas_src>

<mosaic_0001>
module attributes {stable_mosaic.version = 11 : i64} {
  func.func @kernel(%arg0: i32, %arg1: memref<1x8x4xf32, #tpu.memory_space<vmem>>, %arg2: memref<2736x128xbf16, #tpu.memory_space<vmem>>, %arg3: memref<48x128xf32, #tpu.memory_space<vmem>>, %arg4: memref<1x16x8xf32, #tpu.memory_space<vmem>>) attributes {dimension_semantics = [#tpu.dimension_semantics<parallel>], iteration_bounds = array<i64: 2>, scalar_prefetch = 0 : i64, scratch_operands = 0 : i64, tpu.core_type = #tpu.core_type<tc>, window_params = [{transform_indices = @transform_0, window_bounds = array<i64: 1, 8, 4>}, {pipeline_mode = #tpu.pipeline_mode<synchronous>, transform_indices = @transform_1, window_bounds = array<i64: 2736, 128>}, {pipeline_mode = #tpu.pipeline_mode<synchronous>, transform_indices = @transform_2, window_bounds = array<i64: 48, 128>}, {transform_indices = @transform_3, window_bounds = array<i64: 1, 16, 8>}]} {
    %c0 = arith.constant 0 : index
    %c0_0 = arith.constant 0 : index
    %c0_1 = arith.constant 0 : index
    %0 = vector.load %arg1[%c0, %c0_0, %c0_1] : memref<1x8x4xf32, #tpu.memory_space<vmem>>, vector<1x8x4xf32>
    %1 = vector.shape_cast %0 : vector<1x8x4xf32> to vector<8x4xf32>
    %c0_2 = arith.constant 0 : index
    %c0_3 = arith.constant 0 : index
    %2 = vector.load %arg2[%c0_2, %c0_3] : memref<2736x128xbf16, #tpu.memory_space<vmem>>, vector<4x64xbf16>
    %c16 = arith.constant 16 : index
    %c0_4 = arith.constant 0 : index
    %3 = vector.load %arg2[%c16, %c0_4] : memref<2736x128xbf16, #tpu.memory_space<vmem>>, vector<4x64xbf16>
    %c32 = arith.constant 32 : index
    %c0_5 = arith.constant 0 : index
    %4 = vector.load %arg2[%c32, %c0_5] : memref<2736x128xbf16, #tpu.memory_space<vmem>>, vector<4x64xbf16>
    %5 = tpu.iota {dimensions = array<i32: 0>} : vector<8x1xi32>
    %c0_i32 = arith.constant 0 : i32
    %6 = vector.broadcast %c0_i32 : i32 to vector<8x1xi32>
    %7 = arith.cmpi eq, %5, %6 : vector<8x1xi32>
    %c7_i32 = arith.constant 7 : i32
    %8 = vector.broadcast %c7_i32 : i32 to vector<8x1xi32>
    %9 = arith.cmpi eq, %5, %8 : vector<8x1xi32>
    %c1_i32 = arith.constant 1 : i32
    %10 = tpu.dynamic_rotate %1 by %c1_i32 dim 0 : vector<8x4xf32>, i32 -> vector<8x4xf32>
    %cst = arith.constant 0.000000e+00 : f32
    %11 = vector.shape_cast %7 : vector<8x1xi1> to vector<8x1xi1>
    %12 = vector.broadcast %11 : vector<8x1xi1> to vector<8x4xi1>
    %13 = vector.broadcast %cst : f32 to vector<8x4xf32>
    %14 = arith.select %12, %13, %10 : vector<8x4xi1>, vector<8x4xf32>
    %c7_i32_6 = arith.constant 7 : i32
    %15 = tpu.dynamic_rotate %1 by %c7_i32_6 dim 0 : vector<8x4xf32>, i32 -> vector<8x4xf32>
    %cst_7 = arith.constant 0.000000e+00 : f32
    %16 = vector.shape_cast %9 : vector<8x1xi1> to vector<8x1xi1>
    %17 = vector.broadcast %16 : vector<8x1xi1> to vector<8x4xi1>
    %18 = vector.broadcast %cst_7 : f32 to vector<8x4xf32>
    %19 = arith.select %17, %18, %15 : vector<8x4xi1>, vector<8x4xf32>
    %20 = arith.truncf %14 : vector<8x4xf32> to vector<8x4xbf16>
    %21 = arith.truncf %19 : vector<8x4xf32> to vector<8x4xbf16>
    %cst_8 = arith.constant dense<0.000000e+00> : vector<8x64xf32>
    %22 = tpu.matmul %20, %2, %cst_8 {dimension_numbers = #tpu.dot_dimension_numbers<[1], [0], [0], [1], [0, 0, 1, 1], [], []>} : vector<8x4xbf16>, vector<4x64xbf16>, vector<8x64xf32> -> vector<8x64xf32>
    %23 = arith.truncf %1 : vector<8x4xf32> to vector<8x4xbf16>
    %cst_9 = arith.constant dense<0.000000e+00> : vector<8x64xf32>
    %24 = tpu.matmul %23, %3, %cst_9 {dimension_numbers = #tpu.dot_dimension_numbers<[1], [0], [0], [1], [0, 0, 1, 1], [], []>} : vector<8x4xbf16>, vector<4x64xbf16>, vector<8x64xf32> -> vector<8x64xf32>
    %25 = arith.addf %22, %24 : vector<8x64xf32>
    %cst_10 = arith.constant dense<0.000000e+00> : vector<8x64xf32>
    %26 = tpu.matmul %21, %4, %cst_10 {dimension_numbers = #tpu.dot_dimension_numbers<[1], [0], [0], [1], [0, 0, 1, 1], [], []>} : vector<8x4xbf16>, vector<4x64xbf16>, vector<8x64xf32> -> vector<8x64xf32>
    %27 = arith.addf %25, %26 : vector<8x64xf32>
    %c0_11 = arith.constant 0 : index
    %c0_12 = arith.constant 0 : index
    %28 = vector.load %arg3[%c0_11, %c0_12] : memref<48x128xf32, #tpu.memory_space<vmem>>, vector<1x64xf32>
    %29 = vector.broadcast %28 : vector<1x64xf32> to vector<8x64xf32>
    %30 = arith.addf %27, %29 : vector<8x64xf32>
    %cst_13 = arith.constant dense<0.000000e+00> : vector<8xf32>
    %31 = vector.multi_reduction <add>, %30, %cst_13 [1] : vector<8x64xf32> to vector<8xf32>
    %32 = vector.shape_cast %31 : vector<8xf32> to vector<8x1xf32>
    %cst_14 = arith.constant 6.400000e+01 : f32
    %33 = vector.broadcast %cst_14 : f32 to vector<8x1xf32>
    %34 = arith.divf %32, %33 : vector<8x1xf32>
    %35 = vector.broadcast %34 : vector<8x1xf32> to vector<8x64xf32>
    %36 = arith.subf %30, %35 : vector<8x64xf32>
    %37 = arith.mulf %36, %36 : vector<8x64xf32>
    %cst_15 = arith.constant dense<0.000000e+00> : vector<8xf32>
    %38 = vector.multi_reduction <add>, %37, %cst_15 [1] : vector<8x64xf32> to vector<8xf32>
    %39 = vector.shape_cast %38 : vector<8xf32> to vector<8x1xf32>
    %cst_16 = arith.constant 6.400000e+01 : f32
    %40 = vector.broadcast %cst_16 : f32 to vector<8x1xf32>
    %41 = arith.divf %39, %40 : vector<8x1xf32>
    %cst_17 = arith.constant 9.99999997E-7 : f32
    %42 = vector.broadcast %cst_17 : f32 to vector<8x1xf32>
    %43 = arith.addf %41, %42 : vector<8x1xf32>
    %44 = math.rsqrt %43 : vector<8x1xf32>
    %45 = vector.broadcast %44 : vector<8x1xf32> to vector<8x64xf32>
    %46 = arith.mulf %36, %45 : vector<8x64xf32>
    %c1 = arith.constant 1 : index
    %c0_18 = arith.constant 0 : index
    %47 = vector.load %arg3[%c1, %c0_18] : memref<48x128xf32, #tpu.memory_space<vmem>>, vector<1x64xf32>
    %48 = vector.broadcast %47 : vector<1x64xf32> to vector<8x64xf32>
    %49 = arith.mulf %46, %48 : vector<8x64xf32>
    %c2 = arith.constant 2 : index
    %c0_19 = arith.constant 0 : index
    %50 = vector.load %arg3[%c2, %c0_19] : memref<48x128xf32, #tpu.memory_space<vmem>>, vector<1x64xf32>
    %51 = vector.broadcast %50 : vector<1x64xf32> to vector<8x64xf32>
    %52 = arith.addf %49, %51 : vector<8x64xf32>
    %53 = arith.negf %52 : vector<8x64xf32>
    %54 = math.exp %53 : vector<8x64xf32>
    %cst_20 = arith.constant 1.000000e+00 : f32
    %55 = vector.broadcast %cst_20 : f32 to vector<8x64xf32>
    %56 = arith.addf %55, %54 : vector<8x64xf32>
    %57 = arith.divf %55, %56 : vector<8x64xf32>
    %58 = arith.mulf %52, %57 : vector<8x64xf32>
    %c48 = arith.constant 48 : index
    %c0_21 = arith.constant 0 : index
    %59 = vector.load %arg2[%c48, %c0_21] : memref<2736x128xbf16, #tpu.memory_space<vmem>>, vector<64x64xbf16>
    %c112 = arith.constant 112 : index
    %c0_22 = arith.constant 0 : index
    %60 = vector.load %arg2[%c112, %c0_22] : memref<2736x128xbf16, #tpu.memory_space<vmem>>, vector<64x64xbf16>
    %c176 = arith.constant 176 : index
    %c0_23 = arith.constant 0 : index
    %61 = vector.load %arg2[%c176, %c0_23] : memref<2736x128xbf16, #tpu.memory_space<vmem>>, vector<64x64xbf16>
    %c1_i32_24 = arith.constant 1 : i32
    %62 = tpu.dynamic_rotate %58 by %c1_i32_24 dim 0 : vector<8x64xf32>, i32 -> vector<8x64xf32>
    %cst_25 = arith.constant 0.000000e+00 : f32
    %63 = vector.shape_cast %7 : vector<8x1xi1> to vector<8x1xi1>
    %64 = vector.broadcast %63 : vector<8x1xi1> to vector<8x64xi1>
    %65 = vector.broadcast %cst_25 : f32 to vector<8x64xf32>
    %66 = arith.select %64, %65, %62 : vector<8x64xi1>, vector<8x64xf32>
    %c7_i32_26 = arith.constant 7 : i32
    %67 = tpu.dynamic_rotate %58 by %c7_i32_26 dim 0 : vector<8x64xf32>, i32 -> vector<8x64xf32>
    %cst_27 = arith.constant 0.000000e+00 : f32
    %68 = vector.shape_cast %9 : vector<8x1xi1> to vector<8x1xi1>
    %69 = vector.broadcast %68 : vector<8x1xi1> to vector<8x64xi1>
    %70 = vector.broadcast %cst_27 : f32 to vector<8x64xf32>
    %71 = arith.select %69, %70, %67 : vector<8x64xi1>, vector<8x64xf32>
    %72 = arith.truncf %66 : vector<8x64xf32> to vector<8x64xbf16>
    %73 = arith.truncf %71 : vector<8x64xf32> to vector<8x64xbf16>
    %cst_28 = arith.constant dense<0.000000e+00> : vector<8x64xf32>
    %74 = tpu.matmul %72, %59, %cst_28 {dimension_numbers = #tpu.dot_dimension_numbers<[1], [0], [0], [1], [0, 0, 1, 1], [], []>} : vector<8x64xbf16>, vector<64x64xbf16>, vector<8x64xf32> -> vector<8x64xf32>
    %75 = arith.truncf %58 : vector<8x64xf32> to vector<8x64xbf16>
    %cst_29 = arith.constant dense<0.000000e+00> : vector<8x64xf32>
    %76 = tpu.matmul %75, %60, %cst_29 {dimension_numbers = #tpu.dot_dimension_numbers<[1], [0], [0], [1], [0, 0, 1, 1], [], []>} : vector<8x64xbf16>, vector<64x64xbf16>, vector<8x64xf32> -> vector<8x64xf32>
    %77 = arith.addf %74, %76 : vector<8x64xf32>
    %cst_30 = arith.constant dense<0.000000e+00> : vector<8x64xf32>
    %78 = tpu.matmul %73, %61, %cst_30 {dimension_numbers = #tpu.dot_dimension_numbers<[1], [0], [0], [1], [0, 0, 1, 1], [], []>} : vector<8x64xbf16>, vector<64x64xbf16>, vector<8x64xf32> -> vector<8x64xf32>
    %79 = arith.addf %77, %78 : vector<8x64xf32>
    %c3 = arith.constant 3 : index
    %c0_31 = arith.constant 0 : index
    %80 = vector.load %arg3[%c3, %c0_31] : memref<48x128xf32, #tpu.memory_space<vmem>>, vector<1x64xf32>
    %81 = vector.broadcast %80 : vector<1x64xf32> to vector<8x64xf32>
    %82 = arith.addf %79, %81 : vector<8x64xf32>
    %cst_32 = arith.constant dense<0.000000e+00> : vector<8xf32>
    %83 = vector.multi_reduction <add>, %82, %cst_32 [1] : vector<8x64xf32> to vector<8xf32>
    %84 = vector.shape_cast %83 : vector<8xf32> to vector<8x1xf32>
    %cst_33 = arith.constant 6.400000e+01 : f32
    %85 = vector.broadcast %cst_33 : f32 to vector<8x1xf32>
    %86 = arith.divf %84, %85 : vector<8x1xf32>
    %87 = vector.broadcast %86 : vector<8x1xf32> to vector<8x64xf32>
    %88 = arith.subf %82, %87 : vector<8x64xf32>
    %89 = arith.mulf %88, %88 : vector<8x64xf32>
    %cst_34 = arith.constant dense<0.000000e+00> : vector<8xf32>
    %90 = vector.multi_reduction <add>, %89, %cst_34 [1] : vector<8x64xf32> to vector<8xf32>
    %91 = vector.shape_cast %90 : vector<8xf32> to vector<8x1xf32>
    %cst_35 = arith.constant 6.400000e+01 : f32
    %92 = vector.broadcast %cst_35 : f32 to vector<8x1xf32>
    %93 = arith.divf %91, %92 : vector<8x1xf32>
    %cst_36 = arith.constant 9.99999997E-7 : f32
    %94 = vector.broadcast %cst_36 : f32 to vector<8x1xf32>
    %95 = arith.addf %93, %94 : vector<8x1xf32>
    %96 = math.rsqrt %95 : vector<8x1xf32>
    %97 = vector.broadcast %96 : vector<8x1xf32> to vector<8x64xf32>
    %98 = arith.mulf %88, %97 : vector<8x64xf32>
    %c4 = arith.constant 4 : index
    %c0_37 = arith.constant 0 : index
    %99 = vector.load %arg3[%c4, %c0_37] : memref<48x128xf32, #tpu.memory_space<vmem>>, vector<1x64xf32>
    %100 = vector.broadcast %99 : vector<1x64xf32> to vector<8x64xf32>
    %101 = arith.mulf %98, %100 : vector<8x64xf32>
    %c5 = arith.constant 5 : index
    %c0_38 = arith.constant 0 : index
    %102 = vector.load %arg3[%c5, %c0_38] : memref<48x128xf32, #tpu.memory_space<vmem>>, vector<1x64xf32>
    %103 = vector.broadcast %102 : vector<1x64xf32> to vector<8x64xf32>
    %104 = arith.addf %101, %103 : vector<8x64xf32>
    %105 = arith.negf %104 : vector<8x64xf32>
    %106 = math.exp %105 : vector<8x64xf32>
    %cst_39 = arith.constant 1.000000e+00 : f32
    %107 = vector.broadcast %cst_39 : f32 to vector<8x64xf32>
    %108 = arith.addf %107, %106 : vector<8x64xf32>
    %109 = arith.divf %107, %108 : vector<8x64xf32>
    %110 = arith.mulf %104, %109 : vector<8x64xf32>
    %c240 = arith.constant 240 : index
    %c0_40 = arith.constant 0 : index
    %111 = vector.load %arg2[%c240, %c0_40] : memref<2736x128xbf16, #tpu.memory_space<vmem>>, vector<64x64xbf16>
    %c304 = arith.constant 304 : index
    %c0_41 = arith.constant 0 : index
    %112 = vector.load %arg2[%c304, %c0_41] : memref<2736x128xbf16, #tpu.memory_space<vmem>>, vector<64x64xbf16>
    %c368 = arith.constant 368 : index
    %c0_42 = arith.constant 0 : index
    %113 = vector.load %arg2[%c368, %c0_42] : memref<2736x128xbf16, #tpu.memory_space<vmem>>, vector<64x64xbf16>
    %c1_i32_43 = arith.constant 1 : i32
    %114 = tpu.dynamic_rotate %110 by %c1_i32_43 dim 0 : vector<8x64xf32>, i32 -> vector<8x64xf32>
    %cst_44 = arith.constant 0.000000e+00 : f32
    %115 = vector.shape_cast %7 : vector<8x1xi1> to vector<8x1xi1>
    %116 = vector.broadcast %115 : vector<8x1xi1> to vector<8x64xi1>
    %117 = vector.broadcast %cst_44 : f32 to vector<8x64xf32>
    %118 = arith.select %116, %117, %114 : vector<8x64xi1>, vector<8x64xf32>
    %c7_i32_45 = arith.constant 7 : i32
    %119 = tpu.dynamic_rotate %110 by %c7_i32_45 dim 0 : vector<8x64xf32>, i32 -> vector<8x64xf32>
    %cst_46 = arith.constant 0.000000e+00 : f32
    %120 = vector.shape_cast %9 : vector<8x1xi1> to vector<8x1xi1>
    %121 = vector.broadcast %120 : vector<8x1xi1> to vector<8x64xi1>
    %122 = vector.broadcast %cst_46 : f32 to vector<8x64xf32>
    %123 = arith.select %121, %122, %119 : vector<8x64xi1>, vector<8x64xf32>
    %124 = arith.truncf %118 : vector<8x64xf32> to vector<8x64xbf16>
    %125 = arith.truncf %123 : vector<8x64xf32> to vector<8x64xbf16>
    %cst_47 = arith.constant dense<0.000000e+00> : vector<8x64xf32>
    %126 = tpu.matmul %124, %111, %cst_47 {dimension_numbers = #tpu.dot_dimension_numbers<[1], [0], [0], [1], [0, 0, 1, 1], [], []>} : vector<8x64xbf16>, vector<64x64xbf16>, vector<8x64xf32> -> vector<8x64xf32>
    %127 = arith.truncf %110 : vector<8x64xf32> to vector<8x64xbf16>
    %cst_48 = arith.constant dense<0.000000e+00> : vector<8x64xf32>
    %128 = tpu.matmul %127, %112, %cst_48 {dimension_numbers = #tpu.dot_dimension_numbers<[1], [0], [0], [1], [0, 0, 1, 1], [], []>} : vector<8x64xbf16>, vector<64x64xbf16>, vector<8x64xf32> -> vector<8x64xf32>
    %129 = arith.addf %126, %128 : vector<8x64xf32>
    %cst_49 = arith.constant dense<0.000000e+00> : vector<8x64xf32>
    %130 = tpu.matmul %125, %113, %cst_49 {dimension_numbers = #tpu.dot_dimension_numbers<[1], [0], [0], [1], [0, 0, 1, 1], [], []>} : vector<8x64xbf16>, vector<64x64xbf16>, vector<8x64xf32> -> vector<8x64xf32>
    %131 = arith.addf %129, %130 : vector<8x64xf32>
    %c6 = arith.constant 6 : index
    %c0_50 = arith.constant 0 : index
    %132 = vector.load %arg3[%c6, %c0_50] : memref<48x128xf32, #tpu.memory_space<vmem>>, vector<1x64xf32>
    %133 = vector.broadcast %132 : vector<1x64xf32> to vector<8x64xf32>
    %134 = arith.addf %131, %133 : vector<8x64xf32>
    %135 = arith.addf %30, %134 : vector<8x64xf32>
    %cst_51 = arith.constant dense<0.000000e+00> : vector<8xf32>
    %136 = vector.multi_reduction <add>, %135, %cst_51 [1] : vector<8x64xf32> to vector<8xf32>
    %137 = vector.shape_cast %136 : vector<8xf32> to vector<8x1xf32>
    %cst_52 = arith.constant 6.400000e+01 : f32
    %138 = vector.broadcast %cst_52 : f32 to vector<8x1xf32>
    %139 = arith.divf %137, %138 : vector<8x1xf32>
    %140 = vector.broadcast %139 : vector<8x1xf32> to vector<8x64xf32>
    %141 = arith.subf %135, %140 : vector<8x64xf32>
    %142 = arith.mulf %141, %141 : vector<8x64xf32>
    %cst_53 = arith.constant dense<0.000000e+00> : vector<8xf32>
    %143 = vector.multi_reduction <add>, %142, %cst_53 [1] : vector<8x64xf32> to vector<8xf32>
    %144 = vector.shape_cast %143 : vector<8xf32> to vector<8x1xf32>
    %cst_54 = arith.constant 6.400000e+01 : f32
    %145 = vector.broadcast %cst_54 : f32 to vector<8x1xf32>
    %146 = arith.divf %144, %145 : vector<8x1xf32>
    %cst_55 = arith.constant 9.99999997E-7 : f32
    %147 = vector.broadcast %cst_55 : f32 to vector<8x1xf32>
    %148 = arith.addf %146, %147 : vector<8x1xf32>
    %149 = math.rsqrt %148 : vector<8x1xf32>
    %150 = vector.broadcast %149 : vector<8x1xf32> to vector<8x64xf32>
    %151 = arith.mulf %141, %150 : vector<8x64xf32>
    %c7 = arith.constant 7 : index
    %c0_56 = arith.constant 0 : index
    %152 = vector.load %arg3[%c7, %c0_56] : memref<48x128xf32, #tpu.memory_space<vmem>>, vector<1x64xf32>
    %153 = vector.broadcast %152 : vector<1x64xf32> to vector<8x64xf32>
    %154 = arith.mulf %151, %153 : vector<8x64xf32>
    %c8 = arith.constant 8 : index
    %c0_57 = arith.constant 0 : index
    %155 = vector.load %arg3[%c8, %c0_57] : memref<48x128xf32, #tpu.memory_space<vmem>>, vector<1x64xf32>
    %156 = vector.broadcast %155 : vector<1x64xf32> to vector<8x64xf32>
    %157 = arith.addf %154, %156 : vector<8x64xf32>
    %158 = arith.truncf %157 : vector<8x64xf32> to vector<8x64xbf16>
    %c432 = arith.constant 432 : index
    %c0_58 = arith.constant 0 : index
    %159 = vector.load %arg2[%c432, %c0_58] : memref<2736x128xbf16, #tpu.memory_space<vmem>>, vector<64x64xbf16>
    %cst_59 = arith.constant dense<0.000000e+00> : vector<8x64xf32>
    %160 = tpu.matmul %158, %159, %cst_59 {dimension_numbers = #tpu.dot_dimension_numbers<[1], [0], [0], [1], [0, 0, 1, 1], [], []>} : vector<8x64xbf16>, vector<64x64xbf16>, vector<8x64xf32> -> vector<8x64xf32>
    %c9 = arith.constant 9 : index
    %c0_60 = arith.constant 0 : index
    %161 = vector.load %arg3[%c9, %c0_60] : memref<48x128xf32, #tpu.memory_space<vmem>>, vector<1x64xf32>
    %162 = vector.broadcast %161 : vector<1x64xf32> to vector<8x64xf32>
    %163 = arith.addf %160, %162 : vector<8x64xf32>
    %c496 = arith.constant 496 : index
    %c0_61 = arith.constant 0 : index
    %164 = vector.load %arg2[%c496, %c0_61] : memref<2736x128xbf16, #tpu.memory_space<vmem>>, vector<64x64xbf16>
    %cst_62 = arith.constant dense<0.000000e+00> : vector<8x64xf32>
    %165 = tpu.matmul %158, %164, %cst_62 {dimension_numbers = #tpu.dot_dimension_numbers<[1], [0], [0], [1], [0, 0, 1, 1], [], []>} : vector<8x64xbf16>, vector<64x64xbf16>, vector<8x64xf32> -> vector<8x64xf32>
    %c10 = arith.constant 10 : index
    %c0_63 = arith.constant 0 : index
    %166 = vector.load %arg3[%c10, %c0_63] : memref<48x128xf32, #tpu.memory_space<vmem>>, vector<1x64xf32>
    %167 = vector.broadcast %166 : vector<1x64xf32> to vector<8x64xf32>
    %168 = arith.addf %165, %167 : vector<8x64xf32>
    %c560 = arith.constant 560 : index
    %c0_64 = arith.constant 0 : index
    %169 = vector.load %arg2[%c560, %c0_64] : memref<2736x128xbf16, #tpu.memory_space<vmem>>, vector<64x64xbf16>
    %cst_65 = arith.constant dense<0.000000e+00> : vector<8x64xf32>
    %170 = tpu.matmul %158, %169, %cst_65 {dimension_numbers = #tpu.dot_dimension_numbers<[1], [0], [0], [1], [0, 0, 1, 1], [], []>} : vector<8x64xbf16>, vector<64x64xbf16>, vector<8x64xf32> -> vector<8x64xf32>
    %c11 = arith.constant 11 : index
    %c0_66 = arith.constant 0 : index
    %171 = vector.load %arg3[%c11, %c0_66] : memref<48x128xf32, #tpu.memory_space<vmem>>, vector<1x64xf32>
    %172 = vector.broadcast %171 : vector<1x64xf32> to vector<8x64xf32>
    %173 = arith.addf %170, %172 : vector<8x64xf32>
    %174 = arith.truncf %163 : vector<8x64xf32> to vector<8x64xbf16>
    %175 = arith.truncf %168 : vector<8x64xf32> to vector<8x64xbf16>
    %cst_67 = arith.constant dense<0.000000e+00> : vector<8x8xf32>
    %176 = tpu.matmul %174, %175, %cst_67 {dimension_numbers = #tpu.dot_dimension_numbers<[1], [1], [0], [0], [0, 0, 1, 0], [], []>} : vector<8x64xbf16>, vector<8x64xbf16>, vector<8x8xf32> -> vector<8x8xf32>
    %cst_68 = arith.constant dense<0xFF800000> : vector<8xf32>
    %177 = vector.multi_reduction <maximumf>, %176, %cst_68 [1] : vector<8x8xf32> to vector<8xf32>
    %178 = vector.shape_cast %177 : vector<8xf32> to vector<8x1xf32>
    %179 = vector.broadcast %178 : vector<8x1xf32> to vector<8x8xf32>
    %180 = arith.subf %176, %179 : vector<8x8xf32>
    %181 = math.exp %180 : vector<8x8xf32>
    %cst_69 = arith.constant dense<0.000000e+00> : vector<8xf32>
    %182 = vector.multi_reduction <add>, %181, %cst_69 [1] : vector<8x8xf32> to vector<8xf32>
    %183 = vector.shape_cast %182 : vector<8xf32> to vector<8x1xf32>
    %184 = tpu.reciprocal %183 {approx = true} : vector<8x1xf32> -> vector<8x1xf32>
    %185 = vector.broadcast %184 : vector<8x1xf32> to vector<8x8xf32>
    %186 = arith.mulf %181, %185 : vector<8x8xf32>
    %187 = arith.truncf %186 : vector<8x8xf32> to vector<8x8xbf16>
    %188 = arith.truncf %173 : vector<8x64xf32> to vector<8x64xbf16>
    %cst_70 = arith.constant dense<0.000000e+00> : vector<8x64xf32>
    %189 = tpu.matmul %187, %188, %cst_70 {dimension_numbers = #tpu.dot_dimension_numbers<[1], [0], [0], [1], [0, 0, 1, 1], [], []>} : vector<8x8xbf16>, vector<8x64xbf16>, vector<8x64xf32> -> vector<8x64xf32>
    %190 = arith.truncf %189 : vector<8x64xf32> to vector<8x64xbf16>
    %c624 = arith.constant 624 : index
    %c0_71 = arith.constant 0 : index
    %191 = vector.load %arg2[%c624, %c0_71] : memref<2736x128xbf16, #tpu.memory_space<vmem>>, vector<64x64xbf16>
    %cst_72 = arith.constant dense<0.000000e+00> : vector<8x64xf32>
    %192 = tpu.matmul %190, %191, %cst_72 {dimension_numbers = #tpu.dot_dimension_numbers<[1], [0], [0], [1], [0, 0, 1, 1], [], []>} : vector<8x64xbf16>, vector<64x64xbf16>, vector<8x64xf32> -> vector<8x64xf32>
    %193 = arith.addf %135, %192 : vector<8x64xf32>
    %c12 = arith.constant 12 : index
    %c0_73 = arith.constant 0 : index
    %194 = vector.load %arg3[%c12, %c0_73] : memref<48x128xf32, #tpu.memory_space<vmem>>, vector<1x64xf32>
    %195 = vector.broadcast %194 : vector<1x64xf32> to vector<8x64xf32>
    %196 = arith.addf %193, %195 : vector<8x64xf32>
    %cst_74 = arith.constant dense<0.000000e+00> : vector<8xf32>
    %197 = vector.multi_reduction <add>, %196, %cst_74 [1] : vector<8x64xf32> to vector<8xf32>
    %198 = vector.shape_cast %197 : vector<8xf32> to vector<8x1xf32>
    %cst_75 = arith.constant 6.400000e+01 : f32
    %199 = vector.broadcast %cst_75 : f32 to vector<8x1xf32>
    %200 = arith.divf %198, %199 : vector<8x1xf32>
    %201 = vector.broadcast %200 : vector<8x1xf32> to vector<8x64xf32>
    %202 = arith.subf %196, %201 : vector<8x64xf32>
    %203 = arith.mulf %202, %202 : vector<8x64xf32>
    %cst_76 = arith.constant dense<0.000000e+00> : vector<8xf32>
    %204 = vector.multi_reduction <add>, %203, %cst_76 [1] : vector<8x64xf32> to vector<8xf32>
    %205 = vector.shape_cast %204 : vector<8xf32> to vector<8x1xf32>
    %cst_77 = arith.constant 6.400000e+01 : f32
    %206 = vector.broadcast %cst_77 : f32 to vector<8x1xf32>
    %207 = arith.divf %205, %206 : vector<8x1xf32>
    %cst_78 = arith.constant 9.99999997E-7 : f32
    %208 = vector.broadcast %cst_78 : f32 to vector<8x1xf32>
    %209 = arith.addf %207, %208 : vector<8x1xf32>
    %210 = math.rsqrt %209 : vector<8x1xf32>
    %211 = vector.broadcast %210 : vector<8x1xf32> to vector<8x64xf32>
    %212 = arith.mulf %202, %211 : vector<8x64xf32>
    %c13 = arith.constant 13 : index
    %c0_79 = arith.constant 0 : index
    %213 = vector.load %arg3[%c13, %c0_79] : memref<48x128xf32, #tpu.memory_space<vmem>>, vector<1x64xf32>
    %214 = vector.broadcast %213 : vector<1x64xf32> to vector<8x64xf32>
    %215 = arith.mulf %212, %214 : vector<8x64xf32>
    %c14 = arith.constant 14 : index
    %c0_80 = arith.constant 0 : index
    %216 = vector.load %arg3[%c14, %c0_80] : memref<48x128xf32, #tpu.memory_space<vmem>>, vector<1x64xf32>
    %217 = vector.broadcast %216 : vector<1x64xf32> to vector<8x64xf32>
    %218 = arith.addf %215, %217 : vector<8x64xf32>
    %219 = arith.negf %218 : vector<8x64xf32>
    %220 = math.exp %219 : vector<8x64xf32>
    %cst_81 = arith.constant 1.000000e+00 : f32
    %221 = vector.broadcast %cst_81 : f32 to vector<8x64xf32>
    %222 = arith.addf %221, %220 : vector<8x64xf32>
    %223 = arith.divf %221, %222 : vector<8x64xf32>
    %224 = arith.mulf %218, %223 : vector<8x64xf32>
    %c688 = arith.constant 688 : index
    %c0_82 = arith.constant 0 : index
    %225 = vector.load %arg2[%c688, %c0_82] : memref<2736x128xbf16, #tpu.memory_space<vmem>>, vector<64x64xbf16>
    %c752 = arith.constant 752 : index
    %c0_83 = arith.constant 0 : index
    %226 = vector.load %arg2[%c752, %c0_83] : memref<2736x128xbf16, #tpu.memory_space<vmem>>, vector<64x64xbf16>
    %c816 = arith.constant 816 : index
    %c0_84 = arith.constant 0 : index
    %227 = vector.load %arg2[%c816, %c0_84] : memref<2736x128xbf16, #tpu.memory_space<vmem>>, vector<64x64xbf16>
    %c1_i32_85 = arith.constant 1 : i32
    %228 = tpu.dynamic_rotate %224 by %c1_i32_85 dim 0 : vector<8x64xf32>, i32 -> vector<8x64xf32>
    %cst_86 = arith.constant 0.000000e+00 : f32
    %229 = vector.shape_cast %7 : vector<8x1xi1> to vector<8x1xi1>
    %230 = vector.broadcast %229 : vector<8x1xi1> to vector<8x64xi1>
    %231 = vector.broadcast %cst_86 : f32 to vector<8x64xf32>
    %232 = arith.select %230, %231, %228 : vector<8x64xi1>, vector<8x64xf32>
    %c7_i32_87 = arith.constant 7 : i32
    %233 = tpu.dynamic_rotate %224 by %c7_i32_87 dim 0 : vector<8x64xf32>, i32 -> vector<8x64xf32>
    %cst_88 = arith.constant 0.000000e+00 : f32
    %234 = vector.shape_cast %9 : vector<8x1xi1> to vector<8x1xi1>
    %235 = vector.broadcast %234 : vector<8x1xi1> to vector<8x64xi1>
    %236 = vector.broadcast %cst_88 : f32 to vector<8x64xf32>
    %237 = arith.select %235, %236, %233 : vector<8x64xi1>, vector<8x64xf32>
    %238 = arith.truncf %232 : vector<8x64xf32> to vector<8x64xbf16>
    %239 = arith.truncf %237 : vector<8x64xf32> to vector<8x64xbf16>
    %cst_89 = arith.constant dense<0.000000e+00> : vector<8x64xf32>
    %240 = tpu.matmul %238, %225, %cst_89 {dimension_numbers = #tpu.dot_dimension_numbers<[1], [0], [0], [1], [0, 0, 1, 1], [], []>} : vector<8x64xbf16>, vector<64x64xbf16>, vector<8x64xf32> -> vector<8x64xf32>
    %241 = arith.truncf %224 : vector<8x64xf32> to vector<8x64xbf16>
    %cst_90 = arith.constant dense<0.000000e+00> : vector<8x64xf32>
    %242 = tpu.matmul %241, %226, %cst_90 {dimension_numbers = #tpu.dot_dimension_numbers<[1], [0], [0], [1], [0, 0, 1, 1], [], []>} : vector<8x64xbf16>, vector<64x64xbf16>, vector<8x64xf32> -> vector<8x64xf32>
    %243 = arith.addf %240, %242 : vector<8x64xf32>
    %cst_91 = arith.constant dense<0.000000e+00> : vector<8x64xf32>
    %244 = tpu.matmul %239, %227, %cst_91 {dimension_numbers = #tpu.dot_dimension_numbers<[1], [0], [0], [1], [0, 0, 1, 1], [], []>} : vector<8x64xbf16>, vector<64x64xbf16>, vector<8x64xf32> -> vector<8x64xf32>
    %245 = arith.addf %243, %244 : vector<8x64xf32>
    %c15 = arith.constant 15 : index
    %c0_92 = arith.constant 0 : index
    %246 = vector.load %arg3[%c15, %c0_92] : memref<48x128xf32, #tpu.memory_space<vmem>>, vector<1x64xf32>
    %247 = vector.broadcast %246 : vector<1x64xf32> to vector<8x64xf32>
    %248 = arith.addf %245, %247 : vector<8x64xf32>
    %cst_93 = arith.constant dense<0.000000e+00> : vector<8xf32>
    %249 = vector.multi_reduction <add>, %248, %cst_93 [1] : vector<8x64xf32> to vector<8xf32>
    %250 = vector.shape_cast %249 : vector<8xf32> to vector<8x1xf32>
    %cst_94 = arith.constant 6.400000e+01 : f32
    %251 = vector.broadcast %cst_94 : f32 to vector<8x1xf32>
    %252 = arith.divf %250, %251 : vector<8x1xf32>
    %253 = vector.broadcast %252 : vector<8x1xf32> to vector<8x64xf32>
    %254 = arith.subf %248, %253 : vector<8x64xf32>
    %255 = arith.mulf %254, %254 : vector<8x64xf32>
    %cst_95 = arith.constant dense<0.000000e+00> : vector<8xf32>
    %256 = vector.multi_reduction <add>, %255, %cst_95 [1] : vector<8x64xf32> to vector<8xf32>
    %257 = vector.shape_cast %256 : vector<8xf32> to vector<8x1xf32>
    %cst_96 = arith.constant 6.400000e+01 : f32
    %258 = vector.broadcast %cst_96 : f32 to vector<8x1xf32>
    %259 = arith.divf %257, %258 : vector<8x1xf32>
    %cst_97 = arith.constant 9.99999997E-7 : f32
    %260 = vector.broadcast %cst_97 : f32 to vector<8x1xf32>
    %261 = arith.addf %259, %260 : vector<8x1xf32>
    %262 = math.rsqrt %261 : vector<8x1xf32>
    %263 = vector.broadcast %262 : vector<8x1xf32> to vector<8x64xf32>
    %264 = arith.mulf %254, %263 : vector<8x64xf32>
    %c16_98 = arith.constant 16 : index
    %c0_99 = arith.constant 0 : index
    %265 = vector.load %arg3[%c16_98, %c0_99] : memref<48x128xf32, #tpu.memory_space<vmem>>, vector<1x64xf32>
    %266 = vector.broadcast %265 : vector<1x64xf32> to vector<8x64xf32>
    %267 = arith.mulf %264, %266 : vector<8x64xf32>
    %c17 = arith.constant 17 : index
    %c0_100 = arith.constant 0 : index
    %268 = vector.load %arg3[%c17, %c0_100] : memref<48x128xf32, #tpu.memory_space<vmem>>, vector<1x64xf32>
    %269 = vector.broadcast %268 : vector<1x64xf32> to vector<8x64xf32>
    %270 = arith.addf %267, %269 : vector<8x64xf32>
    %271 = arith.negf %270 : vector<8x64xf32>
    %272 = math.exp %271 : vector<8x64xf32>
    %cst_101 = arith.constant 1.000000e+00 : f32
    %273 = vector.broadcast %cst_101 : f32 to vector<8x64xf32>
    %274 = arith.addf %273, %272 : vector<8x64xf32>
    %275 = arith.divf %273, %274 : vector<8x64xf32>
    %276 = arith.mulf %270, %275 : vector<8x64xf32>
    %c880 = arith.constant 880 : index
    %c0_102 = arith.constant 0 : index
    %277 = vector.load %arg2[%c880, %c0_102] : memref<2736x128xbf16, #tpu.memory_space<vmem>>, vector<64x64xbf16>
    %c944 = arith.constant 944 : index
    %c0_103 = arith.constant 0 : index
    %278 = vector.load %arg2[%c944, %c0_103] : memref<2736x128xbf16, #tpu.memory_space<vmem>>, vector<64x64xbf16>
    %c1008 = arith.constant 1008 : index
    %c0_104 = arith.constant 0 : index
    %279 = vector.load %arg2[%c1008, %c0_104] : memref<2736x128xbf16, #tpu.memory_space<vmem>>, vector<64x64xbf16>
    %c1_i32_105 = arith.constant 1 : i32
    %280 = tpu.dynamic_rotate %276 by %c1_i32_105 dim 0 : vector<8x64xf32>, i32 -> vector<8x64xf32>
    %cst_106 = arith.constant 0.000000e+00 : f32
    %281 = vector.shape_cast %7 : vector<8x1xi1> to vector<8x1xi1>
    %282 = vector.broadcast %281 : vector<8x1xi1> to vector<8x64xi1>
    %283 = vector.broadcast %cst_106 : f32 to vector<8x64xf32>
    %284 = arith.select %282, %283, %280 : vector<8x64xi1>, vector<8x64xf32>
    %c7_i32_107 = arith.constant 7 : i32
    %285 = tpu.dynamic_rotate %276 by %c7_i32_107 dim 0 : vector<8x64xf32>, i32 -> vector<8x64xf32>
    %cst_108 = arith.constant 0.000000e+00 : f32
    %286 = vector.shape_cast %9 : vector<8x1xi1> to vector<8x1xi1>
    %287 = vector.broadcast %286 : vector<8x1xi1> to vector<8x64xi1>
    %288 = vector.broadcast %cst_108 : f32 to vector<8x64xf32>
    %289 = arith.select %287, %288, %285 : vector<8x64xi1>, vector<8x64xf32>
    %290 = arith.truncf %284 : vector<8x64xf32> to vector<8x64xbf16>
    %291 = arith.truncf %289 : vector<8x64xf32> to vector<8x64xbf16>
    %cst_109 = arith.constant dense<0.000000e+00> : vector<8x64xf32>
    %292 = tpu.matmul %290, %277, %cst_109 {dimension_numbers = #tpu.dot_dimension_numbers<[1], [0], [0], [1], [0, 0, 1, 1], [], []>} : vector<8x64xbf16>, vector<64x64xbf16>, vector<8x64xf32> -> vector<8x64xf32>
    %293 = arith.truncf %276 : vector<8x64xf32> to vector<8x64xbf16>
    %cst_110 = arith.constant dense<0.000000e+00> : vector<8x64xf32>
    %294 = tpu.matmul %293, %278, %cst_110 {dimension_numbers = #tpu.dot_dimension_numbers<[1], [0], [0], [1], [0, 0, 1, 1], [], []>} : vector<8x64xbf16>, vector<64x64xbf16>, vector<8x64xf32> -> vector<8x64xf32>
    %295 = arith.addf %292, %294 : vector<8x64xf32>
    %cst_111 = arith.constant dense<0.000000e+00> : vector<8x64xf32>
    %296 = tpu.matmul %291, %279, %cst_111 {dimension_numbers = #tpu.dot_dimension_numbers<[1], [0], [0], [1], [0, 0, 1, 1], [], []>} : vector<8x64xbf16>, vector<64x64xbf16>, vector<8x64xf32> -> vector<8x64xf32>
    %297 = arith.addf %295, %296 : vector<8x64xf32>
    %c18 = arith.constant 18 : index
    %c0_112 = arith.constant 0 : index
    %298 = vector.load %arg3[%c18, %c0_112] : memref<48x128xf32, #tpu.memory_space<vmem>>, vector<1x64xf32>
    %299 = vector.broadcast %298 : vector<1x64xf32> to vector<8x64xf32>
    %300 = arith.addf %297, %299 : vector<8x64xf32>
    %301 = arith.addf %196, %300 : vector<8x64xf32>
    %cst_113 = arith.constant dense<0.000000e+00> : vector<8xf32>
    %302 = vector.multi_reduction <add>, %301, %cst_113 [1] : vector<8x64xf32> to vector<8xf32>
    %303 = vector.shape_cast %302 : vector<8xf32> to vector<8x1xf32>
    %cst_114 = arith.constant 6.400000e+01 : f32
    %304 = vector.broadcast %cst_114 : f32 to vector<8x1xf32>
    %305 = arith.divf %303, %304 : vector<8x1xf32>
    %306 = vector.broadcast %305 : vector<8x1xf32> to vector<8x64xf32>
    %307 = arith.subf %301, %306 : vector<8x64xf32>
    %308 = arith.mulf %307, %307 : vector<8x64xf32>
    %cst_115 = arith.constant dense<0.000000e+00> : vector<8xf32>
    %309 = vector.multi_reduction <add>, %308, %cst_115 [1] : vector<8x64xf32> to vector<8xf32>
    %310 = vector.shape_cast %309 : vector<8xf32> to vector<8x1xf32>
    %cst_116 = arith.constant 6.400000e+01 : f32
    %311 = vector.broadcast %cst_116 : f32 to vector<8x1xf32>
    %312 = arith.divf %310, %311 : vector<8x1xf32>
    %cst_117 = arith.constant 9.99999997E-7 : f32
    %313 = vector.broadcast %cst_117 : f32 to vector<8x1xf32>
    %314 = arith.addf %312, %313 : vector<8x1xf32>
    %315 = math.rsqrt %314 : vector<8x1xf32>
    %316 = vector.broadcast %315 : vector<8x1xf32> to vector<8x64xf32>
    %317 = arith.mulf %307, %316 : vector<8x64xf32>
    %c19 = arith.constant 19 : index
    %c0_118 = arith.constant 0 : index
    %318 = vector.load %arg3[%c19, %c0_118] : memref<48x128xf32, #tpu.memory_space<vmem>>, vector<1x64xf32>
    %319 = vector.broadcast %318 : vector<1x64xf32> to vector<8x64xf32>
    %320 = arith.mulf %317, %319 : vector<8x64xf32>
    %c20 = arith.constant 20 : index
    %c0_119 = arith.constant 0 : index
    %321 = vector.load %arg3[%c20, %c0_119] : memref<48x128xf32, #tpu.memory_space<vmem>>, vector<1x64xf32>
    %322 = vector.broadcast %321 : vector<1x64xf32> to vector<8x64xf32>
    %323 = arith.addf %320, %322 : vector<8x64xf32>
    %324 = arith.negf %323 : vector<8x64xf32>
    %325 = math.exp %324 : vector<8x64xf32>
    %cst_120 = arith.constant 1.000000e+00 : f32
    %326 = vector.broadcast %cst_120 : f32 to vector<8x64xf32>
    %327 = arith.addf %326, %325 : vector<8x64xf32>
    %328 = arith.divf %326, %327 : vector<8x64xf32>
    %329 = arith.mulf %323, %328 : vector<8x64xf32>
    %c1072 = arith.constant 1072 : index
    %c0_121 = arith.constant 0 : index
    %330 = vector.load %arg2[%c1072, %c0_121] : memref<2736x128xbf16, #tpu.memory_space<vmem>>, vector<64x64xbf16>
    %c1136 = arith.constant 1136 : index
    %c0_122 = arith.constant 0 : index
    %331 = vector.load %arg2[%c1136, %c0_122] : memref<2736x128xbf16, #tpu.memory_space<vmem>>, vector<64x64xbf16>
    %c1200 = arith.constant 1200 : index
    %c0_123 = arith.constant 0 : index
    %332 = vector.load %arg2[%c1200, %c0_123] : memref<2736x128xbf16, #tpu.memory_space<vmem>>, vector<64x64xbf16>
    %c1_i32_124 = arith.constant 1 : i32
    %333 = tpu.dynamic_rotate %329 by %c1_i32_124 dim 0 : vector<8x64xf32>, i32 -> vector<8x64xf32>
    %cst_125 = arith.constant 0.000000e+00 : f32
    %334 = vector.shape_cast %7 : vector<8x1xi1> to vector<8x1xi1>
    %335 = vector.broadcast %334 : vector<8x1xi1> to vector<8x64xi1>
    %336 = vector.broadcast %cst_125 : f32 to vector<8x64xf32>
    %337 = arith.select %335, %336, %333 : vector<8x64xi1>, vector<8x64xf32>
    %c7_i32_126 = arith.constant 7 : i32
    %338 = tpu.dynamic_rotate %329 by %c7_i32_126 dim 0 : vector<8x64xf32>, i32 -> vector<8x64xf32>
    %cst_127 = arith.constant 0.000000e+00 : f32
    %339 = vector.shape_cast %9 : vector<8x1xi1> to vector<8x1xi1>
    %340 = vector.broadcast %339 : vector<8x1xi1> to vector<8x64xi1>
    %341 = vector.broadcast %cst_127 : f32 to vector<8x64xf32>
    %342 = arith.select %340, %341, %338 : vector<8x64xi1>, vector<8x64xf32>
    %343 = arith.truncf %337 : vector<8x64xf32> to vector<8x64xbf16>
    %344 = arith.truncf %342 : vector<8x64xf32> to vector<8x64xbf16>
    %cst_128 = arith.constant dense<0.000000e+00> : vector<8x64xf32>
    %345 = tpu.matmul %343, %330, %cst_128 {dimension_numbers = #tpu.dot_dimension_numbers<[1], [0], [0], [1], [0, 0, 1, 1], [], []>} : vector<8x64xbf16>, vector<64x64xbf16>, vector<8x64xf32> -> vector<8x64xf32>
    %346 = arith.truncf %329 : vector<8x64xf32> to vector<8x64xbf16>
    %cst_129 = arith.constant dense<0.000000e+00> : vector<8x64xf32>
    %347 = tpu.matmul %346, %331, %cst_129 {dimension_numbers = #tpu.dot_dimension_numbers<[1], [0], [0], [1], [0, 0, 1, 1], [], []>} : vector<8x64xbf16>, vector<64x64xbf16>, vector<8x64xf32> -> vector<8x64xf32>
    %348 = arith.addf %345, %347 : vector<8x64xf32>
    %cst_130 = arith.constant dense<0.000000e+00> : vector<8x64xf32>
    %349 = tpu.matmul %344, %332, %cst_130 {dimension_numbers = #tpu.dot_dimension_numbers<[1], [0], [0], [1], [0, 0, 1, 1], [], []>} : vector<8x64xbf16>, vector<64x64xbf16>, vector<8x64xf32> -> vector<8x64xf32>
    %350 = arith.addf %348, %349 : vector<8x64xf32>
    %c21 = arith.constant 21 : index
    %c0_131 = arith.constant 0 : index
    %351 = vector.load %arg3[%c21, %c0_131] : memref<48x128xf32, #tpu.memory_space<vmem>>, vector<1x64xf32>
    %352 = vector.broadcast %351 : vector<1x64xf32> to vector<8x64xf32>
    %353 = arith.addf %350, %352 : vector<8x64xf32>
    %cst_132 = arith.constant dense<0.000000e+00> : vector<8xf32>
    %354 = vector.multi_reduction <add>, %353, %cst_132 [1] : vector<8x64xf32> to vector<8xf32>
    %355 = vector.shape_cast %354 : vector<8xf32> to vector<8x1xf32>
    %cst_133 = arith.constant 6.400000e+01 : f32
    %356 = vector.broadcast %cst_133 : f32 to vector<8x1xf32>
    %357 = arith.divf %355, %356 : vector<8x1xf32>
    %358 = vector.broadcast %357 : vector<8x1xf32> to vector<8x64xf32>
    %359 = arith.subf %353, %358 : vector<8x64xf32>
    %360 = arith.mulf %359, %359 : vector<8x64xf32>
    %cst_134 = arith.constant dense<0.000000e+00> : vector<8xf32>
    %361 = vector.multi_reduction <add>, %360, %cst_134 [1] : vector<8x64xf32> to vector<8xf32>
    %362 = vector.shape_cast %361 : vector<8xf32> to vector<8x1xf32>
    %cst_135 = arith.constant 6.400000e+01 : f32
    %363 = vector.broadcast %cst_135 : f32 to vector<8x1xf32>
    %364 = arith.divf %362, %363 : vector<8x1xf32>
    %cst_136 = arith.constant 9.99999997E-7 : f32
    %365 = vector.broadcast %cst_136 : f32 to vector<8x1xf32>
    %366 = arith.addf %364, %365 : vector<8x1xf32>
    %367 = math.rsqrt %366 : vector<8x1xf32>
    %368 = vector.broadcast %367 : vector<8x1xf32> to vector<8x64xf32>
    %369 = arith.mulf %359, %368 : vector<8x64xf32>
    %c22 = arith.constant 22 : index
    %c0_137 = arith.constant 0 : index
    %370 = vector.load %arg3[%c22, %c0_137] : memref<48x128xf32, #tpu.memory_space<vmem>>, vector<1x64xf32>
    %371 = vector.broadcast %370 : vector<1x64xf32> to vector<8x64xf32>
    %372 = arith.mulf %369, %371 : vector<8x64xf32>
    %c23 = arith.constant 23 : index
    %c0_138 = arith.constant 0 : index
    %373 = vector.load %arg3[%c23, %c0_138] : memref<48x128xf32, #tpu.memory_space<vmem>>, vector<1x64xf32>
    %374 = vector.broadcast %373 : vector<1x64xf32> to vector<8x64xf32>
    %375 = arith.addf %372, %374 : vector<8x64xf32>
    %376 = arith.negf %375 : vector<8x64xf32>
    %377 = math.exp %376 : vector<8x64xf32>
    %cst_139 = arith.constant 1.000000e+00 : f32
    %378 = vector.broadcast %cst_139 : f32 to vector<8x64xf32>
    %379 = arith.addf %378, %377 : vector<8x64xf32>
    %380 = arith.divf %378, %379 : vector<8x64xf32>
    %381 = arith.mulf %375, %380 : vector<8x64xf32>
    %c1264 = arith.constant 1264 : index
    %c0_140 = arith.constant 0 : index
    %382 = vector.load %arg2[%c1264, %c0_140] : memref<2736x128xbf16, #tpu.memory_space<vmem>>, vector<64x64xbf16>
    %c1328 = arith.constant 1328 : index
    %c0_141 = arith.constant 0 : index
    %383 = vector.load %arg2[%c1328, %c0_141] : memref<2736x128xbf16, #tpu.memory_space<vmem>>, vector<64x64xbf16>
    %c1392 = arith.constant 1392 : index
    %c0_142 = arith.constant 0 : index
    %384 = vector.load %arg2[%c1392, %c0_142] : memref<2736x128xbf16, #tpu.memory_space<vmem>>, vector<64x64xbf16>
    %c1_i32_143 = arith.constant 1 : i32
    %385 = tpu.dynamic_rotate %381 by %c1_i32_143 dim 0 : vector<8x64xf32>, i32 -> vector<8x64xf32>
    %cst_144 = arith.constant 0.000000e+00 : f32
    %386 = vector.shape_cast %7 : vector<8x1xi1> to vector<8x1xi1>
    %387 = vector.broadcast %386 : vector<8x1xi1> to vector<8x64xi1>
    %388 = vector.broadcast %cst_144 : f32 to vector<8x64xf32>
    %389 = arith.select %387, %388, %385 : vector<8x64xi1>, vector<8x64xf32>
    %c7_i32_145 = arith.constant 7 : i32
    %390 = tpu.dynamic_rotate %381 by %c7_i32_145 dim 0 : vector<8x64xf32>, i32 -> vector<8x64xf32>
    %cst_146 = arith.constant 0.000000e+00 : f32
    %391 = vector.shape_cast %9 : vector<8x1xi1> to vector<8x1xi1>
    %392 = vector.broadcast %391 : vector<8x1xi1> to vector<8x64xi1>
    %393 = vector.broadcast %cst_146 : f32 to vector<8x64xf32>
    %394 = arith.select %392, %393, %390 : vector<8x64xi1>, vector<8x64xf32>
    %395 = arith.truncf %389 : vector<8x64xf32> to vector<8x64xbf16>
    %396 = arith.truncf %394 : vector<8x64xf32> to vector<8x64xbf16>
    %cst_147 = arith.constant dense<0.000000e+00> : vector<8x64xf32>
    %397 = tpu.matmul %395, %382, %cst_147 {dimension_numbers = #tpu.dot_dimension_numbers<[1], [0], [0], [1], [0, 0, 1, 1], [], []>} : vector<8x64xbf16>, vector<64x64xbf16>, vector<8x64xf32> -> vector<8x64xf32>
    %398 = arith.truncf %381 : vector<8x64xf32> to vector<8x64xbf16>
    %cst_148 = arith.constant dense<0.000000e+00> : vector<8x64xf32>
    %399 = tpu.matmul %398, %383, %cst_148 {dimension_numbers = #tpu.dot_dimension_numbers<[1], [0], [0], [1], [0, 0, 1, 1], [], []>} : vector<8x64xbf16>, vector<64x64xbf16>, vector<8x64xf32> -> vector<8x64xf32>
    %400 = arith.addf %397, %399 : vector<8x64xf32>
    %cst_149 = arith.constant dense<0.000000e+00> : vector<8x64xf32>
    %401 = tpu.matmul %396, %384, %cst_149 {dimension_numbers = #tpu.dot_dimension_numbers<[1], [0], [0], [1], [0, 0, 1, 1], [], []>} : vector<8x64xbf16>, vector<64x64xbf16>, vector<8x64xf32> -> vector<8x64xf32>
    %402 = arith.addf %400, %401 : vector<8x64xf32>
    %c24 = arith.constant 24 : index
    %c0_150 = arith.constant 0 : index
    %403 = vector.load %arg3[%c24, %c0_150] : memref<48x128xf32, #tpu.memory_space<vmem>>, vector<1x64xf32>
    %404 = vector.broadcast %403 : vector<1x64xf32> to vector<8x64xf32>
    %405 = arith.addf %402, %404 : vector<8x64xf32>
    %406 = arith.addf %301, %405 : vector<8x64xf32>
    %cst_151 = arith.constant dense<0.000000e+00> : vector<8xf32>
    %407 = vector.multi_reduction <add>, %406, %cst_151 [1] : vector<8x64xf32> to vector<8xf32>
    %408 = vector.shape_cast %407 : vector<8xf32> to vector<8x1xf32>
    %cst_152 = arith.constant 6.400000e+01 : f32
    %409 = vector.broadcast %cst_152 : f32 to vector<8x1xf32>
    %410 = arith.divf %408, %409 : vector<8x1xf32>
    %411 = vector.broadcast %410 : vector<8x1xf32> to vector<8x64xf32>
    %412 = arith.subf %406, %411 : vector<8x64xf32>
    %413 = arith.mulf %412, %412 : vector<8x64xf32>
    %cst_153 = arith.constant dense<0.000000e+00> : vector<8xf32>
    %414 = vector.multi_reduction <add>, %413, %cst_153 [1] : vector<8x64xf32> to vector<8xf32>
    %415 = vector.shape_cast %414 : vector<8xf32> to vector<8x1xf32>
    %cst_154 = arith.constant 6.400000e+01 : f32
    %416 = vector.broadcast %cst_154 : f32 to vector<8x1xf32>
    %417 = arith.divf %415, %416 : vector<8x1xf32>
    %cst_155 = arith.constant 9.99999997E-7 : f32
    %418 = vector.broadcast %cst_155 : f32 to vector<8x1xf32>
    %419 = arith.addf %417, %418 : vector<8x1xf32>
    %420 = math.rsqrt %419 : vector<8x1xf32>
    %421 = vector.broadcast %420 : vector<8x1xf32> to vector<8x64xf32>
    %422 = arith.mulf %412, %421 : vector<8x64xf32>
    %c25 = arith.constant 25 : index
    %c0_156 = arith.constant 0 : index
    %423 = vector.load %arg3[%c25, %c0_156] : memref<48x128xf32, #tpu.memory_space<vmem>>, vector<1x64xf32>
    %424 = vector.broadcast %423 : vector<1x64xf32> to vector<8x64xf32>
    %425 = arith.mulf %422, %424 : vector<8x64xf32>
    %c26 = arith.constant 26 : index
    %c0_157 = arith.constant 0 : index
    %426 = vector.load %arg3[%c26, %c0_157] : memref<48x128xf32, #tpu.memory_space<vmem>>, vector<1x64xf32>
    %427 = vector.broadcast %426 : vector<1x64xf32> to vector<8x64xf32>
    %428 = arith.addf %425, %427 : vector<8x64xf32>
    %429 = arith.negf %428 : vector<8x64xf32>
    %430 = math.exp %429 : vector<8x64xf32>
    %cst_158 = arith.constant 1.000000e+00 : f32
    %431 = vector.broadcast %cst_158 : f32 to vector<8x64xf32>
    %432 = arith.addf %431, %430 : vector<8x64xf32>
    %433 = arith.divf %431, %432 : vector<8x64xf32>
    %434 = arith.mulf %428, %433 : vector<8x64xf32>
    %c1456 = arith.constant 1456 : index
    %c0_159 = arith.constant 0 : index
    %435 = vector.load %arg2[%c1456, %c0_159] : memref<2736x128xbf16, #tpu.memory_space<vmem>>, vector<64x64xbf16>
    %c1520 = arith.constant 1520 : index
    %c0_160 = arith.constant 0 : index
    %436 = vector.load %arg2[%c1520, %c0_160] : memref<2736x128xbf16, #tpu.memory_space<vmem>>, vector<64x64xbf16>
    %c1584 = arith.constant 1584 : index
    %c0_161 = arith.constant 0 : index
    %437 = vector.load %arg2[%c1584, %c0_161] : memref<2736x128xbf16, #tpu.memory_space<vmem>>, vector<64x64xbf16>
    %c1_i32_162 = arith.constant 1 : i32
    %438 = tpu.dynamic_rotate %434 by %c1_i32_162 dim 0 : vector<8x64xf32>, i32 -> vector<8x64xf32>
    %cst_163 = arith.constant 0.000000e+00 : f32
    %439 = vector.shape_cast %7 : vector<8x1xi1> to vector<8x1xi1>
    %440 = vector.broadcast %439 : vector<8x1xi1> to vector<8x64xi1>
    %441 = vector.broadcast %cst_163 : f32 to vector<8x64xf32>
    %442 = arith.select %440, %441, %438 : vector<8x64xi1>, vector<8x64xf32>
    %c7_i32_164 = arith.constant 7 : i32
    %443 = tpu.dynamic_rotate %434 by %c7_i32_164 dim 0 : vector<8x64xf32>, i32 -> vector<8x64xf32>
    %cst_165 = arith.constant 0.000000e+00 : f32
    %444 = vector.shape_cast %9 : vector<8x1xi1> to vector<8x1xi1>
    %445 = vector.broadcast %444 : vector<8x1xi1> to vector<8x64xi1>
    %446 = vector.broadcast %cst_165 : f32 to vector<8x64xf32>
    %447 = arith.select %445, %446, %443 : vector<8x64xi1>, vector<8x64xf32>
    %448 = arith.truncf %442 : vector<8x64xf32> to vector<8x64xbf16>
    %449 = arith.truncf %447 : vector<8x64xf32> to vector<8x64xbf16>
    %cst_166 = arith.constant dense<0.000000e+00> : vector<8x64xf32>
    %450 = tpu.matmul %448, %435, %cst_166 {dimension_numbers = #tpu.dot_dimension_numbers<[1], [0], [0], [1], [0, 0, 1, 1], [], []>} : vector<8x64xbf16>, vector<64x64xbf16>, vector<8x64xf32> -> vector<8x64xf32>
    %451 = arith.truncf %434 : vector<8x64xf32> to vector<8x64xbf16>
    %cst_167 = arith.constant dense<0.000000e+00> : vector<8x64xf32>
    %452 = tpu.matmul %451, %436, %cst_167 {dimension_numbers = #tpu.dot_dimension_numbers<[1], [0], [0], [1], [0, 0, 1, 1], [], []>} : vector<8x64xbf16>, vector<64x64xbf16>, vector<8x64xf32> -> vector<8x64xf32>
    %453 = arith.addf %450, %452 : vector<8x64xf32>
    %cst_168 = arith.constant dense<0.000000e+00> : vector<8x64xf32>
    %454 = tpu.matmul %449, %437, %cst_168 {dimension_numbers = #tpu.dot_dimension_numbers<[1], [0], [0], [1], [0, 0, 1, 1], [], []>} : vector<8x64xbf16>, vector<64x64xbf16>, vector<8x64xf32> -> vector<8x64xf32>
    %455 = arith.addf %453, %454 : vector<8x64xf32>
    %c27 = arith.constant 27 : index
    %c0_169 = arith.constant 0 : index
    %456 = vector.load %arg3[%c27, %c0_169] : memref<48x128xf32, #tpu.memory_space<vmem>>, vector<1x64xf32>
    %457 = vector.broadcast %456 : vector<1x64xf32> to vector<8x64xf32>
    %458 = arith.addf %455, %457 : vector<8x64xf32>
    %cst_170 = arith.constant dense<0.000000e+00> : vector<8xf32>
    %459 = vector.multi_reduction <add>, %458, %cst_170 [1] : vector<8x64xf32> to vector<8xf32>
    %460 = vector.shape_cast %459 : vector<8xf32> to vector<8x1xf32>
    %cst_171 = arith.constant 6.400000e+01 : f32
    %461 = vector.broadcast %cst_171 : f32 to vector<8x1xf32>
    %462 = arith.divf %460, %461 : vector<8x1xf32>
    %463 = vector.broadcast %462 : vector<8x1xf32> to vector<8x64xf32>
    %464 = arith.subf %458, %463 : vector<8x64xf32>
    %465 = arith.mulf %464, %464 : vector<8x64xf32>
    %cst_172 = arith.constant dense<0.000000e+00> : vector<8xf32>
    %466 = vector.multi_reduction <add>, %465, %cst_172 [1] : vector<8x64xf32> to vector<8xf32>
    %467 = vector.shape_cast %466 : vector<8xf32> to vector<8x1xf32>
    %cst_173 = arith.constant 6.400000e+01 : f32
    %468 = vector.broadcast %cst_173 : f32 to vector<8x1xf32>
    %469 = arith.divf %467, %468 : vector<8x1xf32>
    %cst_174 = arith.constant 9.99999997E-7 : f32
    %470 = vector.broadcast %cst_174 : f32 to vector<8x1xf32>
    %471 = arith.addf %469, %470 : vector<8x1xf32>
    %472 = math.rsqrt %471 : vector<8x1xf32>
    %473 = vector.broadcast %472 : vector<8x1xf32> to vector<8x64xf32>
    %474 = arith.mulf %464, %473 : vector<8x64xf32>
    %c28 = arith.constant 28 : index
    %c0_175 = arith.constant 0 : index
    %475 = vector.load %arg3[%c28, %c0_175] : memref<48x128xf32, #tpu.memory_space<vmem>>, vector<1x64xf32>
    %476 = vector.broadcast %475 : vector<1x64xf32> to vector<8x64xf32>
    %477 = arith.mulf %474, %476 : vector<8x64xf32>
    %c29 = arith.constant 29 : index
    %c0_176 = arith.constant 0 : index
    %478 = vector.load %arg3[%c29, %c0_176] : memref<48x128xf32, #tpu.memory_space<vmem>>, vector<1x64xf32>
    %479 = vector.broadcast %478 : vector<1x64xf32> to vector<8x64xf32>
    %480 = arith.addf %477, %479 : vector<8x64xf32>
    %481 = arith.negf %480 : vector<8x64xf32>
    %482 = math.exp %481 : vector<8x64xf32>
    %cst_177 = arith.constant 1.000000e+00 : f32
    %483 = vector.broadcast %cst_177 : f32 to vector<8x64xf32>
    %484 = arith.addf %483, %482 : vector<8x64xf32>
    %485 = arith.divf %483, %484 : vector<8x64xf32>
    %486 = arith.mulf %480, %485 : vector<8x64xf32>
    %c1648 = arith.constant 1648 : index
    %c0_178 = arith.constant 0 : index
    %487 = vector.load %arg2[%c1648, %c0_178] : memref<2736x128xbf16, #tpu.memory_space<vmem>>, vector<64x64xbf16>
    %c1712 = arith.constant 1712 : index
    %c0_179 = arith.constant 0 : index
    %488 = vector.load %arg2[%c1712, %c0_179] : memref<2736x128xbf16, #tpu.memory_space<vmem>>, vector<64x64xbf16>
    %c1776 = arith.constant 1776 : index
    %c0_180 = arith.constant 0 : index
    %489 = vector.load %arg2[%c1776, %c0_180] : memref<2736x128xbf16, #tpu.memory_space<vmem>>, vector<64x64xbf16>
    %c1_i32_181 = arith.constant 1 : i32
    %490 = tpu.dynamic_rotate %486 by %c1_i32_181 dim 0 : vector<8x64xf32>, i32 -> vector<8x64xf32>
    %cst_182 = arith.constant 0.000000e+00 : f32
    %491 = vector.shape_cast %7 : vector<8x1xi1> to vector<8x1xi1>
    %492 = vector.broadcast %491 : vector<8x1xi1> to vector<8x64xi1>
    %493 = vector.broadcast %cst_182 : f32 to vector<8x64xf32>
    %494 = arith.select %492, %493, %490 : vector<8x64xi1>, vector<8x64xf32>
    %c7_i32_183 = arith.constant 7 : i32
    %495 = tpu.dynamic_rotate %486 by %c7_i32_183 dim 0 : vector<8x64xf32>, i32 -> vector<8x64xf32>
    %cst_184 = arith.constant 0.000000e+00 : f32
    %496 = vector.shape_cast %9 : vector<8x1xi1> to vector<8x1xi1>
    %497 = vector.broadcast %496 : vector<8x1xi1> to vector<8x64xi1>
    %498 = vector.broadcast %cst_184 : f32 to vector<8x64xf32>
    %499 = arith.select %497, %498, %495 : vector<8x64xi1>, vector<8x64xf32>
    %500 = arith.truncf %494 : vector<8x64xf32> to vector<8x64xbf16>
    %501 = arith.truncf %499 : vector<8x64xf32> to vector<8x64xbf16>
    %cst_185 = arith.constant dense<0.000000e+00> : vector<8x64xf32>
    %502 = tpu.matmul %500, %487, %cst_185 {dimension_numbers = #tpu.dot_dimension_numbers<[1], [0], [0], [1], [0, 0, 1, 1], [], []>} : vector<8x64xbf16>, vector<64x64xbf16>, vector<8x64xf32> -> vector<8x64xf32>
    %503 = arith.truncf %486 : vector<8x64xf32> to vector<8x64xbf16>
    %cst_186 = arith.constant dense<0.000000e+00> : vector<8x64xf32>
    %504 = tpu.matmul %503, %488, %cst_186 {dimension_numbers = #tpu.dot_dimension_numbers<[1], [0], [0], [1], [0, 0, 1, 1], [], []>} : vector<8x64xbf16>, vector<64x64xbf16>, vector<8x64xf32> -> vector<8x64xf32>
    %505 = arith.addf %502, %504 : vector<8x64xf32>
    %cst_187 = arith.constant dense<0.000000e+00> : vector<8x64xf32>
    %506 = tpu.matmul %501, %489, %cst_187 {dimension_numbers = #tpu.dot_dimension_numbers<[1], [0], [0], [1], [0, 0, 1, 1], [], []>} : vector<8x64xbf16>, vector<64x64xbf16>, vector<8x64xf32> -> vector<8x64xf32>
    %507 = arith.addf %505, %506 : vector<8x64xf32>
    %c30 = arith.constant 30 : index
    %c0_188 = arith.constant 0 : index
    %508 = vector.load %arg3[%c30, %c0_188] : memref<48x128xf32, #tpu.memory_space<vmem>>, vector<1x64xf32>
    %509 = vector.broadcast %508 : vector<1x64xf32> to vector<8x64xf32>
    %510 = arith.addf %507, %509 : vector<8x64xf32>
    %511 = arith.addf %406, %510 : vector<8x64xf32>
    %c1840 = arith.constant 1840 : index
    %c0_189 = arith.constant 0 : index
    %512 = vector.load %arg2[%c1840, %c0_189] : memref<2736x128xbf16, #tpu.memory_space<vmem>>, vector<64x64xbf16>
    %c1904 = arith.constant 1904 : index
    %c0_190 = arith.constant 0 : index
    %513 = vector.load %arg2[%c1904, %c0_190] : memref<2736x128xbf16, #tpu.memory_space<vmem>>, vector<64x64xbf16>
    %c1968 = arith.constant 1968 : index
    %c0_191 = arith.constant 0 : index
    %514 = vector.load %arg2[%c1968, %c0_191] : memref<2736x128xbf16, #tpu.memory_space<vmem>>, vector<64x64xbf16>
    %c2032 = arith.constant 2032 : index
    %c0_192 = arith.constant 0 : index
    %515 = vector.load %arg2[%c2032, %c0_192] : memref<2736x128xbf16, #tpu.memory_space<vmem>>, vector<64x64xbf16>
    %c31 = arith.constant 31 : index
    %c0_193 = arith.constant 0 : index
    %516 = vector.load %arg3[%c31, %c0_193] : memref<48x128xf32, #tpu.memory_space<vmem>>, vector<1x64xf32>
    %517 = arith.truncf %511 : vector<8x64xf32> to vector<8x64xbf16>
    %c1_i32_194 = arith.constant 1 : i32
    %518 = tpu.dynamic_rotate %511 by %c1_i32_194 dim 0 : vector<8x64xf32>, i32 -> vector<8x64xf32>
    %cst_195 = arith.constant 0.000000e+00 : f32
    %519 = vector.shape_cast %7 : vector<8x1xi1> to vector<8x1xi1>
    %520 = vector.broadcast %519 : vector<8x1xi1> to vector<8x64xi1>
    %521 = vector.broadcast %cst_195 : f32 to vector<8x64xf32>
    %522 = arith.select %520, %521, %518 : vector<8x64xi1>, vector<8x64xf32>
    %c7_i32_196 = arith.constant 7 : i32
    %523 = tpu.dynamic_rotate %511 by %c7_i32_196 dim 0 : vector<8x64xf32>, i32 -> vector<8x64xf32>
    %cst_197 = arith.constant 0.000000e+00 : f32
    %524 = vector.shape_cast %9 : vector<8x1xi1> to vector<8x1xi1>
    %525 = vector.broadcast %524 : vector<8x1xi1> to vector<8x64xi1>
    %526 = vector.broadcast %cst_197 : f32 to vector<8x64xf32>
    %527 = arith.select %525, %526, %523 : vector<8x64xi1>, vector<8x64xf32>
    %528 = arith.truncf %522 : vector<8x64xf32> to vector<8x64xbf16>
    %529 = arith.truncf %527 : vector<8x64xf32> to vector<8x64xbf16>
    %cst_198 = arith.constant dense<0.000000e+00> : vector<8x64xf32>
    %530 = tpu.matmul %528, %512, %cst_198 {dimension_numbers = #tpu.dot_dimension_numbers<[1], [0], [0], [1], [0, 0, 1, 1], [], []>} : vector<8x64xbf16>, vector<64x64xbf16>, vector<8x64xf32> -> vector<8x64xf32>
    %cst_199 = arith.constant dense<0.000000e+00> : vector<8x64xf32>
    %531 = tpu.matmul %517, %513, %cst_199 {dimension_numbers = #tpu.dot_dimension_numbers<[1], [0], [0], [1], [0, 0, 1, 1], [], []>} : vector<8x64xbf16>, vector<64x64xbf16>, vector<8x64xf32> -> vector<8x64xf32>
    %532 = arith.addf %530, %531 : vector<8x64xf32>
    %533 = vector.broadcast %516 : vector<1x64xf32> to vector<8x64xf32>
    %534 = arith.addf %532, %533 : vector<8x64xf32>
    %cst_200 = arith.constant dense<0.000000e+00> : vector<8x64xf32>
    %535 = tpu.matmul %517, %514, %cst_200 {dimension_numbers = #tpu.dot_dimension_numbers<[1], [0], [0], [1], [0, 0, 1, 1], [], []>} : vector<8x64xbf16>, vector<64x64xbf16>, vector<8x64xf32> -> vector<8x64xf32>
    %cst_201 = arith.constant dense<0.000000e+00> : vector<8x64xf32>
    %536 = tpu.matmul %529, %515, %cst_201 {dimension_numbers = #tpu.dot_dimension_numbers<[1], [0], [0], [1], [0, 0, 1, 1], [], []>} : vector<8x64xbf16>, vector<64x64xbf16>, vector<8x64xf32> -> vector<8x64xf32>
    %537 = arith.addf %535, %536 : vector<8x64xf32>
    %538 = vector.broadcast %516 : vector<1x64xf32> to vector<8x64xf32>
    %539 = arith.addf %537, %538 : vector<8x64xf32>
    %540 = vector.shape_cast %534 : vector<8x64xf32> to vector<8x1x64xf32>
    %541 = vector.shape_cast %539 : vector<8x64xf32> to vector<8x1x64xf32>
    %542 = tpu.concatenate %540, %541 in 1 : vector<8x1x64xf32>, vector<8x1x64xf32> -> vector<8x2x64xf32>
    %543 = vector.shape_cast %542 : vector<8x2x64xf32> to vector<16x64xf32>
    %cst_202 = arith.constant dense<0.000000e+00> : vector<16xf32>
    %544 = vector.multi_reduction <add>, %543, %cst_202 [1] : vector<16x64xf32> to vector<16xf32>
    %545 = vector.shape_cast %544 : vector<16xf32> to vector<16x1xf32>
    %cst_203 = arith.constant 6.400000e+01 : f32
    %546 = vector.broadcast %cst_203 : f32 to vector<16x1xf32>
    %547 = arith.divf %545, %546 : vector<16x1xf32>
    %548 = vector.broadcast %547 : vector<16x1xf32> to vector<16x64xf32>
    %549 = arith.subf %543, %548 : vector<16x64xf32>
    %550 = arith.mulf %549, %549 : vector<16x64xf32>
    %cst_204 = arith.constant dense<0.000000e+00> : vector<16xf32>
    %551 = vector.multi_reduction <add>, %550, %cst_204 [1] : vector<16x64xf32> to vector<16xf32>
    %552 = vector.shape_cast %551 : vector<16xf32> to vector<16x1xf32>
    %cst_205 = arith.constant 6.400000e+01 : f32
    %553 = vector.broadcast %cst_205 : f32 to vector<16x1xf32>
    %554 = arith.divf %552, %553 : vector<16x1xf32>
    %cst_206 = arith.constant 9.99999997E-7 : f32
    %555 = vector.broadcast %cst_206 : f32 to vector<16x1xf32>
    %556 = arith.addf %554, %555 : vector<16x1xf32>
    %557 = math.rsqrt %556 : vector<16x1xf32>
    %558 = vector.broadcast %557 : vector<16x1xf32> to vector<16x64xf32>
    %559 = arith.mulf %549, %558 : vector<16x64xf32>
    %c32_207 = arith.constant 32 : index
    %c0_208 = arith.constant 0 : index
    %560 = vector.load %arg3[%c32_207, %c0_208] : memref<48x128xf32, #tpu.memory_space<vmem>>, vector<1x64xf32>
    %561 = vector.broadcast %560 : vector<1x64xf32> to vector<16x64xf32>
    %562 = arith.mulf %559, %561 : vector<16x64xf32>
    %c33 = arith.constant 33 : index
    %c0_209 = arith.constant 0 : index
    %563 = vector.load %arg3[%c33, %c0_209] : memref<48x128xf32, #tpu.memory_space<vmem>>, vector<1x64xf32>
    %564 = vector.broadcast %563 : vector<1x64xf32> to vector<16x64xf32>
    %565 = arith.addf %562, %564 : vector<16x64xf32>
    %566 = arith.negf %565 : vector<16x64xf32>
    %567 = math.exp %566 : vector<16x64xf32>
    %cst_210 = arith.constant 1.000000e+00 : f32
    %568 = vector.broadcast %cst_210 : f32 to vector<16x64xf32>
    %569 = arith.addf %568, %567 : vector<16x64xf32>
    %570 = arith.divf %568, %569 : vector<16x64xf32>
    %571 = arith.mulf %565, %570 : vector<16x64xf32>
    %c2096 = arith.constant 2096 : index
    %c0_211 = arith.constant 0 : index
    %572 = vector.load %arg2[%c2096, %c0_211] : memref<2736x128xbf16, #tpu.memory_space<vmem>>, vector<64x32xbf16>
    %c2160 = arith.constant 2160 : index
    %c0_212 = arith.constant 0 : index
    %573 = vector.load %arg2[%c2160, %c0_212] : memref<2736x128xbf16, #tpu.memory_space<vmem>>, vector<64x32xbf16>
    %c2224 = arith.constant 2224 : index
    %c0_213 = arith.constant 0 : index
    %574 = vector.load %arg2[%c2224, %c0_213] : memref<2736x128xbf16, #tpu.memory_space<vmem>>, vector<64x32xbf16>
    %575 = tpu.iota {dimensions = array<i32: 0>} : vector<16x1xi32>
    %c0_i32_214 = arith.constant 0 : i32
    %576 = vector.broadcast %c0_i32_214 : i32 to vector<16x1xi32>
    %577 = arith.cmpi eq, %575, %576 : vector<16x1xi32>
    %c15_i32 = arith.constant 15 : i32
    %578 = vector.broadcast %c15_i32 : i32 to vector<16x1xi32>
    %579 = arith.cmpi eq, %575, %578 : vector<16x1xi32>
    %c1_i32_215 = arith.constant 1 : i32
    %580 = tpu.dynamic_rotate %571 by %c1_i32_215 dim 0 : vector<16x64xf32>, i32 -> vector<16x64xf32>
    %cst_216 = arith.constant 0.000000e+00 : f32
    %581 = vector.shape_cast %577 : vector<16x1xi1> to vector<16x1xi1>
    %582 = vector.broadcast %581 : vector<16x1xi1> to vector<16x64xi1>
    %583 = vector.broadcast %cst_216 : f32 to vector<16x64xf32>
    %584 = arith.select %582, %583, %580 : vector<16x64xi1>, vector<16x64xf32>
    %c15_i32_217 = arith.constant 15 : i32
    %585 = tpu.dynamic_rotate %571 by %c15_i32_217 dim 0 : vector<16x64xf32>, i32 -> vector<16x64xf32>
    %cst_218 = arith.constant 0.000000e+00 : f32
    %586 = vector.shape_cast %579 : vector<16x1xi1> to vector<16x1xi1>
    %587 = vector.broadcast %586 : vector<16x1xi1> to vector<16x64xi1>
    %588 = vector.broadcast %cst_218 : f32 to vector<16x64xf32>
    %589 = arith.select %587, %588, %585 : vector<16x64xi1>, vector<16x64xf32>
    %590 = arith.truncf %584 : vector<16x64xf32> to vector<16x64xbf16>
    %591 = arith.truncf %589 : vector<16x64xf32> to vector<16x64xbf16>
    %cst_219 = arith.constant dense<0.000000e+00> : vector<16x32xf32>
    %592 = tpu.matmul %590, %572, %cst_219 {dimension_numbers = #tpu.dot_dimension_numbers<[1], [0], [0], [1], [0, 0, 1, 1], [], []>} : vector<16x64xbf16>, vector<64x32xbf16>, vector<16x32xf32> -> vector<16x32xf32>
    %593 = arith.truncf %571 : vector<16x64xf32> to vector<16x64xbf16>
    %cst_220 = arith.constant dense<0.000000e+00> : vector<16x32xf32>
    %594 = tpu.matmul %593, %573, %cst_220 {dimension_numbers = #tpu.dot_dimension_numbers<[1], [0], [0], [1], [0, 0, 1, 1], [], []>} : vector<16x64xbf16>, vector<64x32xbf16>, vector<16x32xf32> -> vector<16x32xf32>
    %595 = arith.addf %592, %594 : vector<16x32xf32>
    %cst_221 = arith.constant dense<0.000000e+00> : vector<16x32xf32>
    %596 = tpu.matmul %591, %574, %cst_221 {dimension_numbers = #tpu.dot_dimension_numbers<[1], [0], [0], [1], [0, 0, 1, 1], [], []>} : vector<16x64xbf16>, vector<64x32xbf16>, vector<16x32xf32> -> vector<16x32xf32>
    %597 = arith.addf %595, %596 : vector<16x32xf32>
    %c34 = arith.constant 34 : index
    %c0_222 = arith.constant 0 : index
    %598 = vector.load %arg3[%c34, %c0_222] : memref<48x128xf32, #tpu.memory_space<vmem>>, vector<1x32xf32>
    %599 = vector.broadcast %598 : vector<1x32xf32> to vector<16x32xf32>
    %600 = arith.addf %597, %599 : vector<16x32xf32>
    %cst_223 = arith.constant dense<0.000000e+00> : vector<16xf32>
    %601 = vector.multi_reduction <add>, %600, %cst_223 [1] : vector<16x32xf32> to vector<16xf32>
    %602 = vector.shape_cast %601 : vector<16xf32> to vector<16x1xf32>
    %cst_224 = arith.constant 3.200000e+01 : f32
    %603 = vector.broadcast %cst_224 : f32 to vector<16x1xf32>
    %604 = arith.divf %602, %603 : vector<16x1xf32>
    %605 = vector.broadcast %604 : vector<16x1xf32> to vector<16x32xf32>
    %606 = arith.subf %600, %605 : vector<16x32xf32>
    %607 = arith.mulf %606, %606 : vector<16x32xf32>
    %cst_225 = arith.constant dense<0.000000e+00> : vector<16xf32>
    %608 = vector.multi_reduction <add>, %607, %cst_225 [1] : vector<16x32xf32> to vector<16xf32>
    %609 = vector.shape_cast %608 : vector<16xf32> to vector<16x1xf32>
    %cst_226 = arith.constant 3.200000e+01 : f32
    %610 = vector.broadcast %cst_226 : f32 to vector<16x1xf32>
    %611 = arith.divf %609, %610 : vector<16x1xf32>
    %cst_227 = arith.constant 9.99999997E-7 : f32
    %612 = vector.broadcast %cst_227 : f32 to vector<16x1xf32>
    %613 = arith.addf %611, %612 : vector<16x1xf32>
    %614 = math.rsqrt %613 : vector<16x1xf32>
    %615 = vector.broadcast %614 : vector<16x1xf32> to vector<16x32xf32>
    %616 = arith.mulf %606, %615 : vector<16x32xf32>
    %c35 = arith.constant 35 : index
    %c0_228 = arith.constant 0 : index
    %617 = vector.load %arg3[%c35, %c0_228] : memref<48x128xf32, #tpu.memory_space<vmem>>, vector<1x32xf32>
    %618 = vector.broadcast %617 : vector<1x32xf32> to vector<16x32xf32>
    %619 = arith.mulf %616, %618 : vector<16x32xf32>
    %c36 = arith.constant 36 : index
    %c0_229 = arith.constant 0 : index
    %620 = vector.load %arg3[%c36, %c0_229] : memref<48x128xf32, #tpu.memory_space<vmem>>, vector<1x32xf32>
    %621 = vector.broadcast %620 : vector<1x32xf32> to vector<16x32xf32>
    %622 = arith.addf %619, %621 : vector<16x32xf32>
    %623 = arith.negf %622 : vector<16x32xf32>
    %624 = math.exp %623 : vector<16x32xf32>
    %cst_230 = arith.constant 1.000000e+00 : f32
    %625 = vector.broadcast %cst_230 : f32 to vector<16x32xf32>
    %626 = arith.addf %625, %624 : vector<16x32xf32>
    %627 = arith.divf %625, %626 : vector<16x32xf32>
    %628 = arith.mulf %622, %627 : vector<16x32xf32>
    %c2288 = arith.constant 2288 : index
    %c0_231 = arith.constant 0 : index
    %629 = vector.load %arg2[%c2288, %c0_231] : memref<2736x128xbf16, #tpu.memory_space<vmem>>, vector<32x32xbf16>
    %c2320 = arith.constant 2320 : index
    %c0_232 = arith.constant 0 : index
    %630 = vector.load %arg2[%c2320, %c0_232] : memref<2736x128xbf16, #tpu.memory_space<vmem>>, vector<32x32xbf16>
    %c2352 = arith.constant 2352 : index
    %c0_233 = arith.constant 0 : index
    %631 = vector.load %arg2[%c2352, %c0_233] : memref<2736x128xbf16, #tpu.memory_space<vmem>>, vector<32x32xbf16>
    %c1_i32_234 = arith.constant 1 : i32
    %632 = tpu.dynamic_rotate %628 by %c1_i32_234 dim 0 : vector<16x32xf32>, i32 -> vector<16x32xf32>
    %cst_235 = arith.constant 0.000000e+00 : f32
    %633 = vector.shape_cast %577 : vector<16x1xi1> to vector<16x1xi1>
    %634 = vector.broadcast %633 : vector<16x1xi1> to vector<16x32xi1>
    %635 = vector.broadcast %cst_235 : f32 to vector<16x32xf32>
    %636 = arith.select %634, %635, %632 : vector<16x32xi1>, vector<16x32xf32>
    %c15_i32_236 = arith.constant 15 : i32
    %637 = tpu.dynamic_rotate %628 by %c15_i32_236 dim 0 : vector<16x32xf32>, i32 -> vector<16x32xf32>
    %cst_237 = arith.constant 0.000000e+00 : f32
    %638 = vector.shape_cast %579 : vector<16x1xi1> to vector<16x1xi1>
    %639 = vector.broadcast %638 : vector<16x1xi1> to vector<16x32xi1>
    %640 = vector.broadcast %cst_237 : f32 to vector<16x32xf32>
    %641 = arith.select %639, %640, %637 : vector<16x32xi1>, vector<16x32xf32>
    %642 = arith.truncf %636 : vector<16x32xf32> to vector<16x32xbf16>
    %643 = arith.truncf %641 : vector<16x32xf32> to vector<16x32xbf16>
    %cst_238 = arith.constant dense<0.000000e+00> : vector<16x32xf32>
    %644 = tpu.matmul %642, %629, %cst_238 {dimension_numbers = #tpu.dot_dimension_numbers<[1], [0], [0], [1], [0, 0, 1, 1], [], []>} : vector<16x32xbf16>, vector<32x32xbf16>, vector<16x32xf32> -> vector<16x32xf32>
    %645 = arith.truncf %628 : vector<16x32xf32> to vector<16x32xbf16>
    %cst_239 = arith.constant dense<0.000000e+00> : vector<16x32xf32>
    %646 = tpu.matmul %645, %630, %cst_239 {dimension_numbers = #tpu.dot_dimension_numbers<[1], [0], [0], [1], [0, 0, 1, 1], [], []>} : vector<16x32xbf16>, vector<32x32xbf16>, vector<16x32xf32> -> vector<16x32xf32>
    %647 = arith.addf %644, %646 : vector<16x32xf32>
    %cst_240 = arith.constant dense<0.000000e+00> : vector<16x32xf32>
    %648 = tpu.matmul %643, %631, %cst_240 {dimension_numbers = #tpu.dot_dimension_numbers<[1], [0], [0], [1], [0, 0, 1, 1], [], []>} : vector<16x32xbf16>, vector<32x32xbf16>, vector<16x32xf32> -> vector<16x32xf32>
    %649 = arith.addf %647, %648 : vector<16x32xf32>
    %c37 = arith.constant 37 : index
    %c0_241 = arith.constant 0 : index
    %650 = vector.load %arg3[%c37, %c0_241] : memref<48x128xf32, #tpu.memory_space<vmem>>, vector<1x32xf32>
    %651 = vector.broadcast %650 : vector<1x32xf32> to vector<16x32xf32>
    %652 = arith.addf %649, %651 : vector<16x32xf32>
    %653 = arith.truncf %543 : vector<16x64xf32> to vector<16x64xbf16>
    %c2384 = arith.constant 2384 : index
    %c0_242 = arith.constant 0 : index
    %654 = vector.load %arg2[%c2384, %c0_242] : memref<2736x128xbf16, #tpu.memory_space<vmem>>, vector<64x32xbf16>
    %cst_243 = arith.constant dense<0.000000e+00> : vector<16x32xf32>
    %655 = tpu.matmul %653, %654, %cst_243 {dimension_numbers = #tpu.dot_dimension_numbers<[1], [0], [0], [1], [0, 0, 1, 1], [], []>} : vector<16x64xbf16>, vector<64x32xbf16>, vector<16x32xf32> -> vector<16x32xf32>
    %c38 = arith.constant 38 : index
    %c0_244 = arith.constant 0 : index
    %656 = vector.load %arg3[%c38, %c0_244] : memref<48x128xf32, #tpu.memory_space<vmem>>, vector<1x32xf32>
    %657 = vector.broadcast %656 : vector<1x32xf32> to vector<16x32xf32>
    %658 = arith.addf %655, %657 : vector<16x32xf32>
    %659 = arith.addf %658, %652 : vector<16x32xf32>
    %cst_245 = arith.constant dense<0.000000e+00> : vector<16xf32>
    %660 = vector.multi_reduction <add>, %659, %cst_245 [1] : vector<16x32xf32> to vector<16xf32>
    %661 = vector.shape_cast %660 : vector<16xf32> to vector<16x1xf32>
    %cst_246 = arith.constant 3.200000e+01 : f32
    %662 = vector.broadcast %cst_246 : f32 to vector<16x1xf32>
    %663 = arith.divf %661, %662 : vector<16x1xf32>
    %664 = vector.broadcast %663 : vector<16x1xf32> to vector<16x32xf32>
    %665 = arith.subf %659, %664 : vector<16x32xf32>
    %666 = arith.mulf %665, %665 : vector<16x32xf32>
    %cst_247 = arith.constant dense<0.000000e+00> : vector<16xf32>
    %667 = vector.multi_reduction <add>, %666, %cst_247 [1] : vector<16x32xf32> to vector<16xf32>
    %668 = vector.shape_cast %667 : vector<16xf32> to vector<16x1xf32>
    %cst_248 = arith.constant 3.200000e+01 : f32
    %669 = vector.broadcast %cst_248 : f32 to vector<16x1xf32>
    %670 = arith.divf %668, %669 : vector<16x1xf32>
    %cst_249 = arith.constant 9.99999997E-7 : f32
    %671 = vector.broadcast %cst_249 : f32 to vector<16x1xf32>
    %672 = arith.addf %670, %671 : vector<16x1xf32>
    %673 = math.rsqrt %672 : vector<16x1xf32>
    %674 = vector.broadcast %673 : vector<16x1xf32> to vector<16x32xf32>
    %675 = arith.mulf %665, %674 : vector<16x32xf32>
    %c39 = arith.constant 39 : index
    %c0_250 = arith.constant 0 : index
    %676 = vector.load %arg3[%c39, %c0_250] : memref<48x128xf32, #tpu.memory_space<vmem>>, vector<1x32xf32>
    %677 = vector.broadcast %676 : vector<1x32xf32> to vector<16x32xf32>
    %678 = arith.mulf %675, %677 : vector<16x32xf32>
    %c40 = arith.constant 40 : index
    %c0_251 = arith.constant 0 : index
    %679 = vector.load %arg3[%c40, %c0_251] : memref<48x128xf32, #tpu.memory_space<vmem>>, vector<1x32xf32>
    %680 = vector.broadcast %679 : vector<1x32xf32> to vector<16x32xf32>
    %681 = arith.addf %678, %680 : vector<16x32xf32>
    %682 = arith.negf %681 : vector<16x32xf32>
    %683 = math.exp %682 : vector<16x32xf32>
    %cst_252 = arith.constant 1.000000e+00 : f32
    %684 = vector.broadcast %cst_252 : f32 to vector<16x32xf32>
    %685 = arith.addf %684, %683 : vector<16x32xf32>
    %686 = arith.divf %684, %685 : vector<16x32xf32>
    %687 = arith.mulf %681, %686 : vector<16x32xf32>
    %c2448 = arith.constant 2448 : index
    %c0_253 = arith.constant 0 : index
    %688 = vector.load %arg2[%c2448, %c0_253] : memref<2736x128xbf16, #tpu.memory_space<vmem>>, vector<32x32xbf16>
    %c2480 = arith.constant 2480 : index
    %c0_254 = arith.constant 0 : index
    %689 = vector.load %arg2[%c2480, %c0_254] : memref<2736x128xbf16, #tpu.memory_space<vmem>>, vector<32x32xbf16>
    %c2512 = arith.constant 2512 : index
    %c0_255 = arith.constant 0 : index
    %690 = vector.load %arg2[%c2512, %c0_255] : memref<2736x128xbf16, #tpu.memory_space<vmem>>, vector<32x32xbf16>
    %c1_i32_256 = arith.constant 1 : i32
    %691 = tpu.dynamic_rotate %687 by %c1_i32_256 dim 0 : vector<16x32xf32>, i32 -> vector<16x32xf32>
    %cst_257 = arith.constant 0.000000e+00 : f32
    %692 = vector.shape_cast %577 : vector<16x1xi1> to vector<16x1xi1>
    %693 = vector.broadcast %692 : vector<16x1xi1> to vector<16x32xi1>
    %694 = vector.broadcast %cst_257 : f32 to vector<16x32xf32>
    %695 = arith.select %693, %694, %691 : vector<16x32xi1>, vector<16x32xf32>
    %c15_i32_258 = arith.constant 15 : i32
    %696 = tpu.dynamic_rotate %687 by %c15_i32_258 dim 0 : vector<16x32xf32>, i32 -> vector<16x32xf32>
    %cst_259 = arith.constant 0.000000e+00 : f32
    %697 = vector.shape_cast %579 : vector<16x1xi1> to vector<16x1xi1>
    %698 = vector.broadcast %697 : vector<16x1xi1> to vector<16x32xi1>
    %699 = vector.broadcast %cst_259 : f32 to vector<16x32xf32>
    %700 = arith.select %698, %699, %696 : vector<16x32xi1>, vector<16x32xf32>
    %701 = arith.truncf %695 : vector<16x32xf32> to vector<16x32xbf16>
    %702 = arith.truncf %700 : vector<16x32xf32> to vector<16x32xbf16>
    %cst_260 = arith.constant dense<0.000000e+00> : vector<16x32xf32>
    %703 = tpu.matmul %701, %688, %cst_260 {dimension_numbers = #tpu.dot_dimension_numbers<[1], [0], [0], [1], [0, 0, 1, 1], [], []>} : vector<16x32xbf16>, vector<32x32xbf16>, vector<16x32xf32> -> vector<16x32xf32>
    %704 = arith.truncf %687 : vector<16x32xf32> to vector<16x32xbf16>
    %cst_261 = arith.constant dense<0.000000e+00> : vector<16x32xf32>
    %705 = tpu.matmul %704, %689, %cst_261 {dimension_numbers = #tpu.dot_dimension_numbers<[1], [0], [0], [1], [0, 0, 1, 1], [], []>} : vector<16x32xbf16>, vector<32x32xbf16>, vector<16x32xf32> -> vector<16x32xf32>
    %706 = arith.addf %703, %705 : vector<16x32xf32>
    %cst_262 = arith.constant dense<0.000000e+00> : vector<16x32xf32>
    %707 = tpu.matmul %702, %690, %cst_262 {dimension_numbers = #tpu.dot_dimension_numbers<[1], [0], [0], [1], [0, 0, 1, 1], [], []>} : vector<16x32xbf16>, vector<32x32xbf16>, vector<16x32xf32> -> vector<16x32xf32>
    %708 = arith.addf %706, %707 : vector<16x32xf32>
    %c41 = arith.constant 41 : index
    %c0_263 = arith.constant 0 : index
    %709 = vector.load %arg3[%c41, %c0_263] : memref<48x128xf32, #tpu.memory_space<vmem>>, vector<1x32xf32>
    %710 = vector.broadcast %709 : vector<1x32xf32> to vector<16x32xf32>
    %711 = arith.addf %708, %710 : vector<16x32xf32>
    %cst_264 = arith.constant dense<0.000000e+00> : vector<16xf32>
    %712 = vector.multi_reduction <add>, %711, %cst_264 [1] : vector<16x32xf32> to vector<16xf32>
    %713 = vector.shape_cast %712 : vector<16xf32> to vector<16x1xf32>
    %cst_265 = arith.constant 3.200000e+01 : f32
    %714 = vector.broadcast %cst_265 : f32 to vector<16x1xf32>
    %715 = arith.divf %713, %714 : vector<16x1xf32>
    %716 = vector.broadcast %715 : vector<16x1xf32> to vector<16x32xf32>
    %717 = arith.subf %711, %716 : vector<16x32xf32>
    %718 = arith.mulf %717, %717 : vector<16x32xf32>
    %cst_266 = arith.constant dense<0.000000e+00> : vector<16xf32>
    %719 = vector.multi_reduction <add>, %718, %cst_266 [1] : vector<16x32xf32> to vector<16xf32>
    %720 = vector.shape_cast %719 : vector<16xf32> to vector<16x1xf32>
    %cst_267 = arith.constant 3.200000e+01 : f32
    %721 = vector.broadcast %cst_267 : f32 to vector<16x1xf32>
    %722 = arith.divf %720, %721 : vector<16x1xf32>
    %cst_268 = arith.constant 9.99999997E-7 : f32
    %723 = vector.broadcast %cst_268 : f32 to vector<16x1xf32>
    %724 = arith.addf %722, %723 : vector<16x1xf32>
    %725 = math.rsqrt %724 : vector<16x1xf32>
    %726 = vector.broadcast %725 : vector<16x1xf32> to vector<16x32xf32>
    %727 = arith.mulf %717, %726 : vector<16x32xf32>
    %c42 = arith.constant 42 : index
    %c0_269 = arith.constant 0 : index
    %728 = vector.load %arg3[%c42, %c0_269] : memref<48x128xf32, #tpu.memory_space<vmem>>, vector<1x32xf32>
    %729 = vector.broadcast %728 : vector<1x32xf32> to vector<16x32xf32>
    %730 = arith.mulf %727, %729 : vector<16x32xf32>
    %c43 = arith.constant 43 : index
    %c0_270 = arith.constant 0 : index
    %731 = vector.load %arg3[%c43, %c0_270] : memref<48x128xf32, #tpu.memory_space<vmem>>, vector<1x32xf32>
    %732 = vector.broadcast %731 : vector<1x32xf32> to vector<16x32xf32>
    %733 = arith.addf %730, %732 : vector<16x32xf32>
    %734 = arith.negf %733 : vector<16x32xf32>
    %735 = math.exp %734 : vector<16x32xf32>
    %cst_271 = arith.constant 1.000000e+00 : f32
    %736 = vector.broadcast %cst_271 : f32 to vector<16x32xf32>
    %737 = arith.addf %736, %735 : vector<16x32xf32>
    %738 = arith.divf %736, %737 : vector<16x32xf32>
    %739 = arith.mulf %733, %738 : vector<16x32xf32>
    %c2544 = arith.constant 2544 : index
    %c0_272 = arith.constant 0 : index
    %740 = vector.load %arg2[%c2544, %c0_272] : memref<2736x128xbf16, #tpu.memory_space<vmem>>, vector<32x32xbf16>
    %c2576 = arith.constant 2576 : index
    %c0_273 = arith.constant 0 : index
    %741 = vector.load %arg2[%c2576, %c0_273] : memref<2736x128xbf16, #tpu.memory_space<vmem>>, vector<32x32xbf16>
    %c2608 = arith.constant 2608 : index
    %c0_274 = arith.constant 0 : index
    %742 = vector.load %arg2[%c2608, %c0_274] : memref<2736x128xbf16, #tpu.memory_space<vmem>>, vector<32x32xbf16>
    %c1_i32_275 = arith.constant 1 : i32
    %743 = tpu.dynamic_rotate %739 by %c1_i32_275 dim 0 : vector<16x32xf32>, i32 -> vector<16x32xf32>
    %cst_276 = arith.constant 0.000000e+00 : f32
    %744 = vector.shape_cast %577 : vector<16x1xi1> to vector<16x1xi1>
    %745 = vector.broadcast %744 : vector<16x1xi1> to vector<16x32xi1>
    %746 = vector.broadcast %cst_276 : f32 to vector<16x32xf32>
    %747 = arith.select %745, %746, %743 : vector<16x32xi1>, vector<16x32xf32>
    %c15_i32_277 = arith.constant 15 : i32
    %748 = tpu.dynamic_rotate %739 by %c15_i32_277 dim 0 : vector<16x32xf32>, i32 -> vector<16x32xf32>
    %cst_278 = arith.constant 0.000000e+00 : f32
    %749 = vector.shape_cast %579 : vector<16x1xi1> to vector<16x1xi1>
    %750 = vector.broadcast %749 : vector<16x1xi1> to vector<16x32xi1>
    %751 = vector.broadcast %cst_278 : f32 to vector<16x32xf32>
    %752 = arith.select %750, %751, %748 : vector<16x32xi1>, vector<16x32xf32>
    %753 = arith.truncf %747 : vector<16x32xf32> to vector<16x32xbf16>
    %754 = arith.truncf %752 : vector<16x32xf32> to vector<16x32xbf16>
    %cst_279 = arith.constant dense<0.000000e+00> : vector<16x32xf32>
    %755 = tpu.matmul %753, %740, %cst_279 {dimension_numbers = #tpu.dot_dimension_numbers<[1], [0], [0], [1], [0, 0, 1, 1], [], []>} : vector<16x32xbf16>, vector<32x32xbf16>, vector<16x32xf32> -> vector<16x32xf32>
    %756 = arith.truncf %739 : vector<16x32xf32> to vector<16x32xbf16>
    %cst_280 = arith.constant dense<0.000000e+00> : vector<16x32xf32>
    %757 = tpu.matmul %756, %741, %cst_280 {dimension_numbers = #tpu.dot_dimension_numbers<[1], [0], [0], [1], [0, 0, 1, 1], [], []>} : vector<16x32xbf16>, vector<32x32xbf16>, vector<16x32xf32> -> vector<16x32xf32>
    %758 = arith.addf %755, %757 : vector<16x32xf32>
    %cst_281 = arith.constant dense<0.000000e+00> : vector<16x32xf32>
    %759 = tpu.matmul %754, %742, %cst_281 {dimension_numbers = #tpu.dot_dimension_numbers<[1], [0], [0], [1], [0, 0, 1, 1], [], []>} : vector<16x32xbf16>, vector<32x32xbf16>, vector<16x32xf32> -> vector<16x32xf32>
    %760 = arith.addf %758, %759 : vector<16x32xf32>
    %c44 = arith.constant 44 : index
    %c0_282 = arith.constant 0 : index
    %761 = vector.load %arg3[%c44, %c0_282] : memref<48x128xf32, #tpu.memory_space<vmem>>, vector<1x32xf32>
    %762 = vector.broadcast %761 : vector<1x32xf32> to vector<16x32xf32>
    %763 = arith.addf %760, %762 : vector<16x32xf32>
    %764 = arith.addf %659, %763 : vector<16x32xf32>
    %cst_283 = arith.constant dense<0.000000e+00> : vector<16xf32>
    %765 = vector.multi_reduction <add>, %764, %cst_283 [1] : vector<16x32xf32> to vector<16xf32>
    %766 = vector.shape_cast %765 : vector<16xf32> to vector<16x1xf32>
    %cst_284 = arith.constant 3.200000e+01 : f32
    %767 = vector.broadcast %cst_284 : f32 to vector<16x1xf32>
    %768 = arith.divf %766, %767 : vector<16x1xf32>
    %769 = vector.broadcast %768 : vector<16x1xf32> to vector<16x32xf32>
    %770 = arith.subf %764, %769 : vector<16x32xf32>
    %771 = arith.mulf %770, %770 : vector<16x32xf32>
    %cst_285 = arith.constant dense<0.000000e+00> : vector<16xf32>
    %772 = vector.multi_reduction <add>, %771, %cst_285 [1] : vector<16x32xf32> to vector<16xf32>
    %773 = vector.shape_cast %772 : vector<16xf32> to vector<16x1xf32>
    %cst_286 = arith.constant 3.200000e+01 : f32
    %774 = vector.broadcast %cst_286 : f32 to vector<16x1xf32>
    %775 = arith.divf %773, %774 : vector<16x1xf32>
    %cst_287 = arith.constant 9.99999997E-7 : f32
    %776 = vector.broadcast %cst_287 : f32 to vector<16x1xf32>
    %777 = arith.addf %775, %776 : vector<16x1xf32>
    %778 = math.rsqrt %777 : vector<16x1xf32>
    %779 = vector.broadcast %778 : vector<16x1xf32> to vector<16x32xf32>
    %780 = arith.mulf %770, %779 : vector<16x32xf32>
    %c45 = arith.constant 45 : index
    %c0_288 = arith.constant 0 : index
    %781 = vector.load %arg3[%c45, %c0_288] : memref<48x128xf32, #tpu.memory_space<vmem>>, vector<1x32xf32>
    %782 = vector.broadcast %781 : vector<1x32xf32> to vector<16x32xf32>
    %783 = arith.mulf %780, %782 : vector<16x32xf32>
    %c46 = arith.constant 46 : index
    %c0_289 = arith.constant 0 : index
    %784 = vector.load %arg3[%c46, %c0_289] : memref<48x128xf32, #tpu.memory_space<vmem>>, vector<1x32xf32>
    %785 = vector.broadcast %784 : vector<1x32xf32> to vector<16x32xf32>
    %786 = arith.addf %783, %785 : vector<16x32xf32>
    %787 = arith.negf %786 : vector<16x32xf32>
    %788 = math.exp %787 : vector<16x32xf32>
    %cst_290 = arith.constant 1.000000e+00 : f32
    %789 = vector.broadcast %cst_290 : f32 to vector<16x32xf32>
    %790 = arith.addf %789, %788 : vector<16x32xf32>
    %791 = arith.divf %789, %790 : vector<16x32xf32>
    %792 = arith.mulf %786, %791 : vector<16x32xf32>
    %c2640 = arith.constant 2640 : index
    %c0_291 = arith.constant 0 : index
    %793 = vector.load %arg2[%c2640, %c0_291] : memref<2736x128xbf16, #tpu.memory_space<vmem>>, vector<32x8xbf16>
    %c2672 = arith.constant 2672 : index
    %c0_292 = arith.constant 0 : index
    %794 = vector.load %arg2[%c2672, %c0_292] : memref<2736x128xbf16, #tpu.memory_space<vmem>>, vector<32x8xbf16>
    %c2704 = arith.constant 2704 : index
    %c0_293 = arith.constant 0 : index
    %795 = vector.load %arg2[%c2704, %c0_293] : memref<2736x128xbf16, #tpu.memory_space<vmem>>, vector<32x8xbf16>
    %c1_i32_294 = arith.constant 1 : i32
    %796 = tpu.dynamic_rotate %792 by %c1_i32_294 dim 0 : vector<16x32xf32>, i32 -> vector<16x32xf32>
    %cst_295 = arith.constant 0.000000e+00 : f32
    %797 = vector.shape_cast %577 : vector<16x1xi1> to vector<16x1xi1>
    %798 = vector.broadcast %797 : vector<16x1xi1> to vector<16x32xi1>
    %799 = vector.broadcast %cst_295 : f32 to vector<16x32xf32>
    %800 = arith.select %798, %799, %796 : vector<16x32xi1>, vector<16x32xf32>
    %c15_i32_296 = arith.constant 15 : i32
    %801 = tpu.dynamic_rotate %792 by %c15_i32_296 dim 0 : vector<16x32xf32>, i32 -> vector<16x32xf32>
    %cst_297 = arith.constant 0.000000e+00 : f32
    %802 = vector.shape_cast %579 : vector<16x1xi1> to vector<16x1xi1>
    %803 = vector.broadcast %802 : vector<16x1xi1> to vector<16x32xi1>
    %804 = vector.broadcast %cst_297 : f32 to vector<16x32xf32>
    %805 = arith.select %803, %804, %801 : vector<16x32xi1>, vector<16x32xf32>
    %806 = arith.truncf %800 : vector<16x32xf32> to vector<16x32xbf16>
    %807 = arith.truncf %805 : vector<16x32xf32> to vector<16x32xbf16>
    %cst_298 = arith.constant dense<0.000000e+00> : vector<16x8xf32>
    %808 = tpu.matmul %806, %793, %cst_298 {dimension_numbers = #tpu.dot_dimension_numbers<[1], [0], [0], [1], [0, 0, 1, 1], [], []>} : vector<16x32xbf16>, vector<32x8xbf16>, vector<16x8xf32> -> vector<16x8xf32>
    %809 = arith.truncf %792 : vector<16x32xf32> to vector<16x32xbf16>
    %cst_299 = arith.constant dense<0.000000e+00> : vector<16x8xf32>
    %810 = tpu.matmul %809, %794, %cst_299 {dimension_numbers = #tpu.dot_dimension_numbers<[1], [0], [0], [1], [0, 0, 1, 1], [], []>} : vector<16x32xbf16>, vector<32x8xbf16>, vector<16x8xf32> -> vector<16x8xf32>
    %811 = arith.addf %808, %810 : vector<16x8xf32>
    %cst_300 = arith.constant dense<0.000000e+00> : vector<16x8xf32>
    %812 = tpu.matmul %807, %795, %cst_300 {dimension_numbers = #tpu.dot_dimension_numbers<[1], [0], [0], [1], [0, 0, 1, 1], [], []>} : vector<16x32xbf16>, vector<32x8xbf16>, vector<16x8xf32> -> vector<16x8xf32>
    %813 = arith.addf %811, %812 : vector<16x8xf32>
    %c47 = arith.constant 47 : index
    %c0_301 = arith.constant 0 : index
    %814 = vector.load %arg3[%c47, %c0_301] : memref<48x128xf32, #tpu.memory_space<vmem>>, vector<1x8xf32>
    %815 = vector.broadcast %814 : vector<1x8xf32> to vector<16x8xf32>
    %816 = arith.addf %813, %815 : vector<16x8xf32>
    %c0_302 = arith.constant 0 : index
    %c0_303 = arith.constant 0 : index
    %c0_304 = arith.constant 0 : index
    %817 = vector.load %arg4[%c0_302, %c0_303, %c0_304] : memref<1x16x8xf32, #tpu.memory_space<vmem>>, vector<1x16x8xf32>
    %818 = vector.shape_cast %817 : vector<1x16x8xf32> to vector<16x8xf32>
    %819 = vector.shape_cast %816 : vector<16x8xf32> to vector<1x16x8xf32>
    tpu.vector_store %arg4[%c0_302, %c0_303, %c0_304], %819 {strides = array<i32>} : memref<1x16x8xf32, #tpu.memory_space<vmem>>, vector<1x16x8xf32>,
    return
  }
  func.func @transform_0(%arg0: i32) -> (i32, i32, i32) {
    %c0_i32 = arith.constant 0 : i32
    %c0_i32_0 = arith.constant 0 : i32
    %c0_i32_1 = arith.constant 0 : i32
    return %arg0, %c0_i32, %c0_i32_0 : i32, i32, i32
  }
  func.func @transform_1(%arg0: i32) -> (i32, i32) {
    %c0_i32 = arith.constant 0 : i32
    %c0_i32_0 = arith.constant 0 : i32
    %c0_i32_1 = arith.constant 0 : i32
    return %c0_i32, %c0_i32_0 : i32, i32
  }
  func.func @transform_2(%arg0: i32) -> (i32, i32) {
    %c0_i32 = arith.constant 0 : i32
    %c0_i32_0 = arith.constant 0 : i32
    %c0_i32_1 = arith.constant 0 : i32
    return %c0_i32, %c0_i32_0 : i32, i32
  }
  func.func @transform_3(%arg0: i32) -> (i32, i32, i32) {
    %c0_i32 = arith.constant 0 : i32
    %c0_i32_0 = arith.constant 0 : i32
    %c0_i32_1 = arith.constant 0 : i32
    return %arg0, %c0_i32, %c0_i32_0 : i32, i32, i32
  }
}

</mosaic_0001>

<llo_original>
// kernel: tpu_custom_call.1
$region0: #{tpu_custom_call.1}
  #allocation0 [shape = 'u32[]', space=smem, size = 0x4, offset = 0x4, fixed_abs, tag = 'smem constant byte address 0x4 - core index']
  #allocation1 [shape = 'u32[144,128]{1,0:T(1,128)}', space=vmem, size = 0x12000, scoped, tag = 'internal scratch']
  %s0 = inlined_call_operand.vmem [shape: f32[2,8,4], index: 0, kind: input, shape index: {}]
  %s1 = inlined_call_operand.hbm [shape: bf16[2736,128], index: 1, kind: input, shape index: {}]
  %s2 = inlined_call_operand.hbm [shape: f32[48,128], index: 2, kind: input, shape index: {}]
  %s3 = inlined_call_operand.vmem [shape: f32[2,16,8], index: 3, kind: output, shape index: {}]
  %s4 = sld [smem:[#allocation0]]
  $region53: #{tpu_custom_call.1} parent=0
    _
  %s6 = ssub.s32 1, %s4
  %s7 = scalar_select 0, %s6, %s4
  $region1: #{tpu_custom_call.1} parent=0
    #allocation2 [shape = 'u8[700416]{0}', space=vmem, size = 0xab000, scoped, tag = 'input window, operand 1, single buffered']
    #allocation3 [shape = 's32[2]{0}', space=sflag, size = 0x8, scoped, tag = 'scoped memory for tpu_custom_call.1']
    #allocation4 [shape = 'u8[24576]{0}', space=vmem, size = 0x6000, scoped, tag = 'input window, operand 2, single buffered']
    #allocation5 [shape = 's32[1]{0}', space=sflag, size = 0x4, scoped, tag = 'scoped memory for tpu_custom_call.1']
    %8 = vsyncpa [#allocation3], 0
    %9 = vsyncpa [#allocation5], 0
    loop: start=0, step=1, limit=4
    $region2: #{tpu_custom_call.1} parent=1 // loop_pre_header
      _
    $region3: #{tpu_custom_call.1} parent=1 // loop_header
      %s11 = sphi 0, %s15
      %p12 = scmp.ge.s32.totalorder %s11, 4
      %s21 = sphi 0, %s23
      %s24 = sphi 0, %s21
      %s25 = sphi 0, %s24
      %s41 = sphi 0, %s25
      %s45 = sphi 0, %s45
      %s47 = sphi 0, %s45
      %s48 = sphi 0, %s47
      %s62 = sphi 0, %s48
      %s66 = sphi 0, %s66
      %s68 = sphi 0, %s66
      %s69 = sphi 0, %s68
      %s83 = sphi 0, %s69
      %s89 = sphi 0, %s91
      %s92 = sphi 0, %s89
      %s93 = sphi 0, %s92
      %s109 = sphi 0, %s93
    $region4: #{tpu_custom_call.1} parent=1 // loop_header_branch
      %14 = sbr.rel (%p12) target = $region8
    $region5: #{tpu_custom_call.1} parent=1 // loop_body
      %s16 = ssub.s32 %s11, 1
      %s17 = ssub.s32 %s11, 2
      %s18 = sadd.s32 %s11, 1
      %s19 = ssub.s32 %s11, %s18
      %p20 = scmp.eq.s32.totalorder %s19, 0
      %s22 = sadd.s32 %s21, 1
      %s23 = scalar_select %p20, %s21, %s22
      %p26 = pneg %p20
      %p27 = scmp.eq.s32.totalorder %s11, 1
      %p28 = por %p26, %p27
      %p29 = scmp.ne.s32.totalorder %s21, %s24
      %p30 = scmp.eq.s32.totalorder %s11, 0
      %p31 = por %p29, %p30
      %p32 = scmp.ne.s32.totalorder %s21, %s24
      %p33 = scmp.eq.s32.totalorder %s16, 1
      %p34 = por %p32, %p33
      %p35 = scmp.ne.s32.totalorder %s24, %s25
      %p36 = scmp.eq.s32.totalorder %s16, 0
      %p37 = por %p35, %p36
      %p38 = scmp.ne.s32.totalorder %s24, %s25
      %p39 = scmp.eq.s32.totalorder %s17, 1
      %p40 = por %p38, %p39
      %p42 = scmp.ne.s32.totalorder %s25, %s41
      %p43 = scmp.eq.s32.totalorder %s17, 0
      %p44 = por %p42, %p43
      %s46 = sadd.s32 %s45, 1
      %p49 = scmp.eq.s32.totalorder %s11, 1
      %p50 = scmp.ne.s32.totalorder %s45, %s47
      %p51 = scmp.eq.s32.totalorder %s11, 0
      %p52 = por %p50, %p51
      %p53 = scmp.ne.s32.totalorder %s45, %s47
      %p54 = scmp.eq.s32.totalorder %s16, 1
      %p55 = por %p53, %p54
      %p56 = scmp.ne.s32.totalorder %s47, %s48
      %p57 = scmp.eq.s32.totalorder %s16, 0
      %p58 = por %p56, %p57
      %p59 = scmp.ne.s32.totalorder %s47, %s48
      %p60 = scmp.eq.s32.totalorder %s17, 1
      %p61 = por %p59, %p60
      %p63 = scmp.ne.s32.totalorder %s48, %s62
      %p64 = scmp.eq.s32.totalorder %s17, 0
      %p65 = por %p63, %p64
      %s67 = sadd.s32 %s66, 1
      %p70 = scmp.eq.s32.totalorder %s11, 1
      %p71 = scmp.ne.s32.totalorder %s66, %s68
      %p72 = scmp.eq.s32.totalorder %s11, 0
      %p73 = por %p71, %p72
      %p74 = scmp.ne.s32.totalorder %s66, %s68
      %p75 = scmp.eq.s32.totalorder %s16, 1
      %p76 = por %p74, %p75
      %p77 = scmp.ne.s32.totalorder %s68, %s69
      %p78 = scmp.eq.s32.totalorder %s16, 0
      %p79 = por %p77, %p78
      %p80 = scmp.ne.s32.totalorder %s68, %s69
      %p81 = scmp.eq.s32.totalorder %s17, 1
      %p82 = por %p80, %p81
      %p84 = scmp.ne.s32.totalorder %s69, %s83
      %p85 = scmp.eq.s32.totalorder %s17, 0
      %p86 = por %p84, %p85
      %s87 = ssub.s32 %s11, %s18
      %p88 = scmp.eq.s32.totalorder %s87, 0
      %s90 = sadd.s32 %s89, 1
      %s91 = scalar_select %p88, %s89, %s90
      %p94 = pneg %p88
      %p95 = scmp.eq.s32.totalorder %s11, 1
      %p96 = por %p94, %p95
      %p97 = scmp.ne.s32.totalorder %s89, %s92
      %p98 = scmp.eq.s32.totalorder %s11, 0
      %p99 = por %p97, %p98
      %p100 = scmp.ne.s32.totalorder %s89, %s92
      %p101 = scmp.eq.s32.totalorder %s16, 1
      %p102 = por %p100, %p101
      %p103 = scmp.ne.s32.totalorder %s92, %s93
      %p104 = scmp.eq.s32.totalorder %s16, 0
      %p105 = por %p103, %p104
      %p106 = scmp.ne.s32.totalorder %s92, %s93
      %p107 = scmp.eq.s32.totalorder %s17, 1
      %p108 = por %p106, %p107
      %p110 = scmp.ne.s32.totalorder %s93, %s109
      %p111 = scmp.eq.s32.totalorder %s17, 0
      %p112 = por %p110, %p111
      %p113 = scmp.le.s32.totalorder 1, %s11
      %p114 = scmp.lt.s32.totalorder %s11, 3
      %p115 = pnand %p113, %p114
      %p116 = pneg %p115
      // Predicated region
      $region9: #{tpu_custom_call.1} parent=5 // pred_check
        _
      $region10: #{tpu_custom_call.1} parent=5 // pred_check_branch
        %118 = sbr.rel (%p115) target = $region12
      $region11: #{tpu_custom_call.1} parent=5 // pred_region
        %s119 = ssub.s32 %s11, 1
        // Predicated region
        $region13: #{tpu_custom_call.1} parent=11 // pred_check
          %p120 = pneg %p58
        $region14: #{tpu_custom_call.1} parent=11 // pred_check_branch
          %122 = sbr.rel (%p120) target = $region16
        $region15: #{tpu_custom_call.1} parent=11 // pred_region
          %s124 = ssub.s32 21888, 21888
          %125 = vsyncadd [#allocation3], %s124
          %s126 = sshll.u32 [#allocation2], 4
          %s127 = int_to_ptr.vmem [resolvable:$true] %s126
          %132 = dma.hbm_to_vmem [thread:$0]  %s1, 21888, %s127, [#allocation3], 64, 64, 4
        $region16: #{tpu_custom_call.1} parent=11 // pred_fallthru
          _
        // Predicated region
        $region17: #{tpu_custom_call.1} parent=11 // pred_check
          %p133 = pneg %p79
        $region18: #{tpu_custom_call.1} parent=11 // pred_check_branch
          %135 = sbr.rel (%p133) target = $region20
        $region19: #{tpu_custom_call.1} parent=11 // pred_region
          %s137 = ssub.s32 768, 768
          %138 = vsyncadd [#allocation5], %s137
          %s139 = sshll.u32 [#allocation4], 4
          %s140 = int_to_ptr.vmem [resolvable:$true] %s139
          %145 = dma.hbm_to_vmem [thread:$0]  %s2, 768, %s140, [#allocation5], 128, 128, 8
        $region20: #{tpu_custom_call.1} parent=11 // pred_fallthru
          _
      $region12: #{tpu_custom_call.1} parent=5 // pred_fallthru
        _
      %p146 = scmp.lt.s32.totalorder %s11, 2
      // Predicated region
      $region21: #{tpu_custom_call.1} parent=5 // pred_check
        %p147 = pneg %p146
      $region22: #{tpu_custom_call.1} parent=5 // pred_check_branch
        %149 = sbr.rel (%p147) target = $region24
      $region23: #{tpu_custom_call.1} parent=5 // pred_region
        // Predicated region
        $region25: #{tpu_custom_call.1} parent=23 // pred_check
          %p150 = pneg %p31
        $region26: #{tpu_custom_call.1} parent=23 // pred_check_branch
          %152 = sbr.rel (%p150) target = $region28
        $region27: #{tpu_custom_call.1} parent=23 // pred_region
          %p153 = scmp.lt.s32.totalorder %s11, 1
          %s154 = scalar_select %p153, %s11, 1
          %s155 = smul.addr %s154, 8
          %s156 = scalar_lea.vmem %s0, %s155
        $region28: #{tpu_custom_call.1} parent=23 // pred_fallthru
          _
      $region24: #{tpu_custom_call.1} parent=5 // pred_fallthru
        _
      %p157 = scmp.le.s32.totalorder 1, %s11
      %p158 = scmp.lt.s32.totalorder %s11, 3
      %p159 = pnand %p157, %p158
      %p160 = pneg %p159
      // Predicated region
      $region29: #{tpu_custom_call.1} parent=5 // pred_check
        _
      $region30: #{tpu_custom_call.1} parent=5 // pred_check_branch
        %162 = sbr.rel (%p159) target = $region32
      $region31: #{tpu_custom_call.1} parent=5 // pred_region
        %s163 = ssub.s32 %s11, 1
        // Predicated region
        $region33: #{tpu_custom_call.1} parent=31 // pred_check
          %p164 = pneg %p58
        $region34: #{tpu_custom_call.1} parent=31 // pred_check_branch
          %166 = sbr.rel (%p164) target = $region36
        $region35: #{tpu_custom_call.1} parent=31 // pred_region
          %167 = dma.done [#allocation3], 21888
        $region36: #{tpu_custom_call.1} parent=31 // pred_fallthru
          _
        // Predicated region
        $region37: #{tpu_custom_call.1} parent=31 // pred_check
          %p168 = pneg %p79
        $region38: #{tpu_custom_call.1} parent=31 // pred_check_branch
          %170 = sbr.rel (%p168) target = $region40
        $region39: #{tpu_custom_call.1} parent=31 // pred_region
          %171 = dma.done [#allocation5], 768
        $region40: #{tpu_custom_call.1} parent=31 // pred_fallthru
          _
        %p172 = scmp.lt.s32.totalorder %s16, 1
        %s173 = scalar_select %p172, %s16, 1
        %s174 = smul.addr %s173, 8
        %s175 = scalar_lea.vmem %s0, %s174
        %p176 = pneg %p37
        %p177 = pneg %p34
        %p178 = pneg %p58
        %p179 = pneg %p55
        %p180 = pneg %p79
        %p181 = pneg %p76
        %p182 = pneg %p105
        %p183 = pneg %p102
        %p184 = scmp.lt.s32.totalorder %s16, 1
        %s185 = scalar_select %p184, %s16, 1
        %s186 = smul.addr %s185, 2
        %s187 = smul.addr %s186, 8
        %s188 = scalar_lea.vmem %s3, %s187
        %p189 = scmp.lt.s32.totalorder %s16, 1
        %s190 = scalar_select %p189, %s16, 1
        %s191 = smul.addr %s190, 8
        %s192 = scalar_lea.vmem %s0, %s191
        %p193 = scmp.lt.s32.totalorder %s16, 1
        %s194 = scalar_select %p193, %s16, 1
        %s195 = smul.addr %s194, 2
        %s196 = smul.addr %s195, 8
        %s197 = scalar_lea.vmem %s3, %s196
        %v199 = vld [vmem:[%s192] sm:$0xff]
        %v200 = vld [vmem:[#allocation2] sm:$0x3]
        %v201 = vld [vmem:[#allocation2 + $0x8] sm:$0x3]
        %v202 = vld [vmem:[#allocation2 + $0x10] sm:$0x3]
        %v203 = vlaneseq
        %v204 = vshrl.u32 %v203, 7
        %vm205 = vcmp.eq.s32.totalorder %v204, 0
        %vm206 = vcmp.eq.s32.totalorder %v204, 7
        %v207 = vrot.slane %v199, 7
        %v208 = vsel %vm205, 1, 0
        %vm209 = vcmp.eq.s32.totalorder %v208, 1
        %v210 = vsel %vm209, 0.0, %v207
        %v211 = vrot.slane %v199, 1
        %v212 = vsel %vm206, 1, 0
        %vm213 = vcmp.eq.s32.totalorder %v212, 1
        %v214 = vsel %vm213, 0.0, %v211
        %v215 = vpack.c.bf16 %v210, %v210
        %v216 = vpack.c.bf16 %v214, %v214
        %v217 = vpack.c.bf16 %v199, %v199
        %vm218 = vcmask 31744
        %v220 = vsel %vm218, %v217, 0
        %vm222 = vcmask 1041408
        %v224 = vsel %vm222, %v201, 0
        %226 = vmatprep.subr.bf16.mxu0 0
        %227 = vmatpush1.bf16.msra.mxu0 0
        %228 = vmatprep.subr.bf16.mxu0 0
        %229 = vmatpush1.bf16.msra.mxu0 0
        %230 = vmatprep.subr.bf16.mxu0 0
        %231 = vmatpush1.bf16.msra.mxu0 0
        %232 = vmatprep.subr.bf16.mxu0 0
        %233 = vmatpush1.bf16.msra.mxu0 0
        %234 = vmatprep.subr.bf16.mxu0 0
        %235 = vmatpush1.bf16.msra.mxu0 0
        %236 = vmatprep.subr.bf16.mxu0 0
        %237 = vmatpush1.bf16.msra.mxu0 0
        %238 = vmatprep.subr.bf16.mxu0 0
        %239 = vmatpush1.bf16.msra.mxu0 0
        %240 = vmatprep.subr.bf16.mxu0 0
        %241 = vmatpush1.bf16.msra.mxu0 %v224
        %242 = vmatprep.subr.bf16.mxu0 0
        %243 = vmatpush2.bf16.msra.mxu0 0
        %244 = vmatprep.subr.bf16.mxu0 0
        %245 = vmatpush2.bf16.msra.mxu0 0
        %246 = vmatprep.subr.bf16.mxu0 0
        %247 = vmatpush2.bf16.msra.mxu0 0
        %248 = vmatprep.subr.bf16.mxu0 0
        %249 = vmatpush2.bf16.msra.mxu0 0
        %250 = vmatprep.subr.bf16.mxu0 0
        %251 = vmatpush2.bf16.msra.mxu0 0
        %252 = vmatprep.subr.bf16.mxu0 0
        %253 = vmatpush2.bf16.msra.mxu0 0
        %254 = vmatprep.subr.bf16.mxu0 0
        %255 = vmatpush2.bf16.msra.mxu0 0
        %256 = vmatprep.subr.bf16.mxu0 0
        %257 = vmatpush2.bf16.msra.mxu0 0
        %258 = vmatprep.mubr.bf16.mxu0 0
        %259 = vmatmul.mubr.bf16.gmra.mxu0 %v220
        %v260 = vpop.f32.mrf.mxu0
        %v261 = vadd.f32 0.0, %v260
        %v262 = vpop.f32.mrf.mxu0
        %v263 = vpop.f32.mrf.mxu0
        %v264 = vpop.f32.mrf.mxu0
        %265 = vdwg.mxu0
        %v267 = vsel %vm218, %v215, 0
        %v270 = vsel %vm222, %v200, 0
        %272 = vmatprep.subr.bf16.mxu0 0
        %273 = vmatpush1.bf16.msra.mxu0 0
        %274 = vmatprep.subr.bf16.mxu0 0
        %275 = vmatpush1.bf16.msra.mxu0 0
        %276 = vmatprep.subr.bf16.mxu0 0
        %277 = vmatpush1.bf16.msra.mxu0 0
        %278 = vmatprep.subr.bf16.mxu0 0
        %279 = vmatpush1.bf16.msra.mxu0 0
        %280 = vmatprep.subr.bf16.mxu0 0
        %281 = vmatpush1.bf16.msra.mxu0 0
        %282 = vmatprep.subr.bf16.mxu0 0
        %283 = vmatpush1.bf16.msra.mxu0 0
        %284 = vmatprep.subr.bf16.mxu0 0
        %285 = vmatpush1.bf16.msra.mxu0 0
        %286 = vmatprep.subr.bf16.mxu0 0
        %287 = vmatpush1.bf16.msra.mxu0 %v270
        %288 = vmatprep.subr.bf16.mxu0 0
        %289 = vmatpush2.bf16.msra.mxu0 0
        %290 = vmatprep.subr.bf16.mxu0 0
        %291 = vmatpush2.bf16.msra.mxu0 0
        %292 = vmatprep.subr.bf16.mxu0 0
        %293 = vmatpush2.bf16.msra.mxu0 0
        %294 = vmatprep.subr.bf16.mxu0 0
        %295 = vmatpush2.bf16.msra.mxu0 0
        %296 = vmatprep.subr.bf16.mxu0 0
        %297 = vmatpush2.bf16.msra.mxu0 0
        %298 = vmatprep.subr.bf16.mxu0 0
        %299 = vmatpush2.bf16.msra.mxu0 0
        %300 = vmatprep.subr.bf16.mxu0 0
        %301 = vmatpush2.bf16.msra.mxu0 0
        %302 = vmatprep.subr.bf16.mxu0 0
        %303 = vmatpush2.bf16.msra.mxu0 0
        %304 = vmatprep.mubr.bf16.mxu0 0
        %305 = vmatmul.mubr.bf16.gmra.mxu0 %v267
        %v306 = vpop.f32.mrf.mxu0
        %v307 = vadd.f32 %v261, %v306
        %v308 = vpop.f32.mrf.mxu0
        %v309 = vpop.f32.mrf.mxu0
        %v310 = vpop.f32.mrf.mxu0
        %311 = vdwg.mxu0
        %v313 = vsel %vm218, %v216, 0
        %v316 = vsel %vm222, %v202, 0
        %318 = vmatprep.subr.bf16.mxu0 0
        %319 = vmatpush1.bf16.msra.mxu0 0
        %320 = vmatprep.subr.bf16.mxu0 0
        %321 = vmatpush1.bf16.msra.mxu0 0
        %322 = vmatprep.subr.bf16.mxu0 0
        %323 = vmatpush1.bf16.msra.mxu0 0
        %324 = vmatprep.subr.bf16.mxu0 0
        %325 = vmatpush1.bf16.msra.mxu0 0
        %326 = vmatprep.subr.bf16.mxu0 0
        %327 = vmatpush1.bf16.msra.mxu0 0
        %328 = vmatprep.subr.bf16.mxu0 0
        %329 = vmatpush1.bf16.msra.mxu0 0
        %330 = vmatprep.subr.bf16.mxu0 0
        %331 = vmatpush1.bf16.msra.mxu0 0
        %332 = vmatprep.subr.bf16.mxu0 0
        %333 = vmatpush1.bf16.msra.mxu0 %v316
        %334 = vmatprep.subr.bf16.mxu0 0
        %335 = vmatpush2.bf16.msra.mxu0 0
        %336 = vmatprep.subr.bf16.mxu0 0
        %337 = vmatpush2.bf16.msra.mxu0 0
        %338 = vmatprep.subr.bf16.mxu0 0
        %339 = vmatpush2.bf16.msra.mxu0 0
        %340 = vmatprep.subr.bf16.mxu0 0
        %341 = vmatpush2.bf16.msra.mxu0 0
        %342 = vmatprep.subr.bf16.mxu0 0
        %343 = vmatpush2.bf16.msra.mxu0 0
        %344 = vmatprep.subr.bf16.mxu0 0
        %345 = vmatpush2.bf16.msra.mxu0 0
        %346 = vmatprep.subr.bf16.mxu0 0
        %347 = vmatpush2.bf16.msra.mxu0 0
        %348 = vmatprep.subr.bf16.mxu0 0
        %349 = vmatpush2.bf16.msra.mxu0 0
        %350 = vmatprep.mubr.bf16.mxu0 0
        %351 = vmatmul.mubr.bf16.gmra.mxu0 %v313
        %v352 = vpop.f32.mrf.mxu0
        %v353 = vadd.f32 0.0, %v352
        %v354 = vpop.f32.mrf.mxu0
        %v355 = vpop.f32.mrf.mxu0
        %v356 = vpop.f32.mrf.mxu0
        %357 = vdwg.mxu0
        %v358 = vadd.f32 %v307, %v353
        %v359 = vld [vmem:[#allocation4] sm:$0x1]
        %v360 = vlaneseq
        %v361 = vshrl.u32 %v360, 7
        %v362 = vsub.s32 0, %v361
        %v363 = vrot.slane %v359, %v362
        %v364 = vadd.f32 %v358, %v363
        %vm365 = vcmask 523264
        %v366 = vsel %vm365, %v364, 0.0
        %367 = vadd.xlane.f32.xlu0 %v366
        %v368 = vpop.xlane.xlu0 %367
        %v369 = vrcp.pop 64.0
        %v370 = vmul.f32 %v368, %v369
        %v371 = vsub.f32 %v364, %v370
        %v372 = vmul.f32 %v371, %v371
        %v373 = vsel %vm365, %v372, 0.0
        %374 = vadd.xlane.f32.xlu0 %v373
        %v375 = vpop.xlane.xlu0 %374
        %v376 = vmul.f32 %v375, %v369
        %v377 = vadd.f32 %v376, 1e-06
        %v378 = vrsqrt.pop %v377
        %v379 = vmul.f32 %v371, %v378
        %v380 = vld [vmem:[#allocation4 + $0x1] sm:$0x1]
        %v381 = vlaneseq
        %v382 = vshrl.u32 %v381, 7
        %v383 = vsub.s32 0, %v382
        %v384 = vrot.slane %v380, %v383
        %v385 = vmul.f32 %v379, %v384
        %v386 = vld [vmem:[#allocation4 + $0x2] sm:$0x1]
        %v387 = vlaneseq
        %v388 = vshrl.u32 %v387, 7
        %v389 = vsub.s32 0, %v388
        %v390 = vrot.slane %v386, %v389
        %v391 = vadd.f32 %v385, %v390
        %v392 = vxor.u32 %v391, 2147483648
        %v393 = vmul.f32 %v392, 1.442695
        %v394 = vpow.pop %v393
        %v395 = vadd.f32 %v394, 1.0
        %v396 = vrcp.pop %v395
        %v397 = vmul.f32 1.0, %v396
        %v398 = vmul.f32 %v391, %v397
        %v399 = vld [vmem:[#allocation2 + $0x18] sm:$0xf]
        %v400 = vld [vmem:[#allocation2 + $0x1c] sm:$0xf]
        %v401 = vld [vmem:[#allocation2 + $0x20] sm:$0xf]
        %v402 = vld [vmem:[#allocation2 + $0x24] sm:$0xf]
        %v403 = vld [vmem:[#allocation2 + $0x28] sm:$0xf]
        %v404 = vld [vmem:[#allocation2 + $0x2c] sm:$0xf]
        %v405 = vld [vmem:[#allocation2 + $0x30] sm:$0xf]
        %v406 = vld [vmem:[#allocation2 + $0x34] sm:$0xf]
        %v407 = vld [vmem:[#allocation2 + $0x38] sm:$0xf]
        %v408 = vld [vmem:[#allocation2 + $0x3c] sm:$0xf]
        %v409 = vld [vmem:[#allocation2 + $0x40] sm:$0xf]
        %v410 = vld [vmem:[#allocation2 + $0x44] sm:$0xf]
        %v411 = vld [vmem:[#allocation2 + $0x48] sm:$0xf]
        %v412 = vld [vmem:[#allocation2 + $0x4c] sm:$0xf]
        %v413 = vld [vmem:[#allocation2 + $0x50] sm:$0xf]
        %v414 = vld [vmem:[#allocation2 + $0x54] sm:$0xf]
        %v415 = vld [vmem:[#allocation2 + $0x58] sm:$0xf]
        %v416 = vld [vmem:[#allocation2 + $0x5c] sm:$0xf]
        %v417 = vld [vmem:[#allocation2 + $0x60] sm:$0xf]
        %v418 = vld [vmem:[#allocation2 + $0x64] sm:$0xf]
        %v419 = vld [vmem:[#allocation2 + $0x68] sm:$0xf]
        %v420 = vld [vmem:[#allocation2 + $0x6c] sm:$0xf]
        %v421 = vld [vmem:[#allocation2 + $0x70] sm:$0xf]
        %v422 = vld [vmem:[#allocation2 + $0x74] sm:$0xf]
        %v423 = vrot.slane %v398, 7
        %v424 = vsel %vm209, 0.0, %v423
        %v425 = vrot.slane %v398, 1
        %v426 = vsel %vm213, 0.0, %v425
        %v427 = vpack.c.bf16 %v424, %v424
        %v428 = vpack.c.bf16 %v426, %v426
        %v429 = vpack.c.bf16 %v398, %v398
        %v438 = vunpack.c.l.b16 %v407
        %v439 = vunpack.c.l.b16 %v408
        %v440 = vunpack.c.l.b16 %v409
        %v441 = vunpack.c.l.b16 %v410
        %v442 = vunpack.c.l.b16 %v411
        %v443 = vunpack.c.l.b16 %v412
        %v444 = vunpack.c.l.b16 %v413
        %v445 = vunpack.c.l.b16 %v414
        %v446 = vpack.c.b16 %v439, %v438
        %v447 = vpack.c.b16 %v441, %v440
        %v448 = vpack.c.b16 %v443, %v442
        %v449 = vpack.c.b16 %v445, %v444
        %v455 = vsel %vm365, %v429, 0
        %457 = vmatprep.subr.bf16.mxu0 0
        %458 = vmatpush1.bf16.msra.mxu0 0
        %459 = vmatprep.subr.bf16.mxu0 0
        %460 = vmatpush1.bf16.msra.mxu0 0
        %461 = vmatprep.subr.bf16.mxu0 0
        %462 = vmatpush1.bf16.msra.mxu0 0
        %463 = vmatprep.subr.bf16.mxu0 0
        %464 = vmatpush1.bf16.msra.mxu0 0
        %465 = vmatprep.subr.bf16.mxu0 0
        %466 = vmatpush1.bf16.msra.mxu0 %v449
        %467 = vmatprep.subr.bf16.mxu0 0
        %468 = vmatpush1.bf16.msra.mxu0 %v448
        %469 = vmatprep.subr.bf16.mxu0 0
        %470 = vmatpush1.bf16.msra.mxu0 %v447
        %471 = vmatprep.subr.bf16.mxu0 0
        %472 = vmatpush1.bf16.msra.mxu0 %v446
        %473 = vmatprep.subr.bf16.mxu0 0
        %474 = vmatpush2.bf16.msra.mxu0 0
        %475 = vmatprep.subr.bf16.mxu0 0
        %476 = vmatpush2.bf16.msra.mxu0 0
        %477 = vmatprep.subr.bf16.mxu0 0
        %478 = vmatpush2.bf16.msra.mxu0 0
        %479 = vmatprep.subr.bf16.mxu0 0
        %480 = vmatpush2.bf16.msra.mxu0 0
        %481 = vmatprep.subr.bf16.mxu0 0
        %482 = vmatpush2.bf16.msra.mxu0 0
        %483 = vmatprep.subr.bf16.mxu0 0
        %484 = vmatpush2.bf16.msra.mxu0 0
        %485 = vmatprep.subr.bf16.mxu0 0
        %486 = vmatpush2.bf16.msra.mxu0 0
        %487 = vmatprep.subr.bf16.mxu0 0
        %488 = vmatpush2.bf16.msra.mxu0 0
        %489 = vmatprep.mubr.bf16.mxu0 0
        %490 = vmatmul.mubr.bf16.gmra.mxu0 %v455
        %v491 = vpop.f32.mrf.mxu0
        %v492 = vadd.f32 0.0, %v491
        %v493 = vpop.f32.mrf.mxu0
        %v494 = vpop.f32.mrf.mxu0
        %v495 = vpop.f32.mrf.mxu0
        %496 = vdwg.mxu0
        %v505 = vunpack.c.l.b16 %v399
        %v506 = vunpack.c.l.b16 %v400
        %v507 = vunpack.c.l.b16 %v401
        %v508 = vunpack.c.l.b16 %v402
        %v509 = vunpack.c.l.b16 %v403
        %v510 = vunpack.c.l.b16 %v404
        %v511 = vunpack.c.l.b16 %v405
        %v512 = vunpack.c.l.b16 %v406
        %v513 = vpack.c.b16 %v506, %v505
        %v514 = vpack.c.b16 %v508, %v507
        %v515 = vpack.c.b16 %v510, %v509
        %v516 = vpack.c.b16 %v512, %v511
        %v522 = vsel %vm365, %v427, 0
        %524 = vmatprep.subr.bf16.mxu0 0
        %525 = vmatpush1.bf16.msra.mxu0 0
        %526 = vmatprep.subr.bf16.mxu0 0
        %527 = vmatpush1.bf16.msra.mxu0 0
        %528 = vmatprep.subr.bf16.mxu0 0
        %529 = vmatpush1.bf16.msra.mxu0 0
        %530 = vmatprep.subr.bf16.mxu0 0
        %531 = vmatpush1.bf16.msra.mxu0 0
        %532 = vmatprep.subr.bf16.mxu0 0
        %533 = vmatpush1.bf16.msra.mxu0 %v516
        %534 = vmatprep.subr.bf16.mxu0 0
        %535 = vmatpush1.bf16.msra.mxu0 %v515
        %536 = vmatprep.subr.bf16.mxu0 0
        %537 = vmatpush1.bf16.msra.mxu0 %v514
        %538 = vmatprep.subr.bf16.mxu0 0
        %539 = vmatpush1.bf16.msra.mxu0 %v513
        %540 = vmatprep.subr.bf16.mxu0 0
        %541 = vmatpush2.bf16.msra.mxu0 0
        %542 = vmatprep.subr.bf16.mxu0 0
        %543 = vmatpush2.bf16.msra.mxu0 0
        %544 = vmatprep.subr.bf16.mxu0 0
        %545 = vmatpush2.bf16.msra.mxu0 0
        %546 = vmatprep.subr.bf16.mxu0 0
        %547 = vmatpush2.bf16.msra.mxu0 0
        %548 = vmatprep.subr.bf16.mxu0 0
        %549 = vmatpush2.bf16.msra.mxu0 0
        %550 = vmatprep.subr.bf16.mxu0 0
        %551 = vmatpush2.bf16.msra.mxu0 0
        %552 = vmatprep.subr.bf16.mxu0 0
        %553 = vmatpush2.bf16.msra.mxu0 0
        %554 = vmatprep.subr.bf16.mxu0 0
        %555 = vmatpush2.bf16.msra.mxu0 0
        %556 = vmatprep.mubr.bf16.mxu0 0
        %557 = vmatmul.mubr.bf16.gmra.mxu0 %v522
        %v558 = vpop.f32.mrf.mxu0
        %v559 = vadd.f32 %v492, %v558
        %v560 = vpop.f32.mrf.mxu0
        %v561 = vpop.f32.mrf.mxu0
        %v562 = vpop.f32.mrf.mxu0
        %563 = vdwg.mxu0
        %v572 = vunpack.c.l.b16 %v415
        %v573 = vunpack.c.l.b16 %v416
        %v574 = vunpack.c.l.b16 %v417
        %v575 = vunpack.c.l.b16 %v418
        %v576 = vunpack.c.l.b16 %v419
        %v577 = vunpack.c.l.b16 %v420
        %v578 = vunpack.c.l.b16 %v421
        %v579 = vunpack.c.l.b16 %v422
        %v580 = vpack.c.b16 %v573, %v572
        %v581 = vpack.c.b16 %v575, %v574
        %v582 = vpack.c.b16 %v577, %v576
        %v583 = vpack.c.b16 %v579, %v578
        %v589 = vsel %vm365, %v428, 0
        %591 = vmatprep.subr.bf16.mxu0 0
        %592 = vmatpush1.bf16.msra.mxu0 0
        %593 = vmatprep.subr.bf16.mxu0 0
        %594 = vmatpush1.bf16.msra.mxu0 0
        %595 = vmatprep.subr.bf16.mxu0 0
        %596 = vmatpush1.bf16.msra.mxu0 0
        %597 = vmatprep.subr.bf16.mxu0 0
        %598 = vmatpush1.bf16.msra.mxu0 0
        %599 = vmatprep.subr.bf16.mxu0 0
        %600 = vmatpush1.bf16.msra.mxu0 %v583
        %601 = vmatprep.subr.bf16.mxu0 0
        %602 = vmatpush1.bf16.msra.mxu0 %v582
        %603 = vmatprep.subr.bf16.mxu0 0
        %604 = vmatpush1.bf16.msra.mxu0 %v581
        %605 = vmatprep.subr.bf16.mxu0 0
        %606 = vmatpush1.bf16.msra.mxu0 %v580
        %607 = vmatprep.subr.bf16.mxu0 0
        %608 = vmatpush2.bf16.msra.mxu0 0
        %609 = vmatprep.subr.bf16.mxu0 0
        %610 = vmatpush2.bf16.msra.mxu0 0
        %611 = vmatprep.subr.bf16.mxu0 0
        %612 = vmatpush2.bf16.msra.mxu0 0
        %613 = vmatprep.subr.bf16.mxu0 0
        %614 = vmatpush2.bf16.msra.mxu0 0
        %615 = vmatprep.subr.bf16.mxu0 0
        %616 = vmatpush2.bf16.msra.mxu0 0
        %617 = vmatprep.subr.bf16.mxu0 0
        %618 = vmatpush2.bf16.msra.mxu0 0
        %619 = vmatprep.subr.bf16.mxu0 0
        %620 = vmatpush2.bf16.msra.mxu0 0
        %621 = vmatprep.subr.bf16.mxu0 0
        %622 = vmatpush2.bf16.msra.mxu0 0
        %623 = vmatprep.mubr.bf16.mxu0 0
        %624 = vmatmul.mubr.bf16.gmra.mxu0 %v589
        %v625 = vpop.f32.mrf.mxu0
        %v626 = vadd.f32 0.0, %v625
        %v627 = vpop.f32.mrf.mxu0
        %v628 = vpop.f32.mrf.mxu0
        %v629 = vpop.f32.mrf.mxu0
        %630 = vdwg.mxu0
        %v631 = vadd.f32 %v559, %v626
        %v632 = vld [vmem:[#allocation4 + $0x3] sm:$0x1]
        %v633 = vlaneseq
        %v634 = vshrl.u32 %v633, 7
        %v635 = vsub.s32 0, %v634
        %v636 = vrot.slane %v632, %v635
        %v637 = vadd.f32 %v631, %v636
        %v638 = vsel %vm365, %v637, 0.0
        %639 = vadd.xlane.f32.xlu0 %v638
        %v640 = vpop.xlane.xlu0 %639
        %v641 = vmul.f32 %v640, %v369
        %v642 = vsub.f32 %v637, %v641
        %v643 = vmul.f32 %v642, %v642
        %v644 = vsel %vm365, %v643, 0.0
        %645 = vadd.xlane.f32.xlu0 %v644
        %v646 = vpop.xlane.xlu0 %645
        %v647 = vmul.f32 %v646, %v369
        %v648 = vadd.f32 %v647, 1e-06
        %v649 = vrsqrt.pop %v648
        %v650 = vmul.f32 %v642, %v649
        %v651 = vld [vmem:[#allocation4 + $0x4] sm:$0x1]
        %v652 = vlaneseq
        %v653 = vshrl.u32 %v652, 7
        %v654 = vsub.s32 0, %v653
        %v655 = vrot.slane %v651, %v654
        %v656 = vmul.f32 %v650, %v655
        %v657 = vld [vmem:[#allocation4 + $0x5] sm:$0x1]
        %v658 = vlaneseq
        %v659 = vshrl.u32 %v658, 7
        %v660 = vsub.s32 0, %v659
        %v661 = vrot.slane %v657, %v660
        %v662 = vadd.f32 %v656, %v661
        %v663 = vxor.u32 %v662, 2147483648
        %v664 = vmul.f32 %v663, 1.442695
        %v665 = vpow.pop %v664
        %v666 = vadd.f32 %v665, 1.0
        %v667 = vrcp.pop %v666
        %v668 = vmul.f32 1.0, %v667
        %v669 = vmul.f32 %v662, %v668
        %v670 = vld [vmem:[#allocation2 + $0x78] sm:$0xf]
        %v671 = vld [vmem:[#allocation2 + $0x7c] sm:$0xf]
        %v672 = vld [vmem:[#allocation2 + $0x80] sm:$0xf]
        %v673 = vld [vmem:[#allocation2 + $0x84] sm:$0xf]
        %v674 = vld [vmem:[#allocation2 + $0x88] sm:$0xf]
        %v675 = vld [vmem:[#allocation2 + $0x8c] sm:$0xf]
        %v676 = vld [vmem:[#allocation2 + $0x90] sm:$0xf]
        %v677 = vld [vmem:[#allocation2 + $0x94] sm:$0xf]
        %v678 = vld [vmem:[#allocation2 + $0x98] sm:$0xf]
        %v679 = vld [vmem:[#allocation2 + $0x9c] sm:$0xf]
        %v680 = vld [vmem:[#allocation2 + $0xa0] sm:$0xf]
        %v681 = vld [vmem:[#allocation2 + $0xa4] sm:$0xf]
        %v682 = vld [vmem:[#allocation2 + $0xa8] sm:$0xf]
        %v683 = vld [vmem:[#allocation2 + $0xac] sm:$0xf]
        %v684 = vld [vmem:[#allocation2 + $0xb0] sm:$0xf]
        %v685 = vld [vmem:[#allocation2 + $0xb4] sm:$0xf]
        %v686 = vld [vmem:[#allocation2 + $0xb8] sm:$0xf]
        %v687 = vld [vmem:[#allocation2 + $0xbc] sm:$0xf]
        %v688 = vld [vmem:[#allocation2 + $0xc0] sm:$0xf]
        %v689 = vld [vmem:[#allocation2 + $0xc4] sm:$0xf]
        %v690 = vld [vmem:[#allocation2 + $0xc8] sm:$0xf]
        %v691 = vld [vmem:[#allocation2 + $0xcc] sm:$0xf]
        %v692 = vld [vmem:[#allocation2 + $0xd0] sm:$0xf]
        %v693 = vld [vmem:[#allocation2 + $0xd4] sm:$0xf]
        %v694 = vrot.slane %v669, 7
        %v695 = vsel %vm209, 0.0, %v694
        %v696 = vrot.slane %v669, 1
        %v697 = vsel %vm213, 0.0, %v696
        %v698 = vpack.c.bf16 %v695, %v695
        %v699 = vpack.c.bf16 %v697, %v697
        %v700 = vpack.c.bf16 %v669, %v669
        %v709 = vunpack.c.l.b16 %v678
        %v710 = vunpack.c.l.b16 %v679
        %v711 = vunpack.c.l.b16 %v680
        %v712 = vunpack.c.l.b16 %v681
        %v713 = vunpack.c.l.b16 %v682
        %v714 = vunpack.c.l.b16 %v683
        %v715 = vunpack.c.l.b16 %v684
        %v716 = vunpack.c.l.b16 %v685
        %v717 = vpack.c.b16 %v710, %v709
        %v718 = vpack.c.b16 %v712, %v711
        %v719 = vpack.c.b16 %v714, %v713
        %v720 = vpack.c.b16 %v716, %v715
        %v726 = vsel %vm365, %v700, 0
        %728 = vmatprep.subr.bf16.mxu0 0
        %729 = vmatpush1.bf16.msra.mxu0 0
        %730 = vmatprep.subr.bf16.mxu0 0
        %731 = vmatpush1.bf16.msra.mxu0 0
        %732 = vmatprep.subr.bf16.mxu0 0
        %733 = vmatpush1.bf16.msra.mxu0 0
        %734 = vmatprep.subr.bf16.mxu0 0
        %735 = vmatpush1.bf16.msra.mxu0 0
        %736 = vmatprep.subr.bf16.mxu0 0
        %737 = vmatpush1.bf16.msra.mxu0 %v720
        %738 = vmatprep.subr.bf16.mxu0 0
        %739 = vmatpush1.bf16.msra.mxu0 %v719
        %740 = vmatprep.subr.bf16.mxu0 0
        %741 = vmatpush1.bf16.msra.mxu0 %v718
        %742 = vmatprep.subr.bf16.mxu0 0
        %743 = vmatpush1.bf16.msra.mxu0 %v717
        %744 = vmatprep.subr.bf16.mxu0 0
        %745 = vmatpush2.bf16.msra.mxu0 0
        %746 = vmatprep.subr.bf16.mxu0 0
        %747 = vmatpush2.bf16.msra.mxu0 0
        %748 = vmatprep.subr.bf16.mxu0 0
        %749 = vmatpush2.bf16.msra.mxu0 0
        %750 = vmatprep.subr.bf16.mxu0 0
        %751 = vmatpush2.bf16.msra.mxu0 0
        %752 = vmatprep.subr.bf16.mxu0 0
        %753 = vmatpush2.bf16.msra.mxu0 0
        %754 = vmatprep.subr.bf16.mxu0 0
        %755 = vmatpush2.bf16.msra.mxu0 0
        %756 = vmatprep.subr.bf16.mxu0 0
        %757 = vmatpush2.bf16.msra.mxu0 0
        %758 = vmatprep.subr.bf16.mxu0 0
        %759 = vmatpush2.bf16.msra.mxu0 0
        %760 = vmatprep.mubr.bf16.mxu0 0
        %761 = vmatmul.mubr.bf16.gmra.mxu0 %v726
        %v762 = vpop.f32.mrf.mxu0
        %v763 = vadd.f32 0.0, %v762
        %v764 = vpop.f32.mrf.mxu0
        %v765 = vpop.f32.mrf.mxu0
        %v766 = vpop.f32.mrf.mxu0
        %767 = vdwg.mxu0
        %v776 = vunpack.c.l.b16 %v670
        %v777 = vunpack.c.l.b16 %v671
        %v778 = vunpack.c.l.b16 %v672
        %v779 = vunpack.c.l.b16 %v673
        %v780 = vunpack.c.l.b16 %v674
        %v781 = vunpack.c.l.b16 %v675
        %v782 = vunpack.c.l.b16 %v676
        %v783 = vunpack.c.l.b16 %v677
        %v784 = vpack.c.b16 %v777, %v776
        %v785 = vpack.c.b16 %v779, %v778
        %v786 = vpack.c.b16 %v781, %v780
        %v787 = vpack.c.b16 %v783, %v782
        %v793 = vsel %vm365, %v698, 0
        %795 = vmatprep.subr.bf16.mxu0 0
        %796 = vmatpush1.bf16.msra.mxu0 0
        %797 = vmatprep.subr.bf16.mxu0 0
        %798 = vmatpush1.bf16.msra.mxu0 0
        %799 = vmatprep.subr.bf16.mxu0 0
        %800 = vmatpush1.bf16.msra.mxu0 0
        %801 = vmatprep.subr.bf16.mxu0 0
        %802 = vmatpush1.bf16.msra.mxu0 0
        %803 = vmatprep.subr.bf16.mxu0 0
        %804 = vmatpush1.bf16.msra.mxu0 %v787
        %805 = vmatprep.subr.bf16.mxu0 0
        %806 = vmatpush1.bf16.msra.mxu0 %v786
        %807 = vmatprep.subr.bf16.mxu0 0
        %808 = vmatpush1.bf16.msra.mxu0 %v785
        %809 = vmatprep.subr.bf16.mxu0 0
        %810 = vmatpush1.bf16.msra.mxu0 %v784
        %811 = vmatprep.subr.bf16.mxu0 0
        %812 = vmatpush2.bf16.msra.mxu0 0
        %813 = vmatprep.subr.bf16.mxu0 0
        %814 = vmatpush2.bf16.msra.mxu0 0
        %815 = vmatprep.subr.bf16.mxu0 0
        %816 = vmatpush2.bf16.msra.mxu0 0
        %817 = vmatprep.subr.bf16.mxu0 0
        %818 = vmatpush2.bf16.msra.mxu0 0
        %819 = vmatprep.subr.bf16.mxu0 0
        %820 = vmatpush2.bf16.msra.mxu0 0
        %821 = vmatprep.subr.bf16.mxu0 0
        %822 = vmatpush2.bf16.msra.mxu0 0
        %823 = vmatprep.subr.bf16.mxu0 0
        %824 = vmatpush2.bf16.msra.mxu0 0
        %825 = vmatprep.subr.bf16.mxu0 0
        %826 = vmatpush2.bf16.msra.mxu0 0
        %827 = vmatprep.mubr.bf16.mxu0 0
        %828 = vmatmul.mubr.bf16.gmra.mxu0 %v793
        %v829 = vpop.f32.mrf.mxu0
        %v830 = vadd.f32 %v763, %v829
        %v831 = vpop.f32.mrf.mxu0
        %v832 = vpop.f32.mrf.mxu0
        %v833 = vpop.f32.mrf.mxu0
        %834 = vdwg.mxu0
        %v843 = vunpack.c.l.b16 %v686
        %v844 = vunpack.c.l.b16 %v687
        %v845 = vunpack.c.l.b16 %v688
        %v846 = vunpack.c.l.b16 %v689
        %v847 = vunpack.c.l.b16 %v690
        %v848 = vunpack.c.l.b16 %v691
        %v849 = vunpack.c.l.b16 %v692
        %v850 = vunpack.c.l.b16 %v693
        %v851 = vpack.c.b16 %v844, %v843
        %v852 = vpack.c.b16 %v846, %v845
        %v853 = vpack.c.b16 %v848, %v847
        %v854 = vpack.c.b16 %v850, %v849
        %v860 = vsel %vm365, %v699, 0
        %862 = vmatprep.subr.bf16.mxu0 0
        %863 = vmatpush1.bf16.msra.mxu0 0
        %864 = vmatprep.subr.bf16.mxu0 0
        %865 = vmatpush1.bf16.msra.mxu0 0
        %866 = vmatprep.subr.bf16.mxu0 0
        %867 = vmatpush1.bf16.msra.mxu0 0
        %868 = vmatprep.subr.bf16.mxu0 0
        %869 = vmatpush1.bf16.msra.mxu0 0
        %870 = vmatprep.subr.bf16.mxu0 0
        %871 = vmatpush1.bf16.msra.mxu0 %v854
        %872 = vmatprep.subr.bf16.mxu0 0
        %873 = vmatpush1.bf16.msra.mxu0 %v853
        %874 = vmatprep.subr.bf16.mxu0 0
        %875 = vmatpush1.bf16.msra.mxu0 %v852
        %876 = vmatprep.subr.bf16.mxu0 0
        %877 = vmatpush1.bf16.msra.mxu0 %v851
        %878 = vmatprep.subr.bf16.mxu0 0
        %879 = vmatpush2.bf16.msra.mxu0 0
        %880 = vmatprep.subr.bf16.mxu0 0
        %881 = vmatpush2.bf16.msra.mxu0 0
        %882 = vmatprep.subr.bf16.mxu0 0
        %883 = vmatpush2.bf16.msra.mxu0 0
        %884 = vmatprep.subr.bf16.mxu0 0
        %885 = vmatpush2.bf16.msra.mxu0 0
        %886 = vmatprep.subr.bf16.mxu0 0
        %887 = vmatpush2.bf16.msra.mxu0 0
        %888 = vmatprep.subr.bf16.mxu0 0
        %889 = vmatpush2.bf16.msra.mxu0 0
        %890 = vmatprep.subr.bf16.mxu0 0
        %891 = vmatpush2.bf16.msra.mxu0 0
        %892 = vmatprep.subr.bf16.mxu0 0
        %893 = vmatpush2.bf16.msra.mxu0 0
        %894 = vmatprep.mubr.bf16.mxu0 0
        %895 = vmatmul.mubr.bf16.gmra.mxu0 %v860
        %v896 = vpop.f32.mrf.mxu0
        %v897 = vadd.f32 0.0, %v896
        %v898 = vpop.f32.mrf.mxu0
        %v899 = vpop.f32.mrf.mxu0
        %v900 = vpop.f32.mrf.mxu0
        %901 = vdwg.mxu0
        %v902 = vadd.f32 %v830, %v897
        %v903 = vld [vmem:[#allocation4 + $0x6] sm:$0x1]
        %v904 = vlaneseq
        %v905 = vshrl.u32 %v904, 7
        %v906 = vsub.s32 0, %v905
        %v907 = vrot.slane %v903, %v906
        %v908 = vadd.f32 %v902, %v907
        %v909 = vadd.f32 %v364, %v908
        %v910 = vsel %vm365, %v909, 0.0
        %911 = vadd.xlane.f32.xlu0 %v910
        %v912 = vpop.xlane.xlu0 %911
        %v913 = vmul.f32 %v912, %v369
        %v914 = vsub.f32 %v909, %v913
        %v915 = vmul.f32 %v914, %v914
        %v916 = vsel %vm365, %v915, 0.0
        %917 = vadd.xlane.f32.xlu0 %v916
        %v918 = vpop.xlane.xlu0 %917
        %v919 = vmul.f32 %v918, %v369
        %v920 = vadd.f32 %v919, 1e-06
        %v921 = vrsqrt.pop %v920
        %v922 = vmul.f32 %v914, %v921
        %v923 = vld [vmem:[#allocation4 + $0x7] sm:$0x1]
        %v924 = vlaneseq
        %v925 = vshrl.u32 %v924, 7
        %v926 = vsub.s32 0, %v925
        %v927 = vrot.slane %v923, %v926
        %v928 = vmul.f32 %v922, %v927
        %v929 = vld [vmem:[#allocation4 + $0x8] sm:$0x1]
        %v930 = vlaneseq
        %v931 = vshrl.u32 %v930, 7
        %v932 = vsub.s32 0, %v931
        %v933 = vrot.slane %v929, %v932
        %v934 = vadd.f32 %v928, %v933
        %v935 = vpack.c.bf16 %v934, %v934
        %v936 = vld [vmem:[#allocation2 + $0xd8] sm:$0xf]
        %v937 = vld [vmem:[#allocation2 + $0xdc] sm:$0xf]
        %v938 = vld [vmem:[#allocation2 + $0xe0] sm:$0xf]
        %v939 = vld [vmem:[#allocation2 + $0xe4] sm:$0xf]
        %v940 = vld [vmem:[#allocation2 + $0xe8] sm:$0xf]
        %v941 = vld [vmem:[#allocation2 + $0xec] sm:$0xf]
        %v942 = vld [vmem:[#allocation2 + $0xf0] sm:$0xf]
        %v943 = vld [vmem:[#allocation2 + $0xf4] sm:$0xf]
        %v944 = vld [vmem:[#allocation4 + $0x9] sm:$0x1]
        %v945 = vlaneseq
        %v946 = vshrl.u32 %v945, 7
        %v947 = vsub.s32 0, %v946
        %v948 = vrot.slane %v944, %v947
        %v957 = vunpack.c.l.b16 %v936
        %v958 = vunpack.c.l.b16 %v937
        %v959 = vunpack.c.l.b16 %v938
        %v960 = vunpack.c.l.b16 %v939
        %v961 = vunpack.c.l.b16 %v940
        %v962 = vunpack.c.l.b16 %v941
        %v963 = vunpack.c.l.b16 %v942
        %v964 = vunpack.c.l.b16 %v943
        %v965 = vpack.c.b16 %v958, %v957
        %v966 = vpack.c.b16 %v960, %v959
        %v967 = vpack.c.b16 %v962, %v961
        %v968 = vpack.c.b16 %v964, %v963
        %v974 = vsel %vm365, %v935, 0
        %976 = vmatprep.subr.bf16.mxu0 0
        %977 = vmatpush1.bf16.msra.mxu0 0
        %978 = vmatprep.subr.bf16.mxu0 0
        %979 = vmatpush1.bf16.msra.mxu0 0
        %980 = vmatprep.subr.bf16.mxu0 0
        %981 = vmatpush1.bf16.msra.mxu0 0
        %982 = vmatprep.subr.bf16.mxu0 0
        %983 = vmatpush1.bf16.msra.mxu0 0
        %984 = vmatprep.subr.bf16.mxu0 0
        %985 = vmatpush1.bf16.msra.mxu0 %v968
        %986 = vmatprep.subr.bf16.mxu0 0
        %987 = vmatpush1.bf16.msra.mxu0 %v967
        %988 = vmatprep.subr.bf16.mxu0 0
        %989 = vmatpush1.bf16.msra.mxu0 %v966
        %990 = vmatprep.subr.bf16.mxu0 0
        %991 = vmatpush1.bf16.msra.mxu0 %v965
        %992 = vmatprep.subr.bf16.mxu0 0
        %993 = vmatpush2.bf16.msra.mxu0 0
        %994 = vmatprep.subr.bf16.mxu0 0
        %995 = vmatpush2.bf16.msra.mxu0 0
        %996 = vmatprep.subr.bf16.mxu0 0
        %997 = vmatpush2.bf16.msra.mxu0 0
        %998 = vmatprep.subr.bf16.mxu0 0
        %999 = vmatpush2.bf16.msra.mxu0 0
        %1000 = vmatprep.subr.bf16.mxu0 0
        %1001 = vmatpush2.bf16.msra.mxu0 0
        %1002 = vmatprep.subr.bf16.mxu0 0
        %1003 = vmatpush2.bf16.msra.mxu0 0
        %1004 = vmatprep.subr.bf16.mxu0 0
        %1005 = vmatpush2.bf16.msra.mxu0 0
        %1006 = vmatprep.subr.bf16.mxu0 0
        %1007 = vmatpush2.bf16.msra.mxu0 0
        %1008 = vmatprep.mubr.bf16.mxu0 0
        %1009 = vmatmul.mubr.bf16.gmra.mxu0 %v974
        %v1010 = vpop.f32.mrf.mxu0
        %v1011 = vadd.f32 %v948, %v1010
        %v1012 = vpop.f32.mrf.mxu0
        %v1013 = vpop.f32.mrf.mxu0
        %v1014 = vpop.f32.mrf.mxu0
        %1015 = vdwg.mxu0
        %v1016 = vld [vmem:[#allocation2 + $0xf8] sm:$0xf]
        %v1017 = vld [vmem:[#allocation2 + $0xfc] sm:$0xf]
        %v1018 = vld [vmem:[#allocation2 + $0x100] sm:$0xf]
        %v1019 = vld [vmem:[#allocation2 + $0x104] sm:$0xf]
        %v1020 = vld [vmem:[#allocation2 + $0x108] sm:$0xf]
        %v1021 = vld [vmem:[#allocation2 + $0x10c] sm:$0xf]
        %v1022 = vld [vmem:[#allocation2 + $0x110] sm:$0xf]
        %v1023 = vld [vmem:[#allocation2 + $0x114] sm:$0xf]
        %v1024 = vld [vmem:[#allocation4 + $0xa] sm:$0x1]
        %v1025 = vlaneseq
        %v1026 = vshrl.u32 %v1025, 7
        %v1027 = vsub.s32 0, %v1026
        %v1028 = vrot.slane %v1024, %v1027
        %v1037 = vunpack.c.l.b16 %v1016
        %v1038 = vunpack.c.l.b16 %v1017
        %v1039 = vunpack.c.l.b16 %v1018
        %v1040 = vunpack.c.l.b16 %v1019
        %v1041 = vunpack.c.l.b16 %v1020
        %v1042 = vunpack.c.l.b16 %v1021
        %v1043 = vunpack.c.l.b16 %v1022
        %v1044 = vunpack.c.l.b16 %v1023
        %v1045 = vpack.c.b16 %v1038, %v1037
        %v1046 = vpack.c.b16 %v1040, %v1039
        %v1047 = vpack.c.b16 %v1042, %v1041
        %v1048 = vpack.c.b16 %v1044, %v1043
        %1053 = vmatprep.subr.bf16.mxu0 0
        %1054 = vmatpush1.bf16.msra.mxu0 0
        %1055 = vmatprep.subr.bf16.mxu0 0
        %1056 = vmatpush1.bf16.msra.mxu0 0
        %1057 = vmatprep.subr.bf16.mxu0 0
        %1058 = vmatpush1.bf16.msra.mxu0 0
        %1059 = vmatprep.subr.bf16.mxu0 0
        %1060 = vmatpush1.bf16.msra.mxu0 0
        %1061 = vmatprep.subr.bf16.mxu0 0
        %1062 = vmatpush1.bf16.msra.mxu0 %v1048
        %1063 = vmatprep.subr.bf16.mxu0 0
        %1064 = vmatpush1.bf16.msra.mxu0 %v1047
        %1065 = vmatprep.subr.bf16.mxu0 0
        %1066 = vmatpush1.bf16.msra.mxu0 %v1046
        %1067 = vmatprep.subr.bf16.mxu0 0
        %1068 = vmatpush1.bf16.msra.mxu0 %v1045
        %1069 = vmatprep.subr.bf16.mxu0 0
        %1070 = vmatpush2.bf16.msra.mxu0 0
        %1071 = vmatprep.subr.bf16.mxu0 0
        %1072 = vmatpush2.bf16.msra.mxu0 0
        %1073 = vmatprep.subr.bf16.mxu0 0
        %1074 = vmatpush2.bf16.msra.mxu0 0
        %1075 = vmatprep.subr.bf16.mxu0 0
        %1076 = vmatpush2.bf16.msra.mxu0 0
        %1077 = vmatprep.subr.bf16.mxu0 0
        %1078 = vmatpush2.bf16.msra.mxu0 0
        %1079 = vmatprep.subr.bf16.mxu0 0
        %1080 = vmatpush2.bf16.msra.mxu0 0
        %1081 = vmatprep.subr.bf16.mxu0 0
        %1082 = vmatpush2.bf16.msra.mxu0 0
        %1083 = vmatprep.subr.bf16.mxu0 0
        %1084 = vmatpush2.bf16.msra.mxu0 0
        %1085 = vmatprep.mubr.bf16.mxu0 0
        %1086 = vmatmul.mubr.bf16.gmra.mxu0 %v974
        %v1087 = vpop.f32.mrf.mxu0
        %v1088 = vadd.f32 %v1028, %v1087
        %v1089 = vpop.f32.mrf.mxu0
        %v1090 = vpop.f32.mrf.mxu0
        %v1091 = vpop.f32.mrf.mxu0
        %1092 = vdwg.mxu0
        %v1093 = vld [vmem:[#allocation2 + $0x118] sm:$0xf]
        %v1094 = vld [vmem:[#allocation2 + $0x11c] sm:$0xf]
        %v1095 = vld [vmem:[#allocation2 + $0x120] sm:$0xf]
        %v1096 = vld [vmem:[#allocation2 + $0x124] sm:$0xf]
        %v1097 = vld [vmem:[#allocation2 + $0x128] sm:$0xf]
        %v1098 = vld [vmem:[#allocation2 + $0x12c] sm:$0xf]
        %v1099 = vld [vmem:[#allocation2 + $0x130] sm:$0xf]
        %v1100 = vld [vmem:[#allocation2 + $0x134] sm:$0xf]
        %v1101 = vld [vmem:[#allocation4 + $0xb] sm:$0x1]
        %v1102 = vlaneseq
        %v1103 = vshrl.u32 %v1102, 7
        %v1104 = vsub.s32 0, %v1103
        %v1105 = vrot.slane %v1101, %v1104
        %v1114 = vunpack.c.l.b16 %v1093
        %v1115 = vunpack.c.l.b16 %v1094
        %v1116 = vunpack.c.l.b16 %v1095
        %v1117 = vunpack.c.l.b16 %v1096
        %v1118 = vunpack.c.l.b16 %v1097
        %v1119 = vunpack.c.l.b16 %v1098
        %v1120 = vunpack.c.l.b16 %v1099
        %v1121 = vunpack.c.l.b16 %v1100
        %v1122 = vpack.c.b16 %v1115, %v1114
        %v1123 = vpack.c.b16 %v1117, %v1116
        %v1124 = vpack.c.b16 %v1119, %v1118
        %v1125 = vpack.c.b16 %v1121, %v1120
        %1130 = vmatprep.subr.bf16.mxu0 0
        %1131 = vmatpush1.bf16.msra.mxu0 0
        %1132 = vmatprep.subr.bf16.mxu0 0
        %1133 = vmatpush1.bf16.msra.mxu0 0
        %1134 = vmatprep.subr.bf16.mxu0 0
        %1135 = vmatpush1.bf16.msra.mxu0 0
        %1136 = vmatprep.subr.bf16.mxu0 0
        %1137 = vmatpush1.bf16.msra.mxu0 0
        %1138 = vmatprep.subr.bf16.mxu0 0
        %1139 = vmatpush1.bf16.msra.mxu0 %v1125
        %1140 = vmatprep.subr.bf16.mxu0 0
        %1141 = vmatpush1.bf16.msra.mxu0 %v1124
        %1142 = vmatprep.subr.bf16.mxu0 0
        %1143 = vmatpush1.bf16.msra.mxu0 %v1123
        %1144 = vmatprep.subr.bf16.mxu0 0
        %1145 = vmatpush1.bf16.msra.mxu0 %v1122
        %1146 = vmatprep.subr.bf16.mxu0 0
        %1147 = vmatpush2.bf16.msra.mxu0 0
        %1148 = vmatprep.subr.bf16.mxu0 0
        %1149 = vmatpush2.bf16.msra.mxu0 0
        %1150 = vmatprep.subr.bf16.mxu0 0
        %1151 = vmatpush2.bf16.msra.mxu0 0
        %1152 = vmatprep.subr.bf16.mxu0 0
        %1153 = vmatpush2.bf16.msra.mxu0 0
        %1154 = vmatprep.subr.bf16.mxu0 0
        %1155 = vmatpush2.bf16.msra.mxu0 0
        %1156 = vmatprep.subr.bf16.mxu0 0
        %1157 = vmatpush2.bf16.msra.mxu0 0
        %1158 = vmatprep.subr.bf16.mxu0 0
        %1159 = vmatpush2.bf16.msra.mxu0 0
        %1160 = vmatprep.subr.bf16.mxu0 0
        %1161 = vmatpush2.bf16.msra.mxu0 0
        %1162 = vmatprep.mubr.bf16.mxu0 0
        %1163 = vmatmul.mubr.bf16.gmra.mxu0 %v974
        %v1164 = vpop.f32.mrf.mxu0
        %v1165 = vadd.f32 %v1105, %v1164
        %v1166 = vpop.f32.mrf.mxu0
        %v1167 = vpop.f32.mrf.mxu0
        %v1168 = vpop.f32.mrf.mxu0
        %1169 = vdwg.mxu0
        %v1170 = vpack.c.bf16 %v1011, %v1011
        %v1171 = vpack.c.bf16 %v1088, %v1088
        %v1173 = vsel %vm365, %v1170, 0
        %v1176 = vsel %vm365, %v1171, 0
        %1178 = vmatprep.subr.bf16.mxu0 0
        %1179 = vmatpush1.bf16.xpose.msra.mxu0 0
        %1180 = vmatprep.subr.bf16.mxu0 0
        %1181 = vmatpush1.bf16.xpose.msra.mxu0 0
        %1182 = vmatprep.subr.bf16.mxu0 0
        %1183 = vmatpush1.bf16.xpose.msra.mxu0 0
        %1184 = vmatprep.subr.bf16.mxu0 0
        %1185 = vmatpush1.bf16.xpose.msra.mxu0 0
        %1186 = vmatprep.subr.bf16.mxu0 0
        %1187 = vmatpush1.bf16.xpose.msra.mxu0 0
        %1188 = vmatprep.subr.bf16.mxu0 0
        %1189 = vmatpush1.bf16.xpose.msra.mxu0 0
        %1190 = vmatprep.subr.bf16.mxu0 0
        %1191 = vmatpush1.bf16.xpose.msra.mxu0 0
        %1192 = vmatprep.subr.bf16.mxu0 0
        %1193 = vmatpush1.bf16.xpose.msra.mxu0 %v1176
        %1194 = vmatprep.subr.bf16.mxu0 0
        %1195 = vmatpush2.bf16.xpose.msra.mxu0 0
        %1196 = vmatprep.subr.bf16.mxu0 0
        %1197 = vmatpush2.bf16.xpose.msra.mxu0 0
        %1198 = vmatprep.subr.bf16.mxu0 0
        %1199 = vmatpush2.bf16.xpose.msra.mxu0 0
        %1200 = vmatprep.subr.bf16.mxu0 0
        %1201 = vmatpush2.bf16.xpose.msra.mxu0 0
        %1202 = vmatprep.subr.bf16.mxu0 0
        %1203 = vmatpush2.bf16.xpose.msra.mxu0 0
        %1204 = vmatprep.subr.bf16.mxu0 0
        %1205 = vmatpush2.bf16.xpose.msra.mxu0 0
        %1206 = vmatprep.subr.bf16.mxu0 0
        %1207 = vmatpush2.bf16.xpose.msra.mxu0 0
        %1208 = vmatprep.subr.bf16.mxu0 0
        %1209 = vmatpush2.bf16.xpose.msra.mxu0 0
        %1210 = vmatprep.mubr.bf16.mxu0 0
        %1211 = vmatmul.mubr.bf16.gmra.mxu0 %v1173
        %v1212 = vpop.f32.mrf.mxu0
        %v1213 = vadd.f32 0.0, %v1212
        %v1214 = vpop.f32.mrf.mxu0
        %v1215 = vpop.f32.mrf.mxu0
        %v1216 = vpop.f32.mrf.mxu0
        %1217 = vdwg.mxu0
        %vm1218 = vcmask 64512
        %v1219 = vsel %vm1218, %v1213, -inf
        %1220 = vmax.xlane.f32.xlu0 %v1219
        %v1221 = vpop.xlane.xlu0 %1220
        %v1222 = vsub.f32 %v1213, %v1221
        %v1223 = vmul.f32 %v1222, 1.442695
        %v1224 = vpow.pop %v1223
        %v1225 = vsel %vm1218, %v1224, 0.0
        %1226 = vadd.xlane.f32.xlu0 %v1225
        %v1227 = vpop.xlane.xlu0 %1226
        %v1228 = vrcp.pop %v1227
        %v1229 = vmul.f32 %v1224, %v1228
        %v1230 = vpack.c.bf16 %v1229, %v1229
        %v1231 = vpack.c.bf16 %v1165, %v1165
        %v1233 = vsel %vm1218, %v1230, 0
        %vm1235 = vcmask 1043456
        %v1237 = vsel %vm1235, %v1231, 0
        %1239 = vmatprep.subr.bf16.mxu0 0
        %1240 = vmatpush1.bf16.msra.mxu0 0
        %1241 = vmatprep.subr.bf16.mxu0 0
        %1242 = vmatpush1.bf16.msra.mxu0 0
        %1243 = vmatprep.subr.bf16.mxu0 0
        %1244 = vmatpush1.bf16.msra.mxu0 0
        %1245 = vmatprep.subr.bf16.mxu0 0
        %1246 = vmatpush1.bf16.msra.mxu0 0
        %1247 = vmatprep.subr.bf16.mxu0 0
        %1248 = vmatpush1.bf16.msra.mxu0 0
        %1249 = vmatprep.subr.bf16.mxu0 0
        %1250 = vmatpush1.bf16.msra.mxu0 0
        %1251 = vmatprep.subr.bf16.mxu0 0
        %1252 = vmatpush1.bf16.msra.mxu0 0
        %1253 = vmatprep.subr.bf16.mxu0 0
        %1254 = vmatpush1.bf16.msra.mxu0 %v1237
        %1255 = vmatprep.subr.bf16.mxu0 0
        %1256 = vmatpush2.bf16.msra.mxu0 0
        %1257 = vmatprep.subr.bf16.mxu0 0
        %1258 = vmatpush2.bf16.msra.mxu0 0
        %1259 = vmatprep.subr.bf16.mxu0 0
        %1260 = vmatpush2.bf16.msra.mxu0 0
        %1261 = vmatprep.subr.bf16.mxu0 0
        %1262 = vmatpush2.bf16.msra.mxu0 0
        %1263 = vmatprep.subr.bf16.mxu0 0
        %1264 = vmatpush2.bf16.msra.mxu0 0
        %1265 = vmatprep.subr.bf16.mxu0 0
        %1266 = vmatpush2.bf16.msra.mxu0 0
        %1267 = vmatprep.subr.bf16.mxu0 0
        %1268 = vmatpush2.bf16.msra.mxu0 0
        %1269 = vmatprep.subr.bf16.mxu0 0
        %1270 = vmatpush2.bf16.msra.mxu0 0
        %1271 = vmatprep.mubr.bf16.mxu0 0
        %1272 = vmatmul.mubr.bf16.gmra.mxu0 %v1233
        %v1273 = vpop.f32.mrf.mxu0
        %v1274 = vadd.f32 0.0, %v1273
        %v1275 = vpop.f32.mrf.mxu0
        %v1276 = vpop.f32.mrf.mxu0
        %v1277 = vpop.f32.mrf.mxu0
        %1278 = vdwg.mxu0
        %v1279 = vpack.c.bf16 %v1274, %v1274
        %v1280 = vld [vmem:[#allocation2 + $0x138] sm:$0xf]
        %v1281 = vld [vmem:[#allocation2 + $0x13c] sm:$0xf]
        %v1282 = vld [vmem:[#allocation2 + $0x140] sm:$0xf]
        %v1283 = vld [vmem:[#allocation2 + $0x144] sm:$0xf]
        %v1284 = vld [vmem:[#allocation2 + $0x148] sm:$0xf]
        %v1285 = vld [vmem:[#allocation2 + $0x14c] sm:$0xf]
        %v1286 = vld [vmem:[#allocation2 + $0x150] sm:$0xf]
        %v1287 = vld [vmem:[#allocation2 + $0x154] sm:$0xf]
        %v1296 = vunpack.c.l.b16 %v1280
        %v1297 = vunpack.c.l.b16 %v1281
        %v1298 = vunpack.c.l.b16 %v1282
        %v1299 = vunpack.c.l.b16 %v1283
        %v1300 = vunpack.c.l.b16 %v1284
        %v1301 = vunpack.c.l.b16 %v1285
        %v1302 = vunpack.c.l.b16 %v1286
        %v1303 = vunpack.c.l.b16 %v1287
        %v1304 = vpack.c.b16 %v1297, %v1296
        %v1305 = vpack.c.b16 %v1299, %v1298
        %v1306 = vpack.c.b16 %v1301, %v1300
        %v1307 = vpack.c.b16 %v1303, %v1302
        %v1313 = vsel %vm365, %v1279, 0
        %1315 = vmatprep.subr.bf16.mxu0 0
        %1316 = vmatpush1.bf16.msra.mxu0 0
        %1317 = vmatprep.subr.bf16.mxu0 0
        %1318 = vmatpush1.bf16.msra.mxu0 0
        %1319 = vmatprep.subr.bf16.mxu0 0
        %1320 = vmatpush1.bf16.msra.mxu0 0
        %1321 = vmatprep.subr.bf16.mxu0 0
        %1322 = vmatpush1.bf16.msra.mxu0 0
        %1323 = vmatprep.subr.bf16.mxu0 0
        %1324 = vmatpush1.bf16.msra.mxu0 %v1307
        %1325 = vmatprep.subr.bf16.mxu0 0
        %1326 = vmatpush1.bf16.msra.mxu0 %v1306
        %1327 = vmatprep.subr.bf16.mxu0 0
        %1328 = vmatpush1.bf16.msra.mxu0 %v1305
        %1329 = vmatprep.subr.bf16.mxu0 0
        %1330 = vmatpush1.bf16.msra.mxu0 %v1304
        %1331 = vmatprep.subr.bf16.mxu0 0
        %1332 = vmatpush2.bf16.msra.mxu0 0
        %1333 = vmatprep.subr.bf16.mxu0 0
        %1334 = vmatpush2.bf16.msra.mxu0 0
        %1335 = vmatprep.subr.bf16.mxu0 0
        %1336 = vmatpush2.bf16.msra.mxu0 0
        %1337 = vmatprep.subr.bf16.mxu0 0
        %1338 = vmatpush2.bf16.msra.mxu0 0
        %1339 = vmatprep.subr.bf16.mxu0 0
        %1340 = vmatpush2.bf16.msra.mxu0 0
        %1341 = vmatprep.subr.bf16.mxu0 0
        %1342 = vmatpush2.bf16.msra.mxu0 0
        %1343 = vmatprep.subr.bf16.mxu0 0
        %1344 = vmatpush2.bf16.msra.mxu0 0
        %1345 = vmatprep.subr.bf16.mxu0 0
        %1346 = vmatpush2.bf16.msra.mxu0 0
        %1347 = vmatprep.mubr.bf16.mxu0 0
        %1348 = vmatmul.mubr.bf16.gmra.mxu0 %v1313
        %v1349 = vpop.f32.mrf.mxu0
        %v1350 = vadd.f32 0.0, %v1349
        %v1351 = vpop.f32.mrf.mxu0
        %v1352 = vpop.f32.mrf.mxu0
        %v1353 = vpop.f32.mrf.mxu0
        %1354 = vdwg.mxu0
        %v1355 = vadd.f32 %v909, %v1350
        %v1356 = vld [vmem:[#allocation4 + $0xc] sm:$0x1]
        %v1357 = vlaneseq
        %v1358 = vshrl.u32 %v1357, 7
        %v1359 = vsub.s32 0, %v1358
        %v1360 = vrot.slane %v1356, %v1359
        %v1361 = vadd.f32 %v1355, %v1360
        %v1362 = vsel %vm365, %v1361, 0.0
        %1363 = vadd.xlane.f32.xlu0 %v1362
        %v1364 = vpop.xlane.xlu0 %1363
        %v1365 = vmul.f32 %v1364, %v369
        %v1366 = vsub.f32 %v1361, %v1365
        %v1367 = vmul.f32 %v1366, %v1366
        %v1368 = vsel %vm365, %v1367, 0.0
        %1369 = vadd.xlane.f32.xlu0 %v1368
        %v1370 = vpop.xlane.xlu0 %1369
        %v1371 = vmul.f32 %v1370, %v369
        %v1372 = vadd.f32 %v1371, 1e-06
        %v1373 = vrsqrt.pop %v1372
        %v1374 = vmul.f32 %v1366, %v1373
        %v1375 = vld [vmem:[#allocation4 + $0xd] sm:$0x1]
        %v1376 = vlaneseq
        %v1377 = vshrl.u32 %v1376, 7
        %v1378 = vsub.s32 0, %v1377
        %v1379 = vrot.slane %v1375, %v1378
        %v1380 = vmul.f32 %v1374, %v1379
        %v1381 = vld [vmem:[#allocation4 + $0xe] sm:$0x1]
        %v1382 = vlaneseq
        %v1383 = vshrl.u32 %v1382, 7
        %v1384 = vsub.s32 0, %v1383
        %v1385 = vrot.slane %v1381, %v1384
        %v1386 = vadd.f32 %v1380, %v1385
        %v1387 = vxor.u32 %v1386, 2147483648
        %v1388 = vmul.f32 %v1387, 1.442695
        %v1389 = vpow.pop %v1388
        %v1390 = vadd.f32 %v1389, 1.0
        %v1391 = vrcp.pop %v1390
        %v1392 = vmul.f32 1.0, %v1391
        %v1393 = vmul.f32 %v1386, %v1392
        %v1394 = vld [vmem:[#allocation2 + $0x158] sm:$0xf]
        %v1395 = vld [vmem:[#allocation2 + $0x15c] sm:$0xf]
        %v1396 = vld [vmem:[#allocation2 + $0x160] sm:$0xf]
        %v1397 = vld [vmem:[#allocation2 + $0x164] sm:$0xf]
        %v1398 = vld [vmem:[#allocation2 + $0x168] sm:$0xf]
        %v1399 = vld [vmem:[#allocation2 + $0x16c] sm:$0xf]
        %v1400 = vld [vmem:[#allocation2 + $0x170] sm:$0xf]
        %v1401 = vld [vmem:[#allocation2 + $0x174] sm:$0xf]
        %v1402 = vld [vmem:[#allocation2 + $0x178] sm:$0xf]
        %v1403 = vld [vmem:[#allocation2 + $0x17c] sm:$0xf]
        %v1404 = vld [vmem:[#allocation2 + $0x180] sm:$0xf]
        %v1405 = vld [vmem:[#allocation2 + $0x184] sm:$0xf]
        %v1406 = vld [vmem:[#allocation2 + $0x188] sm:$0xf]
        %v1407 = vld [vmem:[#allocation2 + $0x18c] sm:$0xf]
        %v1408 = vld [vmem:[#allocation2 + $0x190] sm:$0xf]
        %v1409 = vld [vmem:[#allocation2 + $0x194] sm:$0xf]
        %v1410 = vld [vmem:[#allocation2 + $0x198] sm:$0xf]
        %v1411 = vld [vmem:[#allocation2 + $0x19c] sm:$0xf]
        %v1412 = vld [vmem:[#allocation2 + $0x1a0] sm:$0xf]
        %v1413 = vld [vmem:[#allocation2 + $0x1a4] sm:$0xf]
        %v1414 = vld [vmem:[#allocation2 + $0x1a8] sm:$0xf]
        %v1415 = vld [vmem:[#allocation2 + $0x1ac] sm:$0xf]
        %v1416 = vld [vmem:[#allocation2 + $0x1b0] sm:$0xf]
        %v1417 = vld [vmem:[#allocation2 + $0x1b4] sm:$0xf]
        %v1418 = vrot.slane %v1393, 7
        %v1419 = vsel %vm209, 0.0, %v1418
        %v1420 = vrot.slane %v1393, 1
        %v1421 = vsel %vm213, 0.0, %v1420
        %v1422 = vpack.c.bf16 %v1419, %v1419
        %v1423 = vpack.c.bf16 %v1421, %v1421
        %v1424 = vpack.c.bf16 %v1393, %v1393
        %v1433 = vunpack.c.l.b16 %v1402
        %v1434 = vunpack.c.l.b16 %v1403
        %v1435 = vunpack.c.l.b16 %v1404
        %v1436 = vunpack.c.l.b16 %v1405
        %v1437 = vunpack.c.l.b16 %v1406
        %v1438 = vunpack.c.l.b16 %v1407
        %v1439 = vunpack.c.l.b16 %v1408
        %v1440 = vunpack.c.l.b16 %v1409
        %v1441 = vpack.c.b16 %v1434, %v1433
        %v1442 = vpack.c.b16 %v1436, %v1435
        %v1443 = vpack.c.b16 %v1438, %v1437
        %v1444 = vpack.c.b16 %v1440, %v1439
        %v1450 = vsel %vm365, %v1424, 0
        %1452 = vmatprep.subr.bf16.mxu0 0
        %1453 = vmatpush1.bf16.msra.mxu0 0
        %1454 = vmatprep.subr.bf16.mxu0 0
        %1455 = vmatpush1.bf16.msra.mxu0 0
        %1456 = vmatprep.subr.bf16.mxu0 0
        %1457 = vmatpush1.bf16.msra.mxu0 0
        %1458 = vmatprep.subr.bf16.mxu0 0
        %1459 = vmatpush1.bf16.msra.mxu0 0
        %1460 = vmatprep.subr.bf16.mxu0 0
        %1461 = vmatpush1.bf16.msra.mxu0 %v1444
        %1462 = vmatprep.subr.bf16.mxu0 0
        %1463 = vmatpush1.bf16.msra.mxu0 %v1443
        %1464 = vmatprep.subr.bf16.mxu0 0
        %1465 = vmatpush1.bf16.msra.mxu0 %v1442
        %1466 = vmatprep.subr.bf16.mxu0 0
        %1467 = vmatpush1.bf16.msra.mxu0 %v1441
        %1468 = vmatprep.subr.bf16.mxu0 0
        %1469 = vmatpush2.bf16.msra.mxu0 0
        %1470 = vmatprep.subr.bf16.mxu0 0
        %1471 = vmatpush2.bf16.msra.mxu0 0
        %1472 = vmatprep.subr.bf16.mxu0 0
        %1473 = vmatpush2.bf16.msra.mxu0 0
        %1474 = vmatprep.subr.bf16.mxu0 0
        %1475 = vmatpush2.bf16.msra.mxu0 0
        %1476 = vmatprep.subr.bf16.mxu0 0
        %1477 = vmatpush2.bf16.msra.mxu0 0
        %1478 = vmatprep.subr.bf16.mxu0 0
        %1479 = vmatpush2.bf16.msra.mxu0 0
        %1480 = vmatprep.subr.bf16.mxu0 0
        %1481 = vmatpush2.bf16.msra.mxu0 0
        %1482 = vmatprep.subr.bf16.mxu0 0
        %1483 = vmatpush2.bf16.msra.mxu0 0
        %1484 = vmatprep.mubr.bf16.mxu0 0
        %1485 = vmatmul.mubr.bf16.gmra.mxu0 %v1450
        %v1486 = vpop.f32.mrf.mxu0
        %v1487 = vadd.f32 0.0, %v1486
        %v1488 = vpop.f32.mrf.mxu0
        %v1489 = vpop.f32.mrf.mxu0
        %v1490 = vpop.f32.mrf.mxu0
        %1491 = vdwg.mxu0
        %v1500 = vunpack.c.l.b16 %v1394
        %v1501 = vunpack.c.l.b16 %v1395
        %v1502 = vunpack.c.l.b16 %v1396
        %v1503 = vunpack.c.l.b16 %v1397
        %v1504 = vunpack.c.l.b16 %v1398
        %v1505 = vunpack.c.l.b16 %v1399
        %v1506 = vunpack.c.l.b16 %v1400
        %v1507 = vunpack.c.l.b16 %v1401
        %v1508 = vpack.c.b16 %v1501, %v1500
        %v1509 = vpack.c.b16 %v1503, %v1502
        %v1510 = vpack.c.b16 %v1505, %v1504
        %v1511 = vpack.c.b16 %v1507, %v1506
        %v1517 = vsel %vm365, %v1422, 0
        %1519 = vmatprep.subr.bf16.mxu0 0
        %1520 = vmatpush1.bf16.msra.mxu0 0
        %1521 = vmatprep.subr.bf16.mxu0 0
        %1522 = vmatpush1.bf16.msra.mxu0 0
        %1523 = vmatprep.subr.bf16.mxu0 0
        %1524 = vmatpush1.bf16.msra.mxu0 0
        %1525 = vmatprep.subr.bf16.mxu0 0
        %1526 = vmatpush1.bf16.msra.mxu0 0
        %1527 = vmatprep.subr.bf16.mxu0 0
        %1528 = vmatpush1.bf16.msra.mxu0 %v1511
        %1529 = vmatprep.subr.bf16.mxu0 0
        %1530 = vmatpush1.bf16.msra.mxu0 %v1510
        %1531 = vmatprep.subr.bf16.mxu0 0
        %1532 = vmatpush1.bf16.msra.mxu0 %v1509
        %1533 = vmatprep.subr.bf16.mxu0 0
        %1534 = vmatpush1.bf16.msra.mxu0 %v1508
        %1535 = vmatprep.subr.bf16.mxu0 0
        %1536 = vmatpush2.bf16.msra.mxu0 0
        %1537 = vmatprep.subr.bf16.mxu0 0
        %1538 = vmatpush2.bf16.msra.mxu0 0
        %1539 = vmatprep.subr.bf16.mxu0 0
        %1540 = vmatpush2.bf16.msra.mxu0 0
        %1541 = vmatprep.subr.bf16.mxu0 0
        %1542 = vmatpush2.bf16.msra.mxu0 0
        %1543 = vmatprep.subr.bf16.mxu0 0
        %1544 = vmatpush2.bf16.msra.mxu0 0
        %1545 = vmatprep.subr.bf16.mxu0 0
        %1546 = vmatpush2.bf16.msra.mxu0 0
        %1547 = vmatprep.subr.bf16.mxu0 0
        %1548 = vmatpush2.bf16.msra.mxu0 0
        %1549 = vmatprep.subr.bf16.mxu0 0
        %1550 = vmatpush2.bf16.msra.mxu0 0
        %1551 = vmatprep.mubr.bf16.mxu0 0
        %1552 = vmatmul.mubr.bf16.gmra.mxu0 %v1517
        %v1553 = vpop.f32.mrf.mxu0
        %v1554 = vadd.f32 %v1487, %v1553
        %v1555 = vpop.f32.mrf.mxu0
        %v1556 = vpop.f32.mrf.mxu0
        %v1557 = vpop.f32.mrf.mxu0
        %1558 = vdwg.mxu0
        %v1567 = vunpack.c.l.b16 %v1410
        %v1568 = vunpack.c.l.b16 %v1411
        %v1569 = vunpack.c.l.b16 %v1412
        %v1570 = vunpack.c.l.b16 %v1413
        %v1571 = vunpack.c.l.b16 %v1414
        %v1572 = vunpack.c.l.b16 %v1415
        %v1573 = vunpack.c.l.b16 %v1416
        %v1574 = vunpack.c.l.b16 %v1417
        %v1575 = vpack.c.b16 %v1568, %v1567
        %v1576 = vpack.c.b16 %v1570, %v1569
        %v1577 = vpack.c.b16 %v1572, %v1571
        %v1578 = vpack.c.b16 %v1574, %v1573
        %v1584 = vsel %vm365, %v1423, 0
        %1586 = vmatprep.subr.bf16.mxu0 0
        %1587 = vmatpush1.bf16.msra.mxu0 0
        %1588 = vmatprep.subr.bf16.mxu0 0
        %1589 = vmatpush1.bf16.msra.mxu0 0
        %1590 = vmatprep.subr.bf16.mxu0 0
        %1591 = vmatpush1.bf16.msra.mxu0 0
        %1592 = vmatprep.subr.bf16.mxu0 0
        %1593 = vmatpush1.bf16.msra.mxu0 0
        %1594 = vmatprep.subr.bf16.mxu0 0
        %1595 = vmatpush1.bf16.msra.mxu0 %v1578
        %1596 = vmatprep.subr.bf16.mxu0 0
        %1597 = vmatpush1.bf16.msra.mxu0 %v1577
        %1598 = vmatprep.subr.bf16.mxu0 0
        %1599 = vmatpush1.bf16.msra.mxu0 %v1576
        %1600 = vmatprep.subr.bf16.mxu0 0
        %1601 = vmatpush1.bf16.msra.mxu0 %v1575
        %1602 = vmatprep.subr.bf16.mxu0 0
        %1603 = vmatpush2.bf16.msra.mxu0 0
        %1604 = vmatprep.subr.bf16.mxu0 0
        %1605 = vmatpush2.bf16.msra.mxu0 0
        %1606 = vmatprep.subr.bf16.mxu0 0
        %1607 = vmatpush2.bf16.msra.mxu0 0
        %1608 = vmatprep.subr.bf16.mxu0 0
        %1609 = vmatpush2.bf16.msra.mxu0 0
        %1610 = vmatprep.subr.bf16.mxu0 0
        %1611 = vmatpush2.bf16.msra.mxu0 0
        %1612 = vmatprep.subr.bf16.mxu0 0
        %1613 = vmatpush2.bf16.msra.mxu0 0
        %1614 = vmatprep.subr.bf16.mxu0 0
        %1615 = vmatpush2.bf16.msra.mxu0 0
        %1616 = vmatprep.subr.bf16.mxu0 0
        %1617 = vmatpush2.bf16.msra.mxu0 0
        %1618 = vmatprep.mubr.bf16.mxu0 0
        %1619 = vmatmul.mubr.bf16.gmra.mxu0 %v1584
        %v1620 = vpop.f32.mrf.mxu0
        %v1621 = vadd.f32 0.0, %v1620
        %v1622 = vpop.f32.mrf.mxu0
        %v1623 = vpop.f32.mrf.mxu0
        %v1624 = vpop.f32.mrf.mxu0
        %1625 = vdwg.mxu0
        %v1626 = vadd.f32 %v1554, %v1621
        %v1627 = vld [vmem:[#allocation4 + $0xf] sm:$0x1]
        %v1628 = vlaneseq
        %v1629 = vshrl.u32 %v1628, 7
        %v1630 = vsub.s32 0, %v1629
        %v1631 = vrot.slane %v1627, %v1630
        %v1632 = vadd.f32 %v1626, %v1631
        %v1633 = vsel %vm365, %v1632, 0.0
        %1634 = vadd.xlane.f32.xlu0 %v1633
        %v1635 = vpop.xlane.xlu0 %1634
        %v1636 = vmul.f32 %v1635, %v369
        %v1637 = vsub.f32 %v1632, %v1636
        %v1638 = vmul.f32 %v1637, %v1637
        %v1639 = vsel %vm365, %v1638, 0.0
        %1640 = vadd.xlane.f32.xlu0 %v1639
        %v1641 = vpop.xlane.xlu0 %1640
        %v1642 = vmul.f32 %v1641, %v369
        %v1643 = vadd.f32 %v1642, 1e-06
        %v1644 = vrsqrt.pop %v1643
        %v1645 = vmul.f32 %v1637, %v1644
        %v1646 = vld [vmem:[#allocation4 + $0x10] sm:$0x1]
        %v1647 = vlaneseq
        %v1648 = vshrl.u32 %v1647, 7
        %v1649 = vsub.s32 0, %v1648
        %v1650 = vrot.slane %v1646, %v1649
        %v1651 = vmul.f32 %v1645, %v1650
        %v1652 = vld [vmem:[#allocation4 + $0x11] sm:$0x1]
        %v1653 = vlaneseq
        %v1654 = vshrl.u32 %v1653, 7
        %v1655 = vsub.s32 0, %v1654
        %v1656 = vrot.slane %v1652, %v1655
        %v1657 = vadd.f32 %v1651, %v1656
        %v1658 = vxor.u32 %v1657, 2147483648
        %v1659 = vmul.f32 %v1658, 1.442695
        %v1660 = vpow.pop %v1659
        %v1661 = vadd.f32 %v1660, 1.0
        %v1662 = vrcp.pop %v1661
        %v1663 = vmul.f32 1.0, %v1662
        %v1664 = vmul.f32 %v1657, %v1663
        %v1665 = vld [vmem:[#allocation2 + $0x1b8] sm:$0xf]
        %v1666 = vld [vmem:[#allocation2 + $0x1bc] sm:$0xf]
        %v1667 = vld [vmem:[#allocation2 + $0x1c0] sm:$0xf]
        %v1668 = vld [vmem:[#allocation2 + $0x1c4] sm:$0xf]
        %v1669 = vld [vmem:[#allocation2 + $0x1c8] sm:$0xf]
        %v1670 = vld [vmem:[#allocation2 + $0x1cc] sm:$0xf]
        %v1671 = vld [vmem:[#allocation2 + $0x1d0] sm:$0xf]
        %v1672 = vld [vmem:[#allocation2 + $0x1d4] sm:$0xf]
        %v1673 = vld [vmem:[#allocation2 + $0x1d8] sm:$0xf]
        %v1674 = vld [vmem:[#allocation2 + $0x1dc] sm:$0xf]
        %v1675 = vld [vmem:[#allocation2 + $0x1e0] sm:$0xf]
        %v1676 = vld [vmem:[#allocation2 + $0x1e4] sm:$0xf]
        %v1677 = vld [vmem:[#allocation2 + $0x1e8] sm:$0xf]
        %v1678 = vld [vmem:[#allocation2 + $0x1ec] sm:$0xf]
        %v1679 = vld [vmem:[#allocation2 + $0x1f0] sm:$0xf]
        %v1680 = vld [vmem:[#allocation2 + $0x1f4] sm:$0xf]
        %v1681 = vld [vmem:[#allocation2 + $0x1f8] sm:$0xf]
        %v1682 = vld [vmem:[#allocation2 + $0x1fc] sm:$0xf]
        %v1683 = vld [vmem:[#allocation2 + $0x200] sm:$0xf]
        %v1684 = vld [vmem:[#allocation2 + $0x204] sm:$0xf]
        %v1685 = vld [vmem:[#allocation2 + $0x208] sm:$0xf]
        %v1686 = vld [vmem:[#allocation2 + $0x20c] sm:$0xf]
        %v1687 = vld [vmem:[#allocation2 + $0x210] sm:$0xf]
        %v1688 = vld [vmem:[#allocation2 + $0x214] sm:$0xf]
        %v1689 = vrot.slane %v1664, 7
        %v1690 = vsel %vm209, 0.0, %v1689
        %v1691 = vrot.slane %v1664, 1
        %v1692 = vsel %vm213, 0.0, %v1691
        %v1693 = vpack.c.bf16 %v1690, %v1690
        %v1694 = vpack.c.bf16 %v1692, %v1692
        %v1695 = vpack.c.bf16 %v1664, %v1664
        %v1704 = vunpack.c.l.b16 %v1673
        %v1705 = vunpack.c.l.b16 %v1674
        %v1706 = vunpack.c.l.b16 %v1675
        %v1707 = vunpack.c.l.b16 %v1676
        %v1708 = vunpack.c.l.b16 %v1677
        %v1709 = vunpack.c.l.b16 %v1678
        %v1710 = vunpack.c.l.b16 %v1679
        %v1711 = vunpack.c.l.b16 %v1680
        %v1712 = vpack.c.b16 %v1705, %v1704
        %v1713 = vpack.c.b16 %v1707, %v1706
        %v1714 = vpack.c.b16 %v1709, %v1708
        %v1715 = vpack.c.b16 %v1711, %v1710
        %v1721 = vsel %vm365, %v1695, 0
        %1723 = vmatprep.subr.bf16.mxu0 0
        %1724 = vmatpush1.bf16.msra.mxu0 0
        %1725 = vmatprep.subr.bf16.mxu0 0
        %1726 = vmatpush1.bf16.msra.mxu0 0
        %1727 = vmatprep.subr.bf16.mxu0 0
        %1728 = vmatpush1.bf16.msra.mxu0 0
        %1729 = vmatprep.subr.bf16.mxu0 0
        %1730 = vmatpush1.bf16.msra.mxu0 0
        %1731 = vmatprep.subr.bf16.mxu0 0
        %1732 = vmatpush1.bf16.msra.mxu0 %v1715
        %1733 = vmatprep.subr.bf16.mxu0 0
        %1734 = vmatpush1.bf16.msra.mxu0 %v1714
        %1735 = vmatprep.subr.bf16.mxu0 0
        %1736 = vmatpush1.bf16.msra.mxu0 %v1713
        %1737 = vmatprep.subr.bf16.mxu0 0
        %1738 = vmatpush1.bf16.msra.mxu0 %v1712
        %1739 = vmatprep.subr.bf16.mxu0 0
        %1740 = vmatpush2.bf16.msra.mxu0 0
        %1741 = vmatprep.subr.bf16.mxu0 0
        %1742 = vmatpush2.bf16.msra.mxu0 0
        %1743 = vmatprep.subr.bf16.mxu0 0
        %1744 = vmatpush2.bf16.msra.mxu0 0
        %1745 = vmatprep.subr.bf16.mxu0 0
        %1746 = vmatpush2.bf16.msra.mxu0 0
        %1747 = vmatprep.subr.bf16.mxu0 0
        %1748 = vmatpush2.bf16.msra.mxu0 0
        %1749 = vmatprep.subr.bf16.mxu0 0
        %1750 = vmatpush2.bf16.msra.mxu0 0
        %1751 = vmatprep.subr.bf16.mxu0 0
        %1752 = vmatpush2.bf16.msra.mxu0 0
        %1753 = vmatprep.subr.bf16.mxu0 0
        %1754 = vmatpush2.bf16.msra.mxu0 0
        %1755 = vmatprep.mubr.bf16.mxu0 0
        %1756 = vmatmul.mubr.bf16.gmra.mxu0 %v1721
        %v1757 = vpop.f32.mrf.mxu0
        %v1758 = vadd.f32 0.0, %v1757
        %v1759 = vpop.f32.mrf.mxu0
        %v1760 = vpop.f32.mrf.mxu0
        %v1761 = vpop.f32.mrf.mxu0
        %1762 = vdwg.mxu0
        %v1771 = vunpack.c.l.b16 %v1665
        %v1772 = vunpack.c.l.b16 %v1666
        %v1773 = vunpack.c.l.b16 %v1667
        %v1774 = vunpack.c.l.b16 %v1668
        %v1775 = vunpack.c.l.b16 %v1669
        %v1776 = vunpack.c.l.b16 %v1670
        %v1777 = vunpack.c.l.b16 %v1671
        %v1778 = vunpack.c.l.b16 %v1672
        %v1779 = vpack.c.b16 %v1772, %v1771
        %v1780 = vpack.c.b16 %v1774, %v1773
        %v1781 = vpack.c.b16 %v1776, %v1775
        %v1782 = vpack.c.b16 %v1778, %v1777
        %v1788 = vsel %vm365, %v1693, 0
        %1790 = vmatprep.subr.bf16.mxu0 0
        %1791 = vmatpush1.bf16.msra.mxu0 0
        %1792 = vmatprep.subr.bf16.mxu0 0
        %1793 = vmatpush1.bf16.msra.mxu0 0
        %1794 = vmatprep.subr.bf16.mxu0 0
        %1795 = vmatpush1.bf16.msra.mxu0 0
        %1796 = vmatprep.subr.bf16.mxu0 0
        %1797 = vmatpush1.bf16.msra.mxu0 0
        %1798 = vmatprep.subr.bf16.mxu0 0
        %1799 = vmatpush1.bf16.msra.mxu0 %v1782
        %1800 = vmatprep.subr.bf16.mxu0 0
        %1801 = vmatpush1.bf16.msra.mxu0 %v1781
        %1802 = vmatprep.subr.bf16.mxu0 0
        %1803 = vmatpush1.bf16.msra.mxu0 %v1780
        %1804 = vmatprep.subr.bf16.mxu0 0
        %1805 = vmatpush1.bf16.msra.mxu0 %v1779
        %1806 = vmatprep.subr.bf16.mxu0 0
        %1807 = vmatpush2.bf16.msra.mxu0 0
        %1808 = vmatprep.subr.bf16.mxu0 0
        %1809 = vmatpush2.bf16.msra.mxu0 0
        %1810 = vmatprep.subr.bf16.mxu0 0
        %1811 = vmatpush2.bf16.msra.mxu0 0
        %1812 = vmatprep.subr.bf16.mxu0 0
        %1813 = vmatpush2.bf16.msra.mxu0 0
        %1814 = vmatprep.subr.bf16.mxu0 0
        %1815 = vmatpush2.bf16.msra.mxu0 0
        %1816 = vmatprep.subr.bf16.mxu0 0
        %1817 = vmatpush2.bf16.msra.mxu0 0
        %1818 = vmatprep.subr.bf16.mxu0 0
        %1819 = vmatpush2.bf16.msra.mxu0 0
        %1820 = vmatprep.subr.bf16.mxu0 0
        %1821 = vmatpush2.bf16.msra.mxu0 0
        %1822 = vmatprep.mubr.bf16.mxu0 0
        %1823 = vmatmul.mubr.bf16.gmra.mxu0 %v1788
        %v1824 = vpop.f32.mrf.mxu0
        %v1825 = vadd.f32 %v1758, %v1824
        %v1826 = vpop.f32.mrf.mxu0
        %v1827 = vpop.f32.mrf.mxu0
        %v1828 = vpop.f32.mrf.mxu0
        %1829 = vdwg.mxu0
        %v1838 = vunpack.c.l.b16 %v1681
        %v1839 = vunpack.c.l.b16 %v1682
        %v1840 = vunpack.c.l.b16 %v1683
        %v1841 = vunpack.c.l.b16 %v1684
        %v1842 = vunpack.c.l.b16 %v1685
        %v1843 = vunpack.c.l.b16 %v1686
        %v1844 = vunpack.c.l.b16 %v1687
        %v1845 = vunpack.c.l.b16 %v1688
        %v1846 = vpack.c.b16 %v1839, %v1838
        %v1847 = vpack.c.b16 %v1841, %v1840
        %v1848 = vpack.c.b16 %v1843, %v1842
        %v1849 = vpack.c.b16 %v1845, %v1844
        %v1855 = vsel %vm365, %v1694, 0
        %1857 = vmatprep.subr.bf16.mxu0 0
        %1858 = vmatpush1.bf16.msra.mxu0 0
        %1859 = vmatprep.subr.bf16.mxu0 0
        %1860 = vmatpush1.bf16.msra.mxu0 0
        %1861 = vmatprep.subr.bf16.mxu0 0
        %1862 = vmatpush1.bf16.msra.mxu0 0
        %1863 = vmatprep.subr.bf16.mxu0 0
        %1864 = vmatpush1.bf16.msra.mxu0 0
        %1865 = vmatprep.subr.bf16.mxu0 0
        %1866 = vmatpush1.bf16.msra.mxu0 %v1849
        %1867 = vmatprep.subr.bf16.mxu0 0
        %1868 = vmatpush1.bf16.msra.mxu0 %v1848
        %1869 = vmatprep.subr.bf16.mxu0 0
        %1870 = vmatpush1.bf16.msra.mxu0 %v1847
        %1871 = vmatprep.subr.bf16.mxu0 0
        %1872 = vmatpush1.bf16.msra.mxu0 %v1846
        %1873 = vmatprep.subr.bf16.mxu0 0
        %1874 = vmatpush2.bf16.msra.mxu0 0
        %1875 = vmatprep.subr.bf16.mxu0 0
        %1876 = vmatpush2.bf16.msra.mxu0 0
        %1877 = vmatprep.subr.bf16.mxu0 0
        %1878 = vmatpush2.bf16.msra.mxu0 0
        %1879 = vmatprep.subr.bf16.mxu0 0
        %1880 = vmatpush2.bf16.msra.mxu0 0
        %1881 = vmatprep.subr.bf16.mxu0 0
        %1882 = vmatpush2.bf16.msra.mxu0 0
        %1883 = vmatprep.subr.bf16.mxu0 0
        %1884 = vmatpush2.bf16.msra.mxu0 0
        %1885 = vmatprep.subr.bf16.mxu0 0
        %1886 = vmatpush2.bf16.msra.mxu0 0
        %1887 = vmatprep.subr.bf16.mxu0 0
        %1888 = vmatpush2.bf16.msra.mxu0 0
        %1889 = vmatprep.mubr.bf16.mxu0 0
        %1890 = vmatmul.mubr.bf16.gmra.mxu0 %v1855
        %v1891 = vpop.f32.mrf.mxu0
        %v1892 = vadd.f32 0.0, %v1891
        %v1893 = vpop.f32.mrf.mxu0
        %v1894 = vpop.f32.mrf.mxu0
        %v1895 = vpop.f32.mrf.mxu0
        %1896 = vdwg.mxu0
        %v1897 = vadd.f32 %v1825, %v1892
        %v1898 = vld [vmem:[#allocation4 + $0x12] sm:$0x1]
        %v1899 = vlaneseq
        %v1900 = vshrl.u32 %v1899, 7
        %v1901 = vsub.s32 0, %v1900
        %v1902 = vrot.slane %v1898, %v1901
        %v1903 = vadd.f32 %v1897, %v1902
        %v1904 = vadd.f32 %v1361, %v1903
        %v1905 = vsel %vm365, %v1904, 0.0
        %1906 = vadd.xlane.f32.xlu0 %v1905
        %v1907 = vpop.xlane.xlu0 %1906
        %v1908 = vmul.f32 %v1907, %v369
        %v1909 = vsub.f32 %v1904, %v1908
        %v1910 = vmul.f32 %v1909, %v1909
        %v1911 = vsel %vm365, %v1910, 0.0
        %1912 = vadd.xlane.f32.xlu0 %v1911
        %v1913 = vpop.xlane.xlu0 %1912
        %v1914 = vmul.f32 %v1913, %v369
        %v1915 = vadd.f32 %v1914, 1e-06
        %v1916 = vrsqrt.pop %v1915
        %v1917 = vmul.f32 %v1909, %v1916
        %v1918 = vld [vmem:[#allocation4 + $0x13] sm:$0x1]
        %v1919 = vlaneseq
        %v1920 = vshrl.u32 %v1919, 7
        %v1921 = vsub.s32 0, %v1920
        %v1922 = vrot.slane %v1918, %v1921
        %v1923 = vmul.f32 %v1917, %v1922
        %v1924 = vld [vmem:[#allocation4 + $0x14] sm:$0x1]
        %v1925 = vlaneseq
        %v1926 = vshrl.u32 %v1925, 7
        %v1927 = vsub.s32 0, %v1926
        %v1928 = vrot.slane %v1924, %v1927
        %v1929 = vadd.f32 %v1923, %v1928
        %v1930 = vxor.u32 %v1929, 2147483648
        %v1931 = vmul.f32 %v1930, 1.442695
        %v1932 = vpow.pop %v1931
        %v1933 = vadd.f32 %v1932, 1.0
        %v1934 = vrcp.pop %v1933
        %v1935 = vmul.f32 1.0, %v1934
        %v1936 = vmul.f32 %v1929, %v1935
        %v1937 = vld [vmem:[#allocation2 + $0x218] sm:$0xf]
        %v1938 = vld [vmem:[#allocation2 + $0x21c] sm:$0xf]
        %v1939 = vld [vmem:[#allocation2 + $0x220] sm:$0xf]
        %v1940 = vld [vmem:[#allocation2 + $0x224] sm:$0xf]
        %v1941 = vld [vmem:[#allocation2 + $0x228] sm:$0xf]
        %v1942 = vld [vmem:[#allocation2 + $0x22c] sm:$0xf]
        %v1943 = vld [vmem:[#allocation2 + $0x230] sm:$0xf]
        %v1944 = vld [vmem:[#allocation2 + $0x234] sm:$0xf]
        %v1945 = vld [vmem:[#allocation2 + $0x238] sm:$0xf]
        %v1946 = vld [vmem:[#allocation2 + $0x23c] sm:$0xf]
        %v1947 = vld [vmem:[#allocation2 + $0x240] sm:$0xf]
        %v1948 = vld [vmem:[#allocation2 + $0x244] sm:$0xf]
        %v1949 = vld [vmem:[#allocation2 + $0x248] sm:$0xf]
        %v1950 = vld [vmem:[#allocation2 + $0x24c] sm:$0xf]
        %v1951 = vld [vmem:[#allocation2 + $0x250] sm:$0xf]
        %v1952 = vld [vmem:[#allocation2 + $0x254] sm:$0xf]
        %v1953 = vld [vmem:[#allocation2 + $0x258] sm:$0xf]
        %v1954 = vld [vmem:[#allocation2 + $0x25c] sm:$0xf]
        %v1955 = vld [vmem:[#allocation2 + $0x260] sm:$0xf]
        %v1956 = vld [vmem:[#allocation2 + $0x264] sm:$0xf]
        %v1957 = vld [vmem:[#allocation2 + $0x268] sm:$0xf]
        %v1958 = vld [vmem:[#allocation2 + $0x26c] sm:$0xf]
        %v1959 = vld [vmem:[#allocation2 + $0x270] sm:$0xf]
        %v1960 = vld [vmem:[#allocation2 + $0x274] sm:$0xf]
        %v1961 = vrot.slane %v1936, 7
        %v1962 = vsel %vm209, 0.0, %v1961
        %v1963 = vrot.slane %v1936, 1
        %v1964 = vsel %vm213, 0.0, %v1963
        %v1965 = vpack.c.bf16 %v1962, %v1962
        %v1966 = vpack.c.bf16 %v1964, %v1964
        %v1967 = vpack.c.bf16 %v1936, %v1936
        %v1976 = vunpack.c.l.b16 %v1945
        %v1977 = vunpack.c.l.b16 %v1946
        %v1978 = vunpack.c.l.b16 %v1947
        %v1979 = vunpack.c.l.b16 %v1948
        %v1980 = vunpack.c.l.b16 %v1949
        %v1981 = vunpack.c.l.b16 %v1950
        %v1982 = vunpack.c.l.b16 %v1951
        %v1983 = vunpack.c.l.b16 %v1952
        %v1984 = vpack.c.b16 %v1977, %v1976
        %v1985 = vpack.c.b16 %v1979, %v1978
        %v1986 = vpack.c.b16 %v1981, %v1980
        %v1987 = vpack.c.b16 %v1983, %v1982
        %v1993 = vsel %vm365, %v1967, 0
        %1995 = vmatprep.subr.bf16.mxu0 0
        %1996 = vmatpush1.bf16.msra.mxu0 0
        %1997 = vmatprep.subr.bf16.mxu0 0
        %1998 = vmatpush1.bf16.msra.mxu0 0
        %1999 = vmatprep.subr.bf16.mxu0 0
        %2000 = vmatpush1.bf16.msra.mxu0 0
        %2001 = vmatprep.subr.bf16.mxu0 0
        %2002 = vmatpush1.bf16.msra.mxu0 0
        %2003 = vmatprep.subr.bf16.mxu0 0
        %2004 = vmatpush1.bf16.msra.mxu0 %v1987
        %2005 = vmatprep.subr.bf16.mxu0 0
        %2006 = vmatpush1.bf16.msra.mxu0 %v1986
        %2007 = vmatprep.subr.bf16.mxu0 0
        %2008 = vmatpush1.bf16.msra.mxu0 %v1985
        %2009 = vmatprep.subr.bf16.mxu0 0
        %2010 = vmatpush1.bf16.msra.mxu0 %v1984
        %2011 = vmatprep.subr.bf16.mxu0 0
        %2012 = vmatpush2.bf16.msra.mxu0 0
        %2013 = vmatprep.subr.bf16.mxu0 0
        %2014 = vmatpush2.bf16.msra.mxu0 0
        %2015 = vmatprep.subr.bf16.mxu0 0
        %2016 = vmatpush2.bf16.msra.mxu0 0
        %2017 = vmatprep.subr.bf16.mxu0 0
        %2018 = vmatpush2.bf16.msra.mxu0 0
        %2019 = vmatprep.subr.bf16.mxu0 0
        %2020 = vmatpush2.bf16.msra.mxu0 0
        %2021 = vmatprep.subr.bf16.mxu0 0
        %2022 = vmatpush2.bf16.msra.mxu0 0
        %2023 = vmatprep.subr.bf16.mxu0 0
        %2024 = vmatpush2.bf16.msra.mxu0 0
        %2025 = vmatprep.subr.bf16.mxu0 0
        %2026 = vmatpush2.bf16.msra.mxu0 0
        %2027 = vmatprep.mubr.bf16.mxu0 0
        %2028 = vmatmul.mubr.bf16.gmra.mxu0 %v1993
        %v2029 = vpop.f32.mrf.mxu0
        %v2030 = vadd.f32 0.0, %v2029
        %v2031 = vpop.f32.mrf.mxu0
        %v2032 = vpop.f32.mrf.mxu0
        %v2033 = vpop.f32.mrf.mxu0
        %2034 = vdwg.mxu0
        %v2043 = vunpack.c.l.b16 %v1937
        %v2044 = vunpack.c.l.b16 %v1938
        %v2045 = vunpack.c.l.b16 %v1939
        %v2046 = vunpack.c.l.b16 %v1940
        %v2047 = vunpack.c.l.b16 %v1941
        %v2048 = vunpack.c.l.b16 %v1942
        %v2049 = vunpack.c.l.b16 %v1943
        %v2050 = vunpack.c.l.b16 %v1944
        %v2051 = vpack.c.b16 %v2044, %v2043
        %v2052 = vpack.c.b16 %v2046, %v2045
        %v2053 = vpack.c.b16 %v2048, %v2047
        %v2054 = vpack.c.b16 %v2050, %v2049
        %v2060 = vsel %vm365, %v1965, 0
        %2062 = vmatprep.subr.bf16.mxu0 0
        %2063 = vmatpush1.bf16.msra.mxu0 0
        %2064 = vmatprep.subr.bf16.mxu0 0
        %2065 = vmatpush1.bf16.msra.mxu0 0
        %2066 = vmatprep.subr.bf16.mxu0 0
        %2067 = vmatpush1.bf16.msra.mxu0 0
        %2068 = vmatprep.subr.bf16.mxu0 0
        %2069 = vmatpush1.bf16.msra.mxu0 0
        %2070 = vmatprep.subr.bf16.mxu0 0
        %2071 = vmatpush1.bf16.msra.mxu0 %v2054
        %2072 = vmatprep.subr.bf16.mxu0 0
        %2073 = vmatpush1.bf16.msra.mxu0 %v2053
        %2074 = vmatprep.subr.bf16.mxu0 0
        %2075 = vmatpush1.bf16.msra.mxu0 %v2052
        %2076 = vmatprep.subr.bf16.mxu0 0
        %2077 = vmatpush1.bf16.msra.mxu0 %v2051
        %2078 = vmatprep.subr.bf16.mxu0 0
        %2079 = vmatpush2.bf16.msra.mxu0 0
        %2080 = vmatprep.subr.bf16.mxu0 0
        %2081 = vmatpush2.bf16.msra.mxu0 0
        %2082 = vmatprep.subr.bf16.mxu0 0
        %2083 = vmatpush2.bf16.msra.mxu0 0
        %2084 = vmatprep.subr.bf16.mxu0 0
        %2085 = vmatpush2.bf16.msra.mxu0 0
        %2086 = vmatprep.subr.bf16.mxu0 0
        %2087 = vmatpush2.bf16.msra.mxu0 0
        %2088 = vmatprep.subr.bf16.mxu0 0
        %2089 = vmatpush2.bf16.msra.mxu0 0
        %2090 = vmatprep.subr.bf16.mxu0 0
        %2091 = vmatpush2.bf16.msra.mxu0 0
        %2092 = vmatprep.subr.bf16.mxu0 0
        %2093 = vmatpush2.bf16.msra.mxu0 0
        %2094 = vmatprep.mubr.bf16.mxu0 0
        %2095 = vmatmul.mubr.bf16.gmra.mxu0 %v2060
        %v2096 = vpop.f32.mrf.mxu0
        %v2097 = vadd.f32 %v2030, %v2096
        %v2098 = vpop.f32.mrf.mxu0
        %v2099 = vpop.f32.mrf.mxu0
        %v2100 = vpop.f32.mrf.mxu0
        %2101 = vdwg.mxu0
        %v2110 = vunpack.c.l.b16 %v1953
        %v2111 = vunpack.c.l.b16 %v1954
        %v2112 = vunpack.c.l.b16 %v1955
        %v2113 = vunpack.c.l.b16 %v1956
        %v2114 = vunpack.c.l.b16 %v1957
        %v2115 = vunpack.c.l.b16 %v1958
        %v2116 = vunpack.c.l.b16 %v1959
        %v2117 = vunpack.c.l.b16 %v1960
        %v2118 = vpack.c.b16 %v2111, %v2110
        %v2119 = vpack.c.b16 %v2113, %v2112
        %v2120 = vpack.c.b16 %v2115, %v2114
        %v2121 = vpack.c.b16 %v2117, %v2116
        %v2127 = vsel %vm365, %v1966, 0
        %2129 = vmatprep.subr.bf16.mxu0 0
        %2130 = vmatpush1.bf16.msra.mxu0 0
        %2131 = vmatprep.subr.bf16.mxu0 0
        %2132 = vmatpush1.bf16.msra.mxu0 0
        %2133 = vmatprep.subr.bf16.mxu0 0
        %2134 = vmatpush1.bf16.msra.mxu0 0
        %2135 = vmatprep.subr.bf16.mxu0 0
        %2136 = vmatpush1.bf16.msra.mxu0 0
        %2137 = vmatprep.subr.bf16.mxu0 0
        %2138 = vmatpush1.bf16.msra.mxu0 %v2121
        %2139 = vmatprep.subr.bf16.mxu0 0
        %2140 = vmatpush1.bf16.msra.mxu0 %v2120
        %2141 = vmatprep.subr.bf16.mxu0 0
        %2142 = vmatpush1.bf16.msra.mxu0 %v2119
        %2143 = vmatprep.subr.bf16.mxu0 0
        %2144 = vmatpush1.bf16.msra.mxu0 %v2118
        %2145 = vmatprep.subr.bf16.mxu0 0
        %2146 = vmatpush2.bf16.msra.mxu0 0
        %2147 = vmatprep.subr.bf16.mxu0 0
        %2148 = vmatpush2.bf16.msra.mxu0 0
        %2149 = vmatprep.subr.bf16.mxu0 0
        %2150 = vmatpush2.bf16.msra.mxu0 0
        %2151 = vmatprep.subr.bf16.mxu0 0
        %2152 = vmatpush2.bf16.msra.mxu0 0
        %2153 = vmatprep.subr.bf16.mxu0 0
        %2154 = vmatpush2.bf16.msra.mxu0 0
        %2155 = vmatprep.subr.bf16.mxu0 0
        %2156 = vmatpush2.bf16.msra.mxu0 0
        %2157 = vmatprep.subr.bf16.mxu0 0
        %2158 = vmatpush2.bf16.msra.mxu0 0
        %2159 = vmatprep.subr.bf16.mxu0 0
        %2160 = vmatpush2.bf16.msra.mxu0 0
        %2161 = vmatprep.mubr.bf16.mxu0 0
        %2162 = vmatmul.mubr.bf16.gmra.mxu0 %v2127
        %v2163 = vpop.f32.mrf.mxu0
        %v2164 = vadd.f32 0.0, %v2163
        %v2165 = vpop.f32.mrf.mxu0
        %v2166 = vpop.f32.mrf.mxu0
        %v2167 = vpop.f32.mrf.mxu0
        %2168 = vdwg.mxu0
        %v2169 = vadd.f32 %v2097, %v2164
        %v2170 = vld [vmem:[#allocation4 + $0x15] sm:$0x1]
        %v2171 = vlaneseq
        %v2172 = vshrl.u32 %v2171, 7
        %v2173 = vsub.s32 0, %v2172
        %v2174 = vrot.slane %v2170, %v2173
        %v2175 = vadd.f32 %v2169, %v2174
        %v2176 = vsel %vm365, %v2175, 0.0
        %2177 = vadd.xlane.f32.xlu0 %v2176
        %v2178 = vpop.xlane.xlu0 %2177
        %v2179 = vmul.f32 %v2178, %v369
        %v2180 = vsub.f32 %v2175, %v2179
        %v2181 = vmul.f32 %v2180, %v2180
        %v2182 = vsel %vm365, %v2181, 0.0
        %2183 = vadd.xlane.f32.xlu0 %v2182
        %v2184 = vpop.xlane.xlu0 %2183
        %v2185 = vmul.f32 %v2184, %v369
        %v2186 = vadd.f32 %v2185, 1e-06
        %v2187 = vrsqrt.pop %v2186
        %v2188 = vmul.f32 %v2180, %v2187
        %v2189 = vld [vmem:[#allocation4 + $0x16] sm:$0x1]
        %v2190 = vlaneseq
        %v2191 = vshrl.u32 %v2190, 7
        %v2192 = vsub.s32 0, %v2191
        %v2193 = vrot.slane %v2189, %v2192
        %v2194 = vmul.f32 %v2188, %v2193
        %v2195 = vld [vmem:[#allocation4 + $0x17] sm:$0x1]
        %v2196 = vlaneseq
        %v2197 = vshrl.u32 %v2196, 7
        %v2198 = vsub.s32 0, %v2197
        %v2199 = vrot.slane %v2195, %v2198
        %v2200 = vadd.f32 %v2194, %v2199
        %v2201 = vxor.u32 %v2200, 2147483648
        %v2202 = vmul.f32 %v2201, 1.442695
        %v2203 = vpow.pop %v2202
        %v2204 = vadd.f32 %v2203, 1.0
        %v2205 = vrcp.pop %v2204
        %v2206 = vmul.f32 1.0, %v2205
        %v2207 = vmul.f32 %v2200, %v2206
        %v2208 = vld [vmem:[#allocation2 + $0x278] sm:$0xf]
        %v2209 = vld [vmem:[#allocation2 + $0x27c] sm:$0xf]
        %v2210 = vld [vmem:[#allocation2 + $0x280] sm:$0xf]
        %v2211 = vld [vmem:[#allocation2 + $0x284] sm:$0xf]
        %v2212 = vld [vmem:[#allocation2 + $0x288] sm:$0xf]
        %v2213 = vld [vmem:[#allocation2 + $0x28c] sm:$0xf]
        %v2214 = vld [vmem:[#allocation2 + $0x290] sm:$0xf]
        %v2215 = vld [vmem:[#allocation2 + $0x294] sm:$0xf]
        %v2216 = vld [vmem:[#allocation2 + $0x298] sm:$0xf]
        %v2217 = vld [vmem:[#allocation2 + $0x29c] sm:$0xf]
        %v2218 = vld [vmem:[#allocation2 + $0x2a0] sm:$0xf]
        %v2219 = vld [vmem:[#allocation2 + $0x2a4] sm:$0xf]
        %v2220 = vld [vmem:[#allocation2 + $0x2a8] sm:$0xf]
        %v2221 = vld [vmem:[#allocation2 + $0x2ac] sm:$0xf]
        %v2222 = vld [vmem:[#allocation2 + $0x2b0] sm:$0xf]
        %v2223 = vld [vmem:[#allocation2 + $0x2b4] sm:$0xf]
        %v2224 = vld [vmem:[#allocation2 + $0x2b8] sm:$0xf]
        %v2225 = vld [vmem:[#allocation2 + $0x2bc] sm:$0xf]
        %v2226 = vld [vmem:[#allocation2 + $0x2c0] sm:$0xf]
        %v2227 = vld [vmem:[#allocation2 + $0x2c4] sm:$0xf]
        %v2228 = vld [vmem:[#allocation2 + $0x2c8] sm:$0xf]
        %v2229 = vld [vmem:[#allocation2 + $0x2cc] sm:$0xf]
        %v2230 = vld [vmem:[#allocation2 + $0x2d0] sm:$0xf]
        %v2231 = vld [vmem:[#allocation2 + $0x2d4] sm:$0xf]
        %v2232 = vrot.slane %v2207, 7
        %v2233 = vsel %vm209, 0.0, %v2232
        %v2234 = vrot.slane %v2207, 1
        %v2235 = vsel %vm213, 0.0, %v2234
        %v2236 = vpack.c.bf16 %v2233, %v2233
        %v2237 = vpack.c.bf16 %v2235, %v2235
        %v2238 = vpack.c.bf16 %v2207, %v2207
        %v2247 = vunpack.c.l.b16 %v2216
        %v2248 = vunpack.c.l.b16 %v2217
        %v2249 = vunpack.c.l.b16 %v2218
        %v2250 = vunpack.c.l.b16 %v2219
        %v2251 = vunpack.c.l.b16 %v2220
        %v2252 = vunpack.c.l.b16 %v2221
        %v2253 = vunpack.c.l.b16 %v2222
        %v2254 = vunpack.c.l.b16 %v2223
        %v2255 = vpack.c.b16 %v2248, %v2247
        %v2256 = vpack.c.b16 %v2250, %v2249
        %v2257 = vpack.c.b16 %v2252, %v2251
        %v2258 = vpack.c.b16 %v2254, %v2253
        %v2264 = vsel %vm365, %v2238, 0
        %2266 = vmatprep.subr.bf16.mxu0 0
        %2267 = vmatpush1.bf16.msra.mxu0 0
        %2268 = vmatprep.subr.bf16.mxu0 0
        %2269 = vmatpush1.bf16.msra.mxu0 0
        %2270 = vmatprep.subr.bf16.mxu0 0
        %2271 = vmatpush1.bf16.msra.mxu0 0
        %2272 = vmatprep.subr.bf16.mxu0 0
        %2273 = vmatpush1.bf16.msra.mxu0 0
        %2274 = vmatprep.subr.bf16.mxu0 0
        %2275 = vmatpush1.bf16.msra.mxu0 %v2258
        %2276 = vmatprep.subr.bf16.mxu0 0
        %2277 = vmatpush1.bf16.msra.mxu0 %v2257
        %2278 = vmatprep.subr.bf16.mxu0 0
        %2279 = vmatpush1.bf16.msra.mxu0 %v2256
        %2280 = vmatprep.subr.bf16.mxu0 0
        %2281 = vmatpush1.bf16.msra.mxu0 %v2255
        %2282 = vmatprep.subr.bf16.mxu0 0
        %2283 = vmatpush2.bf16.msra.mxu0 0
        %2284 = vmatprep.subr.bf16.mxu0 0
        %2285 = vmatpush2.bf16.msra.mxu0 0
        %2286 = vmatprep.subr.bf16.mxu0 0
        %2287 = vmatpush2.bf16.msra.mxu0 0
        %2288 = vmatprep.subr.bf16.mxu0 0
        %2289 = vmatpush2.bf16.msra.mxu0 0
        %2290 = vmatprep.subr.bf16.mxu0 0
        %2291 = vmatpush2.bf16.msra.mxu0 0
        %2292 = vmatprep.subr.bf16.mxu0 0
        %2293 = vmatpush2.bf16.msra.mxu0 0
        %2294 = vmatprep.subr.bf16.mxu0 0
        %2295 = vmatpush2.bf16.msra.mxu0 0
        %2296 = vmatprep.subr.bf16.mxu0 0
        %2297 = vmatpush2.bf16.msra.mxu0 0
        %2298 = vmatprep.mubr.bf16.mxu0 0
        %2299 = vmatmul.mubr.bf16.gmra.mxu0 %v2264
        %v2300 = vpop.f32.mrf.mxu0
        %v2301 = vadd.f32 0.0, %v2300
        %v2302 = vpop.f32.mrf.mxu0
        %v2303 = vpop.f32.mrf.mxu0
        %v2304 = vpop.f32.mrf.mxu0
        %2305 = vdwg.mxu0
        %v2314 = vunpack.c.l.b16 %v2208
        %v2315 = vunpack.c.l.b16 %v2209
        %v2316 = vunpack.c.l.b16 %v2210
        %v2317 = vunpack.c.l.b16 %v2211
        %v2318 = vunpack.c.l.b16 %v2212
        %v2319 = vunpack.c.l.b16 %v2213
        %v2320 = vunpack.c.l.b16 %v2214
        %v2321 = vunpack.c.l.b16 %v2215
        %v2322 = vpack.c.b16 %v2315, %v2314
        %v2323 = vpack.c.b16 %v2317, %v2316
        %v2324 = vpack.c.b16 %v2319, %v2318
        %v2325 = vpack.c.b16 %v2321, %v2320
        %v2331 = vsel %vm365, %v2236, 0
        %2333 = vmatprep.subr.bf16.mxu0 0
        %2334 = vmatpush1.bf16.msra.mxu0 0
        %2335 = vmatprep.subr.bf16.mxu0 0
        %2336 = vmatpush1.bf16.msra.mxu0 0
        %2337 = vmatprep.subr.bf16.mxu0 0
        %2338 = vmatpush1.bf16.msra.mxu0 0
        %2339 = vmatprep.subr.bf16.mxu0 0
        %2340 = vmatpush1.bf16.msra.mxu0 0
        %2341 = vmatprep.subr.bf16.mxu0 0
        %2342 = vmatpush1.bf16.msra.mxu0 %v2325
        %2343 = vmatprep.subr.bf16.mxu0 0
        %2344 = vmatpush1.bf16.msra.mxu0 %v2324
        %2345 = vmatprep.subr.bf16.mxu0 0
        %2346 = vmatpush1.bf16.msra.mxu0 %v2323
        %2347 = vmatprep.subr.bf16.mxu0 0
        %2348 = vmatpush1.bf16.msra.mxu0 %v2322
        %2349 = vmatprep.subr.bf16.mxu0 0
        %2350 = vmatpush2.bf16.msra.mxu0 0
        %2351 = vmatprep.subr.bf16.mxu0 0
        %2352 = vmatpush2.bf16.msra.mxu0 0
        %2353 = vmatprep.subr.bf16.mxu0 0
        %2354 = vmatpush2.bf16.msra.mxu0 0
        %2355 = vmatprep.subr.bf16.mxu0 0
        %2356 = vmatpush2.bf16.msra.mxu0 0
        %2357 = vmatprep.subr.bf16.mxu0 0
        %2358 = vmatpush2.bf16.msra.mxu0 0
        %2359 = vmatprep.subr.bf16.mxu0 0
        %2360 = vmatpush2.bf16.msra.mxu0 0
        %2361 = vmatprep.subr.bf16.mxu0 0
        %2362 = vmatpush2.bf16.msra.mxu0 0
        %2363 = vmatprep.subr.bf16.mxu0 0
        %2364 = vmatpush2.bf16.msra.mxu0 0
        %2365 = vmatprep.mubr.bf16.mxu0 0
        %2366 = vmatmul.mubr.bf16.gmra.mxu0 %v2331
        %v2367 = vpop.f32.mrf.mxu0
        %v2368 = vadd.f32 %v2301, %v2367
        %v2369 = vpop.f32.mrf.mxu0
        %v2370 = vpop.f32.mrf.mxu0
        %v2371 = vpop.f32.mrf.mxu0
        %2372 = vdwg.mxu0
        %v2381 = vunpack.c.l.b16 %v2224
        %v2382 = vunpack.c.l.b16 %v2225
        %v2383 = vunpack.c.l.b16 %v2226
        %v2384 = vunpack.c.l.b16 %v2227
        %v2385 = vunpack.c.l.b16 %v2228
        %v2386 = vunpack.c.l.b16 %v2229
        %v2387 = vunpack.c.l.b16 %v2230
        %v2388 = vunpack.c.l.b16 %v2231
        %v2389 = vpack.c.b16 %v2382, %v2381
        %v2390 = vpack.c.b16 %v2384, %v2383
        %v2391 = vpack.c.b16 %v2386, %v2385
        %v2392 = vpack.c.b16 %v2388, %v2387
        %v2398 = vsel %vm365, %v2237, 0
        %2400 = vmatprep.subr.bf16.mxu0 0
        %2401 = vmatpush1.bf16.msra.mxu0 0
        %2402 = vmatprep.subr.bf16.mxu0 0
        %2403 = vmatpush1.bf16.msra.mxu0 0
        %2404 = vmatprep.subr.bf16.mxu0 0
        %2405 = vmatpush1.bf16.msra.mxu0 0
        %2406 = vmatprep.subr.bf16.mxu0 0
        %2407 = vmatpush1.bf16.msra.mxu0 0
        %2408 = vmatprep.subr.bf16.mxu0 0
        %2409 = vmatpush1.bf16.msra.mxu0 %v2392
        %2410 = vmatprep.subr.bf16.mxu0 0
        %2411 = vmatpush1.bf16.msra.mxu0 %v2391
        %2412 = vmatprep.subr.bf16.mxu0 0
        %2413 = vmatpush1.bf16.msra.mxu0 %v2390
        %2414 = vmatprep.subr.bf16.mxu0 0
        %2415 = vmatpush1.bf16.msra.mxu0 %v2389
        %2416 = vmatprep.subr.bf16.mxu0 0
        %2417 = vmatpush2.bf16.msra.mxu0 0
        %2418 = vmatprep.subr.bf16.mxu0 0
        %2419 = vmatpush2.bf16.msra.mxu0 0
        %2420 = vmatprep.subr.bf16.mxu0 0
        %2421 = vmatpush2.bf16.msra.mxu0 0
        %2422 = vmatprep.subr.bf16.mxu0 0
        %2423 = vmatpush2.bf16.msra.mxu0 0
        %2424 = vmatprep.subr.bf16.mxu0 0
        %2425 = vmatpush2.bf16.msra.mxu0 0
        %2426 = vmatprep.subr.bf16.mxu0 0
        %2427 = vmatpush2.bf16.msra.mxu0 0
        %2428 = vmatprep.subr.bf16.mxu0 0
        %2429 = vmatpush2.bf16.msra.mxu0 0
        %2430 = vmatprep.subr.bf16.mxu0 0
        %2431 = vmatpush2.bf16.msra.mxu0 0
        %2432 = vmatprep.mubr.bf16.mxu0 0
        %2433 = vmatmul.mubr.bf16.gmra.mxu0 %v2398
        %v2434 = vpop.f32.mrf.mxu0
        %v2435 = vadd.f32 0.0, %v2434
        %v2436 = vpop.f32.mrf.mxu0
        %v2437 = vpop.f32.mrf.mxu0
        %v2438 = vpop.f32.mrf.mxu0
        %2439 = vdwg.mxu0
        %v2440 = vadd.f32 %v2368, %v2435
        %v2441 = vld [vmem:[#allocation4 + $0x18] sm:$0x1]
        %v2442 = vlaneseq
        %v2443 = vshrl.u32 %v2442, 7
        %v2444 = vsub.s32 0, %v2443
        %v2445 = vrot.slane %v2441, %v2444
        %v2446 = vadd.f32 %v2440, %v2445
        %v2447 = vadd.f32 %v1904, %v2446
        %v2448 = vsel %vm365, %v2447, 0.0
        %2449 = vadd.xlane.f32.xlu0 %v2448
        %v2450 = vpop.xlane.xlu0 %2449
        %v2451 = vmul.f32 %v2450, %v369
        %v2452 = vsub.f32 %v2447, %v2451
        %v2453 = vmul.f32 %v2452, %v2452
        %v2454 = vsel %vm365, %v2453, 0.0
        %2455 = vadd.xlane.f32.xlu0 %v2454
        %v2456 = vpop.xlane.xlu0 %2455
        %v2457 = vmul.f32 %v2456, %v369
        %v2458 = vadd.f32 %v2457, 1e-06
        %v2459 = vrsqrt.pop %v2458
        %v2460 = vmul.f32 %v2452, %v2459
        %v2461 = vld [vmem:[#allocation4 + $0x19] sm:$0x1]
        %v2462 = vlaneseq
        %v2463 = vshrl.u32 %v2462, 7
        %v2464 = vsub.s32 0, %v2463
        %v2465 = vrot.slane %v2461, %v2464
        %v2466 = vmul.f32 %v2460, %v2465
        %v2467 = vld [vmem:[#allocation4 + $0x1a] sm:$0x1]
        %v2468 = vlaneseq
        %v2469 = vshrl.u32 %v2468, 7
        %v2470 = vsub.s32 0, %v2469
        %v2471 = vrot.slane %v2467, %v2470
        %v2472 = vadd.f32 %v2466, %v2471
        %v2473 = vxor.u32 %v2472, 2147483648
        %v2474 = vmul.f32 %v2473, 1.442695
        %v2475 = vpow.pop %v2474
        %v2476 = vadd.f32 %v2475, 1.0
        %v2477 = vrcp.pop %v2476
        %v2478 = vmul.f32 1.0, %v2477
        %v2479 = vmul.f32 %v2472, %v2478
        %v2480 = vld [vmem:[#allocation2 + $0x2d8] sm:$0xf]
        %v2481 = vld [vmem:[#allocation2 + $0x2dc] sm:$0xf]
        %v2482 = vld [vmem:[#allocation2 + $0x2e0] sm:$0xf]
        %v2483 = vld [vmem:[#allocation2 + $0x2e4] sm:$0xf]
        %v2484 = vld [vmem:[#allocation2 + $0x2e8] sm:$0xf]
        %v2485 = vld [vmem:[#allocation2 + $0x2ec] sm:$0xf]
        %v2486 = vld [vmem:[#allocation2 + $0x2f0] sm:$0xf]
        %v2487 = vld [vmem:[#allocation2 + $0x2f4] sm:$0xf]
        %v2488 = vld [vmem:[#allocation2 + $0x2f8] sm:$0xf]
        %v2489 = vld [vmem:[#allocation2 + $0x2fc] sm:$0xf]
        %v2490 = vld [vmem:[#allocation2 + $0x300] sm:$0xf]
        %v2491 = vld [vmem:[#allocation2 + $0x304] sm:$0xf]
        %v2492 = vld [vmem:[#allocation2 + $0x308] sm:$0xf]
        %v2493 = vld [vmem:[#allocation2 + $0x30c] sm:$0xf]
        %v2494 = vld [vmem:[#allocation2 + $0x310] sm:$0xf]
        %v2495 = vld [vmem:[#allocation2 + $0x314] sm:$0xf]
        %v2496 = vld [vmem:[#allocation2 + $0x318] sm:$0xf]
        %v2497 = vld [vmem:[#allocation2 + $0x31c] sm:$0xf]
        %v2498 = vld [vmem:[#allocation2 + $0x320] sm:$0xf]
        %v2499 = vld [vmem:[#allocation2 + $0x324] sm:$0xf]
        %v2500 = vld [vmem:[#allocation2 + $0x328] sm:$0xf]
        %v2501 = vld [vmem:[#allocation2 + $0x32c] sm:$0xf]
        %v2502 = vld [vmem:[#allocation2 + $0x330] sm:$0xf]
        %v2503 = vld [vmem:[#allocation2 + $0x334] sm:$0xf]
        %v2504 = vrot.slane %v2479, 7
        %v2505 = vsel %vm209, 0.0, %v2504
        %v2506 = vrot.slane %v2479, 1
        %v2507 = vsel %vm213, 0.0, %v2506
        %v2508 = vpack.c.bf16 %v2505, %v2505
        %v2509 = vpack.c.bf16 %v2507, %v2507
        %v2510 = vpack.c.bf16 %v2479, %v2479
        %v2519 = vunpack.c.l.b16 %v2488
        %v2520 = vunpack.c.l.b16 %v2489
        %v2521 = vunpack.c.l.b16 %v2490
        %v2522 = vunpack.c.l.b16 %v2491
        %v2523 = vunpack.c.l.b16 %v2492
        %v2524 = vunpack.c.l.b16 %v2493
        %v2525 = vunpack.c.l.b16 %v2494
        %v2526 = vunpack.c.l.b16 %v2495
        %v2527 = vpack.c.b16 %v2520, %v2519
        %v2528 = vpack.c.b16 %v2522, %v2521
        %v2529 = vpack.c.b16 %v2524, %v2523
        %v2530 = vpack.c.b16 %v2526, %v2525
        %v2536 = vsel %vm365, %v2510, 0
        %2538 = vmatprep.subr.bf16.mxu0 0
        %2539 = vmatpush1.bf16.msra.mxu0 0
        %2540 = vmatprep.subr.bf16.mxu0 0
        %2541 = vmatpush1.bf16.msra.mxu0 0
        %2542 = vmatprep.subr.bf16.mxu0 0
        %2543 = vmatpush1.bf16.msra.mxu0 0
        %2544 = vmatprep.subr.bf16.mxu0 0
        %2545 = vmatpush1.bf16.msra.mxu0 0
        %2546 = vmatprep.subr.bf16.mxu0 0
        %2547 = vmatpush1.bf16.msra.mxu0 %v2530
        %2548 = vmatprep.subr.bf16.mxu0 0
        %2549 = vmatpush1.bf16.msra.mxu0 %v2529
        %2550 = vmatprep.subr.bf16.mxu0 0
        %2551 = vmatpush1.bf16.msra.mxu0 %v2528
        %2552 = vmatprep.subr.bf16.mxu0 0
        %2553 = vmatpush1.bf16.msra.mxu0 %v2527
        %2554 = vmatprep.subr.bf16.mxu0 0
        %2555 = vmatpush2.bf16.msra.mxu0 0
        %2556 = vmatprep.subr.bf16.mxu0 0
        %2557 = vmatpush2.bf16.msra.mxu0 0
        %2558 = vmatprep.subr.bf16.mxu0 0
        %2559 = vmatpush2.bf16.msra.mxu0 0
        %2560 = vmatprep.subr.bf16.mxu0 0
        %2561 = vmatpush2.bf16.msra.mxu0 0
        %2562 = vmatprep.subr.bf16.mxu0 0
        %2563 = vmatpush2.bf16.msra.mxu0 0
        %2564 = vmatprep.subr.bf16.mxu0 0
        %2565 = vmatpush2.bf16.msra.mxu0 0
        %2566 = vmatprep.subr.bf16.mxu0 0
        %2567 = vmatpush2.bf16.msra.mxu0 0
        %2568 = vmatprep.subr.bf16.mxu0 0
        %2569 = vmatpush2.bf16.msra.mxu0 0
        %2570 = vmatprep.mubr.bf16.mxu0 0
        %2571 = vmatmul.mubr.bf16.gmra.mxu0 %v2536
        %v2572 = vpop.f32.mrf.mxu0
        %v2573 = vadd.f32 0.0, %v2572
        %v2574 = vpop.f32.mrf.mxu0
        %v2575 = vpop.f32.mrf.mxu0
        %v2576 = vpop.f32.mrf.mxu0
        %2577 = vdwg.mxu0
        %v2586 = vunpack.c.l.b16 %v2480
        %v2587 = vunpack.c.l.b16 %v2481
        %v2588 = vunpack.c.l.b16 %v2482
        %v2589 = vunpack.c.l.b16 %v2483
        %v2590 = vunpack.c.l.b16 %v2484
        %v2591 = vunpack.c.l.b16 %v2485
        %v2592 = vunpack.c.l.b16 %v2486
        %v2593 = vunpack.c.l.b16 %v2487
        %v2594 = vpack.c.b16 %v2587, %v2586
        %v2595 = vpack.c.b16 %v2589, %v2588
        %v2596 = vpack.c.b16 %v2591, %v2590
        %v2597 = vpack.c.b16 %v2593, %v2592
        %v2603 = vsel %vm365, %v2508, 0
        %2605 = vmatprep.subr.bf16.mxu0 0
        %2606 = vmatpush1.bf16.msra.mxu0 0
        %2607 = vmatprep.subr.bf16.mxu0 0
        %2608 = vmatpush1.bf16.msra.mxu0 0
        %2609 = vmatprep.subr.bf16.mxu0 0
        %2610 = vmatpush1.bf16.msra.mxu0 0
        %2611 = vmatprep.subr.bf16.mxu0 0
        %2612 = vmatpush1.bf16.msra.mxu0 0
        %2613 = vmatprep.subr.bf16.mxu0 0
        %2614 = vmatpush1.bf16.msra.mxu0 %v2597
        %2615 = vmatprep.subr.bf16.mxu0 0
        %2616 = vmatpush1.bf16.msra.mxu0 %v2596
        %2617 = vmatprep.subr.bf16.mxu0 0
        %2618 = vmatpush1.bf16.msra.mxu0 %v2595
        %2619 = vmatprep.subr.bf16.mxu0 0
        %2620 = vmatpush1.bf16.msra.mxu0 %v2594
        %2621 = vmatprep.subr.bf16.mxu0 0
        %2622 = vmatpush2.bf16.msra.mxu0 0
        %2623 = vmatprep.subr.bf16.mxu0 0
        %2624 = vmatpush2.bf16.msra.mxu0 0
        %2625 = vmatprep.subr.bf16.mxu0 0
        %2626 = vmatpush2.bf16.msra.mxu0 0
        %2627 = vmatprep.subr.bf16.mxu0 0
        %2628 = vmatpush2.bf16.msra.mxu0 0
        %2629 = vmatprep.subr.bf16.mxu0 0
        %2630 = vmatpush2.bf16.msra.mxu0 0
        %2631 = vmatprep.subr.bf16.mxu0 0
        %2632 = vmatpush2.bf16.msra.mxu0 0
        %2633 = vmatprep.subr.bf16.mxu0 0
        %2634 = vmatpush2.bf16.msra.mxu0 0
        %2635 = vmatprep.subr.bf16.mxu0 0
        %2636 = vmatpush2.bf16.msra.mxu0 0
        %2637 = vmatprep.mubr.bf16.mxu0 0
        %2638 = vmatmul.mubr.bf16.gmra.mxu0 %v2603
        %v2639 = vpop.f32.mrf.mxu0
        %v2640 = vadd.f32 %v2573, %v2639
        %v2641 = vpop.f32.mrf.mxu0
        %v2642 = vpop.f32.mrf.mxu0
        %v2643 = vpop.f32.mrf.mxu0
        %2644 = vdwg.mxu0
        %v2653 = vunpack.c.l.b16 %v2496
        %v2654 = vunpack.c.l.b16 %v2497
        %v2655 = vunpack.c.l.b16 %v2498
        %v2656 = vunpack.c.l.b16 %v2499
        %v2657 = vunpack.c.l.b16 %v2500
        %v2658 = vunpack.c.l.b16 %v2501
        %v2659 = vunpack.c.l.b16 %v2502
        %v2660 = vunpack.c.l.b16 %v2503
        %v2661 = vpack.c.b16 %v2654, %v2653
        %v2662 = vpack.c.b16 %v2656, %v2655
        %v2663 = vpack.c.b16 %v2658, %v2657
        %v2664 = vpack.c.b16 %v2660, %v2659
        %v2670 = vsel %vm365, %v2509, 0
        %2672 = vmatprep.subr.bf16.mxu0 0
        %2673 = vmatpush1.bf16.msra.mxu0 0
        %2674 = vmatprep.subr.bf16.mxu0 0
        %2675 = vmatpush1.bf16.msra.mxu0 0
        %2676 = vmatprep.subr.bf16.mxu0 0
        %2677 = vmatpush1.bf16.msra.mxu0 0
        %2678 = vmatprep.subr.bf16.mxu0 0
        %2679 = vmatpush1.bf16.msra.mxu0 0
        %2680 = vmatprep.subr.bf16.mxu0 0
        %2681 = vmatpush1.bf16.msra.mxu0 %v2664
        %2682 = vmatprep.subr.bf16.mxu0 0
        %2683 = vmatpush1.bf16.msra.mxu0 %v2663
        %2684 = vmatprep.subr.bf16.mxu0 0
        %2685 = vmatpush1.bf16.msra.mxu0 %v2662
        %2686 = vmatprep.subr.bf16.mxu0 0
        %2687 = vmatpush1.bf16.msra.mxu0 %v2661
        %2688 = vmatprep.subr.bf16.mxu0 0
        %2689 = vmatpush2.bf16.msra.mxu0 0
        %2690 = vmatprep.subr.bf16.mxu0 0
        %2691 = vmatpush2.bf16.msra.mxu0 0
        %2692 = vmatprep.subr.bf16.mxu0 0
        %2693 = vmatpush2.bf16.msra.mxu0 0
        %2694 = vmatprep.subr.bf16.mxu0 0
        %2695 = vmatpush2.bf16.msra.mxu0 0
        %2696 = vmatprep.subr.bf16.mxu0 0
        %2697 = vmatpush2.bf16.msra.mxu0 0
        %2698 = vmatprep.subr.bf16.mxu0 0
        %2699 = vmatpush2.bf16.msra.mxu0 0
        %2700 = vmatprep.subr.bf16.mxu0 0
        %2701 = vmatpush2.bf16.msra.mxu0 0
        %2702 = vmatprep.subr.bf16.mxu0 0
        %2703 = vmatpush2.bf16.msra.mxu0 0
        %2704 = vmatprep.mubr.bf16.mxu0 0
        %2705 = vmatmul.mubr.bf16.gmra.mxu0 %v2670
        %v2706 = vpop.f32.mrf.mxu0
        %v2707 = vadd.f32 0.0, %v2706
        %v2708 = vpop.f32.mrf.mxu0
        %v2709 = vpop.f32.mrf.mxu0
        %v2710 = vpop.f32.mrf.mxu0
        %2711 = vdwg.mxu0
        %v2712 = vadd.f32 %v2640, %v2707
        %v2713 = vld [vmem:[#allocation4 + $0x1b] sm:$0x1]
        %v2714 = vlaneseq
        %v2715 = vshrl.u32 %v2714, 7
        %v2716 = vsub.s32 0, %v2715
        %v2717 = vrot.slane %v2713, %v2716
        %v2718 = vadd.f32 %v2712, %v2717
        %v2719 = vsel %vm365, %v2718, 0.0
        %2720 = vadd.xlane.f32.xlu0 %v2719
        %v2721 = vpop.xlane.xlu0 %2720
        %v2722 = vmul.f32 %v2721, %v369
        %v2723 = vsub.f32 %v2718, %v2722
        %v2724 = vmul.f32 %v2723, %v2723
        %v2725 = vsel %vm365, %v2724, 0.0
        %2726 = vadd.xlane.f32.xlu0 %v2725
        %v2727 = vpop.xlane.xlu0 %2726
        %v2728 = vmul.f32 %v2727, %v369
        %v2729 = vadd.f32 %v2728, 1e-06
        %v2730 = vrsqrt.pop %v2729
        %v2731 = vmul.f32 %v2723, %v2730
        %v2732 = vld [vmem:[#allocation4 + $0x1c] sm:$0x1]
        %v2733 = vlaneseq
        %v2734 = vshrl.u32 %v2733, 7
        %v2735 = vsub.s32 0, %v2734
        %v2736 = vrot.slane %v2732, %v2735
        %v2737 = vmul.f32 %v2731, %v2736
        %v2738 = vld [vmem:[#allocation4 + $0x1d] sm:$0x1]
        %v2739 = vlaneseq
        %v2740 = vshrl.u32 %v2739, 7
        %v2741 = vsub.s32 0, %v2740
        %v2742 = vrot.slane %v2738, %v2741
        %v2743 = vadd.f32 %v2737, %v2742
        %v2744 = vxor.u32 %v2743, 2147483648
        %v2745 = vmul.f32 %v2744, 1.442695
        %v2746 = vpow.pop %v2745
        %v2747 = vadd.f32 %v2746, 1.0
        %v2748 = vrcp.pop %v2747
        %v2749 = vmul.f32 1.0, %v2748
        %v2750 = vmul.f32 %v2743, %v2749
        %v2751 = vld [vmem:[#allocation2 + $0x338] sm:$0xf]
        %v2752 = vld [vmem:[#allocation2 + $0x33c] sm:$0xf]
        %v2753 = vld [vmem:[#allocation2 + $0x340] sm:$0xf]
        %v2754 = vld [vmem:[#allocation2 + $0x344] sm:$0xf]
        %v2755 = vld [vmem:[#allocation2 + $0x348] sm:$0xf]
        %v2756 = vld [vmem:[#allocation2 + $0x34c] sm:$0xf]
        %v2757 = vld [vmem:[#allocation2 + $0x350] sm:$0xf]
        %v2758 = vld [vmem:[#allocation2 + $0x354] sm:$0xf]
        %v2759 = vld [vmem:[#allocation2 + $0x358] sm:$0xf]
        %v2760 = vld [vmem:[#allocation2 + $0x35c] sm:$0xf]
        %v2761 = vld [vmem:[#allocation2 + $0x360] sm:$0xf]
        %v2762 = vld [vmem:[#allocation2 + $0x364] sm:$0xf]
        %v2763 = vld [vmem:[#allocation2 + $0x368] sm:$0xf]
        %v2764 = vld [vmem:[#allocation2 + $0x36c] sm:$0xf]
        %v2765 = vld [vmem:[#allocation2 + $0x370] sm:$0xf]
        %v2766 = vld [vmem:[#allocation2 + $0x374] sm:$0xf]
        %v2767 = vld [vmem:[#allocation2 + $0x378] sm:$0xf]
        %v2768 = vld [vmem:[#allocation2 + $0x37c] sm:$0xf]
        %v2769 = vld [vmem:[#allocation2 + $0x380] sm:$0xf]
        %v2770 = vld [vmem:[#allocation2 + $0x384] sm:$0xf]
        %v2771 = vld [vmem:[#allocation2 + $0x388] sm:$0xf]
        %v2772 = vld [vmem:[#allocation2 + $0x38c] sm:$0xf]
        %v2773 = vld [vmem:[#allocation2 + $0x390] sm:$0xf]
        %v2774 = vld [vmem:[#allocation2 + $0x394] sm:$0xf]
        %v2775 = vrot.slane %v2750, 7
        %v2776 = vsel %vm209, 0.0, %v2775
        %v2777 = vrot.slane %v2750, 1
        %v2778 = vsel %vm213, 0.0, %v2777
        %v2779 = vpack.c.bf16 %v2776, %v2776
        %v2780 = vpack.c.bf16 %v2778, %v2778
        %v2781 = vpack.c.bf16 %v2750, %v2750
        %v2790 = vunpack.c.l.b16 %v2759
        %v2791 = vunpack.c.l.b16 %v2760
        %v2792 = vunpack.c.l.b16 %v2761
        %v2793 = vunpack.c.l.b16 %v2762
        %v2794 = vunpack.c.l.b16 %v2763
        %v2795 = vunpack.c.l.b16 %v2764
        %v2796 = vunpack.c.l.b16 %v2765
        %v2797 = vunpack.c.l.b16 %v2766
        %v2798 = vpack.c.b16 %v2791, %v2790
        %v2799 = vpack.c.b16 %v2793, %v2792
        %v2800 = vpack.c.b16 %v2795, %v2794
        %v2801 = vpack.c.b16 %v2797, %v2796
        %v2807 = vsel %vm365, %v2781, 0
        %2809 = vmatprep.subr.bf16.mxu0 0
        %2810 = vmatpush1.bf16.msra.mxu0 0
        %2811 = vmatprep.subr.bf16.mxu0 0
        %2812 = vmatpush1.bf16.msra.mxu0 0
        %2813 = vmatprep.subr.bf16.mxu0 0
        %2814 = vmatpush1.bf16.msra.mxu0 0
        %2815 = vmatprep.subr.bf16.mxu0 0
        %2816 = vmatpush1.bf16.msra.mxu0 0
        %2817 = vmatprep.subr.bf16.mxu0 0
        %2818 = vmatpush1.bf16.msra.mxu0 %v2801
        %2819 = vmatprep.subr.bf16.mxu0 0
        %2820 = vmatpush1.bf16.msra.mxu0 %v2800
        %2821 = vmatprep.subr.bf16.mxu0 0
        %2822 = vmatpush1.bf16.msra.mxu0 %v2799
        %2823 = vmatprep.subr.bf16.mxu0 0
        %2824 = vmatpush1.bf16.msra.mxu0 %v2798
        %2825 = vmatprep.subr.bf16.mxu0 0
        %2826 = vmatpush2.bf16.msra.mxu0 0
        %2827 = vmatprep.subr.bf16.mxu0 0
        %2828 = vmatpush2.bf16.msra.mxu0 0
        %2829 = vmatprep.subr.bf16.mxu0 0
        %2830 = vmatpush2.bf16.msra.mxu0 0
        %2831 = vmatprep.subr.bf16.mxu0 0
        %2832 = vmatpush2.bf16.msra.mxu0 0
        %2833 = vmatprep.subr.bf16.mxu0 0
        %2834 = vmatpush2.bf16.msra.mxu0 0
        %2835 = vmatprep.subr.bf16.mxu0 0
        %2836 = vmatpush2.bf16.msra.mxu0 0
        %2837 = vmatprep.subr.bf16.mxu0 0
        %2838 = vmatpush2.bf16.msra.mxu0 0
        %2839 = vmatprep.subr.bf16.mxu0 0
        %2840 = vmatpush2.bf16.msra.mxu0 0
        %2841 = vmatprep.mubr.bf16.mxu0 0
        %2842 = vmatmul.mubr.bf16.gmra.mxu0 %v2807
        %v2843 = vpop.f32.mrf.mxu0
        %v2844 = vadd.f32 0.0, %v2843
        %v2845 = vpop.f32.mrf.mxu0
        %v2846 = vpop.f32.mrf.mxu0
        %v2847 = vpop.f32.mrf.mxu0
        %2848 = vdwg.mxu0
        %v2857 = vunpack.c.l.b16 %v2751
        %v2858 = vunpack.c.l.b16 %v2752
        %v2859 = vunpack.c.l.b16 %v2753
        %v2860 = vunpack.c.l.b16 %v2754
        %v2861 = vunpack.c.l.b16 %v2755
        %v2862 = vunpack.c.l.b16 %v2756
        %v2863 = vunpack.c.l.b16 %v2757
        %v2864 = vunpack.c.l.b16 %v2758
        %v2865 = vpack.c.b16 %v2858, %v2857
        %v2866 = vpack.c.b16 %v2860, %v2859
        %v2867 = vpack.c.b16 %v2862, %v2861
        %v2868 = vpack.c.b16 %v2864, %v2863
        %v2874 = vsel %vm365, %v2779, 0
        %2876 = vmatprep.subr.bf16.mxu0 0
        %2877 = vmatpush1.bf16.msra.mxu0 0
        %2878 = vmatprep.subr.bf16.mxu0 0
        %2879 = vmatpush1.bf16.msra.mxu0 0
        %2880 = vmatprep.subr.bf16.mxu0 0
        %2881 = vmatpush1.bf16.msra.mxu0 0
        %2882 = vmatprep.subr.bf16.mxu0 0
        %2883 = vmatpush1.bf16.msra.mxu0 0
        %2884 = vmatprep.subr.bf16.mxu0 0
        %2885 = vmatpush1.bf16.msra.mxu0 %v2868
        %2886 = vmatprep.subr.bf16.mxu0 0
        %2887 = vmatpush1.bf16.msra.mxu0 %v2867
        %2888 = vmatprep.subr.bf16.mxu0 0
        %2889 = vmatpush1.bf16.msra.mxu0 %v2866
        %2890 = vmatprep.subr.bf16.mxu0 0
        %2891 = vmatpush1.bf16.msra.mxu0 %v2865
        %2892 = vmatprep.subr.bf16.mxu0 0
        %2893 = vmatpush2.bf16.msra.mxu0 0
        %2894 = vmatprep.subr.bf16.mxu0 0
        %2895 = vmatpush2.bf16.msra.mxu0 0
        %2896 = vmatprep.subr.bf16.mxu0 0
        %2897 = vmatpush2.bf16.msra.mxu0 0
        %2898 = vmatprep.subr.bf16.mxu0 0
        %2899 = vmatpush2.bf16.msra.mxu0 0
        %2900 = vmatprep.subr.bf16.mxu0 0
        %2901 = vmatpush2.bf16.msra.mxu0 0
        %2902 = vmatprep.subr.bf16.mxu0 0
        %2903 = vmatpush2.bf16.msra.mxu0 0
        %2904 = vmatprep.subr.bf16.mxu0 0
        %2905 = vmatpush2.bf16.msra.mxu0 0
        %2906 = vmatprep.subr.bf16.mxu0 0
        %2907 = vmatpush2.bf16.msra.mxu0 0
        %2908 = vmatprep.mubr.bf16.mxu0 0
        %2909 = vmatmul.mubr.bf16.gmra.mxu0 %v2874
        %v2910 = vpop.f32.mrf.mxu0
        %v2911 = vadd.f32 %v2844, %v2910
        %v2912 = vpop.f32.mrf.mxu0
        %v2913 = vpop.f32.mrf.mxu0
        %v2914 = vpop.f32.mrf.mxu0
        %2915 = vdwg.mxu0
        %v2924 = vunpack.c.l.b16 %v2767
        %v2925 = vunpack.c.l.b16 %v2768
        %v2926 = vunpack.c.l.b16 %v2769
        %v2927 = vunpack.c.l.b16 %v2770
        %v2928 = vunpack.c.l.b16 %v2771
        %v2929 = vunpack.c.l.b16 %v2772
        %v2930 = vunpack.c.l.b16 %v2773
        %v2931 = vunpack.c.l.b16 %v2774
        %v2932 = vpack.c.b16 %v2925, %v2924
        %v2933 = vpack.c.b16 %v2927, %v2926
        %v2934 = vpack.c.b16 %v2929, %v2928
        %v2935 = vpack.c.b16 %v2931, %v2930
        %v2941 = vsel %vm365, %v2780, 0
        %2943 = vmatprep.subr.bf16.mxu0 0
        %2944 = vmatpush1.bf16.msra.mxu0 0
        %2945 = vmatprep.subr.bf16.mxu0 0
        %2946 = vmatpush1.bf16.msra.mxu0 0
        %2947 = vmatprep.subr.bf16.mxu0 0
        %2948 = vmatpush1.bf16.msra.mxu0 0
        %2949 = vmatprep.subr.bf16.mxu0 0
        %2950 = vmatpush1.bf16.msra.mxu0 0
        %2951 = vmatprep.subr.bf16.mxu0 0
        %2952 = vmatpush1.bf16.msra.mxu0 %v2935
        %2953 = vmatprep.subr.bf16.mxu0 0
        %2954 = vmatpush1.bf16.msra.mxu0 %v2934
        %2955 = vmatprep.subr.bf16.mxu0 0
        %2956 = vmatpush1.bf16.msra.mxu0 %v2933
        %2957 = vmatprep.subr.bf16.mxu0 0
        %2958 = vmatpush1.bf16.msra.mxu0 %v2932
        %2959 = vmatprep.subr.bf16.mxu0 0
        %2960 = vmatpush2.bf16.msra.mxu0 0
        %2961 = vmatprep.subr.bf16.mxu0 0
        %2962 = vmatpush2.bf16.msra.mxu0 0
        %2963 = vmatprep.subr.bf16.mxu0 0
        %2964 = vmatpush2.bf16.msra.mxu0 0
        %2965 = vmatprep.subr.bf16.mxu0 0
        %2966 = vmatpush2.bf16.msra.mxu0 0
        %2967 = vmatprep.subr.bf16.mxu0 0
        %2968 = vmatpush2.bf16.msra.mxu0 0
        %2969 = vmatprep.subr.bf16.mxu0 0
        %2970 = vmatpush2.bf16.msra.mxu0 0
        %2971 = vmatprep.subr.bf16.mxu0 0
        %2972 = vmatpush2.bf16.msra.mxu0 0
        %2973 = vmatprep.subr.bf16.mxu0 0
        %2974 = vmatpush2.bf16.msra.mxu0 0
        %2975 = vmatprep.mubr.bf16.mxu0 0
        %2976 = vmatmul.mubr.bf16.gmra.mxu0 %v2941
        %v2977 = vpop.f32.mrf.mxu0
        %v2978 = vadd.f32 0.0, %v2977
        %v2979 = vpop.f32.mrf.mxu0
        %v2980 = vpop.f32.mrf.mxu0
        %v2981 = vpop.f32.mrf.mxu0
        %2982 = vdwg.mxu0
        %v2983 = vadd.f32 %v2911, %v2978
        %v2984 = vld [vmem:[#allocation4 + $0x1e] sm:$0x1]
        %v2985 = vlaneseq
        %v2986 = vshrl.u32 %v2985, 7
        %v2987 = vsub.s32 0, %v2986
        %v2988 = vrot.slane %v2984, %v2987
        %v2989 = vadd.f32 %v2983, %v2988
        %v2990 = vadd.f32 %v2447, %v2989
        %v2991 = vld [vmem:[#allocation2 + $0x398] sm:$0xf]
        %v2992 = vld [vmem:[#allocation2 + $0x39c] sm:$0xf]
        %v2993 = vld [vmem:[#allocation2 + $0x3a0] sm:$0xf]
        %v2994 = vld [vmem:[#allocation2 + $0x3a4] sm:$0xf]
        %v2995 = vld [vmem:[#allocation2 + $0x3a8] sm:$0xf]
        %v2996 = vld [vmem:[#allocation2 + $0x3ac] sm:$0xf]
        %v2997 = vld [vmem:[#allocation2 + $0x3b0] sm:$0xf]
        %v2998 = vld [vmem:[#allocation2 + $0x3b4] sm:$0xf]
        %v2999 = vld [vmem:[#allocation2 + $0x3b8] sm:$0xf]
        %v3000 = vld [vmem:[#allocation2 + $0x3bc] sm:$0xf]
        %v3001 = vld [vmem:[#allocation2 + $0x3c0] sm:$0xf]
        %v3002 = vld [vmem:[#allocation2 + $0x3c4] sm:$0xf]
        %v3003 = vld [vmem:[#allocation2 + $0x3c8] sm:$0xf]
        %v3004 = vld [vmem:[#allocation2 + $0x3cc] sm:$0xf]
        %v3005 = vld [vmem:[#allocation2 + $0x3d0] sm:$0xf]
        %v3006 = vld [vmem:[#allocation2 + $0x3d4] sm:$0xf]
        %v3007 = vld [vmem:[#allocation2 + $0x3d8] sm:$0xf]
        %v3008 = vld [vmem:[#allocation2 + $0x3dc] sm:$0xf]
        %v3009 = vld [vmem:[#allocation2 + $0x3e0] sm:$0xf]
        %v3010 = vld [vmem:[#allocation2 + $0x3e4] sm:$0xf]
        %v3011 = vld [vmem:[#allocation2 + $0x3e8] sm:$0xf]
        %v3012 = vld [vmem:[#allocation2 + $0x3ec] sm:$0xf]
        %v3013 = vld [vmem:[#allocation2 + $0x3f0] sm:$0xf]
        %v3014 = vld [vmem:[#allocation2 + $0x3f4] sm:$0xf]
        %v3015 = vld [vmem:[#allocation2 + $0x3f8] sm:$0xf]
        %v3016 = vld [vmem:[#allocation2 + $0x3fc] sm:$0xf]
        %v3017 = vld [vmem:[#allocation2 + $0x400] sm:$0xf]
        %v3018 = vld [vmem:[#allocation2 + $0x404] sm:$0xf]
        %v3019 = vld [vmem:[#allocation2 + $0x408] sm:$0xf]
        %v3020 = vld [vmem:[#allocation2 + $0x40c] sm:$0xf]
        %v3021 = vld [vmem:[#allocation2 + $0x410] sm:$0xf]
        %v3022 = vld [vmem:[#allocation2 + $0x414] sm:$0xf]
        %v3023 = vld [vmem:[#allocation4 + $0x1f] sm:$0x1]
        %v3024 = vpack.c.bf16 %v2990, %v2990
        %v3025 = vrot.slane %v2990, 7
        %v3026 = vsel %vm209, 0.0, %v3025
        %v3027 = vrot.slane %v2990, 1
        %v3028 = vsel %vm213, 0.0, %v3027
        %v3029 = vpack.c.bf16 %v3026, %v3026
        %v3030 = vpack.c.bf16 %v3028, %v3028
        %v3039 = vunpack.c.l.b16 %v2999
        %v3040 = vunpack.c.l.b16 %v3000
        %v3041 = vunpack.c.l.b16 %v3001
        %v3042 = vunpack.c.l.b16 %v3002
        %v3043 = vunpack.c.l.b16 %v3003
        %v3044 = vunpack.c.l.b16 %v3004
        %v3045 = vunpack.c.l.b16 %v3005
        %v3046 = vunpack.c.l.b16 %v3006
        %v3047 = vpack.c.b16 %v3040, %v3039
        %v3048 = vpack.c.b16 %v3042, %v3041
        %v3049 = vpack.c.b16 %v3044, %v3043
        %v3050 = vpack.c.b16 %v3046, %v3045
        %v3056 = vsel %vm365, %v3024, 0
        %3058 = vmatprep.subr.bf16.mxu0 0
        %3059 = vmatpush1.bf16.msra.mxu0 0
        %3060 = vmatprep.subr.bf16.mxu0 0
        %3061 = vmatpush1.bf16.msra.mxu0 0
        %3062 = vmatprep.subr.bf16.mxu0 0
        %3063 = vmatpush1.bf16.msra.mxu0 0
        %3064 = vmatprep.subr.bf16.mxu0 0
        %3065 = vmatpush1.bf16.msra.mxu0 0
        %3066 = vmatprep.subr.bf16.mxu0 0
        %3067 = vmatpush1.bf16.msra.mxu0 %v3050
        %3068 = vmatprep.subr.bf16.mxu0 0
        %3069 = vmatpush1.bf16.msra.mxu0 %v3049
        %3070 = vmatprep.subr.bf16.mxu0 0
        %3071 = vmatpush1.bf16.msra.mxu0 %v3048
        %3072 = vmatprep.subr.bf16.mxu0 0
        %3073 = vmatpush1.bf16.msra.mxu0 %v3047
        %3074 = vmatprep.subr.bf16.mxu0 0
        %3075 = vmatpush2.bf16.msra.mxu0 0
        %3076 = vmatprep.subr.bf16.mxu0 0
        %3077 = vmatpush2.bf16.msra.mxu0 0
        %3078 = vmatprep.subr.bf16.mxu0 0
        %3079 = vmatpush2.bf16.msra.mxu0 0
        %3080 = vmatprep.subr.bf16.mxu0 0
        %3081 = vmatpush2.bf16.msra.mxu0 0
        %3082 = vmatprep.subr.bf16.mxu0 0
        %3083 = vmatpush2.bf16.msra.mxu0 0
        %3084 = vmatprep.subr.bf16.mxu0 0
        %3085 = vmatpush2.bf16.msra.mxu0 0
        %3086 = vmatprep.subr.bf16.mxu0 0
        %3087 = vmatpush2.bf16.msra.mxu0 0
        %3088 = vmatprep.subr.bf16.mxu0 0
        %3089 = vmatpush2.bf16.msra.mxu0 0
        %3090 = vmatprep.mubr.bf16.mxu0 0
        %3091 = vmatmul.mubr.bf16.gmra.mxu0 %v3056
        %v3092 = vpop.f32.mrf.mxu0
        %v3093 = vadd.f32 0.0, %v3092
        %v3094 = vpop.f32.mrf.mxu0
        %v3095 = vpop.f32.mrf.mxu0
        %v3096 = vpop.f32.mrf.mxu0
        %3097 = vdwg.mxu0
        %v3106 = vunpack.c.l.b16 %v2991
        %v3107 = vunpack.c.l.b16 %v2992
        %v3108 = vunpack.c.l.b16 %v2993
        %v3109 = vunpack.c.l.b16 %v2994
        %v3110 = vunpack.c.l.b16 %v2995
        %v3111 = vunpack.c.l.b16 %v2996
        %v3112 = vunpack.c.l.b16 %v2997
        %v3113 = vunpack.c.l.b16 %v2998
        %v3114 = vpack.c.b16 %v3107, %v3106
        %v3115 = vpack.c.b16 %v3109, %v3108
        %v3116 = vpack.c.b16 %v3111, %v3110
        %v3117 = vpack.c.b16 %v3113, %v3112
        %v3123 = vsel %vm365, %v3029, 0
        %3125 = vmatprep.subr.bf16.mxu0 0
        %3126 = vmatpush1.bf16.msra.mxu0 0
        %3127 = vmatprep.subr.bf16.mxu0 0
        %3128 = vmatpush1.bf16.msra.mxu0 0
        %3129 = vmatprep.subr.bf16.mxu0 0
        %3130 = vmatpush1.bf16.msra.mxu0 0
        %3131 = vmatprep.subr.bf16.mxu0 0
        %3132 = vmatpush1.bf16.msra.mxu0 0
        %3133 = vmatprep.subr.bf16.mxu0 0
        %3134 = vmatpush1.bf16.msra.mxu0 %v3117
        %3135 = vmatprep.subr.bf16.mxu0 0
        %3136 = vmatpush1.bf16.msra.mxu0 %v3116
        %3137 = vmatprep.subr.bf16.mxu0 0
        %3138 = vmatpush1.bf16.msra.mxu0 %v3115
        %3139 = vmatprep.subr.bf16.mxu0 0
        %3140 = vmatpush1.bf16.msra.mxu0 %v3114
        %3141 = vmatprep.subr.bf16.mxu0 0
        %3142 = vmatpush2.bf16.msra.mxu0 0
        %3143 = vmatprep.subr.bf16.mxu0 0
        %3144 = vmatpush2.bf16.msra.mxu0 0
        %3145 = vmatprep.subr.bf16.mxu0 0
        %3146 = vmatpush2.bf16.msra.mxu0 0
        %3147 = vmatprep.subr.bf16.mxu0 0
        %3148 = vmatpush2.bf16.msra.mxu0 0
        %3149 = vmatprep.subr.bf16.mxu0 0
        %3150 = vmatpush2.bf16.msra.mxu0 0
        %3151 = vmatprep.subr.bf16.mxu0 0
        %3152 = vmatpush2.bf16.msra.mxu0 0
        %3153 = vmatprep.subr.bf16.mxu0 0
        %3154 = vmatpush2.bf16.msra.mxu0 0
        %3155 = vmatprep.subr.bf16.mxu0 0
        %3156 = vmatpush2.bf16.msra.mxu0 0
        %3157 = vmatprep.mubr.bf16.mxu0 0
        %3158 = vmatmul.mubr.bf16.gmra.mxu0 %v3123
        %v3159 = vpop.f32.mrf.mxu0
        %v3160 = vadd.f32 %v3093, %v3159
        %v3161 = vpop.f32.mrf.mxu0
        %v3162 = vpop.f32.mrf.mxu0
        %v3163 = vpop.f32.mrf.mxu0
        %3164 = vdwg.mxu0
        %v3165 = vlaneseq
        %v3166 = vshrl.u32 %v3165, 7
        %v3167 = vsub.s32 0, %v3166
        %v3168 = vrot.slane %v3023, %v3167
        %v3169 = vadd.f32 %v3160, %v3168
        %v3178 = vunpack.c.l.b16 %v3015
        %v3179 = vunpack.c.l.b16 %v3016
        %v3180 = vunpack.c.l.b16 %v3017
        %v3181 = vunpack.c.l.b16 %v3018
        %v3182 = vunpack.c.l.b16 %v3019
        %v3183 = vunpack.c.l.b16 %v3020
        %v3184 = vunpack.c.l.b16 %v3021
        %v3185 = vunpack.c.l.b16 %v3022
        %v3186 = vpack.c.b16 %v3179, %v3178
        %v3187 = vpack.c.b16 %v3181, %v3180
        %v3188 = vpack.c.b16 %v3183, %v3182
        %v3189 = vpack.c.b16 %v3185, %v3184
        %v3195 = vsel %vm365, %v3030, 0
        %3197 = vmatprep.subr.bf16.mxu0 0
        %3198 = vmatpush1.bf16.msra.mxu0 0
        %3199 = vmatprep.subr.bf16.mxu0 0
        %3200 = vmatpush1.bf16.msra.mxu0 0
        %3201 = vmatprep.subr.bf16.mxu0 0
        %3202 = vmatpush1.bf16.msra.mxu0 0
        %3203 = vmatprep.subr.bf16.mxu0 0
        %3204 = vmatpush1.bf16.msra.mxu0 0
        %3205 = vmatprep.subr.bf16.mxu0 0
        %3206 = vmatpush1.bf16.msra.mxu0 %v3189
        %3207 = vmatprep.subr.bf16.mxu0 0
        %3208 = vmatpush1.bf16.msra.mxu0 %v3188
        %3209 = vmatprep.subr.bf16.mxu0 0
        %3210 = vmatpush1.bf16.msra.mxu0 %v3187
        %3211 = vmatprep.subr.bf16.mxu0 0
        %3212 = vmatpush1.bf16.msra.mxu0 %v3186
        %3213 = vmatprep.subr.bf16.mxu0 0
        %3214 = vmatpush2.bf16.msra.mxu0 0
        %3215 = vmatprep.subr.bf16.mxu0 0
        %3216 = vmatpush2.bf16.msra.mxu0 0
        %3217 = vmatprep.subr.bf16.mxu0 0
        %3218 = vmatpush2.bf16.msra.mxu0 0
        %3219 = vmatprep.subr.bf16.mxu0 0
        %3220 = vmatpush2.bf16.msra.mxu0 0
        %3221 = vmatprep.subr.bf16.mxu0 0
        %3222 = vmatpush2.bf16.msra.mxu0 0
        %3223 = vmatprep.subr.bf16.mxu0 0
        %3224 = vmatpush2.bf16.msra.mxu0 0
        %3225 = vmatprep.subr.bf16.mxu0 0
        %3226 = vmatpush2.bf16.msra.mxu0 0
        %3227 = vmatprep.subr.bf16.mxu0 0
        %3228 = vmatpush2.bf16.msra.mxu0 0
        %3229 = vmatprep.mubr.bf16.mxu0 0
        %3230 = vmatmul.mubr.bf16.gmra.mxu0 %v3195
        %v3231 = vpop.f32.mrf.mxu0
        %v3232 = vadd.f32 0.0, %v3231
        %v3233 = vpop.f32.mrf.mxu0
        %v3234 = vpop.f32.mrf.mxu0
        %v3235 = vpop.f32.mrf.mxu0
        %3236 = vdwg.mxu0
        %v3245 = vunpack.c.l.b16 %v3007
        %v3246 = vunpack.c.l.b16 %v3008
        %v3247 = vunpack.c.l.b16 %v3009
        %v3248 = vunpack.c.l.b16 %v3010
        %v3249 = vunpack.c.l.b16 %v3011
        %v3250 = vunpack.c.l.b16 %v3012
        %v3251 = vunpack.c.l.b16 %v3013
        %v3252 = vunpack.c.l.b16 %v3014
        %v3253 = vpack.c.b16 %v3246, %v3245
        %v3254 = vpack.c.b16 %v3248, %v3247
        %v3255 = vpack.c.b16 %v3250, %v3249
        %v3256 = vpack.c.b16 %v3252, %v3251
        %3261 = vmatprep.subr.bf16.mxu0 0
        %3262 = vmatpush1.bf16.msra.mxu0 0
        %3263 = vmatprep.subr.bf16.mxu0 0
        %3264 = vmatpush1.bf16.msra.mxu0 0
        %3265 = vmatprep.subr.bf16.mxu0 0
        %3266 = vmatpush1.bf16.msra.mxu0 0
        %3267 = vmatprep.subr.bf16.mxu0 0
        %3268 = vmatpush1.bf16.msra.mxu0 0
        %3269 = vmatprep.subr.bf16.mxu0 0
        %3270 = vmatpush1.bf16.msra.mxu0 %v3256
        %3271 = vmatprep.subr.bf16.mxu0 0
        %3272 = vmatpush1.bf16.msra.mxu0 %v3255
        %3273 = vmatprep.subr.bf16.mxu0 0
        %3274 = vmatpush1.bf16.msra.mxu0 %v3254
        %3275 = vmatprep.subr.bf16.mxu0 0
        %3276 = vmatpush1.bf16.msra.mxu0 %v3253
        %3277 = vmatprep.subr.bf16.mxu0 0
        %3278 = vmatpush2.bf16.msra.mxu0 0
        %3279 = vmatprep.subr.bf16.mxu0 0
        %3280 = vmatpush2.bf16.msra.mxu0 0
        %3281 = vmatprep.subr.bf16.mxu0 0
        %3282 = vmatpush2.bf16.msra.mxu0 0
        %3283 = vmatprep.subr.bf16.mxu0 0
        %3284 = vmatpush2.bf16.msra.mxu0 0
        %3285 = vmatprep.subr.bf16.mxu0 0
        %3286 = vmatpush2.bf16.msra.mxu0 0
        %3287 = vmatprep.subr.bf16.mxu0 0
        %3288 = vmatpush2.bf16.msra.mxu0 0
        %3289 = vmatprep.subr.bf16.mxu0 0
        %3290 = vmatpush2.bf16.msra.mxu0 0
        %3291 = vmatprep.subr.bf16.mxu0 0
        %3292 = vmatpush2.bf16.msra.mxu0 0
        %3293 = vmatprep.mubr.bf16.mxu0 0
        %3294 = vmatmul.mubr.bf16.gmra.mxu0 %v3056
        %v3295 = vpop.f32.mrf.mxu0
        %v3296 = vadd.f32 %v3232, %v3295
        %v3297 = vpop.f32.mrf.mxu0
        %v3298 = vpop.f32.mrf.mxu0
        %v3299 = vpop.f32.mrf.mxu0
        %3300 = vdwg.mxu0
        %v3301 = vadd.f32 %v3296, %v3168
        %v3303 = vcombine.high %v3169, %v3169
        %v3305 = vunpack.c.l.s4 1966171168
        %v3306 = vunpack.c.0.s8 %v3305
        %v3307 = vlaneseq
        %v3308 = vshrl.u32 %v3307, 7
        %v3309 = vsub.s32 %v3306, %v3308
        %v3310 = vrot.slane %v3169, %v3309
        %v3312 = vunpack.c.l.s4 1966171168
        %v3313 = vunpack.c.0.s8 %v3312
        %v3314 = vlaneseq
        %v3315 = vshrl.u32 %v3314, 7
        %v3316 = vsub.s32 %v3313, %v3315
        %v3317 = vrot.slane %v3303, %v3316
        %v3318 = vcombine.high %v3310, %v3310
        %v3319 = vcombine.high %v3317, %v3317
        %v3321 = vunpack.c.l.s4 1966171168
        %v3322 = vunpack.c.0.s8 %v3321
        %v3323 = vlaneseq
        %v3324 = vshrl.u32 %v3323, 7
        %v3325 = vsub.s32 %v3322, %v3324
        %v3326 = vrot.slane %v3310, %v3325
        %v3328 = vunpack.c.l.s4 1966171168
        %v3329 = vunpack.c.0.s8 %v3328
        %v3330 = vlaneseq
        %v3331 = vshrl.u32 %v3330, 7
        %v3332 = vsub.s32 %v3329, %v3331
        %v3333 = vrot.slane %v3317, %v3332
        %v3335 = vunpack.c.l.s4 1966171168
        %v3336 = vunpack.c.0.s8 %v3335
        %v3337 = vlaneseq
        %v3338 = vshrl.u32 %v3337, 7
        %v3339 = vsub.s32 %v3336, %v3338
        %v3340 = vrot.slane %v3318, %v3339
        %v3342 = vunpack.c.l.s4 1966171168
        %v3343 = vunpack.c.0.s8 %v3342
        %v3344 = vlaneseq
        %v3345 = vshrl.u32 %v3344, 7
        %v3346 = vsub.s32 %v3343, %v3345
        %v3347 = vrot.slane %v3319, %v3346
        %v3348 = vcombine.high %v3326, %v3326
        %v3349 = vcombine.high %v3333, %v3333
        %v3350 = vcombine.high %v3340, %v3340
        %v3351 = vcombine.high %v3347, %v3347
        %v3361 = vcombine.high %v3301, %v3301
        %v3363 = vunpack.c.l.s4 1966171168
        %v3364 = vunpack.c.0.s8 %v3363
        %v3365 = vlaneseq
        %v3366 = vshrl.u32 %v3365, 7
        %v3367 = vsub.s32 %v3364, %v3366
        %v3368 = vrot.slane %v3301, %v3367
        %v3370 = vunpack.c.l.s4 1966171168
        %v3371 = vunpack.c.0.s8 %v3370
        %v3372 = vlaneseq
        %v3373 = vshrl.u32 %v3372, 7
        %v3374 = vsub.s32 %v3371, %v3373
        %v3375 = vrot.slane %v3361, %v3374
        %v3376 = vcombine.high %v3368, %v3368
        %v3377 = vcombine.high %v3375, %v3375
        %v3379 = vunpack.c.l.s4 1966171168
        %v3380 = vunpack.c.0.s8 %v3379
        %v3381 = vlaneseq
        %v3382 = vshrl.u32 %v3381, 7
        %v3383 = vsub.s32 %v3380, %v3382
        %v3384 = vrot.slane %v3368, %v3383
        %v3386 = vunpack.c.l.s4 1966171168
        %v3387 = vunpack.c.0.s8 %v3386
        %v3388 = vlaneseq
        %v3389 = vshrl.u32 %v3388, 7
        %v3390 = vsub.s32 %v3387, %v3389
        %v3391 = vrot.slane %v3375, %v3390
        %v3393 = vunpack.c.l.s4 1966171168
        %v3394 = vunpack.c.0.s8 %v3393
        %v3395 = vlaneseq
        %v3396 = vshrl.u32 %v3395, 7
        %v3397 = vsub.s32 %v3394, %v3396
        %v3398 = vrot.slane %v3376, %v3397
        %v3400 = vunpack.c.l.s4 1966171168
        %v3401 = vunpack.c.0.s8 %v3400
        %v3402 = vlaneseq
        %v3403 = vshrl.u32 %v3402, 7
        %v3404 = vsub.s32 %v3401, %v3403
        %v3405 = vrot.slane %v3377, %v3404
        %v3406 = vcombine.high %v3384, %v3384
        %v3407 = vcombine.high %v3391, %v3391
        %v3408 = vcombine.high %v3398, %v3398
        %v3409 = vcombine.high %v3405, %v3405
        %v3410 = vlaneseq
        %v3411 = vshrl.u32 %v3410, 7
        %v3412 = vsub.s32 0, %v3411
        %v3413 = vrot.slane %v3384, %v3412
        %v3414 = vlaneseq
        %v3415 = vshrl.u32 %v3414, 7
        %v3416 = vsub.s32 0, %v3415
        %v3417 = vrot.slane %v3398, %v3416
        %v3418 = vlaneseq
        %v3419 = vshrl.u32 %v3418, 7
        %v3420 = vsub.s32 0, %v3419
        %v3421 = vrot.slane %v3406, %v3420
        %v3422 = vlaneseq
        %v3423 = vshrl.u32 %v3422, 7
        %v3424 = vsub.s32 0, %v3423
        %v3425 = vrot.slane %v3408, %v3424
        %v3426 = vlaneseq
        %v3427 = vshrl.u32 %v3426, 7
        %v3428 = vsub.s32 0, %v3427
        %v3429 = vrot.slane %v3391, %v3428
        %v3430 = vlaneseq
        %v3431 = vshrl.u32 %v3430, 7
        %v3432 = vsub.s32 0, %v3431
        %v3433 = vrot.slane %v3405, %v3432
        %v3434 = vlaneseq
        %v3435 = vshrl.u32 %v3434, 7
        %v3436 = vsub.s32 0, %v3435
        %v3437 = vrot.slane %v3407, %v3436
        %v3438 = vlaneseq
        %v3439 = vshrl.u32 %v3438, 7
        %v3440 = vsub.s32 0, %v3439
        %v3441 = vrot.slane %v3409, %v3440
        %vm3450 = vcmask 1040384
        %v3451 = vsel %vm3450, %v3326, %v3413
        %v3452 = vsel %vm3450, %v3340, %v3417
        %v3453 = vsel %vm3450, %v3348, %v3421
        %v3454 = vsel %vm3450, %v3350, %v3425
        %v3455 = vsel %vm3450, %v3333, %v3429
        %v3456 = vsel %vm3450, %v3347, %v3433
        %v3457 = vsel %vm3450, %v3349, %v3437
        %v3458 = vsel %vm3450, %v3351, %v3441
        %v3467 = vcombine.low %v3451, %v3452
        %v3468 = vcombine.low %v3453, %v3454
        %v3470 = vunpack.c.l.s4 1983009808
        %v3471 = vunpack.c.0.s8 %v3470
        %v3472 = vlaneseq
        %v3473 = vshrl.u32 %v3472, 7
        %v3474 = vsub.s32 %v3471, %v3473
        %v3475 = vrot.slane %v3467, %v3474
        %v3477 = vunpack.c.l.s4 1983009808
        %v3478 = vunpack.c.0.s8 %v3477
        %v3479 = vlaneseq
        %v3480 = vshrl.u32 %v3479, 7
        %v3481 = vsub.s32 %v3478, %v3480
        %v3482 = vrot.slane %v3468, %v3481
        %v3483 = vcombine.low %v3475, %v3482
        %v3484 = vcombine.low %v3455, %v3456
        %v3485 = vcombine.low %v3457, %v3458
        %v3487 = vunpack.c.l.s4 1983009808
        %v3488 = vunpack.c.0.s8 %v3487
        %v3489 = vlaneseq
        %v3490 = vshrl.u32 %v3489, 7
        %v3491 = vsub.s32 %v3488, %v3490
        %v3492 = vrot.slane %v3484, %v3491
        %v3494 = vunpack.c.l.s4 1983009808
        %v3495 = vunpack.c.0.s8 %v3494
        %v3496 = vlaneseq
        %v3497 = vshrl.u32 %v3496, 7
        %v3498 = vsub.s32 %v3495, %v3497
        %v3499 = vrot.slane %v3485, %v3498
        %v3500 = vcombine.low %v3492, %v3499
        %v3503 = vsel %vm365, %v3483, 0.0
        %3504 = vadd.xlane.f32.xlu0 %v3503
        %v3505 = vpop.xlane.xlu0 %3504
        %v3506 = vsel %vm365, %v3500, 0.0
        %3507 = vadd.xlane.f32.xlu0 %v3506
        %v3508 = vpop.xlane.xlu0 %3507
        %v3509 = vmul.f32 %v3505, %v369
        %v3510 = vmul.f32 %v3508, %v369
        %v3514 = vunpack.c.l.s4 269488144
        %v3515 = vunpack.c.0.s8 %v3514
        %v3516 = vlaneseq
        %v3517 = vshrl.u32 %v3516, 7
        %v3518 = vsub.s32 %v3515, %v3517
        %v3519 = vrot.slane %v3509, %v3518
        %v3521 = vunpack.c.l.s4 842150450
        %v3522 = vunpack.c.0.s8 %v3521
        %v3523 = vlaneseq
        %v3524 = vshrl.u32 %v3523, 7
        %v3525 = vsub.s32 %v3522, %v3524
        %v3526 = vrot.slane %v3509, %v3525
        %v3528 = vunpack.c.l.s4 1414812756
        %v3529 = vunpack.c.0.s8 %v3528
        %v3530 = vlaneseq
        %v3531 = vshrl.u32 %v3530, 7
        %v3532 = vsub.s32 %v3529, %v3531
        %v3533 = vrot.slane %v3509, %v3532
        %v3535 = vunpack.c.l.s4 1987475062
        %v3536 = vunpack.c.0.s8 %v3535
        %v3537 = vlaneseq
        %v3538 = vshrl.u32 %v3537, 7
        %v3539 = vsub.s32 %v3536, %v3538
        %v3540 = vrot.slane %v3509, %v3539
        %v3542 = vunpack.c.l.s4 269488144
        %v3543 = vunpack.c.0.s8 %v3542
        %v3544 = vlaneseq
        %v3545 = vshrl.u32 %v3544, 7
        %v3546 = vsub.s32 %v3543, %v3545
        %v3547 = vrot.slane %v3510, %v3546
        %v3549 = vunpack.c.l.s4 842150450
        %v3550 = vunpack.c.0.s8 %v3549
        %v3551 = vlaneseq
        %v3552 = vshrl.u32 %v3551, 7
        %v3553 = vsub.s32 %v3550, %v3552
        %v3554 = vrot.slane %v3510, %v3553
        %v3556 = vunpack.c.l.s4 1414812756
        %v3557 = vunpack.c.0.s8 %v3556
        %v3558 = vlaneseq
        %v3559 = vshrl.u32 %v3558, 7
        %v3560 = vsub.s32 %v3557, %v3559
        %v3561 = vrot.slane %v3510, %v3560
        %v3563 = vunpack.c.l.s4 1987475062
        %v3564 = vunpack.c.0.s8 %v3563
        %v3565 = vlaneseq
        %v3566 = vshrl.u32 %v3565, 7
        %v3567 = vsub.s32 %v3564, %v3566
        %v3568 = vrot.slane %v3510, %v3567
        %v3577 = vsub.f32 %v3451, %v3519
        %v3578 = vsub.f32 %v3452, %v3526
        %v3579 = vsub.f32 %v3453, %v3533
        %v3580 = vsub.f32 %v3454, %v3540
        %v3581 = vsub.f32 %v3455, %v3547
        %v3582 = vsub.f32 %v3456, %v3554
        %v3583 = vsub.f32 %v3457, %v3561
        %v3584 = vsub.f32 %v3458, %v3568
        %v3585 = vmul.f32 %v3577, %v3577
        %v3586 = vmul.f32 %v3578, %v3578
        %v3587 = vmul.f32 %v3579, %v3579
        %v3588 = vmul.f32 %v3580, %v3580
        %v3589 = vmul.f32 %v3581, %v3581
        %v3590 = vmul.f32 %v3582, %v3582
        %v3591 = vmul.f32 %v3583, %v3583
        %v3592 = vmul.f32 %v3584, %v3584
        %v3601 = vcombine.low %v3585, %v3586
        %v3602 = vcombine.low %v3587, %v3588
        %v3604 = vunpack.c.l.s4 1983009808
        %v3605 = vunpack.c.0.s8 %v3604
        %v3606 = vlaneseq
        %v3607 = vshrl.u32 %v3606, 7
        %v3608 = vsub.s32 %v3605, %v3607
        %v3609 = vrot.slane %v3601, %v3608
        %v3611 = vunpack.c.l.s4 1983009808
        %v3612 = vunpack.c.0.s8 %v3611
        %v3613 = vlaneseq
        %v3614 = vshrl.u32 %v3613, 7
        %v3615 = vsub.s32 %v3612, %v3614
        %v3616 = vrot.slane %v3602, %v3615
        %v3617 = vcombine.low %v3609, %v3616
        %v3618 = vcombine.low %v3589, %v3590
        %v3619 = vcombine.low %v3591, %v3592
        %v3621 = vunpack.c.l.s4 1983009808
        %v3622 = vunpack.c.0.s8 %v3621
        %v3623 = vlaneseq
        %v3624 = vshrl.u32 %v3623, 7
        %v3625 = vsub.s32 %v3622, %v3624
        %v3626 = vrot.slane %v3618, %v3625
        %v3628 = vunpack.c.l.s4 1983009808
        %v3629 = vunpack.c.0.s8 %v3628
        %v3630 = vlaneseq
        %v3631 = vshrl.u32 %v3630, 7
        %v3632 = vsub.s32 %v3629, %v3631
        %v3633 = vrot.slane %v3619, %v3632
        %v3634 = vcombine.low %v3626, %v3633
        %v3637 = vsel %vm365, %v3617, 0.0
        %3638 = vadd.xlane.f32.xlu0 %v3637
        %v3639 = vpop.xlane.xlu0 %3638
        %v3640 = vsel %vm365, %v3634, 0.0
        %3641 = vadd.xlane.f32.xlu0 %v3640
        %v3642 = vpop.xlane.xlu0 %3641
        %v3643 = vmul.f32 %v3639, %v369
        %v3644 = vmul.f32 %v3642, %v369
        %v3645 = vadd.f32 %v3643, 1e-06
        %v3646 = vadd.f32 %v3644, 1e-06
        %v3647 = vrsqrt.pop %v3645
        %v3648 = vrsqrt.pop %v3646
        %v3652 = vunpack.c.l.s4 269488144
        %v3653 = vunpack.c.0.s8 %v3652
        %v3654 = vlaneseq
        %v3655 = vshrl.u32 %v3654, 7
        %v3656 = vsub.s32 %v3653, %v3655
        %v3657 = vrot.slane %v3647, %v3656
        %v3659 = vunpack.c.l.s4 842150450
        %v3660 = vunpack.c.0.s8 %v3659
        %v3661 = vlaneseq
        %v3662 = vshrl.u32 %v3661, 7
        %v3663 = vsub.s32 %v3660, %v3662
        %v3664 = vrot.slane %v3647, %v3663
        %v3666 = vunpack.c.l.s4 1414812756
        %v3667 = vunpack.c.0.s8 %v3666
        %v3668 = vlaneseq
        %v3669 = vshrl.u32 %v3668, 7
        %v3670 = vsub.s32 %v3667, %v3669
        %v3671 = vrot.slane %v3647, %v3670
        %v3673 = vunpack.c.l.s4 1987475062
        %v3674 = vunpack.c.0.s8 %v3673
        %v3675 = vlaneseq
        %v3676 = vshrl.u32 %v3675, 7
        %v3677 = vsub.s32 %v3674, %v3676
        %v3678 = vrot.slane %v3647, %v3677
        %v3680 = vunpack.c.l.s4 269488144
        %v3681 = vunpack.c.0.s8 %v3680
        %v3682 = vlaneseq
        %v3683 = vshrl.u32 %v3682, 7
        %v3684 = vsub.s32 %v3681, %v3683
        %v3685 = vrot.slane %v3648, %v3684
        %v3687 = vunpack.c.l.s4 842150450
        %v3688 = vunpack.c.0.s8 %v3687
        %v3689 = vlaneseq
        %v3690 = vshrl.u32 %v3689, 7
        %v3691 = vsub.s32 %v3688, %v3690
        %v3692 = vrot.slane %v3648, %v3691
        %v3694 = vunpack.c.l.s4 1414812756
        %v3695 = vunpack.c.0.s8 %v3694
        %v3696 = vlaneseq
        %v3697 = vshrl.u32 %v3696, 7
        %v3698 = vsub.s32 %v3695, %v3697
        %v3699 = vrot.slane %v3648, %v3698
        %v3701 = vunpack.c.l.s4 1987475062
        %v3702 = vunpack.c.0.s8 %v3701
        %v3703 = vlaneseq
        %v3704 = vshrl.u32 %v3703, 7
        %v3705 = vsub.s32 %v3702, %v3704
        %v3706 = vrot.slane %v3648, %v3705
        %v3715 = vmul.f32 %v3577, %v3657
        %v3716 = vmul.f32 %v3578, %v3664
        %v3717 = vmul.f32 %v3579, %v3671
        %v3718 = vmul.f32 %v3580, %v3678
        %v3719 = vmul.f32 %v3581, %v3685
        %v3720 = vmul.f32 %v3582, %v3692
        %v3721 = vmul.f32 %v3583, %v3699
        %v3722 = vmul.f32 %v3584, %v3706
        %v3723 = vld [vmem:[#allocation4 + $0x20] sm:$0x1]
        %v3724 = vlaneseq
        %v3725 = vshrl.u32 %v3724, 7
        %v3726 = vsub.s32 0, %v3725
        %v3727 = vrot.slane %v3723, %v3726
        %v3729 = vcombine.high %v3727, %v3727
        %v3731 = vunpack.c.l.s4 1983009808
        %v3732 = vunpack.c.0.s8 %v3731
        %v3733 = vlaneseq
        %v3734 = vshrl.u32 %v3733, 7
        %v3735 = vsub.s32 %v3732, %v3734
        %v3736 = vrot.slane %v3727, %v3735
        %v3738 = vunpack.c.l.s4 1983009808
        %v3739 = vunpack.c.0.s8 %v3738
        %v3740 = vlaneseq
        %v3741 = vshrl.u32 %v3740, 7
        %v3742 = vsub.s32 %v3739, %v3741
        %v3743 = vrot.slane %v3729, %v3742
        %v3744 = vcombine.high %v3736, %v3736
        %v3745 = vcombine.high %v3743, %v3743
        %v3750 = vmul.f32 %v3715, %v3736
        %v3751 = vmul.f32 %v3716, %v3744
        %v3752 = vmul.f32 %v3717, %v3743
        %v3753 = vmul.f32 %v3718, %v3745
        %v3754 = vmul.f32 %v3719, %v3736
        %v3755 = vmul.f32 %v3720, %v3744
        %v3756 = vmul.f32 %v3721, %v3743
        %v3757 = vmul.f32 %v3722, %v3745
        %v3758 = vld [vmem:[#allocation4 + $0x21] sm:$0x1]
        %v3759 = vlaneseq
        %v3760 = vshrl.u32 %v3759, 7
        %v3761 = vsub.s32 0, %v3760
        %v3762 = vrot.slane %v3758, %v3761
        %v3764 = vcombine.high %v3762, %v3762
        %v3766 = vunpack.c.l.s4 1983009808
        %v3767 = vunpack.c.0.s8 %v3766
        %v3768 = vlaneseq
        %v3769 = vshrl.u32 %v3768, 7
        %v3770 = vsub.s32 %v3767, %v3769
        %v3771 = vrot.slane %v3762, %v3770
        %v3773 = vunpack.c.l.s4 1983009808
        %v3774 = vunpack.c.0.s8 %v3773
        %v3775 = vlaneseq
        %v3776 = vshrl.u32 %v3775, 7
        %v3777 = vsub.s32 %v3774, %v3776
        %v3778 = vrot.slane %v3764, %v3777
        %v3779 = vcombine.high %v3771, %v3771
        %v3780 = vcombine.high %v3778, %v3778
        %v3785 = vadd.f32 %v3750, %v3771
        %v3786 = vadd.f32 %v3751, %v3779
        %v3787 = vadd.f32 %v3752, %v3778
        %v3788 = vadd.f32 %v3753, %v3780
        %v3789 = vadd.f32 %v3754, %v3771
        %v3790 = vadd.f32 %v3755, %v3779
        %v3791 = vadd.f32 %v3756, %v3778
        %v3792 = vadd.f32 %v3757, %v3780
        %v3793 = vxor.u32 %v3785, 2147483648
        %v3794 = vxor.u32 %v3786, 2147483648
        %v3795 = vxor.u32 %v3787, 2147483648
        %v3796 = vxor.u32 %v3788, 2147483648
        %v3797 = vxor.u32 %v3789, 2147483648
        %v3798 = vxor.u32 %v3790, 2147483648
        %v3799 = vxor.u32 %v3791, 2147483648
        %v3800 = vxor.u32 %v3792, 2147483648
        %v3801 = vmul.f32 %v3793, 1.442695
        %v3802 = vpow.pop %v3801
        %v3803 = vmul.f32 %v3794, 1.442695
        %v3804 = vpow.pop %v3803
        %v3805 = vmul.f32 %v3795, 1.442695
        %v3806 = vpow.pop %v3805
        %v3807 = vmul.f32 %v3796, 1.442695
        %v3808 = vpow.pop %v3807
        %v3809 = vmul.f32 %v3797, 1.442695
        %v3810 = vpow.pop %v3809
        %v3811 = vmul.f32 %v3798, 1.442695
        %v3812 = vpow.pop %v3811
        %v3813 = vmul.f32 %v3799, 1.442695
        %v3814 = vpow.pop %v3813
        %v3815 = vmul.f32 %v3800, 1.442695
        %v3816 = vpow.pop %v3815
        %v3817 = vadd.f32 %v3802, 1.0
        %v3818 = vadd.f32 %v3804, 1.0
        %v3819 = vadd.f32 %v3806, 1.0
        %v3820 = vadd.f32 %v3808, 1.0
        %v3821 = vadd.f32 %v3810, 1.0
        %v3822 = vadd.f32 %v3812, 1.0
        %v3823 = vadd.f32 %v3814, 1.0
        %v3824 = vadd.f32 %v3816, 1.0
        %v3825 = vrcp.pop %v3817
        %v3826 = vmul.f32 1.0, %v3825
        %v3827 = vrcp.pop %v3818
        %v3828 = vmul.f32 1.0, %v3827
        %v3829 = vrcp.pop %v3819
        %v3830 = vmul.f32 1.0, %v3829
        %v3831 = vrcp.pop %v3820
        %v3832 = vmul.f32 1.0, %v3831
        %v3833 = vrcp.pop %v3821
        %v3834 = vmul.f32 1.0, %v3833
        %v3835 = vrcp.pop %v3822
        %v3836 = vmul.f32 1.0, %v3835
        %v3837 = vrcp.pop %v3823
        %v3838 = vmul.f32 1.0, %v3837
        %v3839 = vrcp.pop %v3824
        %v3840 = vmul.f32 1.0, %v3839
        %v3841 = vmul.f32 %v3785, %v3826
        %v3842 = vmul.f32 %v3786, %v3828
        %v3843 = vmul.f32 %v3787, %v3830
        %v3844 = vmul.f32 %v3788, %v3832
        %v3845 = vmul.f32 %v3789, %v3834
        %v3846 = vmul.f32 %v3790, %v3836
        %v3847 = vmul.f32 %v3791, %v3838
        %v3848 = vmul.f32 %v3792, %v3840
        %v3849 = vld [vmem:[#allocation2 + $0x418] sm:$0xf]
        %v3850 = vld [vmem:[#allocation2 + $0x41c] sm:$0xf]
        %v3851 = vld [vmem:[#allocation2 + $0x420] sm:$0xf]
        %v3852 = vld [vmem:[#allocation2 + $0x424] sm:$0xf]
        %v3853 = vld [vmem:[#allocation2 + $0x428] sm:$0xf]
        %v3854 = vld [vmem:[#allocation2 + $0x42c] sm:$0xf]
        %v3855 = vld [vmem:[#allocation2 + $0x430] sm:$0xf]
        %v3856 = vld [vmem:[#allocation2 + $0x434] sm:$0xf]
        %v3857 = vld [vmem:[#allocation2 + $0x438] sm:$0xf]
        %v3858 = vld [vmem:[#allocation2 + $0x43c] sm:$0xf]
        %v3859 = vld [vmem:[#allocation2 + $0x440] sm:$0xf]
        %v3860 = vld [vmem:[#allocation2 + $0x444] sm:$0xf]
        %v3861 = vld [vmem:[#allocation2 + $0x448] sm:$0xf]
        %v3862 = vld [vmem:[#allocation2 + $0x44c] sm:$0xf]
        %v3863 = vld [vmem:[#allocation2 + $0x450] sm:$0xf]
        %v3864 = vld [vmem:[#allocation2 + $0x454] sm:$0xf]
        %v3865 = vld [vmem:[#allocation2 + $0x458] sm:$0xf]
        %v3866 = vld [vmem:[#allocation2 + $0x45c] sm:$0xf]
        %v3867 = vld [vmem:[#allocation2 + $0x460] sm:$0xf]
        %v3868 = vld [vmem:[#allocation2 + $0x464] sm:$0xf]
        %v3869 = vld [vmem:[#allocation2 + $0x468] sm:$0xf]
        %v3870 = vld [vmem:[#allocation2 + $0x46c] sm:$0xf]
        %v3871 = vld [vmem:[#allocation2 + $0x470] sm:$0xf]
        %v3872 = vld [vmem:[#allocation2 + $0x474] sm:$0xf]
        %v3873 = vadd.s32 %v204, 8
        %vm3874 = vcmp.eq.s32.totalorder %v3873, 0
        %vm3875 = vcmp.eq.s32.totalorder %v204, 15
        %vm3876 = vcmp.eq.s32.totalorder %v3873, 15
        %v3885 = vcombine.low %v3841, %v3842
        %v3886 = vcombine.low %v3843, %v3844
        %v3888 = vunpack.c.l.s4 1983009808
        %v3889 = vunpack.c.0.s8 %v3888
        %v3890 = vlaneseq
        %v3891 = vshrl.u32 %v3890, 7
        %v3892 = vsub.s32 %v3889, %v3891
        %v3893 = vrot.slane %v3885, %v3892
        %v3895 = vunpack.c.l.s4 1983009808
        %v3896 = vunpack.c.0.s8 %v3895
        %v3897 = vlaneseq
        %v3898 = vshrl.u32 %v3897, 7
        %v3899 = vsub.s32 %v3896, %v3898
        %v3900 = vrot.slane %v3886, %v3899
        %v3901 = vcombine.low %v3893, %v3900
        %v3902 = vcombine.low %v3845, %v3846
        %v3903 = vcombine.low %v3847, %v3848
        %v3905 = vunpack.c.l.s4 1983009808
        %v3906 = vunpack.c.0.s8 %v3905
        %v3907 = vlaneseq
        %v3908 = vshrl.u32 %v3907, 7
        %v3909 = vsub.s32 %v3906, %v3908
        %v3910 = vrot.slane %v3902, %v3909
        %v3912 = vunpack.c.l.s4 1983009808
        %v3913 = vunpack.c.0.s8 %v3912
        %v3914 = vlaneseq
        %v3915 = vshrl.u32 %v3914, 7
        %v3916 = vsub.s32 %v3913, %v3915
        %v3917 = vrot.slane %v3903, %v3916
        %v3918 = vcombine.low %v3910, %v3917
        %v3921 = vrot.slane %v3901, 7
        %v3922 = vrot.slane %v3918, 7
        %vm3923 = vcmp.lt.s32.totalorder %v204, 1
        %v3924 = vsel %vm3923, %v3921, %v3922
        %v3925 = vsel %vm3923, %v3922, %v3921
        %v3926 = vsel %vm3874, 1, 0
        %vm3927 = vcmp.eq.s32.totalorder %v3926, 1
        %v3928 = vsel %vm209, 0.0, %v3925
        %v3929 = vsel %vm3927, 0.0, %v3924
        %v3930 = vrot.slane %v3901, 1
        %v3931 = vrot.slane %v3918, 1
        %vm3932 = vcmp.lt.s32.totalorder %v204, 7
        %v3933 = vsel %vm3932, %v3930, %v3931
        %v3934 = vsel %vm3932, %v3931, %v3930
        %v3935 = vsel %vm3875, 1, 0
        %v3936 = vsel %vm3876, 1, 0
        %vm3937 = vcmp.eq.s32.totalorder %v3935, 1
        %vm3938 = vcmp.eq.s32.totalorder %v3936, 1
        %v3939 = vsel %vm3937, 0.0, %v3933
        %v3940 = vsel %vm3938, 0.0, %v3934
        %v3941 = vpack.c.bf16 %v3929, %v3928
        %v3942 = vpack.c.bf16 %v3940, %v3939
        %v3943 = vpack.c.bf16 %v3918, %v3901
        %v3952 = vunpack.c.l.b16 %v3857
        %v3953 = vunpack.c.l.b16 %v3858
        %v3954 = vunpack.c.l.b16 %v3859
        %v3955 = vunpack.c.l.b16 %v3860
        %v3956 = vunpack.c.l.b16 %v3861
        %v3957 = vunpack.c.l.b16 %v3862
        %v3958 = vunpack.c.l.b16 %v3863
        %v3959 = vunpack.c.l.b16 %v3864
        %v3960 = vpack.c.b16 %v3953, %v3952
        %v3961 = vpack.c.b16 %v3955, %v3954
        %v3962 = vpack.c.b16 %v3957, %v3956
        %v3963 = vpack.c.b16 %v3959, %v3958
        %v3969 = vsel %vm365, %v3943, 0
        %3971 = vmatprep.subr.bf16.mxu0 0
        %3972 = vmatpush1.bf16.msra.mxu0 0
        %3973 = vmatprep.subr.bf16.mxu0 0
        %3974 = vmatpush1.bf16.msra.mxu0 0
        %3975 = vmatprep.subr.bf16.mxu0 0
        %3976 = vmatpush1.bf16.msra.mxu0 0
        %3977 = vmatprep.subr.bf16.mxu0 0
        %3978 = vmatpush1.bf16.msra.mxu0 0
        %3979 = vmatprep.subr.bf16.mxu0 0
        %3980 = vmatpush1.bf16.msra.mxu0 %v3963
        %3981 = vmatprep.subr.bf16.mxu0 0
        %3982 = vmatpush1.bf16.msra.mxu0 %v3962
        %3983 = vmatprep.subr.bf16.mxu0 0
        %3984 = vmatpush1.bf16.msra.mxu0 %v3961
        %3985 = vmatprep.subr.bf16.mxu0 0
        %3986 = vmatpush1.bf16.msra.mxu0 %v3960
        %3987 = vmatprep.subr.bf16.mxu0 0
        %3988 = vmatpush2.bf16.msra.mxu0 0
        %3989 = vmatprep.subr.bf16.mxu0 0
        %3990 = vmatpush2.bf16.msra.mxu0 0
        %3991 = vmatprep.subr.bf16.mxu0 0
        %3992 = vmatpush2.bf16.msra.mxu0 0
        %3993 = vmatprep.subr.bf16.mxu0 0
        %3994 = vmatpush2.bf16.msra.mxu0 0
        %3995 = vmatprep.subr.bf16.mxu0 0
        %3996 = vmatpush2.bf16.msra.mxu0 0
        %3997 = vmatprep.subr.bf16.mxu0 0
        %3998 = vmatpush2.bf16.msra.mxu0 0
        %3999 = vmatprep.subr.bf16.mxu0 0
        %4000 = vmatpush2.bf16.msra.mxu0 0
        %4001 = vmatprep.subr.bf16.mxu0 0
        %4002 = vmatpush2.bf16.msra.mxu0 0
        %4003 = vmatprep.mubr.bf16.mxu0 0
        %4004 = vmatmul.mubr.bf16.gmra.mxu0 %v3969
        %v4005 = vpop.f32.mrf.mxu0
        %v4006 = vadd.f32 0.0, %v4005
        %v4007 = vpop.f32.mrf.mxu0
        %v4008 = vpop.f32.mrf.mxu0
        %v4009 = vadd.f32 0.0, %v4008
        %v4010 = vpop.f32.mrf.mxu0
        %4011 = vdwg.mxu0
        %v4020 = vunpack.c.l.b16 %v3849
        %v4021 = vunpack.c.l.b16 %v3850
        %v4022 = vunpack.c.l.b16 %v3851
        %v4023 = vunpack.c.l.b16 %v3852
        %v4024 = vunpack.c.l.b16 %v3853
        %v4025 = vunpack.c.l.b16 %v3854
        %v4026 = vunpack.c.l.b16 %v3855
        %v4027 = vunpack.c.l.b16 %v3856
        %v4028 = vpack.c.b16 %v4021, %v4020
        %v4029 = vpack.c.b16 %v4023, %v4022
        %v4030 = vpack.c.b16 %v4025, %v4024
        %v4031 = vpack.c.b16 %v4027, %v4026
        %v4037 = vsel %vm365, %v3941, 0
        %4039 = vmatprep.subr.bf16.mxu0 0
        %4040 = vmatpush1.bf16.msra.mxu0 0
        %4041 = vmatprep.subr.bf16.mxu0 0
        %4042 = vmatpush1.bf16.msra.mxu0 0
        %4043 = vmatprep.subr.bf16.mxu0 0
        %4044 = vmatpush1.bf16.msra.mxu0 0
        %4045 = vmatprep.subr.bf16.mxu0 0
        %4046 = vmatpush1.bf16.msra.mxu0 0
        %4047 = vmatprep.subr.bf16.mxu0 0
        %4048 = vmatpush1.bf16.msra.mxu0 %v4031
        %4049 = vmatprep.subr.bf16.mxu0 0
        %4050 = vmatpush1.bf16.msra.mxu0 %v4030
        %4051 = vmatprep.subr.bf16.mxu0 0
        %4052 = vmatpush1.bf16.msra.mxu0 %v4029
        %4053 = vmatprep.subr.bf16.mxu0 0
        %4054 = vmatpush1.bf16.msra.mxu0 %v4028
        %4055 = vmatprep.subr.bf16.mxu0 0
        %4056 = vmatpush2.bf16.msra.mxu0 0
        %4057 = vmatprep.subr.bf16.mxu0 0
        %4058 = vmatpush2.bf16.msra.mxu0 0
        %4059 = vmatprep.subr.bf16.mxu0 0
        %4060 = vmatpush2.bf16.msra.mxu0 0
        %4061 = vmatprep.subr.bf16.mxu0 0
        %4062 = vmatpush2.bf16.msra.mxu0 0
        %4063 = vmatprep.subr.bf16.mxu0 0
        %4064 = vmatpush2.bf16.msra.mxu0 0
        %4065 = vmatprep.subr.bf16.mxu0 0
        %4066 = vmatpush2.bf16.msra.mxu0 0
        %4067 = vmatprep.subr.bf16.mxu0 0
        %4068 = vmatpush2.bf16.msra.mxu0 0
        %4069 = vmatprep.subr.bf16.mxu0 0
        %4070 = vmatpush2.bf16.msra.mxu0 0
        %4071 = vmatprep.mubr.bf16.mxu0 0
        %4072 = vmatmul.mubr.bf16.gmra.mxu0 %v4037
        %v4073 = vpop.f32.mrf.mxu0
        %v4074 = vadd.f32 %v4006, %v4073
        %v4075 = vpop.f32.mrf.mxu0
        %v4076 = vpop.f32.mrf.mxu0
        %v4077 = vadd.f32 %v4009, %v4076
        %v4078 = vpop.f32.mrf.mxu0
        %4079 = vdwg.mxu0
        %v4088 = vunpack.c.l.b16 %v3865
        %v4089 = vunpack.c.l.b16 %v3866
        %v4090 = vunpack.c.l.b16 %v3867
        %v4091 = vunpack.c.l.b16 %v3868
        %v4092 = vunpack.c.l.b16 %v3869
        %v4093 = vunpack.c.l.b16 %v3870
        %v4094 = vunpack.c.l.b16 %v3871
        %v4095 = vunpack.c.l.b16 %v3872
        %v4096 = vpack.c.b16 %v4089, %v4088
        %v4097 = vpack.c.b16 %v4091, %v4090
        %v4098 = vpack.c.b16 %v4093, %v4092
        %v4099 = vpack.c.b16 %v4095, %v4094
        %v4105 = vsel %vm365, %v3942, 0
        %4107 = vmatprep.subr.bf16.mxu0 0
        %4108 = vmatpush1.bf16.msra.mxu0 0
        %4109 = vmatprep.subr.bf16.mxu0 0
        %4110 = vmatpush1.bf16.msra.mxu0 0
        %4111 = vmatprep.subr.bf16.mxu0 0
        %4112 = vmatpush1.bf16.msra.mxu0 0
        %4113 = vmatprep.subr.bf16.mxu0 0
        %4114 = vmatpush1.bf16.msra.mxu0 0
        %4115 = vmatprep.subr.bf16.mxu0 0
        %4116 = vmatpush1.bf16.msra.mxu0 %v4099
        %4117 = vmatprep.subr.bf16.mxu0 0
        %4118 = vmatpush1.bf16.msra.mxu0 %v4098
        %4119 = vmatprep.subr.bf16.mxu0 0
        %4120 = vmatpush1.bf16.msra.mxu0 %v4097
        %4121 = vmatprep.subr.bf16.mxu0 0
        %4122 = vmatpush1.bf16.msra.mxu0 %v4096
        %4123 = vmatprep.subr.bf16.mxu0 0
        %4124 = vmatpush2.bf16.msra.mxu0 0
        %4125 = vmatprep.subr.bf16.mxu0 0
        %4126 = vmatpush2.bf16.msra.mxu0 0
        %4127 = vmatprep.subr.bf16.mxu0 0
        %4128 = vmatpush2.bf16.msra.mxu0 0
        %4129 = vmatprep.subr.bf16.mxu0 0
        %4130 = vmatpush2.bf16.msra.mxu0 0
        %4131 = vmatprep.subr.bf16.mxu0 0
        %4132 = vmatpush2.bf16.msra.mxu0 0
        %4133 = vmatprep.subr.bf16.mxu0 0
        %4134 = vmatpush2.bf16.msra.mxu0 0
        %4135 = vmatprep.subr.bf16.mxu0 0
        %4136 = vmatpush2.bf16.msra.mxu0 0
        %4137 = vmatprep.subr.bf16.mxu0 0
        %4138 = vmatpush2.bf16.msra.mxu0 0
        %4139 = vmatprep.mubr.bf16.mxu0 0
        %4140 = vmatmul.mubr.bf16.gmra.mxu0 %v4105
        %v4141 = vpop.f32.mrf.mxu0
        %v4142 = vadd.f32 0.0, %v4141
        %v4143 = vpop.f32.mrf.mxu0
        %v4144 = vpop.f32.mrf.mxu0
        %v4145 = vadd.f32 0.0, %v4144
        %v4146 = vpop.f32.mrf.mxu0
        %4147 = vdwg.mxu0
        %v4148 = vadd.f32 %v4074, %v4142
        %v4149 = vadd.f32 %v4077, %v4145
        %v4150 = vld [vmem:[#allocation4 + $0x22] sm:$0x1]
        %v4151 = vlaneseq
        %v4152 = vshrl.u32 %v4151, 7
        %v4153 = vsub.s32 0, %v4152
        %v4154 = vrot.slane %v4150, %v4153
        %v4155 = vadd.f32 %v4148, %v4154
        %v4156 = vadd.f32 %v4149, %v4154
        %vm4157 = vcmask 261120
        %v4158 = vsel %vm4157, %v4155, 0.0
        %4159 = vadd.xlane.f32.xlu0 %v4158
        %v4160 = vpop.xlane.xlu0 %4159
        %v4161 = vsel %vm4157, %v4156, 0.0
        %4162 = vadd.xlane.f32.xlu0 %v4161
        %v4163 = vpop.xlane.xlu0 %4162
        %v4164 = vrcp.pop 32.0
        %v4165 = vmul.f32 %v4160, %v4164
        %v4166 = vmul.f32 %v4163, %v4164
        %v4167 = vsub.f32 %v4155, %v4165
        %v4168 = vsub.f32 %v4156, %v4166
        %v4169 = vmul.f32 %v4167, %v4167
        %v4170 = vmul.f32 %v4168, %v4168
        %v4171 = vsel %vm4157, %v4169, 0.0
        %4172 = vadd.xlane.f32.xlu0 %v4171
        %v4173 = vpop.xlane.xlu0 %4172
        %v4174 = vsel %vm4157, %v4170, 0.0
        %4175 = vadd.xlane.f32.xlu0 %v4174
        %v4176 = vpop.xlane.xlu0 %4175
        %v4177 = vmul.f32 %v4173, %v4164
        %v4178 = vmul.f32 %v4176, %v4164
        %v4179 = vadd.f32 %v4177, 1e-06
        %v4180 = vadd.f32 %v4178, 1e-06
        %v4181 = vrsqrt.pop %v4179
        %v4182 = vrsqrt.pop %v4180
        %v4183 = vmul.f32 %v4167, %v4181
        %v4184 = vmul.f32 %v4168, %v4182
        %v4185 = vld [vmem:[#allocation4 + $0x23] sm:$0x1]
        %v4186 = vlaneseq
        %v4187 = vshrl.u32 %v4186, 7
        %v4188 = vsub.s32 0, %v4187
        %v4189 = vrot.slane %v4185, %v4188
        %v4190 = vmul.f32 %v4183, %v4189
        %v4191 = vmul.f32 %v4184, %v4189
        %v4192 = vld [vmem:[#allocation4 + $0x24] sm:$0x1]
        %v4193 = vlaneseq
        %v4194 = vshrl.u32 %v4193, 7
        %v4195 = vsub.s32 0, %v4194
        %v4196 = vrot.slane %v4192, %v4195
        %v4197 = vadd.f32 %v4190, %v4196
        %v4198 = vadd.f32 %v4191, %v4196
        %v4199 = vxor.u32 %v4197, 2147483648
        %v4200 = vxor.u32 %v4198, 2147483648
        %v4201 = vmul.f32 %v4199, 1.442695
        %v4202 = vpow.pop %v4201
        %v4203 = vmul.f32 %v4200, 1.442695
        %v4204 = vpow.pop %v4203
        %v4205 = vadd.f32 %v4202, 1.0
        %v4206 = vadd.f32 %v4204, 1.0
        %v4207 = vrcp.pop %v4205
        %v4208 = vmul.f32 1.0, %v4207
        %v4209 = vrcp.pop %v4206
        %v4210 = vmul.f32 1.0, %v4209
        %v4211 = vmul.f32 %v4197, %v4208
        %v4212 = vmul.f32 %v4198, %v4210
        %v4213 = vld [vmem:[#allocation2 + $0x478] sm:$0xf]
        %v4214 = vld [vmem:[#allocation2 + $0x47c] sm:$0xf]
        %v4215 = vld [vmem:[#allocation2 + $0x480] sm:$0xf]
        %v4216 = vld [vmem:[#allocation2 + $0x484] sm:$0xf]
        %v4217 = vld [vmem:[#allocation2 + $0x488] sm:$0xf]
        %v4218 = vld [vmem:[#allocation2 + $0x48c] sm:$0xf]
        %v4219 = vld [vmem:[#allocation2 + $0x490] sm:$0xf]
        %v4220 = vld [vmem:[#allocation2 + $0x494] sm:$0xf]
        %v4221 = vld [vmem:[#allocation2 + $0x498] sm:$0xf]
        %v4222 = vld [vmem:[#allocation2 + $0x49c] sm:$0xf]
        %v4223 = vld [vmem:[#allocation2 + $0x4a0] sm:$0xf]
        %v4224 = vld [vmem:[#allocation2 + $0x4a4] sm:$0xf]
        %v4225 = vrot.slane %v4211, 7
        %v4226 = vrot.slane %v4212, 7
        %v4227 = vsel %vm3923, %v4225, %v4226
        %v4228 = vsel %vm3923, %v4226, %v4225
        %v4229 = vsel %vm209, 0.0, %v4228
        %v4230 = vsel %vm3927, 0.0, %v4227
        %v4231 = vrot.slane %v4211, 1
        %v4232 = vrot.slane %v4212, 1
        %v4233 = vsel %vm3932, %v4231, %v4232
        %v4234 = vsel %vm3932, %v4232, %v4231
        %v4235 = vsel %vm3937, 0.0, %v4233
        %v4236 = vsel %vm3938, 0.0, %v4234
        %v4237 = vpack.c.bf16 %v4230, %v4229
        %v4238 = vpack.c.bf16 %v4236, %v4235
        %v4239 = vpack.c.bf16 %v4212, %v4211
        %v4244 = vunpack.c.l.b16 %v4217
        %v4245 = vunpack.c.l.b16 %v4218
        %v4246 = vunpack.c.l.b16 %v4219
        %v4247 = vunpack.c.l.b16 %v4220
        %v4248 = vpack.c.b16 %v4245, %v4244
        %v4249 = vpack.c.b16 %v4247, %v4246
        %v4253 = vsel %vm4157, %v4239, 0
        %4255 = vmatprep.subr.bf16.mxu0 0
        %4256 = vmatpush1.bf16.msra.mxu0 0
        %4257 = vmatprep.subr.bf16.mxu0 0
        %4258 = vmatpush1.bf16.msra.mxu0 0
        %4259 = vmatprep.subr.bf16.mxu0 0
        %4260 = vmatpush1.bf16.msra.mxu0 0
        %4261 = vmatprep.subr.bf16.mxu0 0
        %4262 = vmatpush1.bf16.msra.mxu0 0
        %4263 = vmatprep.subr.bf16.mxu0 0
        %4264 = vmatpush1.bf16.msra.mxu0 0
        %4265 = vmatprep.subr.bf16.mxu0 0
        %4266 = vmatpush1.bf16.msra.mxu0 0
        %4267 = vmatprep.subr.bf16.mxu0 0
        %4268 = vmatpush1.bf16.msra.mxu0 %v4249
        %4269 = vmatprep.subr.bf16.mxu0 0
        %4270 = vmatpush1.bf16.msra.mxu0 %v4248
        %4271 = vmatprep.subr.bf16.mxu0 0
        %4272 = vmatpush2.bf16.msra.mxu0 0
        %4273 = vmatprep.subr.bf16.mxu0 0
        %4274 = vmatpush2.bf16.msra.mxu0 0
        %4275 = vmatprep.subr.bf16.mxu0 0
        %4276 = vmatpush2.bf16.msra.mxu0 0
        %4277 = vmatprep.subr.bf16.mxu0 0
        %4278 = vmatpush2.bf16.msra.mxu0 0
        %4279 = vmatprep.subr.bf16.mxu0 0
        %4280 = vmatpush2.bf16.msra.mxu0 0
        %4281 = vmatprep.subr.bf16.mxu0 0
        %4282 = vmatpush2.bf16.msra.mxu0 0
        %4283 = vmatprep.subr.bf16.mxu0 0
        %4284 = vmatpush2.bf16.msra.mxu0 0
        %4285 = vmatprep.subr.bf16.mxu0 0
        %4286 = vmatpush2.bf16.msra.mxu0 0
        %4287 = vmatprep.mubr.bf16.mxu0 0
        %4288 = vmatmul.mubr.bf16.gmra.mxu0 %v4253
        %v4289 = vpop.f32.mrf.mxu0
        %v4290 = vadd.f32 0.0, %v4289
        %v4291 = vpop.f32.mrf.mxu0
        %v4292 = vpop.f32.mrf.mxu0
        %v4293 = vadd.f32 0.0, %v4292
        %v4294 = vpop.f32.mrf.mxu0
        %4295 = vdwg.mxu0
        %v4300 = vunpack.c.l.b16 %v4213
        %v4301 = vunpack.c.l.b16 %v4214
        %v4302 = vunpack.c.l.b16 %v4215
        %v4303 = vunpack.c.l.b16 %v4216
        %v4304 = vpack.c.b16 %v4301, %v4300
        %v4305 = vpack.c.b16 %v4303, %v4302
        %v4309 = vsel %vm4157, %v4237, 0
        %4311 = vmatprep.subr.bf16.mxu0 0
        %4312 = vmatpush1.bf16.msra.mxu0 0
        %4313 = vmatprep.subr.bf16.mxu0 0
        %4314 = vmatpush1.bf16.msra.mxu0 0
        %4315 = vmatprep.subr.bf16.mxu0 0
        %4316 = vmatpush1.bf16.msra.mxu0 0
        %4317 = vmatprep.subr.bf16.mxu0 0
        %4318 = vmatpush1.bf16.msra.mxu0 0
        %4319 = vmatprep.subr.bf16.mxu0 0
        %4320 = vmatpush1.bf16.msra.mxu0 0
        %4321 = vmatprep.subr.bf16.mxu0 0
        %4322 = vmatpush1.bf16.msra.mxu0 0
        %4323 = vmatprep.subr.bf16.mxu0 0
        %4324 = vmatpush1.bf16.msra.mxu0 %v4305
        %4325 = vmatprep.subr.bf16.mxu0 0
        %4326 = vmatpush1.bf16.msra.mxu0 %v4304
        %4327 = vmatprep.subr.bf16.mxu0 0
        %4328 = vmatpush2.bf16.msra.mxu0 0
        %4329 = vmatprep.subr.bf16.mxu0 0
        %4330 = vmatpush2.bf16.msra.mxu0 0
        %4331 = vmatprep.subr.bf16.mxu0 0
        %4332 = vmatpush2.bf16.msra.mxu0 0
        %4333 = vmatprep.subr.bf16.mxu0 0
        %4334 = vmatpush2.bf16.msra.mxu0 0
        %4335 = vmatprep.subr.bf16.mxu0 0
        %4336 = vmatpush2.bf16.msra.mxu0 0
        %4337 = vmatprep.subr.bf16.mxu0 0
        %4338 = vmatpush2.bf16.msra.mxu0 0
        %4339 = vmatprep.subr.bf16.mxu0 0
        %4340 = vmatpush2.bf16.msra.mxu0 0
        %4341 = vmatprep.subr.bf16.mxu0 0
        %4342 = vmatpush2.bf16.msra.mxu0 0
        %4343 = vmatprep.mubr.bf16.mxu0 0
        %4344 = vmatmul.mubr.bf16.gmra.mxu0 %v4309
        %v4345 = vpop.f32.mrf.mxu0
        %v4346 = vadd.f32 %v4290, %v4345
        %v4347 = vpop.f32.mrf.mxu0
        %v4348 = vpop.f32.mrf.mxu0
        %v4349 = vadd.f32 %v4293, %v4348
        %v4350 = vpop.f32.mrf.mxu0
        %4351 = vdwg.mxu0
        %v4356 = vunpack.c.l.b16 %v4221
        %v4357 = vunpack.c.l.b16 %v4222
        %v4358 = vunpack.c.l.b16 %v4223
        %v4359 = vunpack.c.l.b16 %v4224
        %v4360 = vpack.c.b16 %v4357, %v4356
        %v4361 = vpack.c.b16 %v4359, %v4358
        %v4365 = vsel %vm4157, %v4238, 0
        %4367 = vmatprep.subr.bf16.mxu0 0
        %4368 = vmatpush1.bf16.msra.mxu0 0
        %4369 = vmatprep.subr.bf16.mxu0 0
        %4370 = vmatpush1.bf16.msra.mxu0 0
        %4371 = vmatprep.subr.bf16.mxu0 0
        %4372 = vmatpush1.bf16.msra.mxu0 0
        %4373 = vmatprep.subr.bf16.mxu0 0
        %4374 = vmatpush1.bf16.msra.mxu0 0
        %4375 = vmatprep.subr.bf16.mxu0 0
        %4376 = vmatpush1.bf16.msra.mxu0 0
        %4377 = vmatprep.subr.bf16.mxu0 0
        %4378 = vmatpush1.bf16.msra.mxu0 0
        %4379 = vmatprep.subr.bf16.mxu0 0
        %4380 = vmatpush1.bf16.msra.mxu0 %v4361
        %4381 = vmatprep.subr.bf16.mxu0 0
        %4382 = vmatpush1.bf16.msra.mxu0 %v4360
        %4383 = vmatprep.subr.bf16.mxu0 0
        %4384 = vmatpush2.bf16.msra.mxu0 0
        %4385 = vmatprep.subr.bf16.mxu0 0
        %4386 = vmatpush2.bf16.msra.mxu0 0
        %4387 = vmatprep.subr.bf16.mxu0 0
        %4388 = vmatpush2.bf16.msra.mxu0 0
        %4389 = vmatprep.subr.bf16.mxu0 0
        %4390 = vmatpush2.bf16.msra.mxu0 0
        %4391 = vmatprep.subr.bf16.mxu0 0
        %4392 = vmatpush2.bf16.msra.mxu0 0
        %4393 = vmatprep.subr.bf16.mxu0 0
        %4394 = vmatpush2.bf16.msra.mxu0 0
        %4395 = vmatprep.subr.bf16.mxu0 0
        %4396 = vmatpush2.bf16.msra.mxu0 0
        %4397 = vmatprep.subr.bf16.mxu0 0
        %4398 = vmatpush2.bf16.msra.mxu0 0
        %4399 = vmatprep.mubr.bf16.mxu0 0
        %4400 = vmatmul.mubr.bf16.gmra.mxu0 %v4365
        %v4401 = vpop.f32.mrf.mxu0
        %v4402 = vadd.f32 0.0, %v4401
        %v4403 = vpop.f32.mrf.mxu0
        %v4404 = vpop.f32.mrf.mxu0
        %v4405 = vadd.f32 0.0, %v4404
        %v4406 = vpop.f32.mrf.mxu0
        %4407 = vdwg.mxu0
        %v4408 = vadd.f32 %v4346, %v4402
        %v4409 = vadd.f32 %v4349, %v4405
        %v4410 = vld [vmem:[#allocation4 + $0x25] sm:$0x1]
        %v4411 = vlaneseq
        %v4412 = vshrl.u32 %v4411, 7
        %v4413 = vsub.s32 0, %v4412
        %v4414 = vrot.slane %v4410, %v4413
        %v4415 = vadd.f32 %v4408, %v4414
        %v4416 = vadd.f32 %v4409, %v4414
        %v4417 = vpack.c.bf16 %v3500, %v3483
        %v4418 = vld [vmem:[#allocation2 + $0x4a8] sm:$0xf]
        %v4419 = vld [vmem:[#allocation2 + $0x4ac] sm:$0xf]
        %v4420 = vld [vmem:[#allocation2 + $0x4b0] sm:$0xf]
        %v4421 = vld [vmem:[#allocation2 + $0x4b4] sm:$0xf]
        %v4422 = vld [vmem:[#allocation2 + $0x4b8] sm:$0xf]
        %v4423 = vld [vmem:[#allocation2 + $0x4bc] sm:$0xf]
        %v4424 = vld [vmem:[#allocation2 + $0x4c0] sm:$0xf]
        %v4425 = vld [vmem:[#allocation2 + $0x4c4] sm:$0xf]
        %v4426 = vld [vmem:[#allocation4 + $0x26] sm:$0x1]
        %v4427 = vlaneseq
        %v4428 = vshrl.u32 %v4427, 7
        %v4429 = vsub.s32 0, %v4428
        %v4430 = vrot.slane %v4426, %v4429
        %v4439 = vunpack.c.l.b16 %v4418
        %v4440 = vunpack.c.l.b16 %v4419
        %v4441 = vunpack.c.l.b16 %v4420
        %v4442 = vunpack.c.l.b16 %v4421
        %v4443 = vunpack.c.l.b16 %v4422
        %v4444 = vunpack.c.l.b16 %v4423
        %v4445 = vunpack.c.l.b16 %v4424
        %v4446 = vunpack.c.l.b16 %v4425
        %v4447 = vpack.c.b16 %v4440, %v4439
        %v4448 = vpack.c.b16 %v4442, %v4441
        %v4449 = vpack.c.b16 %v4444, %v4443
        %v4450 = vpack.c.b16 %v4446, %v4445
        %v4456 = vsel %vm365, %v4417, 0
        %4458 = vmatprep.subr.bf16.mxu0 0
        %4459 = vmatpush1.bf16.msra.mxu0 0
        %4460 = vmatprep.subr.bf16.mxu0 0
        %4461 = vmatpush1.bf16.msra.mxu0 0
        %4462 = vmatprep.subr.bf16.mxu0 0
        %4463 = vmatpush1.bf16.msra.mxu0 0
        %4464 = vmatprep.subr.bf16.mxu0 0
        %4465 = vmatpush1.bf16.msra.mxu0 0
        %4466 = vmatprep.subr.bf16.mxu0 0
        %4467 = vmatpush1.bf16.msra.mxu0 %v4450
        %4468 = vmatprep.subr.bf16.mxu0 0
        %4469 = vmatpush1.bf16.msra.mxu0 %v4449
        %4470 = vmatprep.subr.bf16.mxu0 0
        %4471 = vmatpush1.bf16.msra.mxu0 %v4448
        %4472 = vmatprep.subr.bf16.mxu0 0
        %4473 = vmatpush1.bf16.msra.mxu0 %v4447
        %4474 = vmatprep.subr.bf16.mxu0 0
        %4475 = vmatpush2.bf16.msra.mxu0 0
        %4476 = vmatprep.subr.bf16.mxu0 0
        %4477 = vmatpush2.bf16.msra.mxu0 0
        %4478 = vmatprep.subr.bf16.mxu0 0
        %4479 = vmatpush2.bf16.msra.mxu0 0
        %4480 = vmatprep.subr.bf16.mxu0 0
        %4481 = vmatpush2.bf16.msra.mxu0 0
        %4482 = vmatprep.subr.bf16.mxu0 0
        %4483 = vmatpush2.bf16.msra.mxu0 0
        %4484 = vmatprep.subr.bf16.mxu0 0
        %4485 = vmatpush2.bf16.msra.mxu0 0
        %4486 = vmatprep.subr.bf16.mxu0 0
        %4487 = vmatpush2.bf16.msra.mxu0 0
        %4488 = vmatprep.subr.bf16.mxu0 0
        %4489 = vmatpush2.bf16.msra.mxu0 0
        %4490 = vmatprep.mubr.bf16.mxu0 0
        %4491 = vmatmul.mubr.bf16.gmra.mxu0 %v4456
        %v4492 = vpop.f32.mrf.mxu0
        %v4493 = vadd.f32 %v4430, %v4492
        %v4494 = vpop.f32.mrf.mxu0
        %v4495 = vpop.f32.mrf.mxu0
        %v4496 = vadd.f32 %v4430, %v4495
        %v4497 = vpop.f32.mrf.mxu0
        %4498 = vdwg.mxu0
        %v4499 = vadd.f32 %v4493, %v4415
        %v4500 = vadd.f32 %v4496, %v4416
        %v4501 = vsel %vm4157, %v4499, 0.0
        %4502 = vadd.xlane.f32.xlu0 %v4501
        %v4503 = vpop.xlane.xlu0 %4502
        %v4504 = vsel %vm4157, %v4500, 0.0
        %4505 = vadd.xlane.f32.xlu0 %v4504
        %v4506 = vpop.xlane.xlu0 %4505
        %v4507 = vmul.f32 %v4503, %v4164
        %v4508 = vmul.f32 %v4506, %v4164
        %v4509 = vsub.f32 %v4499, %v4507
        %v4510 = vsub.f32 %v4500, %v4508
        %v4511 = vmul.f32 %v4509, %v4509
        %v4512 = vmul.f32 %v4510, %v4510
        %v4513 = vsel %vm4157, %v4511, 0.0
        %4514 = vadd.xlane.f32.xlu0 %v4513
        %v4515 = vpop.xlane.xlu0 %4514
        %v4516 = vsel %vm4157, %v4512, 0.0
        %4517 = vadd.xlane.f32.xlu0 %v4516
        %v4518 = vpop.xlane.xlu0 %4517
        %v4519 = vmul.f32 %v4515, %v4164
        %v4520 = vmul.f32 %v4518, %v4164
        %v4521 = vadd.f32 %v4519, 1e-06
        %v4522 = vadd.f32 %v4520, 1e-06
        %v4523 = vrsqrt.pop %v4521
        %v4524 = vrsqrt.pop %v4522
        %v4525 = vmul.f32 %v4509, %v4523
        %v4526 = vmul.f32 %v4510, %v4524
        %v4527 = vld [vmem:[#allocation4 + $0x27] sm:$0x1]
        %v4528 = vlaneseq
        %v4529 = vshrl.u32 %v4528, 7
        %v4530 = vsub.s32 0, %v4529
        %v4531 = vrot.slane %v4527, %v4530
        %v4532 = vmul.f32 %v4525, %v4531
        %v4533 = vmul.f32 %v4526, %v4531
        %v4534 = vld [vmem:[#allocation4 + $0x28] sm:$0x1]
        %v4535 = vlaneseq
        %v4536 = vshrl.u32 %v4535, 7
        %v4537 = vsub.s32 0, %v4536
        %v4538 = vrot.slane %v4534, %v4537
        %v4539 = vadd.f32 %v4532, %v4538
        %v4540 = vadd.f32 %v4533, %v4538
        %v4541 = vxor.u32 %v4539, 2147483648
        %v4542 = vxor.u32 %v4540, 2147483648
        %v4543 = vmul.f32 %v4541, 1.442695
        %v4544 = vpow.pop %v4543
        %v4545 = vmul.f32 %v4542, 1.442695
        %v4546 = vpow.pop %v4545
        %v4547 = vadd.f32 %v4544, 1.0
        %v4548 = vadd.f32 %v4546, 1.0
        %v4549 = vrcp.pop %v4547
        %v4550 = vmul.f32 1.0, %v4549
        %v4551 = vrcp.pop %v4548
        %v4552 = vmul.f32 1.0, %v4551
        %v4553 = vmul.f32 %v4539, %v4550
        %v4554 = vmul.f32 %v4540, %v4552
        %v4555 = vld [vmem:[#allocation2 + $0x4c8] sm:$0xf]
        %v4556 = vld [vmem:[#allocation2 + $0x4cc] sm:$0xf]
        %v4557 = vld [vmem:[#allocation2 + $0x4d0] sm:$0xf]
        %v4558 = vld [vmem:[#allocation2 + $0x4d4] sm:$0xf]
        %v4559 = vld [vmem:[#allocation2 + $0x4d8] sm:$0xf]
        %v4560 = vld [vmem:[#allocation2 + $0x4dc] sm:$0xf]
        %v4561 = vld [vmem:[#allocation2 + $0x4e0] sm:$0xf]
        %v4562 = vld [vmem:[#allocation2 + $0x4e4] sm:$0xf]
        %v4563 = vld [vmem:[#allocation2 + $0x4e8] sm:$0xf]
        %v4564 = vld [vmem:[#allocation2 + $0x4ec] sm:$0xf]
        %v4565 = vld [vmem:[#allocation2 + $0x4f0] sm:$0xf]
        %v4566 = vld [vmem:[#allocation2 + $0x4f4] sm:$0xf]
        %v4567 = vrot.slane %v4553, 7
        %v4568 = vrot.slane %v4554, 7
        %v4569 = vsel %vm3923, %v4567, %v4568
        %v4570 = vsel %vm3923, %v4568, %v4567
        %v4571 = vsel %vm209, 0.0, %v4570
        %v4572 = vsel %vm3927, 0.0, %v4569
        %v4573 = vrot.slane %v4553, 1
        %v4574 = vrot.slane %v4554, 1
        %v4575 = vsel %vm3932, %v4573, %v4574
        %v4576 = vsel %vm3932, %v4574, %v4573
        %v4577 = vsel %vm3937, 0.0, %v4575
        %v4578 = vsel %vm3938, 0.0, %v4576
        %v4579 = vpack.c.bf16 %v4572, %v4571
        %v4580 = vpack.c.bf16 %v4578, %v4577
        %v4581 = vpack.c.bf16 %v4554, %v4553
        %v4586 = vunpack.c.l.b16 %v4559
        %v4587 = vunpack.c.l.b16 %v4560
        %v4588 = vunpack.c.l.b16 %v4561
        %v4589 = vunpack.c.l.b16 %v4562
        %v4590 = vpack.c.b16 %v4587, %v4586
        %v4591 = vpack.c.b16 %v4589, %v4588
        %v4595 = vsel %vm4157, %v4581, 0
        %4597 = vmatprep.subr.bf16.mxu0 0
        %4598 = vmatpush1.bf16.msra.mxu0 0
        %4599 = vmatprep.subr.bf16.mxu0 0
        %4600 = vmatpush1.bf16.msra.mxu0 0
        %4601 = vmatprep.subr.bf16.mxu0 0
        %4602 = vmatpush1.bf16.msra.mxu0 0
        %4603 = vmatprep.subr.bf16.mxu0 0
        %4604 = vmatpush1.bf16.msra.mxu0 0
        %4605 = vmatprep.subr.bf16.mxu0 0
        %4606 = vmatpush1.bf16.msra.mxu0 0
        %4607 = vmatprep.subr.bf16.mxu0 0
        %4608 = vmatpush1.bf16.msra.mxu0 0
        %4609 = vmatprep.subr.bf16.mxu0 0
        %4610 = vmatpush1.bf16.msra.mxu0 %v4591
        %4611 = vmatprep.subr.bf16.mxu0 0
        %4612 = vmatpush1.bf16.msra.mxu0 %v4590
        %4613 = vmatprep.subr.bf16.mxu0 0
        %4614 = vmatpush2.bf16.msra.mxu0 0
        %4615 = vmatprep.subr.bf16.mxu0 0
        %4616 = vmatpush2.bf16.msra.mxu0 0
        %4617 = vmatprep.subr.bf16.mxu0 0
        %4618 = vmatpush2.bf16.msra.mxu0 0
        %4619 = vmatprep.subr.bf16.mxu0 0
        %4620 = vmatpush2.bf16.msra.mxu0 0
        %4621 = vmatprep.subr.bf16.mxu0 0
        %4622 = vmatpush2.bf16.msra.mxu0 0
        %4623 = vmatprep.subr.bf16.mxu0 0
        %4624 = vmatpush2.bf16.msra.mxu0 0
        %4625 = vmatprep.subr.bf16.mxu0 0
        %4626 = vmatpush2.bf16.msra.mxu0 0
        %4627 = vmatprep.subr.bf16.mxu0 0
        %4628 = vmatpush2.bf16.msra.mxu0 0
        %4629 = vmatprep.mubr.bf16.mxu0 0
        %4630 = vmatmul.mubr.bf16.gmra.mxu0 %v4595
        %v4631 = vpop.f32.mrf.mxu0
        %v4632 = vadd.f32 0.0, %v4631
        %v4633 = vpop.f32.mrf.mxu0
        %v4634 = vpop.f32.mrf.mxu0
        %v4635 = vadd.f32 0.0, %v4634
        %v4636 = vpop.f32.mrf.mxu0
        %4637 = vdwg.mxu0
        %v4642 = vunpack.c.l.b16 %v4555
        %v4643 = vunpack.c.l.b16 %v4556
        %v4644 = vunpack.c.l.b16 %v4557
        %v4645 = vunpack.c.l.b16 %v4558
        %v4646 = vpack.c.b16 %v4643, %v4642
        %v4647 = vpack.c.b16 %v4645, %v4644
        %v4651 = vsel %vm4157, %v4579, 0
        %4653 = vmatprep.subr.bf16.mxu0 0
        %4654 = vmatpush1.bf16.msra.mxu0 0
        %4655 = vmatprep.subr.bf16.mxu0 0
        %4656 = vmatpush1.bf16.msra.mxu0 0
        %4657 = vmatprep.subr.bf16.mxu0 0
        %4658 = vmatpush1.bf16.msra.mxu0 0
        %4659 = vmatprep.subr.bf16.mxu0 0
        %4660 = vmatpush1.bf16.msra.mxu0 0
        %4661 = vmatprep.subr.bf16.mxu0 0
        %4662 = vmatpush1.bf16.msra.mxu0 0
        %4663 = vmatprep.subr.bf16.mxu0 0
        %4664 = vmatpush1.bf16.msra.mxu0 0
        %4665 = vmatprep.subr.bf16.mxu0 0
        %4666 = vmatpush1.bf16.msra.mxu0 %v4647
        %4667 = vmatprep.subr.bf16.mxu0 0
        %4668 = vmatpush1.bf16.msra.mxu0 %v4646
        %4669 = vmatprep.subr.bf16.mxu0 0
        %4670 = vmatpush2.bf16.msra.mxu0 0
        %4671 = vmatprep.subr.bf16.mxu0 0
        %4672 = vmatpush2.bf16.msra.mxu0 0
        %4673 = vmatprep.subr.bf16.mxu0 0
        %4674 = vmatpush2.bf16.msra.mxu0 0
        %4675 = vmatprep.subr.bf16.mxu0 0
        %4676 = vmatpush2.bf16.msra.mxu0 0
        %4677 = vmatprep.subr.bf16.mxu0 0
        %4678 = vmatpush2.bf16.msra.mxu0 0
        %4679 = vmatprep.subr.bf16.mxu0 0
        %4680 = vmatpush2.bf16.msra.mxu0 0
        %4681 = vmatprep.subr.bf16.mxu0 0
        %4682 = vmatpush2.bf16.msra.mxu0 0
        %4683 = vmatprep.subr.bf16.mxu0 0
        %4684 = vmatpush2.bf16.msra.mxu0 0
        %4685 = vmatprep.mubr.bf16.mxu0 0
        %4686 = vmatmul.mubr.bf16.gmra.mxu0 %v4651
        %v4687 = vpop.f32.mrf.mxu0
        %v4688 = vadd.f32 %v4632, %v4687
        %v4689 = vpop.f32.mrf.mxu0
        %v4690 = vpop.f32.mrf.mxu0
        %v4691 = vadd.f32 %v4635, %v4690
        %v4692 = vpop.f32.mrf.mxu0
        %4693 = vdwg.mxu0
        %v4698 = vunpack.c.l.b16 %v4563
        %v4699 = vunpack.c.l.b16 %v4564
        %v4700 = vunpack.c.l.b16 %v4565
        %v4701 = vunpack.c.l.b16 %v4566
        %v4702 = vpack.c.b16 %v4699, %v4698
        %v4703 = vpack.c.b16 %v4701, %v4700
        %v4707 = vsel %vm4157, %v4580, 0
        %4709 = vmatprep.subr.bf16.mxu0 0
        %4710 = vmatpush1.bf16.msra.mxu0 0
        %4711 = vmatprep.subr.bf16.mxu0 0
        %4712 = vmatpush1.bf16.msra.mxu0 0
        %4713 = vmatprep.subr.bf16.mxu0 0
        %4714 = vmatpush1.bf16.msra.mxu0 0
        %4715 = vmatprep.subr.bf16.mxu0 0
        %4716 = vmatpush1.bf16.msra.mxu0 0
        %4717 = vmatprep.subr.bf16.mxu0 0
        %4718 = vmatpush1.bf16.msra.mxu0 0
        %4719 = vmatprep.subr.bf16.mxu0 0
        %4720 = vmatpush1.bf16.msra.mxu0 0
        %4721 = vmatprep.subr.bf16.mxu0 0
        %4722 = vmatpush1.bf16.msra.mxu0 %v4703
        %4723 = vmatprep.subr.bf16.mxu0 0
        %4724 = vmatpush1.bf16.msra.mxu0 %v4702
        %4725 = vmatprep.subr.bf16.mxu0 0
        %4726 = vmatpush2.bf16.msra.mxu0 0
        %4727 = vmatprep.subr.bf16.mxu0 0
        %4728 = vmatpush2.bf16.msra.mxu0 0
        %4729 = vmatprep.subr.bf16.mxu0 0
        %4730 = vmatpush2.bf16.msra.mxu0 0
        %4731 = vmatprep.subr.bf16.mxu0 0
        %4732 = vmatpush2.bf16.msra.mxu0 0
        %4733 = vmatprep.subr.bf16.mxu0 0
        %4734 = vmatpush2.bf16.msra.mxu0 0
        %4735 = vmatprep.subr.bf16.mxu0 0
        %4736 = vmatpush2.bf16.msra.mxu0 0
        %4737 = vmatprep.subr.bf16.mxu0 0
        %4738 = vmatpush2.bf16.msra.mxu0 0
        %4739 = vmatprep.subr.bf16.mxu0 0
        %4740 = vmatpush2.bf16.msra.mxu0 0
        %4741 = vmatprep.mubr.bf16.mxu0 0
        %4742 = vmatmul.mubr.bf16.gmra.mxu0 %v4707
        %v4743 = vpop.f32.mrf.mxu0
        %v4744 = vadd.f32 0.0, %v4743
        %v4745 = vpop.f32.mrf.mxu0
        %v4746 = vpop.f32.mrf.mxu0
        %v4747 = vadd.f32 0.0, %v4746
        %v4748 = vpop.f32.mrf.mxu0
        %4749 = vdwg.mxu0
        %v4750 = vadd.f32 %v4688, %v4744
        %v4751 = vadd.f32 %v4691, %v4747
        %v4752 = vld [vmem:[#allocation4 + $0x29] sm:$0x1]
        %v4753 = vlaneseq
        %v4754 = vshrl.u32 %v4753, 7
        %v4755 = vsub.s32 0, %v4754
        %v4756 = vrot.slane %v4752, %v4755
        %v4757 = vadd.f32 %v4750, %v4756
        %v4758 = vadd.f32 %v4751, %v4756
        %v4759 = vsel %vm4157, %v4757, 0.0
        %4760 = vadd.xlane.f32.xlu0 %v4759
        %v4761 = vpop.xlane.xlu0 %4760
        %v4762 = vsel %vm4157, %v4758, 0.0
        %4763 = vadd.xlane.f32.xlu0 %v4762
        %v4764 = vpop.xlane.xlu0 %4763
        %v4765 = vmul.f32 %v4761, %v4164
        %v4766 = vmul.f32 %v4764, %v4164
        %v4767 = vsub.f32 %v4757, %v4765
        %v4768 = vsub.f32 %v4758, %v4766
        %v4769 = vmul.f32 %v4767, %v4767
        %v4770 = vmul.f32 %v4768, %v4768
        %v4771 = vsel %vm4157, %v4769, 0.0
        %4772 = vadd.xlane.f32.xlu0 %v4771
        %v4773 = vpop.xlane.xlu0 %4772
        %v4774 = vsel %vm4157, %v4770, 0.0
        %4775 = vadd.xlane.f32.xlu0 %v4774
        %v4776 = vpop.xlane.xlu0 %4775
        %v4777 = vmul.f32 %v4773, %v4164
        %v4778 = vmul.f32 %v4776, %v4164
        %v4779 = vadd.f32 %v4777, 1e-06
        %v4780 = vadd.f32 %v4778, 1e-06
        %v4781 = vrsqrt.pop %v4779
        %v4782 = vrsqrt.pop %v4780
        %v4783 = vmul.f32 %v4767, %v4781
        %v4784 = vmul.f32 %v4768, %v4782
        %v4785 = vld [vmem:[#allocation4 + $0x2a] sm:$0x1]
        %v4786 = vlaneseq
        %v4787 = vshrl.u32 %v4786, 7
        %v4788 = vsub.s32 0, %v4787
        %v4789 = vrot.slane %v4785, %v4788
        %v4790 = vmul.f32 %v4783, %v4789
        %v4791 = vmul.f32 %v4784, %v4789
        %v4792 = vld [vmem:[#allocation4 + $0x2b] sm:$0x1]
        %v4793 = vlaneseq
        %v4794 = vshrl.u32 %v4793, 7
        %v4795 = vsub.s32 0, %v4794
        %v4796 = vrot.slane %v4792, %v4795
        %v4797 = vadd.f32 %v4790, %v4796
        %v4798 = vadd.f32 %v4791, %v4796
        %v4799 = vxor.u32 %v4797, 2147483648
        %v4800 = vxor.u32 %v4798, 2147483648
        %v4801 = vmul.f32 %v4799, 1.442695
        %v4802 = vpow.pop %v4801
        %v4803 = vmul.f32 %v4800, 1.442695
        %v4804 = vpow.pop %v4803
        %v4805 = vadd.f32 %v4802, 1.0
        %v4806 = vadd.f32 %v4804, 1.0
        %v4807 = vrcp.pop %v4805
        %v4808 = vmul.f32 1.0, %v4807
        %v4809 = vrcp.pop %v4806
        %v4810 = vmul.f32 1.0, %v4809
        %v4811 = vmul.f32 %v4797, %v4808
        %v4812 = vmul.f32 %v4798, %v4810
        %v4813 = vld [vmem:[#allocation2 + $0x4f8] sm:$0xf]
        %v4814 = vld [vmem:[#allocation2 + $0x4fc] sm:$0xf]
        %v4815 = vld [vmem:[#allocation2 + $0x500] sm:$0xf]
        %v4816 = vld [vmem:[#allocation2 + $0x504] sm:$0xf]
        %v4817 = vld [vmem:[#allocation2 + $0x508] sm:$0xf]
        %v4818 = vld [vmem:[#allocation2 + $0x50c] sm:$0xf]
        %v4819 = vld [vmem:[#allocation2 + $0x510] sm:$0xf]
        %v4820 = vld [vmem:[#allocation2 + $0x514] sm:$0xf]
        %v4821 = vld [vmem:[#allocation2 + $0x518] sm:$0xf]
        %v4822 = vld [vmem:[#allocation2 + $0x51c] sm:$0xf]
        %v4823 = vld [vmem:[#allocation2 + $0x520] sm:$0xf]
        %v4824 = vld [vmem:[#allocation2 + $0x524] sm:$0xf]
        %v4825 = vrot.slane %v4811, 7
        %v4826 = vrot.slane %v4812, 7
        %v4827 = vsel %vm3923, %v4825, %v4826
        %v4828 = vsel %vm3923, %v4826, %v4825
        %v4829 = vsel %vm209, 0.0, %v4828
        %v4830 = vsel %vm3927, 0.0, %v4827
        %v4831 = vrot.slane %v4811, 1
        %v4832 = vrot.slane %v4812, 1
        %v4833 = vsel %vm3932, %v4831, %v4832
        %v4834 = vsel %vm3932, %v4832, %v4831
        %v4835 = vsel %vm3937, 0.0, %v4833
        %v4836 = vsel %vm3938, 0.0, %v4834
        %v4837 = vpack.c.bf16 %v4830, %v4829
        %v4838 = vpack.c.bf16 %v4836, %v4835
        %v4839 = vpack.c.bf16 %v4812, %v4811
        %v4844 = vunpack.c.l.b16 %v4817
        %v4845 = vunpack.c.l.b16 %v4818
        %v4846 = vunpack.c.l.b16 %v4819
        %v4847 = vunpack.c.l.b16 %v4820
        %v4848 = vpack.c.b16 %v4845, %v4844
        %v4849 = vpack.c.b16 %v4847, %v4846
        %v4853 = vsel %vm4157, %v4839, 0
        %4855 = vmatprep.subr.bf16.mxu0 0
        %4856 = vmatpush1.bf16.msra.mxu0 0
        %4857 = vmatprep.subr.bf16.mxu0 0
        %4858 = vmatpush1.bf16.msra.mxu0 0
        %4859 = vmatprep.subr.bf16.mxu0 0
        %4860 = vmatpush1.bf16.msra.mxu0 0
        %4861 = vmatprep.subr.bf16.mxu0 0
        %4862 = vmatpush1.bf16.msra.mxu0 0
        %4863 = vmatprep.subr.bf16.mxu0 0
        %4864 = vmatpush1.bf16.msra.mxu0 0
        %4865 = vmatprep.subr.bf16.mxu0 0
        %4866 = vmatpush1.bf16.msra.mxu0 0
        %4867 = vmatprep.subr.bf16.mxu0 0
        %4868 = vmatpush1.bf16.msra.mxu0 %v4849
        %4869 = vmatprep.subr.bf16.mxu0 0
        %4870 = vmatpush1.bf16.msra.mxu0 %v4848
        %4871 = vmatprep.subr.bf16.mxu0 0
        %4872 = vmatpush2.bf16.msra.mxu0 0
        %4873 = vmatprep.subr.bf16.mxu0 0
        %4874 = vmatpush2.bf16.msra.mxu0 0
        %4875 = vmatprep.subr.bf16.mxu0 0
        %4876 = vmatpush2.bf16.msra.mxu0 0
        %4877 = vmatprep.subr.bf16.mxu0 0
        %4878 = vmatpush2.bf16.msra.mxu0 0
        %4879 = vmatprep.subr.bf16.mxu0 0
        %4880 = vmatpush2.bf16.msra.mxu0 0
        %4881 = vmatprep.subr.bf16.mxu0 0
        %4882 = vmatpush2.bf16.msra.mxu0 0
        %4883 = vmatprep.subr.bf16.mxu0 0
        %4884 = vmatpush2.bf16.msra.mxu0 0
        %4885 = vmatprep.subr.bf16.mxu0 0
        %4886 = vmatpush2.bf16.msra.mxu0 0
        %4887 = vmatprep.mubr.bf16.mxu0 0
        %4888 = vmatmul.mubr.bf16.gmra.mxu0 %v4853
        %v4889 = vpop.f32.mrf.mxu0
        %v4890 = vadd.f32 0.0, %v4889
        %v4891 = vpop.f32.mrf.mxu0
        %v4892 = vpop.f32.mrf.mxu0
        %v4893 = vadd.f32 0.0, %v4892
        %v4894 = vpop.f32.mrf.mxu0
        %4895 = vdwg.mxu0
        %v4900 = vunpack.c.l.b16 %v4813
        %v4901 = vunpack.c.l.b16 %v4814
        %v4902 = vunpack.c.l.b16 %v4815
        %v4903 = vunpack.c.l.b16 %v4816
        %v4904 = vpack.c.b16 %v4901, %v4900
        %v4905 = vpack.c.b16 %v4903, %v4902
        %v4909 = vsel %vm4157, %v4837, 0
        %4911 = vmatprep.subr.bf16.mxu0 0
        %4912 = vmatpush1.bf16.msra.mxu0 0
        %4913 = vmatprep.subr.bf16.mxu0 0
        %4914 = vmatpush1.bf16.msra.mxu0 0
        %4915 = vmatprep.subr.bf16.mxu0 0
        %4916 = vmatpush1.bf16.msra.mxu0 0
        %4917 = vmatprep.subr.bf16.mxu0 0
        %4918 = vmatpush1.bf16.msra.mxu0 0
        %4919 = vmatprep.subr.bf16.mxu0 0
        %4920 = vmatpush1.bf16.msra.mxu0 0
        %4921 = vmatprep.subr.bf16.mxu0 0
        %4922 = vmatpush1.bf16.msra.mxu0 0
        %4923 = vmatprep.subr.bf16.mxu0 0
        %4924 = vmatpush1.bf16.msra.mxu0 %v4905
        %4925 = vmatprep.subr.bf16.mxu0 0
        %4926 = vmatpush1.bf16.msra.mxu0 %v4904
        %4927 = vmatprep.subr.bf16.mxu0 0
        %4928 = vmatpush2.bf16.msra.mxu0 0
        %4929 = vmatprep.subr.bf16.mxu0 0
        %4930 = vmatpush2.bf16.msra.mxu0 0
        %4931 = vmatprep.subr.bf16.mxu0 0
        %4932 = vmatpush2.bf16.msra.mxu0 0
        %4933 = vmatprep.subr.bf16.mxu0 0
        %4934 = vmatpush2.bf16.msra.mxu0 0
        %4935 = vmatprep.subr.bf16.mxu0 0
        %4936 = vmatpush2.bf16.msra.mxu0 0
        %4937 = vmatprep.subr.bf16.mxu0 0
        %4938 = vmatpush2.bf16.msra.mxu0 0
        %4939 = vmatprep.subr.bf16.mxu0 0
        %4940 = vmatpush2.bf16.msra.mxu0 0
        %4941 = vmatprep.subr.bf16.mxu0 0
        %4942 = vmatpush2.bf16.msra.mxu0 0
        %4943 = vmatprep.mubr.bf16.mxu0 0
        %4944 = vmatmul.mubr.bf16.gmra.mxu0 %v4909
        %v4945 = vpop.f32.mrf.mxu0
        %v4946 = vadd.f32 %v4890, %v4945
        %v4947 = vpop.f32.mrf.mxu0
        %v4948 = vpop.f32.mrf.mxu0
        %v4949 = vadd.f32 %v4893, %v4948
        %v4950 = vpop.f32.mrf.mxu0
        %4951 = vdwg.mxu0
        %v4956 = vunpack.c.l.b16 %v4821
        %v4957 = vunpack.c.l.b16 %v4822
        %v4958 = vunpack.c.l.b16 %v4823
        %v4959 = vunpack.c.l.b16 %v4824
        %v4960 = vpack.c.b16 %v4957, %v4956
        %v4961 = vpack.c.b16 %v4959, %v4958
        %v4965 = vsel %vm4157, %v4838, 0
        %4967 = vmatprep.subr.bf16.mxu0 0
        %4968 = vmatpush1.bf16.msra.mxu0 0
        %4969 = vmatprep.subr.bf16.mxu0 0
        %4970 = vmatpush1.bf16.msra.mxu0 0
        %4971 = vmatprep.subr.bf16.mxu0 0
        %4972 = vmatpush1.bf16.msra.mxu0 0
        %4973 = vmatprep.subr.bf16.mxu0 0
        %4974 = vmatpush1.bf16.msra.mxu0 0
        %4975 = vmatprep.subr.bf16.mxu0 0
        %4976 = vmatpush1.bf16.msra.mxu0 0
        %4977 = vmatprep.subr.bf16.mxu0 0
        %4978 = vmatpush1.bf16.msra.mxu0 0
        %4979 = vmatprep.subr.bf16.mxu0 0
        %4980 = vmatpush1.bf16.msra.mxu0 %v4961
        %4981 = vmatprep.subr.bf16.mxu0 0
        %4982 = vmatpush1.bf16.msra.mxu0 %v4960
        %4983 = vmatprep.subr.bf16.mxu0 0
        %4984 = vmatpush2.bf16.msra.mxu0 0
        %4985 = vmatprep.subr.bf16.mxu0 0
        %4986 = vmatpush2.bf16.msra.mxu0 0
        %4987 = vmatprep.subr.bf16.mxu0 0
        %4988 = vmatpush2.bf16.msra.mxu0 0
        %4989 = vmatprep.subr.bf16.mxu0 0
        %4990 = vmatpush2.bf16.msra.mxu0 0
        %4991 = vmatprep.subr.bf16.mxu0 0
        %4992 = vmatpush2.bf16.msra.mxu0 0
        %4993 = vmatprep.subr.bf16.mxu0 0
        %4994 = vmatpush2.bf16.msra.mxu0 0
        %4995 = vmatprep.subr.bf16.mxu0 0
        %4996 = vmatpush2.bf16.msra.mxu0 0
        %4997 = vmatprep.subr.bf16.mxu0 0
        %4998 = vmatpush2.bf16.msra.mxu0 0
        %4999 = vmatprep.mubr.bf16.mxu0 0
        %5000 = vmatmul.mubr.bf16.gmra.mxu0 %v4965
        %v5001 = vpop.f32.mrf.mxu0
        %v5002 = vadd.f32 0.0, %v5001
        %v5003 = vpop.f32.mrf.mxu0
        %v5004 = vpop.f32.mrf.mxu0
        %v5005 = vadd.f32 0.0, %v5004
        %v5006 = vpop.f32.mrf.mxu0
        %5007 = vdwg.mxu0
        %v5008 = vadd.f32 %v4946, %v5002
        %v5009 = vadd.f32 %v4949, %v5005
        %v5010 = vld [vmem:[#allocation4 + $0x2c] sm:$0x1]
        %v5011 = vlaneseq
        %v5012 = vshrl.u32 %v5011, 7
        %v5013 = vsub.s32 0, %v5012
        %v5014 = vrot.slane %v5010, %v5013
        %v5015 = vadd.f32 %v5008, %v5014
        %v5016 = vadd.f32 %v5009, %v5014
        %v5017 = vadd.f32 %v4499, %v5015
        %v5018 = vadd.f32 %v4500, %v5016
        %v5019 = vsel %vm4157, %v5017, 0.0
        %5020 = vadd.xlane.f32.xlu0 %v5019
        %v5021 = vpop.xlane.xlu0 %5020
        %v5022 = vsel %vm4157, %v5018, 0.0
        %5023 = vadd.xlane.f32.xlu0 %v5022
        %v5024 = vpop.xlane.xlu0 %5023
        %v5025 = vmul.f32 %v5021, %v4164
        %v5026 = vmul.f32 %v5024, %v4164
        %v5027 = vsub.f32 %v5017, %v5025
        %v5028 = vsub.f32 %v5018, %v5026
        %v5029 = vmul.f32 %v5027, %v5027
        %v5030 = vmul.f32 %v5028, %v5028
        %v5031 = vsel %vm4157, %v5029, 0.0
        %5032 = vadd.xlane.f32.xlu0 %v5031
        %v5033 = vpop.xlane.xlu0 %5032
        %v5034 = vsel %vm4157, %v5030, 0.0
        %5035 = vadd.xlane.f32.xlu0 %v5034
        %v5036 = vpop.xlane.xlu0 %5035
        %v5037 = vmul.f32 %v5033, %v4164
        %v5038 = vmul.f32 %v5036, %v4164
        %v5039 = vadd.f32 %v5037, 1e-06
        %v5040 = vadd.f32 %v5038, 1e-06
        %v5041 = vrsqrt.pop %v5039
        %v5042 = vrsqrt.pop %v5040
        %v5043 = vmul.f32 %v5027, %v5041
        %v5044 = vmul.f32 %v5028, %v5042
        %v5045 = vld [vmem:[#allocation4 + $0x2d] sm:$0x1]
        %v5046 = vlaneseq
        %v5047 = vshrl.u32 %v5046, 7
        %v5048 = vsub.s32 0, %v5047
        %v5049 = vrot.slane %v5045, %v5048
        %v5050 = vmul.f32 %v5043, %v5049
        %v5051 = vmul.f32 %v5044, %v5049
        %v5052 = vld [vmem:[#allocation4 + $0x2e] sm:$0x1]
        %v5053 = vlaneseq
        %v5054 = vshrl.u32 %v5053, 7
        %v5055 = vsub.s32 0, %v5054
        %v5056 = vrot.slane %v5052, %v5055
        %v5057 = vadd.f32 %v5050, %v5056
        %v5058 = vadd.f32 %v5051, %v5056
        %v5059 = vxor.u32 %v5057, 2147483648
        %v5060 = vxor.u32 %v5058, 2147483648
        %v5061 = vmul.f32 %v5059, 1.442695
        %v5062 = vpow.pop %v5061
        %v5063 = vmul.f32 %v5060, 1.442695
        %v5064 = vpow.pop %v5063
        %v5065 = vadd.f32 %v5062, 1.0
        %v5066 = vadd.f32 %v5064, 1.0
        %v5067 = vrcp.pop %v5065
        %v5068 = vmul.f32 1.0, %v5067
        %v5069 = vrcp.pop %v5066
        %v5070 = vmul.f32 1.0, %v5069
        %v5071 = vmul.f32 %v5057, %v5068
        %v5072 = vmul.f32 %v5058, %v5070
        %v5073 = vld [vmem:[#allocation2 + $0x528] sm:$0xf]
        %v5074 = vld [vmem:[#allocation2 + $0x52c] sm:$0xf]
        %v5075 = vld [vmem:[#allocation2 + $0x530] sm:$0xf]
        %v5076 = vld [vmem:[#allocation2 + $0x534] sm:$0xf]
        %v5077 = vld [vmem:[#allocation2 + $0x538] sm:$0xf]
        %v5078 = vld [vmem:[#allocation2 + $0x53c] sm:$0xf]
        %v5079 = vld [vmem:[#allocation2 + $0x540] sm:$0xf]
        %v5080 = vld [vmem:[#allocation2 + $0x544] sm:$0xf]
        %v5081 = vld [vmem:[#allocation2 + $0x548] sm:$0xf]
        %v5082 = vld [vmem:[#allocation2 + $0x54c] sm:$0xf]
        %v5083 = vld [vmem:[#allocation2 + $0x550] sm:$0xf]
        %v5084 = vld [vmem:[#allocation2 + $0x554] sm:$0xf]
        %v5085 = vrot.slane %v5071, 7
        %v5086 = vrot.slane %v5072, 7
        %v5087 = vsel %vm3923, %v5085, %v5086
        %v5088 = vsel %vm3923, %v5086, %v5085
        %v5089 = vsel %vm209, 0.0, %v5088
        %v5090 = vsel %vm3927, 0.0, %v5087
        %v5091 = vrot.slane %v5071, 1
        %v5092 = vrot.slane %v5072, 1
        %v5093 = vsel %vm3932, %v5091, %v5092
        %v5094 = vsel %vm3932, %v5092, %v5091
        %v5095 = vsel %vm3937, 0.0, %v5093
        %v5096 = vsel %vm3938, 0.0, %v5094
        %v5097 = vpack.c.bf16 %v5090, %v5089
        %v5098 = vpack.c.bf16 %v5096, %v5095
        %v5099 = vpack.c.bf16 %v5072, %v5071
        %v5104 = vunpack.c.l.b16 %v5077
        %v5105 = vunpack.c.l.b16 %v5078
        %v5106 = vunpack.c.l.b16 %v5079
        %v5107 = vunpack.c.l.b16 %v5080
        %v5108 = vpack.c.b16 %v5105, %v5104
        %v5109 = vpack.c.b16 %v5107, %v5106
        %v5113 = vsel %vm4157, %v5099, 0
        %5115 = vmatprep.subr.bf16.mxu0 0
        %5116 = vmatpush1.bf16.msra.mxu0 0
        %5117 = vmatprep.subr.bf16.mxu0 0
        %5118 = vmatpush1.bf16.msra.mxu0 0
        %5119 = vmatprep.subr.bf16.mxu0 0
        %5120 = vmatpush1.bf16.msra.mxu0 0
        %5121 = vmatprep.subr.bf16.mxu0 0
        %5122 = vmatpush1.bf16.msra.mxu0 0
        %5123 = vmatprep.subr.bf16.mxu0 0
        %5124 = vmatpush1.bf16.msra.mxu0 0
        %5125 = vmatprep.subr.bf16.mxu0 0
        %5126 = vmatpush1.bf16.msra.mxu0 0
        %5127 = vmatprep.subr.bf16.mxu0 0
        %5128 = vmatpush1.bf16.msra.mxu0 %v5109
        %5129 = vmatprep.subr.bf16.mxu0 0
        %5130 = vmatpush1.bf16.msra.mxu0 %v5108
        %5131 = vmatprep.subr.bf16.mxu0 0
        %5132 = vmatpush2.bf16.msra.mxu0 0
        %5133 = vmatprep.subr.bf16.mxu0 0
        %5134 = vmatpush2.bf16.msra.mxu0 0
        %5135 = vmatprep.subr.bf16.mxu0 0
        %5136 = vmatpush2.bf16.msra.mxu0 0
        %5137 = vmatprep.subr.bf16.mxu0 0
        %5138 = vmatpush2.bf16.msra.mxu0 0
        %5139 = vmatprep.subr.bf16.mxu0 0
        %5140 = vmatpush2.bf16.msra.mxu0 0
        %5141 = vmatprep.subr.bf16.mxu0 0
        %5142 = vmatpush2.bf16.msra.mxu0 0
        %5143 = vmatprep.subr.bf16.mxu0 0
        %5144 = vmatpush2.bf16.msra.mxu0 0
        %5145 = vmatprep.subr.bf16.mxu0 0
        %5146 = vmatpush2.bf16.msra.mxu0 0
        %5147 = vmatprep.mubr.bf16.mxu0 0
        %5148 = vmatmul.mubr.bf16.gmra.mxu0 %v5113
        %v5149 = vpop.f32.mrf.mxu0
        %v5150 = vadd.f32 0.0, %v5149
        %v5151 = vpop.f32.mrf.mxu0
        %v5152 = vpop.f32.mrf.mxu0
        %v5153 = vadd.f32 0.0, %v5152
        %v5154 = vpop.f32.mrf.mxu0
        %5155 = vdwg.mxu0
        %v5160 = vunpack.c.l.b16 %v5073
        %v5161 = vunpack.c.l.b16 %v5074
        %v5162 = vunpack.c.l.b16 %v5075
        %v5163 = vunpack.c.l.b16 %v5076
        %v5164 = vpack.c.b16 %v5161, %v5160
        %v5165 = vpack.c.b16 %v5163, %v5162
        %v5169 = vsel %vm4157, %v5097, 0
        %5171 = vmatprep.subr.bf16.mxu0 0
        %5172 = vmatpush1.bf16.msra.mxu0 0
        %5173 = vmatprep.subr.bf16.mxu0 0
        %5174 = vmatpush1.bf16.msra.mxu0 0
        %5175 = vmatprep.subr.bf16.mxu0 0
        %5176 = vmatpush1.bf16.msra.mxu0 0
        %5177 = vmatprep.subr.bf16.mxu0 0
        %5178 = vmatpush1.bf16.msra.mxu0 0
        %5179 = vmatprep.subr.bf16.mxu0 0
        %5180 = vmatpush1.bf16.msra.mxu0 0
        %5181 = vmatprep.subr.bf16.mxu0 0
        %5182 = vmatpush1.bf16.msra.mxu0 0
        %5183 = vmatprep.subr.bf16.mxu0 0
        %5184 = vmatpush1.bf16.msra.mxu0 %v5165
        %5185 = vmatprep.subr.bf16.mxu0 0
        %5186 = vmatpush1.bf16.msra.mxu0 %v5164
        %5187 = vmatprep.subr.bf16.mxu0 0
        %5188 = vmatpush2.bf16.msra.mxu0 0
        %5189 = vmatprep.subr.bf16.mxu0 0
        %5190 = vmatpush2.bf16.msra.mxu0 0
        %5191 = vmatprep.subr.bf16.mxu0 0
        %5192 = vmatpush2.bf16.msra.mxu0 0
        %5193 = vmatprep.subr.bf16.mxu0 0
        %5194 = vmatpush2.bf16.msra.mxu0 0
        %5195 = vmatprep.subr.bf16.mxu0 0
        %5196 = vmatpush2.bf16.msra.mxu0 0
        %5197 = vmatprep.subr.bf16.mxu0 0
        %5198 = vmatpush2.bf16.msra.mxu0 0
        %5199 = vmatprep.subr.bf16.mxu0 0
        %5200 = vmatpush2.bf16.msra.mxu0 0
        %5201 = vmatprep.subr.bf16.mxu0 0
        %5202 = vmatpush2.bf16.msra.mxu0 0
        %5203 = vmatprep.mubr.bf16.mxu0 0
        %5204 = vmatmul.mubr.bf16.gmra.mxu0 %v5169
        %v5205 = vpop.f32.mrf.mxu0
        %v5206 = vadd.f32 %v5150, %v5205
        %v5207 = vpop.f32.mrf.mxu0
        %v5208 = vpop.f32.mrf.mxu0
        %v5209 = vadd.f32 %v5153, %v5208
        %v5210 = vpop.f32.mrf.mxu0
        %5211 = vdwg.mxu0
        %v5216 = vunpack.c.l.b16 %v5081
        %v5217 = vunpack.c.l.b16 %v5082
        %v5218 = vunpack.c.l.b16 %v5083
        %v5219 = vunpack.c.l.b16 %v5084
        %v5220 = vpack.c.b16 %v5217, %v5216
        %v5221 = vpack.c.b16 %v5219, %v5218
        %v5225 = vsel %vm4157, %v5098, 0
        %5227 = vmatprep.subr.bf16.mxu0 0
        %5228 = vmatpush1.bf16.msra.mxu0 0
        %5229 = vmatprep.subr.bf16.mxu0 0
        %5230 = vmatpush1.bf16.msra.mxu0 0
        %5231 = vmatprep.subr.bf16.mxu0 0
        %5232 = vmatpush1.bf16.msra.mxu0 0
        %5233 = vmatprep.subr.bf16.mxu0 0
        %5234 = vmatpush1.bf16.msra.mxu0 0
        %5235 = vmatprep.subr.bf16.mxu0 0
        %5236 = vmatpush1.bf16.msra.mxu0 0
        %5237 = vmatprep.subr.bf16.mxu0 0
        %5238 = vmatpush1.bf16.msra.mxu0 0
        %5239 = vmatprep.subr.bf16.mxu0 0
        %5240 = vmatpush1.bf16.msra.mxu0 %v5221
        %5241 = vmatprep.subr.bf16.mxu0 0
        %5242 = vmatpush1.bf16.msra.mxu0 %v5220
        %5243 = vmatprep.subr.bf16.mxu0 0
        %5244 = vmatpush2.bf16.msra.mxu0 0
        %5245 = vmatprep.subr.bf16.mxu0 0
        %5246 = vmatpush2.bf16.msra.mxu0 0
        %5247 = vmatprep.subr.bf16.mxu0 0
        %5248 = vmatpush2.bf16.msra.mxu0 0
        %5249 = vmatprep.subr.bf16.mxu0 0
        %5250 = vmatpush2.bf16.msra.mxu0 0
        %5251 = vmatprep.subr.bf16.mxu0 0
        %5252 = vmatpush2.bf16.msra.mxu0 0
        %5253 = vmatprep.subr.bf16.mxu0 0
        %5254 = vmatpush2.bf16.msra.mxu0 0
        %5255 = vmatprep.subr.bf16.mxu0 0
        %5256 = vmatpush2.bf16.msra.mxu0 0
        %5257 = vmatprep.subr.bf16.mxu0 0
        %5258 = vmatpush2.bf16.msra.mxu0 0
        %5259 = vmatprep.mubr.bf16.mxu0 0
        %5260 = vmatmul.mubr.bf16.gmra.mxu0 %v5225
        %v5261 = vpop.f32.mrf.mxu0
        %v5262 = vadd.f32 0.0, %v5261
        %v5263 = vpop.f32.mrf.mxu0
        %v5264 = vpop.f32.mrf.mxu0
        %v5265 = vadd.f32 0.0, %v5264
        %v5266 = vpop.f32.mrf.mxu0
        %5267 = vdwg.mxu0
        %v5268 = vadd.f32 %v5206, %v5262
        %v5269 = vadd.f32 %v5209, %v5265
        %v5270 = vld [vmem:[#allocation4 + $0x2f] sm:$0x1]
        %v5271 = vlaneseq
        %v5272 = vshrl.u32 %v5271, 7
        %v5273 = vsub.s32 0, %v5272
        %v5274 = vrot.slane %v5270, %v5273
        %v5275 = vadd.f32 %v5268, %v5274
        %v5276 = vadd.f32 %v5269, %v5274
        %5277 = vst.msk [vmem:[%s197] sm:$0xff] %vm1218, %v5275
        %5278 = vst.msk [vmem:[%s197 + $0x8] sm:$0xff] %vm1218, %v5276
        %p5279 = scmp.lt.s32.totalorder %s16, 1
        %s5280 = scalar_select %p5279, %s16, 1
        %s5281 = smul.addr %s5280, 2
        %s5282 = smul.addr %s5281, 8
        %s5283 = scalar_lea.vmem %s3, %s5282
        // Predicated region
        $region41: #{tpu_custom_call.1} parent=31 // pred_check
          %p5284 = pneg %p102
        $region42: #{tpu_custom_call.1} parent=31 // pred_check_branch
          %5286 = sbr.rel (%p5284) target = $region44
        $region43: #{tpu_custom_call.1} parent=31 // pred_region
          _
        $region44: #{tpu_custom_call.1} parent=31 // pred_fallthru
          _
      $region32: #{tpu_custom_call.1} parent=5 // pred_fallthru
        _
      %p5287 = scmp.le.s32.totalorder 2, %s11
      // Predicated region
      $region45: #{tpu_custom_call.1} parent=5 // pred_check
        %p5288 = pneg %p5287
      $region46: #{tpu_custom_call.1} parent=5 // pred_check_branch
        %5290 = sbr.rel (%p5288) target = $region48
      $region47: #{tpu_custom_call.1} parent=5 // pred_region
        %s5291 = ssub.s32 %s11, 2
        // Predicated region
        $region49: #{tpu_custom_call.1} parent=47 // pred_check
          %p5292 = pneg %p108
        $region50: #{tpu_custom_call.1} parent=47 // pred_check_branch
          %5294 = sbr.rel (%p5292) target = $region52
        $region51: #{tpu_custom_call.1} parent=47 // pred_region
          %p5295 = scmp.lt.s32.totalorder %s17, 1
          %s5296 = scalar_select %p5295, %s17, 1
          %s5297 = smul.addr %s5296, 2
          %s5298 = smul.addr %s5297, 8
          %s5299 = scalar_lea.vmem %s3, %s5298
        $region52: #{tpu_custom_call.1} parent=47 // pred_fallthru
          _
      $region48: #{tpu_custom_call.1} parent=5 // pred_fallthru
        _
    $region6: #{tpu_custom_call.1} parent=1 // loop_footer
      %s15 = sadd.s32 1, %s11
    $region7: #{tpu_custom_call.1} parent=1 // loop_footer_branch
      %10 = sbr.rel target = $region3
    $region8: #{tpu_custom_call.1} parent=1 // loop_exit
      _
    %5300 = vsyncpa [#allocation3], 1
    %s5301 = scalar_lea.sflag [#allocation3], 1
    %5302 = vsyncpa %s5301, 1
    %5303 = vsyncpa [#allocation5], 1

</llo_original>
